<compile_context>
chip_gen: v5e
topology: v5e:2x2
jax: 0.10.0
libtpu: 0.0.40
codegen_flags: <defaults>
</compile_context>

<pallas_src>
import functools
import math

import jax
import jax.numpy as jnp
from jax.experimental import pallas as pl
from jax.experimental.pallas import tpu as pltpu


def _round_up(v: int, m: int) -> int:
    return ((v + m - 1) // m) * m


# --------------------------------------------------------------------------------------
# Pallas kernel: per-example symmetric FIR correlation with replicate-padded input.
#   out[b, t] = f[b,0]*x_ext[b, t+h] + sum_{m=1}^{h} f[b,m]*(x_ext[b,t+h-m] + x_ext[b,t+h+m])
# where f[b,m] is the tap at offset |m| (filters are symmetric) and x_ext is the
# replicate-padded waveform (left pad = h).
# --------------------------------------------------------------------------------------
def _fir_kernel(f_ref, x0_ref, x1_ref, o_ref, xcat_ref, *, h_max: int, halo: int,
                t_sub: int):
    bt, tt = o_ref.shape

    # Stitch the haloed tile into VMEM scratch:
    #   xcat = [ x_ext block j (Tt lanes) | halo block starting at (j+1)*Tt ]
    # Both stores are 128-lane aligned.
    xcat_ref[:, :tt] = x0_ref[...]
    xcat_ref[:, tt:tt + halo] = x1_ref[...]

    n_sub = tt // t_sub
    for c in range(n_sub):                      # static: small (block_t // t_sub)
        base = c * t_sub
        # Center tap (m = 0); coefficient slab is a lane-aligned (Bt, t_sub) load.
        acc = (f_ref[:, 0:t_sub]
               * xcat_ref[:, base + h_max: base + h_max + t_sub])
        # Symmetric tap pairs m = 1..h_max: add + mul + add (no f32 FMA on the VPU,
        # so pairing saves ~25% VALU work vs per-tap mul+add).
        for m in range(1, h_max + 1):           # static unroll
            xs = (xcat_ref[:, base + h_max - m: base + h_max - m + t_sub]
                  + xcat_ref[:, base + h_max + m: base + h_max + m + t_sub])
            acc = acc + f_ref[:, m * t_sub:(m + 1) * t_sub] * xs
        o_ref[:, base:base + t_sub] = acc.astype(o_ref.dtype)


def lowpass_fir_pallas(x, filt_half, h_max, *, block_b: int = 8, block_t: int = 2048,
                       t_sub: int = 512):
    """Apply per-example symmetric FIR low-pass filters (replicate edge padding).

    x         : (B, T)        float32 waveforms
    filt_half : (B, h_max+1)  float32; filt_half[b, m] = tap at offset |m|
                (full filter length K = 2*h_max+1, symmetric about the center).
    """
    x = jnp.asarray(x, jnp.float32)
    filt_half = jnp.asarray(filt_half, jnp.float32)
    B, T = x.shape
    Kh = filt_half.shape[1]
    assert Kh == h_max + 1, "filt_half must hold taps for offsets 0..h_max"
    K = 2 * h_max + 1

    halo = _round_up(max(K - 1, 1), 128)          # right-halo lanes needed per tile
    align = math.lcm(halo, t_sub)                 # Tt must be a multiple of both
    Tt = _round_up(max(block_t, align), align)
    Bt = block_b if B >= block_b else B           # full-dim block allowed when B < 8
    Gb = pl.cdiv(B, Bt)
    Gt = pl.cdiv(T, Tt)
    Tp = Gt * Tt

    # Replicate ("edge") padding: h_max on the left; enough on the right so every
    # (Bt, Tt) main block and (Bt, halo) halo block is fully in-bounds along time.
    right = Tp + halo - T - h_max                 # >= 0 since halo >= 2*h_max, Tp >= T
    x_ext = jnp.pad(x, ((0, 0), (h_max, right)), mode="edge")

    # Pre-broadcast the (symmetric-half) taps over the sub-chunk width so the kernel
    # reads lane-aligned coefficient slabs: f_bcast[:, m*t_sub + r] = filt_half[:, m].
    f_bcast = jnp.repeat(filt_half, t_sub, axis=1)        # (B, Kh * t_sub)

    mult = Tt // halo
    kernel = functools.partial(_fir_kernel, h_max=h_max, halo=halo, t_sub=t_sub)

    out = pl.pallas_call(
        kernel,
        out_shape=jax.ShapeDtypeStruct((B, T), jnp.float32),
        grid_spec=pltpu.PrefetchScalarGridSpec(
            num_scalar_prefetch=0,
            grid=(Gb, Gt),
            in_specs=[
                # taps: resident over the time axis
                pl.BlockSpec((Bt, Kh * t_sub), lambda i, j: (i, 0)),
                # x_ext, current time tile
                pl.BlockSpec((Bt, Tt), lambda i, j: (i, j)),
                # x_ext, halo only (starts at element (j+1)*Tt)
                pl.BlockSpec((Bt, halo), lambda i, j, m=mult: (i, (j + 1) * m)),
            ],
            out_specs=pl.BlockSpec((Bt, Tt), lambda i, j: (i, j)),
            scratch_shapes=[pltpu.VMEM((Bt, Tt + halo), jnp.float32)],
        ),
        compiler_params=pltpu.CompilerParams(
            dimension_semantics=("parallel", "parallel"),
        ),
    )(f_bcast, x_ext, x_ext)

    return out


# --------------------------------------------------------------------------------------
# Parameter setup (plain JAX glue, runs once per call outside the hot loop):
# per-example windowed-sinc low-pass taps, julius-style.
#   half_b = floor(zeros / (2 * cutoff_norm_b));  tap_b(m) = 2*c*hann(m)*sinc(2*c*m)
# Only the symmetric half (m = 0..h_used) is materialized; taps with |m| > half_b are
# zero, so shrinking h_used to the batch maximum (instead of the min_cutoff worst case)
# is mathematically identical and removes wasted taps.
# --------------------------------------------------------------------------------------
def build_lowpass_filters(cutoffs_hz, sample_rate, zeros=8, max_half=None):
    cut = jnp.asarray(cutoffs_hz, jnp.float32) / float(sample_rate)   # (B,) normalized
    half = jnp.maximum(jnp.floor(zeros / (2.0 * cut)), 1.0)           # (B,) per-example
    # Static half-width: actual batch max, rounded up to a x16 bucket to bound the
    # number of distinct compiled kernels, capped at the configured worst case.
    h_act = int(jnp.max(half))                                        # host sync (setup)
    h_used = _round_up(max(h_act, 1), 16)
    if max_half is not None:
        h_used = min(h_used, int(max_half))
    h_used = max(h_used, h_act)                                       # never drop taps
    m = jnp.arange(0, h_used + 1, dtype=jnp.float32)                  # offsets 0..h_used
    c = cut[:, None]
    h = half[:, None]
    window = 0.5 * (1.0 + jnp.cos(math.pi * m[None, :] / h))          # Hann
    taps = 2.0 * c * window * jnp.sinc(2.0 * c * m[None, :])
    taps = jnp.where(m[None, :] <= h, taps, 0.0)
    return taps.astype(jnp.float32), h_used


class ApplyLowPassFilter:
    """JAX/Pallas port of the PyTorch ApplyLowPassFilter wrapper (forward only).

    Cutoffs are re-sampled on every call (matching torch_audiomentations), using an
    internal PRNG key that is split per call.
    """

    def __init__(self, sample_rate, min_cutoff_freq, max_cutoff_freq, zeros=8, seed=0):
        self.sample_rate = float(sample_rate)
        self.min_cutoff_freq = float(min_cutoff_freq)
        self.max_cutoff_freq = float(max_cutoff_freq)
        self.zeros = zeros
        self._key = jax.random.PRNGKey(seed)
        # Worst-case half length, used only as a cap for the per-call bucket.
        self._h_cap = max(1, int(math.floor(
            zeros * self.sample_rate / (2.0 * self.min_cutoff_freq))))

    def sample_cutoffs(self, batch):
        self._key, sub = jax.random.split(self._key)
        return jax.random.uniform(sub, (batch,), minval=self.min_cutoff_freq,
                                  maxval=self.max_cutoff_freq)

    def __call__(self, audio_waveform, cutoffs_hz=None):
        # torch: unsqueeze(1) -> filter -> squeeze(1); the channel dim of 1 folds away.
        if cutoffs_hz is None:
            cutoffs_hz = self.sample_cutoffs(audio_waveform.shape[0])
        filt_half, h_used = build_lowpass_filters(
            cutoffs_hz, self.sample_rate, self.zeros, max_half=self._h_cap)
        return lowpass_fir_pallas(audio_waveform, filt_half, h_used)


if __name__ == "__main__":
    key = jax.random.PRNGKey(0)
    kx, _ = jax.random.split(key)
    B, T, sr = 8, 2000, 16000
    x = jax.random.normal(kx, (B, T), dtype=jnp.float32)

    lp = ApplyLowPassFilter(sample_rate=sr, min_cutoff_freq=2000.0,
                            max_cutoff_freq=6000.0, seed=0)
    cutoffs = lp.sample_cutoffs(B)                     # deterministic given seed
    y = lp(x, cutoffs_hz=cutoffs)
    y = jax.block_until_ready(y)
    assert y.shape == (B, T)

    # Pure-JAX reference: full (non-symmetric) replicate-padded correlation with the
    # mirrored filter, built from the same sampled cutoffs.
    filt_half, h = build_lowpass_filters(cutoffs, sr, lp.zeros, max_half=lp._h_cap)
    filt_full = jnp.concatenate([filt_half[:, ::-1], filt_half[:, 1:]], axis=1)  # (B, 2h+1)
    K = 2 * h + 1
    idx = jnp.clip(jnp.arange(T + K - 1) - h, 0, T - 1)
    x_rep = x[:, idx]
    ref = jnp.zeros((B, T), jnp.float32)
    for k in range(K):
        ref = ref + filt_full[:, k:k + 1] * x_rep[:, k:k + T]
    assert bool(jnp.allclose(y, ref, atol=1e-4, rtol=1e-4)), "Pallas output mismatch vs reference"

    print("KERNEL_OK")
</pallas_src>

<mosaic_0001>
module attributes {stable_mosaic.version = 11 : i64} {
  func.func @_fir_kernel(%arg0: i32, %arg1: i32, %arg2: memref<8x16896xf32, #tpu.memory_space<vmem>>, %arg3: memref<8x2048xf32, #tpu.memory_space<vmem>>, %arg4: memref<8x128xf32, #tpu.memory_space<vmem>>, %arg5: memref<8x2048xf32, #tpu.memory_space<vmem>>, %arg6: memref<8x2176xf32, #tpu.memory_space<vmem>>) attributes {dimension_semantics = [#tpu.dimension_semantics<parallel>, #tpu.dimension_semantics<parallel>], iteration_bounds = array<i64: 1, 1>, scalar_prefetch = 0 : i64, scratch_operands = 1 : i64, tpu.core_type = #tpu.core_type<tc>, window_params = [{transform_indices = @transform_0, window_bounds = array<i64: 8, 16896>}, {transform_indices = @transform_1, window_bounds = array<i64: 8, 2048>}, {transform_indices = @transform_2, window_bounds = array<i64: 8, 128>}, {transform_indices = @transform_3, window_bounds = array<i64: 8, 2048>}]} {
    %c0 = arith.constant 0 : index
    %c0_0 = arith.constant 0 : index
    %0 = vector.load %arg3[%c0, %c0_0] : memref<8x2048xf32, #tpu.memory_space<vmem>>, vector<8x2048xf32>
    %c0_1 = arith.constant 0 : index
    %c0_2 = arith.constant 0 : index
    %1 = vector.load %arg6[%c0_1, %c0_2] : memref<8x2176xf32, #tpu.memory_space<vmem>>, vector<8x2048xf32>
    tpu.vector_store %arg6[%c0_1, %c0_2], %0 {strides = array<i32>} : memref<8x2176xf32, #tpu.memory_space<vmem>>, vector<8x2048xf32>,
    %c0_3 = arith.constant 0 : index
    %c0_4 = arith.constant 0 : index
    %2 = vector.load %arg4[%c0_3, %c0_4] : memref<8x128xf32, #tpu.memory_space<vmem>>, vector<8x128xf32>
    %c0_5 = arith.constant 0 : index
    %c2048 = arith.constant 2048 : index
    %3 = vector.load %arg6[%c0_5, %c2048] : memref<8x2176xf32, #tpu.memory_space<vmem>>, vector<8x128xf32>
    tpu.vector_store %arg6[%c0_5, %c2048], %2 {strides = array<i32>} : memref<8x2176xf32, #tpu.memory_space<vmem>>, vector<8x128xf32>,
    %c0_6 = arith.constant 0 : index
    %c0_7 = arith.constant 0 : index
    %4 = vector.load %arg2[%c0_6, %c0_7] : memref<8x16896xf32, #tpu.memory_space<vmem>>, vector<8x512xf32>
    %c0_8 = arith.constant 0 : index
    %c32 = arith.constant 32 : index
    %5 = vector.load %arg6[%c0_8, %c32] : memref<8x2176xf32, #tpu.memory_space<vmem>>, vector<8x512xf32>
    %6 = arith.mulf %4, %5 : vector<8x512xf32>
    %c0_9 = arith.constant 0 : index
    %c31 = arith.constant 31 : index
    %7 = vector.load %arg6[%c0_9, %c31] : memref<8x2176xf32, #tpu.memory_space<vmem>>, vector<8x512xf32>
    %c0_10 = arith.constant 0 : index
    %c33 = arith.constant 33 : index
    %8 = vector.load %arg6[%c0_10, %c33] : memref<8x2176xf32, #tpu.memory_space<vmem>>, vector<8x512xf32>
    %9 = arith.addf %7, %8 : vector<8x512xf32>
    %c0_11 = arith.constant 0 : index
    %c512 = arith.constant 512 : index
    %10 = vector.load %arg2[%c0_11, %c512] : memref<8x16896xf32, #tpu.memory_space<vmem>>, vector<8x512xf32>
    %11 = arith.mulf %10, %9 : vector<8x512xf32>
    %12 = arith.addf %6, %11 : vector<8x512xf32>
    %c0_12 = arith.constant 0 : index
    %c30 = arith.constant 30 : index
    %13 = vector.load %arg6[%c0_12, %c30] : memref<8x2176xf32, #tpu.memory_space<vmem>>, vector<8x512xf32>
    %c0_13 = arith.constant 0 : index
    %c34 = arith.constant 34 : index
    %14 = vector.load %arg6[%c0_13, %c34] : memref<8x2176xf32, #tpu.memory_space<vmem>>, vector<8x512xf32>
    %15 = arith.addf %13, %14 : vector<8x512xf32>
    %c0_14 = arith.constant 0 : index
    %c1024 = arith.constant 1024 : index
    %16 = vector.load %arg2[%c0_14, %c1024] : memref<8x16896xf32, #tpu.memory_space<vmem>>, vector<8x512xf32>
    %17 = arith.mulf %16, %15 : vector<8x512xf32>
    %18 = arith.addf %12, %17 : vector<8x512xf32>
    %c0_15 = arith.constant 0 : index
    %c29 = arith.constant 29 : index
    %19 = vector.load %arg6[%c0_15, %c29] : memref<8x2176xf32, #tpu.memory_space<vmem>>, vector<8x512xf32>
    %c0_16 = arith.constant 0 : index
    %c35 = arith.constant 35 : index
    %20 = vector.load %arg6[%c0_16, %c35] : memref<8x2176xf32, #tpu.memory_space<vmem>>, vector<8x512xf32>
    %21 = arith.addf %19, %20 : vector<8x512xf32>
    %c0_17 = arith.constant 0 : index
    %c1536 = arith.constant 1536 : index
    %22 = vector.load %arg2[%c0_17, %c1536] : memref<8x16896xf32, #tpu.memory_space<vmem>>, vector<8x512xf32>
    %23 = arith.mulf %22, %21 : vector<8x512xf32>
    %24 = arith.addf %18, %23 : vector<8x512xf32>
    %c0_18 = arith.constant 0 : index
    %c28 = arith.constant 28 : index
    %25 = vector.load %arg6[%c0_18, %c28] : memref<8x2176xf32, #tpu.memory_space<vmem>>, vector<8x512xf32>
    %c0_19 = arith.constant 0 : index
    %c36 = arith.constant 36 : index
    %26 = vector.load %arg6[%c0_19, %c36] : memref<8x2176xf32, #tpu.memory_space<vmem>>, vector<8x512xf32>
    %27 = arith.addf %25, %26 : vector<8x512xf32>
    %c0_20 = arith.constant 0 : index
    %c2048_21 = arith.constant 2048 : index
    %28 = vector.load %arg2[%c0_20, %c2048_21] : memref<8x16896xf32, #tpu.memory_space<vmem>>, vector<8x512xf32>
    %29 = arith.mulf %28, %27 : vector<8x512xf32>
    %30 = arith.addf %24, %29 : vector<8x512xf32>
    %c0_22 = arith.constant 0 : index
    %c27 = arith.constant 27 : index
    %31 = vector.load %arg6[%c0_22, %c27] : memref<8x2176xf32, #tpu.memory_space<vmem>>, vector<8x512xf32>
    %c0_23 = arith.constant 0 : index
    %c37 = arith.constant 37 : index
    %32 = vector.load %arg6[%c0_23, %c37] : memref<8x2176xf32, #tpu.memory_space<vmem>>, vector<8x512xf32>
    %33 = arith.addf %31, %32 : vector<8x512xf32>
    %c0_24 = arith.constant 0 : index
    %c2560 = arith.constant 2560 : index
    %34 = vector.load %arg2[%c0_24, %c2560] : memref<8x16896xf32, #tpu.memory_space<vmem>>, vector<8x512xf32>
    %35 = arith.mulf %34, %33 : vector<8x512xf32>
    %36 = arith.addf %30, %35 : vector<8x512xf32>
    %c0_25 = arith.constant 0 : index
    %c26 = arith.constant 26 : index
    %37 = vector.load %arg6[%c0_25, %c26] : memref<8x2176xf32, #tpu.memory_space<vmem>>, vector<8x512xf32>
    %c0_26 = arith.constant 0 : index
    %c38 = arith.constant 38 : index
    %38 = vector.load %arg6[%c0_26, %c38] : memref<8x2176xf32, #tpu.memory_space<vmem>>, vector<8x512xf32>
    %39 = arith.addf %37, %38 : vector<8x512xf32>
    %c0_27 = arith.constant 0 : index
    %c3072 = arith.constant 3072 : index
    %40 = vector.load %arg2[%c0_27, %c3072] : memref<8x16896xf32, #tpu.memory_space<vmem>>, vector<8x512xf32>
    %41 = arith.mulf %40, %39 : vector<8x512xf32>
    %42 = arith.addf %36, %41 : vector<8x512xf32>
    %c0_28 = arith.constant 0 : index
    %c25 = arith.constant 25 : index
    %43 = vector.load %arg6[%c0_28, %c25] : memref<8x2176xf32, #tpu.memory_space<vmem>>, vector<8x512xf32>
    %c0_29 = arith.constant 0 : index
    %c39 = arith.constant 39 : index
    %44 = vector.load %arg6[%c0_29, %c39] : memref<8x2176xf32, #tpu.memory_space<vmem>>, vector<8x512xf32>
    %45 = arith.addf %43, %44 : vector<8x512xf32>
    %c0_30 = arith.constant 0 : index
    %c3584 = arith.constant 3584 : index
    %46 = vector.load %arg2[%c0_30, %c3584] : memref<8x16896xf32, #tpu.memory_space<vmem>>, vector<8x512xf32>
    %47 = arith.mulf %46, %45 : vector<8x512xf32>
    %48 = arith.addf %42, %47 : vector<8x512xf32>
    %c0_31 = arith.constant 0 : index
    %c24 = arith.constant 24 : index
    %49 = vector.load %arg6[%c0_31, %c24] : memref<8x2176xf32, #tpu.memory_space<vmem>>, vector<8x512xf32>
    %c0_32 = arith.constant 0 : index
    %c40 = arith.constant 40 : index
    %50 = vector.load %arg6[%c0_32, %c40] : memref<8x2176xf32, #tpu.memory_space<vmem>>, vector<8x512xf32>
    %51 = arith.addf %49, %50 : vector<8x512xf32>
    %c0_33 = arith.constant 0 : index
    %c4096 = arith.constant 4096 : index
    %52 = vector.load %arg2[%c0_33, %c4096] : memref<8x16896xf32, #tpu.memory_space<vmem>>, vector<8x512xf32>
    %53 = arith.mulf %52, %51 : vector<8x512xf32>
    %54 = arith.addf %48, %53 : vector<8x512xf32>
    %c0_34 = arith.constant 0 : index
    %c23 = arith.constant 23 : index
    %55 = vector.load %arg6[%c0_34, %c23] : memref<8x2176xf32, #tpu.memory_space<vmem>>, vector<8x512xf32>
    %c0_35 = arith.constant 0 : index
    %c41 = arith.constant 41 : index
    %56 = vector.load %arg6[%c0_35, %c41] : memref<8x2176xf32, #tpu.memory_space<vmem>>, vector<8x512xf32>
    %57 = arith.addf %55, %56 : vector<8x512xf32>
    %c0_36 = arith.constant 0 : index
    %c4608 = arith.constant 4608 : index
    %58 = vector.load %arg2[%c0_36, %c4608] : memref<8x16896xf32, #tpu.memory_space<vmem>>, vector<8x512xf32>
    %59 = arith.mulf %58, %57 : vector<8x512xf32>
    %60 = arith.addf %54, %59 : vector<8x512xf32>
    %c0_37 = arith.constant 0 : index
    %c22 = arith.constant 22 : index
    %61 = vector.load %arg6[%c0_37, %c22] : memref<8x2176xf32, #tpu.memory_space<vmem>>, vector<8x512xf32>
    %c0_38 = arith.constant 0 : index
    %c42 = arith.constant 42 : index
    %62 = vector.load %arg6[%c0_38, %c42] : memref<8x2176xf32, #tpu.memory_space<vmem>>, vector<8x512xf32>
    %63 = arith.addf %61, %62 : vector<8x512xf32>
    %c0_39 = arith.constant 0 : index
    %c5120 = arith.constant 5120 : index
    %64 = vector.load %arg2[%c0_39, %c5120] : memref<8x16896xf32, #tpu.memory_space<vmem>>, vector<8x512xf32>
    %65 = arith.mulf %64, %63 : vector<8x512xf32>
    %66 = arith.addf %60, %65 : vector<8x512xf32>
    %c0_40 = arith.constant 0 : index
    %c21 = arith.constant 21 : index
    %67 = vector.load %arg6[%c0_40, %c21] : memref<8x2176xf32, #tpu.memory_space<vmem>>, vector<8x512xf32>
    %c0_41 = arith.constant 0 : index
    %c43 = arith.constant 43 : index
    %68 = vector.load %arg6[%c0_41, %c43] : memref<8x2176xf32, #tpu.memory_space<vmem>>, vector<8x512xf32>
    %69 = arith.addf %67, %68 : vector<8x512xf32>
    %c0_42 = arith.constant 0 : index
    %c5632 = arith.constant 5632 : index
    %70 = vector.load %arg2[%c0_42, %c5632] : memref<8x16896xf32, #tpu.memory_space<vmem>>, vector<8x512xf32>
    %71 = arith.mulf %70, %69 : vector<8x512xf32>
    %72 = arith.addf %66, %71 : vector<8x512xf32>
    %c0_43 = arith.constant 0 : index
    %c20 = arith.constant 20 : index
    %73 = vector.load %arg6[%c0_43, %c20] : memref<8x2176xf32, #tpu.memory_space<vmem>>, vector<8x512xf32>
    %c0_44 = arith.constant 0 : index
    %c44 = arith.constant 44 : index
    %74 = vector.load %arg6[%c0_44, %c44] : memref<8x2176xf32, #tpu.memory_space<vmem>>, vector<8x512xf32>
    %75 = arith.addf %73, %74 : vector<8x512xf32>
    %c0_45 = arith.constant 0 : index
    %c6144 = arith.constant 6144 : index
    %76 = vector.load %arg2[%c0_45, %c6144] : memref<8x16896xf32, #tpu.memory_space<vmem>>, vector<8x512xf32>
    %77 = arith.mulf %76, %75 : vector<8x512xf32>
    %78 = arith.addf %72, %77 : vector<8x512xf32>
    %c0_46 = arith.constant 0 : index
    %c19 = arith.constant 19 : index
    %79 = vector.load %arg6[%c0_46, %c19] : memref<8x2176xf32, #tpu.memory_space<vmem>>, vector<8x512xf32>
    %c0_47 = arith.constant 0 : index
    %c45 = arith.constant 45 : index
    %80 = vector.load %arg6[%c0_47, %c45] : memref<8x2176xf32, #tpu.memory_space<vmem>>, vector<8x512xf32>
    %81 = arith.addf %79, %80 : vector<8x512xf32>
    %c0_48 = arith.constant 0 : index
    %c6656 = arith.constant 6656 : index
    %82 = vector.load %arg2[%c0_48, %c6656] : memref<8x16896xf32, #tpu.memory_space<vmem>>, vector<8x512xf32>
    %83 = arith.mulf %82, %81 : vector<8x512xf32>
    %84 = arith.addf %78, %83 : vector<8x512xf32>
    %c0_49 = arith.constant 0 : index
    %c18 = arith.constant 18 : index
    %85 = vector.load %arg6[%c0_49, %c18] : memref<8x2176xf32, #tpu.memory_space<vmem>>, vector<8x512xf32>
    %c0_50 = arith.constant 0 : index
    %c46 = arith.constant 46 : index
    %86 = vector.load %arg6[%c0_50, %c46] : memref<8x2176xf32, #tpu.memory_space<vmem>>, vector<8x512xf32>
    %87 = arith.addf %85, %86 : vector<8x512xf32>
    %c0_51 = arith.constant 0 : index
    %c7168 = arith.constant 7168 : index
    %88 = vector.load %arg2[%c0_51, %c7168] : memref<8x16896xf32, #tpu.memory_space<vmem>>, vector<8x512xf32>
    %89 = arith.mulf %88, %87 : vector<8x512xf32>
    %90 = arith.addf %84, %89 : vector<8x512xf32>
    %c0_52 = arith.constant 0 : index
    %c17 = arith.constant 17 : index
    %91 = vector.load %arg6[%c0_52, %c17] : memref<8x2176xf32, #tpu.memory_space<vmem>>, vector<8x512xf32>
    %c0_53 = arith.constant 0 : index
    %c47 = arith.constant 47 : index
    %92 = vector.load %arg6[%c0_53, %c47] : memref<8x2176xf32, #tpu.memory_space<vmem>>, vector<8x512xf32>
    %93 = arith.addf %91, %92 : vector<8x512xf32>
    %c0_54 = arith.constant 0 : index
    %c7680 = arith.constant 7680 : index
    %94 = vector.load %arg2[%c0_54, %c7680] : memref<8x16896xf32, #tpu.memory_space<vmem>>, vector<8x512xf32>
    %95 = arith.mulf %94, %93 : vector<8x512xf32>
    %96 = arith.addf %90, %95 : vector<8x512xf32>
    %c0_55 = arith.constant 0 : index
    %c16 = arith.constant 16 : index
    %97 = vector.load %arg6[%c0_55, %c16] : memref<8x2176xf32, #tpu.memory_space<vmem>>, vector<8x512xf32>
    %c0_56 = arith.constant 0 : index
    %c48 = arith.constant 48 : index
    %98 = vector.load %arg6[%c0_56, %c48] : memref<8x2176xf32, #tpu.memory_space<vmem>>, vector<8x512xf32>
    %99 = arith.addf %97, %98 : vector<8x512xf32>
    %c0_57 = arith.constant 0 : index
    %c8192 = arith.constant 8192 : index
    %100 = vector.load %arg2[%c0_57, %c8192] : memref<8x16896xf32, #tpu.memory_space<vmem>>, vector<8x512xf32>
    %101 = arith.mulf %100, %99 : vector<8x512xf32>
    %102 = arith.addf %96, %101 : vector<8x512xf32>
    %c0_58 = arith.constant 0 : index
    %c15 = arith.constant 15 : index
    %103 = vector.load %arg6[%c0_58, %c15] : memref<8x2176xf32, #tpu.memory_space<vmem>>, vector<8x512xf32>
    %c0_59 = arith.constant 0 : index
    %c49 = arith.constant 49 : index
    %104 = vector.load %arg6[%c0_59, %c49] : memref<8x2176xf32, #tpu.memory_space<vmem>>, vector<8x512xf32>
    %105 = arith.addf %103, %104 : vector<8x512xf32>
    %c0_60 = arith.constant 0 : index
    %c8704 = arith.constant 8704 : index
    %106 = vector.load %arg2[%c0_60, %c8704] : memref<8x16896xf32, #tpu.memory_space<vmem>>, vector<8x512xf32>
    %107 = arith.mulf %106, %105 : vector<8x512xf32>
    %108 = arith.addf %102, %107 : vector<8x512xf32>
    %c0_61 = arith.constant 0 : index
    %c14 = arith.constant 14 : index
    %109 = vector.load %arg6[%c0_61, %c14] : memref<8x2176xf32, #tpu.memory_space<vmem>>, vector<8x512xf32>
    %c0_62 = arith.constant 0 : index
    %c50 = arith.constant 50 : index
    %110 = vector.load %arg6[%c0_62, %c50] : memref<8x2176xf32, #tpu.memory_space<vmem>>, vector<8x512xf32>
    %111 = arith.addf %109, %110 : vector<8x512xf32>
    %c0_63 = arith.constant 0 : index
    %c9216 = arith.constant 9216 : index
    %112 = vector.load %arg2[%c0_63, %c9216] : memref<8x16896xf32, #tpu.memory_space<vmem>>, vector<8x512xf32>
    %113 = arith.mulf %112, %111 : vector<8x512xf32>
    %114 = arith.addf %108, %113 : vector<8x512xf32>
    %c0_64 = arith.constant 0 : index
    %c13 = arith.constant 13 : index
    %115 = vector.load %arg6[%c0_64, %c13] : memref<8x2176xf32, #tpu.memory_space<vmem>>, vector<8x512xf32>
    %c0_65 = arith.constant 0 : index
    %c51 = arith.constant 51 : index
    %116 = vector.load %arg6[%c0_65, %c51] : memref<8x2176xf32, #tpu.memory_space<vmem>>, vector<8x512xf32>
    %117 = arith.addf %115, %116 : vector<8x512xf32>
    %c0_66 = arith.constant 0 : index
    %c9728 = arith.constant 9728 : index
    %118 = vector.load %arg2[%c0_66, %c9728] : memref<8x16896xf32, #tpu.memory_space<vmem>>, vector<8x512xf32>
    %119 = arith.mulf %118, %117 : vector<8x512xf32>
    %120 = arith.addf %114, %119 : vector<8x512xf32>
    %c0_67 = arith.constant 0 : index
    %c12 = arith.constant 12 : index
    %121 = vector.load %arg6[%c0_67, %c12] : memref<8x2176xf32, #tpu.memory_space<vmem>>, vector<8x512xf32>
    %c0_68 = arith.constant 0 : index
    %c52 = arith.constant 52 : index
    %122 = vector.load %arg6[%c0_68, %c52] : memref<8x2176xf32, #tpu.memory_space<vmem>>, vector<8x512xf32>
    %123 = arith.addf %121, %122 : vector<8x512xf32>
    %c0_69 = arith.constant 0 : index
    %c10240 = arith.constant 10240 : index
    %124 = vector.load %arg2[%c0_69, %c10240] : memref<8x16896xf32, #tpu.memory_space<vmem>>, vector<8x512xf32>
    %125 = arith.mulf %124, %123 : vector<8x512xf32>
    %126 = arith.addf %120, %125 : vector<8x512xf32>
    %c0_70 = arith.constant 0 : index
    %c11 = arith.constant 11 : index
    %127 = vector.load %arg6[%c0_70, %c11] : memref<8x2176xf32, #tpu.memory_space<vmem>>, vector<8x512xf32>
    %c0_71 = arith.constant 0 : index
    %c53 = arith.constant 53 : index
    %128 = vector.load %arg6[%c0_71, %c53] : memref<8x2176xf32, #tpu.memory_space<vmem>>, vector<8x512xf32>
    %129 = arith.addf %127, %128 : vector<8x512xf32>
    %c0_72 = arith.constant 0 : index
    %c10752 = arith.constant 10752 : index
    %130 = vector.load %arg2[%c0_72, %c10752] : memref<8x16896xf32, #tpu.memory_space<vmem>>, vector<8x512xf32>
    %131 = arith.mulf %130, %129 : vector<8x512xf32>
    %132 = arith.addf %126, %131 : vector<8x512xf32>
    %c0_73 = arith.constant 0 : index
    %c10 = arith.constant 10 : index
    %133 = vector.load %arg6[%c0_73, %c10] : memref<8x2176xf32, #tpu.memory_space<vmem>>, vector<8x512xf32>
    %c0_74 = arith.constant 0 : index
    %c54 = arith.constant 54 : index
    %134 = vector.load %arg6[%c0_74, %c54] : memref<8x2176xf32, #tpu.memory_space<vmem>>, vector<8x512xf32>
    %135 = arith.addf %133, %134 : vector<8x512xf32>
    %c0_75 = arith.constant 0 : index
    %c11264 = arith.constant 11264 : index
    %136 = vector.load %arg2[%c0_75, %c11264] : memref<8x16896xf32, #tpu.memory_space<vmem>>, vector<8x512xf32>
    %137 = arith.mulf %136, %135 : vector<8x512xf32>
    %138 = arith.addf %132, %137 : vector<8x512xf32>
    %c0_76 = arith.constant 0 : index
    %c9 = arith.constant 9 : index
    %139 = vector.load %arg6[%c0_76, %c9] : memref<8x2176xf32, #tpu.memory_space<vmem>>, vector<8x512xf32>
    %c0_77 = arith.constant 0 : index
    %c55 = arith.constant 55 : index
    %140 = vector.load %arg6[%c0_77, %c55] : memref<8x2176xf32, #tpu.memory_space<vmem>>, vector<8x512xf32>
    %141 = arith.addf %139, %140 : vector<8x512xf32>
    %c0_78 = arith.constant 0 : index
    %c11776 = arith.constant 11776 : index
    %142 = vector.load %arg2[%c0_78, %c11776] : memref<8x16896xf32, #tpu.memory_space<vmem>>, vector<8x512xf32>
    %143 = arith.mulf %142, %141 : vector<8x512xf32>
    %144 = arith.addf %138, %143 : vector<8x512xf32>
    %c0_79 = arith.constant 0 : index
    %c8 = arith.constant 8 : index
    %145 = vector.load %arg6[%c0_79, %c8] : memref<8x2176xf32, #tpu.memory_space<vmem>>, vector<8x512xf32>
    %c0_80 = arith.constant 0 : index
    %c56 = arith.constant 56 : index
    %146 = vector.load %arg6[%c0_80, %c56] : memref<8x2176xf32, #tpu.memory_space<vmem>>, vector<8x512xf32>
    %147 = arith.addf %145, %146 : vector<8x512xf32>
    %c0_81 = arith.constant 0 : index
    %c12288 = arith.constant 12288 : index
    %148 = vector.load %arg2[%c0_81, %c12288] : memref<8x16896xf32, #tpu.memory_space<vmem>>, vector<8x512xf32>
    %149 = arith.mulf %148, %147 : vector<8x512xf32>
    %150 = arith.addf %144, %149 : vector<8x512xf32>
    %c0_82 = arith.constant 0 : index
    %c7 = arith.constant 7 : index
    %151 = vector.load %arg6[%c0_82, %c7] : memref<8x2176xf32, #tpu.memory_space<vmem>>, vector<8x512xf32>
    %c0_83 = arith.constant 0 : index
    %c57 = arith.constant 57 : index
    %152 = vector.load %arg6[%c0_83, %c57] : memref<8x2176xf32, #tpu.memory_space<vmem>>, vector<8x512xf32>
    %153 = arith.addf %151, %152 : vector<8x512xf32>
    %c0_84 = arith.constant 0 : index
    %c12800 = arith.constant 12800 : index
    %154 = vector.load %arg2[%c0_84, %c12800] : memref<8x16896xf32, #tpu.memory_space<vmem>>, vector<8x512xf32>
    %155 = arith.mulf %154, %153 : vector<8x512xf32>
    %156 = arith.addf %150, %155 : vector<8x512xf32>
    %c0_85 = arith.constant 0 : index
    %c6 = arith.constant 6 : index
    %157 = vector.load %arg6[%c0_85, %c6] : memref<8x2176xf32, #tpu.memory_space<vmem>>, vector<8x512xf32>
    %c0_86 = arith.constant 0 : index
    %c58 = arith.constant 58 : index
    %158 = vector.load %arg6[%c0_86, %c58] : memref<8x2176xf32, #tpu.memory_space<vmem>>, vector<8x512xf32>
    %159 = arith.addf %157, %158 : vector<8x512xf32>
    %c0_87 = arith.constant 0 : index
    %c13312 = arith.constant 13312 : index
    %160 = vector.load %arg2[%c0_87, %c13312] : memref<8x16896xf32, #tpu.memory_space<vmem>>, vector<8x512xf32>
    %161 = arith.mulf %160, %159 : vector<8x512xf32>
    %162 = arith.addf %156, %161 : vector<8x512xf32>
    %c0_88 = arith.constant 0 : index
    %c5 = arith.constant 5 : index
    %163 = vector.load %arg6[%c0_88, %c5] : memref<8x2176xf32, #tpu.memory_space<vmem>>, vector<8x512xf32>
    %c0_89 = arith.constant 0 : index
    %c59 = arith.constant 59 : index
    %164 = vector.load %arg6[%c0_89, %c59] : memref<8x2176xf32, #tpu.memory_space<vmem>>, vector<8x512xf32>
    %165 = arith.addf %163, %164 : vector<8x512xf32>
    %c0_90 = arith.constant 0 : index
    %c13824 = arith.constant 13824 : index
    %166 = vector.load %arg2[%c0_90, %c13824] : memref<8x16896xf32, #tpu.memory_space<vmem>>, vector<8x512xf32>
    %167 = arith.mulf %166, %165 : vector<8x512xf32>
    %168 = arith.addf %162, %167 : vector<8x512xf32>
    %c0_91 = arith.constant 0 : index
    %c4 = arith.constant 4 : index
    %169 = vector.load %arg6[%c0_91, %c4] : memref<8x2176xf32, #tpu.memory_space<vmem>>, vector<8x512xf32>
    %c0_92 = arith.constant 0 : index
    %c60 = arith.constant 60 : index
    %170 = vector.load %arg6[%c0_92, %c60] : memref<8x2176xf32, #tpu.memory_space<vmem>>, vector<8x512xf32>
    %171 = arith.addf %169, %170 : vector<8x512xf32>
    %c0_93 = arith.constant 0 : index
    %c14336 = arith.constant 14336 : index
    %172 = vector.load %arg2[%c0_93, %c14336] : memref<8x16896xf32, #tpu.memory_space<vmem>>, vector<8x512xf32>
    %173 = arith.mulf %172, %171 : vector<8x512xf32>
    %174 = arith.addf %168, %173 : vector<8x512xf32>
    %c0_94 = arith.constant 0 : index
    %c3 = arith.constant 3 : index
    %175 = vector.load %arg6[%c0_94, %c3] : memref<8x2176xf32, #tpu.memory_space<vmem>>, vector<8x512xf32>
    %c0_95 = arith.constant 0 : index
    %c61 = arith.constant 61 : index
    %176 = vector.load %arg6[%c0_95, %c61] : memref<8x2176xf32, #tpu.memory_space<vmem>>, vector<8x512xf32>
    %177 = arith.addf %175, %176 : vector<8x512xf32>
    %c0_96 = arith.constant 0 : index
    %c14848 = arith.constant 14848 : index
    %178 = vector.load %arg2[%c0_96, %c14848] : memref<8x16896xf32, #tpu.memory_space<vmem>>, vector<8x512xf32>
    %179 = arith.mulf %178, %177 : vector<8x512xf32>
    %180 = arith.addf %174, %179 : vector<8x512xf32>
    %c0_97 = arith.constant 0 : index
    %c2 = arith.constant 2 : index
    %181 = vector.load %arg6[%c0_97, %c2] : memref<8x2176xf32, #tpu.memory_space<vmem>>, vector<8x512xf32>
    %c0_98 = arith.constant 0 : index
    %c62 = arith.constant 62 : index
    %182 = vector.load %arg6[%c0_98, %c62] : memref<8x2176xf32, #tpu.memory_space<vmem>>, vector<8x512xf32>
    %183 = arith.addf %181, %182 : vector<8x512xf32>
    %c0_99 = arith.constant 0 : index
    %c15360 = arith.constant 15360 : index
    %184 = vector.load %arg2[%c0_99, %c15360] : memref<8x16896xf32, #tpu.memory_space<vmem>>, vector<8x512xf32>
    %185 = arith.mulf %184, %183 : vector<8x512xf32>
    %186 = arith.addf %180, %185 : vector<8x512xf32>
    %c0_100 = arith.constant 0 : index
    %c1 = arith.constant 1 : index
    %187 = vector.load %arg6[%c0_100, %c1] : memref<8x2176xf32, #tpu.memory_space<vmem>>, vector<8x512xf32>
    %c0_101 = arith.constant 0 : index
    %c63 = arith.constant 63 : index
    %188 = vector.load %arg6[%c0_101, %c63] : memref<8x2176xf32, #tpu.memory_space<vmem>>, vector<8x512xf32>
    %189 = arith.addf %187, %188 : vector<8x512xf32>
    %c0_102 = arith.constant 0 : index
    %c15872 = arith.constant 15872 : index
    %190 = vector.load %arg2[%c0_102, %c15872] : memref<8x16896xf32, #tpu.memory_space<vmem>>, vector<8x512xf32>
    %191 = arith.mulf %190, %189 : vector<8x512xf32>
    %192 = arith.addf %186, %191 : vector<8x512xf32>
    %c0_103 = arith.constant 0 : index
    %c0_104 = arith.constant 0 : index
    %193 = vector.load %arg6[%c0_103, %c0_104] : memref<8x2176xf32, #tpu.memory_space<vmem>>, vector<8x512xf32>
    %c0_105 = arith.constant 0 : index
    %c64 = arith.constant 64 : index
    %194 = vector.load %arg6[%c0_105, %c64] : memref<8x2176xf32, #tpu.memory_space<vmem>>, vector<8x512xf32>
    %195 = arith.addf %193, %194 : vector<8x512xf32>
    %c0_106 = arith.constant 0 : index
    %c16384 = arith.constant 16384 : index
    %196 = vector.load %arg2[%c0_106, %c16384] : memref<8x16896xf32, #tpu.memory_space<vmem>>, vector<8x512xf32>
    %197 = arith.mulf %196, %195 : vector<8x512xf32>
    %198 = arith.addf %192, %197 : vector<8x512xf32>
    %c0_107 = arith.constant 0 : index
    %c0_108 = arith.constant 0 : index
    %199 = vector.load %arg5[%c0_107, %c0_108] : memref<8x2048xf32, #tpu.memory_space<vmem>>, vector<8x512xf32>
    tpu.vector_store %arg5[%c0_107, %c0_108], %198 {strides = array<i32>} : memref<8x2048xf32, #tpu.memory_space<vmem>>, vector<8x512xf32>,
    %c0_109 = arith.constant 0 : index
    %c0_110 = arith.constant 0 : index
    %200 = vector.load %arg2[%c0_109, %c0_110] : memref<8x16896xf32, #tpu.memory_space<vmem>>, vector<8x512xf32>
    %c0_111 = arith.constant 0 : index
    %c544 = arith.constant 544 : index
    %201 = vector.load %arg6[%c0_111, %c544] : memref<8x2176xf32, #tpu.memory_space<vmem>>, vector<8x512xf32>
    %202 = arith.mulf %200, %201 : vector<8x512xf32>
    %c0_112 = arith.constant 0 : index
    %c543 = arith.constant 543 : index
    %203 = vector.load %arg6[%c0_112, %c543] : memref<8x2176xf32, #tpu.memory_space<vmem>>, vector<8x512xf32>
    %c0_113 = arith.constant 0 : index
    %c545 = arith.constant 545 : index
    %204 = vector.load %arg6[%c0_113, %c545] : memref<8x2176xf32, #tpu.memory_space<vmem>>, vector<8x512xf32>
    %205 = arith.addf %203, %204 : vector<8x512xf32>
    %c0_114 = arith.constant 0 : index
    %c512_115 = arith.constant 512 : index
    %206 = vector.load %arg2[%c0_114, %c512_115] : memref<8x16896xf32, #tpu.memory_space<vmem>>, vector<8x512xf32>
    %207 = arith.mulf %206, %205 : vector<8x512xf32>
    %208 = arith.addf %202, %207 : vector<8x512xf32>
    %c0_116 = arith.constant 0 : index
    %c542 = arith.constant 542 : index
    %209 = vector.load %arg6[%c0_116, %c542] : memref<8x2176xf32, #tpu.memory_space<vmem>>, vector<8x512xf32>
    %c0_117 = arith.constant 0 : index
    %c546 = arith.constant 546 : index
    %210 = vector.load %arg6[%c0_117, %c546] : memref<8x2176xf32, #tpu.memory_space<vmem>>, vector<8x512xf32>
    %211 = arith.addf %209, %210 : vector<8x512xf32>
    %c0_118 = arith.constant 0 : index
    %c1024_119 = arith.constant 1024 : index
    %212 = vector.load %arg2[%c0_118, %c1024_119] : memref<8x16896xf32, #tpu.memory_space<vmem>>, vector<8x512xf32>
    %213 = arith.mulf %212, %211 : vector<8x512xf32>
    %214 = arith.addf %208, %213 : vector<8x512xf32>
    %c0_120 = arith.constant 0 : index
    %c541 = arith.constant 541 : index
    %215 = vector.load %arg6[%c0_120, %c541] : memref<8x2176xf32, #tpu.memory_space<vmem>>, vector<8x512xf32>
    %c0_121 = arith.constant 0 : index
    %c547 = arith.constant 547 : index
    %216 = vector.load %arg6[%c0_121, %c547] : memref<8x2176xf32, #tpu.memory_space<vmem>>, vector<8x512xf32>
    %217 = arith.addf %215, %216 : vector<8x512xf32>
    %c0_122 = arith.constant 0 : index
    %c1536_123 = arith.constant 1536 : index
    %218 = vector.load %arg2[%c0_122, %c1536_123] : memref<8x16896xf32, #tpu.memory_space<vmem>>, vector<8x512xf32>
    %219 = arith.mulf %218, %217 : vector<8x512xf32>
    %220 = arith.addf %214, %219 : vector<8x512xf32>
    %c0_124 = arith.constant 0 : index
    %c540 = arith.constant 540 : index
    %221 = vector.load %arg6[%c0_124, %c540] : memref<8x2176xf32, #tpu.memory_space<vmem>>, vector<8x512xf32>
    %c0_125 = arith.constant 0 : index
    %c548 = arith.constant 548 : index
    %222 = vector.load %arg6[%c0_125, %c548] : memref<8x2176xf32, #tpu.memory_space<vmem>>, vector<8x512xf32>
    %223 = arith.addf %221, %222 : vector<8x512xf32>
    %c0_126 = arith.constant 0 : index
    %c2048_127 = arith.constant 2048 : index
    %224 = vector.load %arg2[%c0_126, %c2048_127] : memref<8x16896xf32, #tpu.memory_space<vmem>>, vector<8x512xf32>
    %225 = arith.mulf %224, %223 : vector<8x512xf32>
    %226 = arith.addf %220, %225 : vector<8x512xf32>
    %c0_128 = arith.constant 0 : index
    %c539 = arith.constant 539 : index
    %227 = vector.load %arg6[%c0_128, %c539] : memref<8x2176xf32, #tpu.memory_space<vmem>>, vector<8x512xf32>
    %c0_129 = arith.constant 0 : index
    %c549 = arith.constant 549 : index
    %228 = vector.load %arg6[%c0_129, %c549] : memref<8x2176xf32, #tpu.memory_space<vmem>>, vector<8x512xf32>
    %229 = arith.addf %227, %228 : vector<8x512xf32>
    %c0_130 = arith.constant 0 : index
    %c2560_131 = arith.constant 2560 : index
    %230 = vector.load %arg2[%c0_130, %c2560_131] : memref<8x16896xf32, #tpu.memory_space<vmem>>, vector<8x512xf32>
    %231 = arith.mulf %230, %229 : vector<8x512xf32>
    %232 = arith.addf %226, %231 : vector<8x512xf32>
    %c0_132 = arith.constant 0 : index
    %c538 = arith.constant 538 : index
    %233 = vector.load %arg6[%c0_132, %c538] : memref<8x2176xf32, #tpu.memory_space<vmem>>, vector<8x512xf32>
    %c0_133 = arith.constant 0 : index
    %c550 = arith.constant 550 : index
    %234 = vector.load %arg6[%c0_133, %c550] : memref<8x2176xf32, #tpu.memory_space<vmem>>, vector<8x512xf32>
    %235 = arith.addf %233, %234 : vector<8x512xf32>
    %c0_134 = arith.constant 0 : index
    %c3072_135 = arith.constant 3072 : index
    %236 = vector.load %arg2[%c0_134, %c3072_135] : memref<8x16896xf32, #tpu.memory_space<vmem>>, vector<8x512xf32>
    %237 = arith.mulf %236, %235 : vector<8x512xf32>
    %238 = arith.addf %232, %237 : vector<8x512xf32>
    %c0_136 = arith.constant 0 : index
    %c537 = arith.constant 537 : index
    %239 = vector.load %arg6[%c0_136, %c537] : memref<8x2176xf32, #tpu.memory_space<vmem>>, vector<8x512xf32>
    %c0_137 = arith.constant 0 : index
    %c551 = arith.constant 551 : index
    %240 = vector.load %arg6[%c0_137, %c551] : memref<8x2176xf32, #tpu.memory_space<vmem>>, vector<8x512xf32>
    %241 = arith.addf %239, %240 : vector<8x512xf32>
    %c0_138 = arith.constant 0 : index
    %c3584_139 = arith.constant 3584 : index
    %242 = vector.load %arg2[%c0_138, %c3584_139] : memref<8x16896xf32, #tpu.memory_space<vmem>>, vector<8x512xf32>
    %243 = arith.mulf %242, %241 : vector<8x512xf32>
    %244 = arith.addf %238, %243 : vector<8x512xf32>
    %c0_140 = arith.constant 0 : index
    %c536 = arith.constant 536 : index
    %245 = vector.load %arg6[%c0_140, %c536] : memref<8x2176xf32, #tpu.memory_space<vmem>>, vector<8x512xf32>
    %c0_141 = arith.constant 0 : index
    %c552 = arith.constant 552 : index
    %246 = vector.load %arg6[%c0_141, %c552] : memref<8x2176xf32, #tpu.memory_space<vmem>>, vector<8x512xf32>
    %247 = arith.addf %245, %246 : vector<8x512xf32>
    %c0_142 = arith.constant 0 : index
    %c4096_143 = arith.constant 4096 : index
    %248 = vector.load %arg2[%c0_142, %c4096_143] : memref<8x16896xf32, #tpu.memory_space<vmem>>, vector<8x512xf32>
    %249 = arith.mulf %248, %247 : vector<8x512xf32>
    %250 = arith.addf %244, %249 : vector<8x512xf32>
    %c0_144 = arith.constant 0 : index
    %c535 = arith.constant 535 : index
    %251 = vector.load %arg6[%c0_144, %c535] : memref<8x2176xf32, #tpu.memory_space<vmem>>, vector<8x512xf32>
    %c0_145 = arith.constant 0 : index
    %c553 = arith.constant 553 : index
    %252 = vector.load %arg6[%c0_145, %c553] : memref<8x2176xf32, #tpu.memory_space<vmem>>, vector<8x512xf32>
    %253 = arith.addf %251, %252 : vector<8x512xf32>
    %c0_146 = arith.constant 0 : index
    %c4608_147 = arith.constant 4608 : index
    %254 = vector.load %arg2[%c0_146, %c4608_147] : memref<8x16896xf32, #tpu.memory_space<vmem>>, vector<8x512xf32>
    %255 = arith.mulf %254, %253 : vector<8x512xf32>
    %256 = arith.addf %250, %255 : vector<8x512xf32>
    %c0_148 = arith.constant 0 : index
    %c534 = arith.constant 534 : index
    %257 = vector.load %arg6[%c0_148, %c534] : memref<8x2176xf32, #tpu.memory_space<vmem>>, vector<8x512xf32>
    %c0_149 = arith.constant 0 : index
    %c554 = arith.constant 554 : index
    %258 = vector.load %arg6[%c0_149, %c554] : memref<8x2176xf32, #tpu.memory_space<vmem>>, vector<8x512xf32>
    %259 = arith.addf %257, %258 : vector<8x512xf32>
    %c0_150 = arith.constant 0 : index
    %c5120_151 = arith.constant 5120 : index
    %260 = vector.load %arg2[%c0_150, %c5120_151] : memref<8x16896xf32, #tpu.memory_space<vmem>>, vector<8x512xf32>
    %261 = arith.mulf %260, %259 : vector<8x512xf32>
    %262 = arith.addf %256, %261 : vector<8x512xf32>
    %c0_152 = arith.constant 0 : index
    %c533 = arith.constant 533 : index
    %263 = vector.load %arg6[%c0_152, %c533] : memref<8x2176xf32, #tpu.memory_space<vmem>>, vector<8x512xf32>
    %c0_153 = arith.constant 0 : index
    %c555 = arith.constant 555 : index
    %264 = vector.load %arg6[%c0_153, %c555] : memref<8x2176xf32, #tpu.memory_space<vmem>>, vector<8x512xf32>
    %265 = arith.addf %263, %264 : vector<8x512xf32>
    %c0_154 = arith.constant 0 : index
    %c5632_155 = arith.constant 5632 : index
    %266 = vector.load %arg2[%c0_154, %c5632_155] : memref<8x16896xf32, #tpu.memory_space<vmem>>, vector<8x512xf32>
    %267 = arith.mulf %266, %265 : vector<8x512xf32>
    %268 = arith.addf %262, %267 : vector<8x512xf32>
    %c0_156 = arith.constant 0 : index
    %c532 = arith.constant 532 : index
    %269 = vector.load %arg6[%c0_156, %c532] : memref<8x2176xf32, #tpu.memory_space<vmem>>, vector<8x512xf32>
    %c0_157 = arith.constant 0 : index
    %c556 = arith.constant 556 : index
    %270 = vector.load %arg6[%c0_157, %c556] : memref<8x2176xf32, #tpu.memory_space<vmem>>, vector<8x512xf32>
    %271 = arith.addf %269, %270 : vector<8x512xf32>
    %c0_158 = arith.constant 0 : index
    %c6144_159 = arith.constant 6144 : index
    %272 = vector.load %arg2[%c0_158, %c6144_159] : memref<8x16896xf32, #tpu.memory_space<vmem>>, vector<8x512xf32>
    %273 = arith.mulf %272, %271 : vector<8x512xf32>
    %274 = arith.addf %268, %273 : vector<8x512xf32>
    %c0_160 = arith.constant 0 : index
    %c531 = arith.constant 531 : index
    %275 = vector.load %arg6[%c0_160, %c531] : memref<8x2176xf32, #tpu.memory_space<vmem>>, vector<8x512xf32>
    %c0_161 = arith.constant 0 : index
    %c557 = arith.constant 557 : index
    %276 = vector.load %arg6[%c0_161, %c557] : memref<8x2176xf32, #tpu.memory_space<vmem>>, vector<8x512xf32>
    %277 = arith.addf %275, %276 : vector<8x512xf32>
    %c0_162 = arith.constant 0 : index
    %c6656_163 = arith.constant 6656 : index
    %278 = vector.load %arg2[%c0_162, %c6656_163] : memref<8x16896xf32, #tpu.memory_space<vmem>>, vector<8x512xf32>
    %279 = arith.mulf %278, %277 : vector<8x512xf32>
    %280 = arith.addf %274, %279 : vector<8x512xf32>
    %c0_164 = arith.constant 0 : index
    %c530 = arith.constant 530 : index
    %281 = vector.load %arg6[%c0_164, %c530] : memref<8x2176xf32, #tpu.memory_space<vmem>>, vector<8x512xf32>
    %c0_165 = arith.constant 0 : index
    %c558 = arith.constant 558 : index
    %282 = vector.load %arg6[%c0_165, %c558] : memref<8x2176xf32, #tpu.memory_space<vmem>>, vector<8x512xf32>
    %283 = arith.addf %281, %282 : vector<8x512xf32>
    %c0_166 = arith.constant 0 : index
    %c7168_167 = arith.constant 7168 : index
    %284 = vector.load %arg2[%c0_166, %c7168_167] : memref<8x16896xf32, #tpu.memory_space<vmem>>, vector<8x512xf32>
    %285 = arith.mulf %284, %283 : vector<8x512xf32>
    %286 = arith.addf %280, %285 : vector<8x512xf32>
    %c0_168 = arith.constant 0 : index
    %c529 = arith.constant 529 : index
    %287 = vector.load %arg6[%c0_168, %c529] : memref<8x2176xf32, #tpu.memory_space<vmem>>, vector<8x512xf32>
    %c0_169 = arith.constant 0 : index
    %c559 = arith.constant 559 : index
    %288 = vector.load %arg6[%c0_169, %c559] : memref<8x2176xf32, #tpu.memory_space<vmem>>, vector<8x512xf32>
    %289 = arith.addf %287, %288 : vector<8x512xf32>
    %c0_170 = arith.constant 0 : index
    %c7680_171 = arith.constant 7680 : index
    %290 = vector.load %arg2[%c0_170, %c7680_171] : memref<8x16896xf32, #tpu.memory_space<vmem>>, vector<8x512xf32>
    %291 = arith.mulf %290, %289 : vector<8x512xf32>
    %292 = arith.addf %286, %291 : vector<8x512xf32>
    %c0_172 = arith.constant 0 : index
    %c528 = arith.constant 528 : index
    %293 = vector.load %arg6[%c0_172, %c528] : memref<8x2176xf32, #tpu.memory_space<vmem>>, vector<8x512xf32>
    %c0_173 = arith.constant 0 : index
    %c560 = arith.constant 560 : index
    %294 = vector.load %arg6[%c0_173, %c560] : memref<8x2176xf32, #tpu.memory_space<vmem>>, vector<8x512xf32>
    %295 = arith.addf %293, %294 : vector<8x512xf32>
    %c0_174 = arith.constant 0 : index
    %c8192_175 = arith.constant 8192 : index
    %296 = vector.load %arg2[%c0_174, %c8192_175] : memref<8x16896xf32, #tpu.memory_space<vmem>>, vector<8x512xf32>
    %297 = arith.mulf %296, %295 : vector<8x512xf32>
    %298 = arith.addf %292, %297 : vector<8x512xf32>
    %c0_176 = arith.constant 0 : index
    %c527 = arith.constant 527 : index
    %299 = vector.load %arg6[%c0_176, %c527] : memref<8x2176xf32, #tpu.memory_space<vmem>>, vector<8x512xf32>
    %c0_177 = arith.constant 0 : index
    %c561 = arith.constant 561 : index
    %300 = vector.load %arg6[%c0_177, %c561] : memref<8x2176xf32, #tpu.memory_space<vmem>>, vector<8x512xf32>
    %301 = arith.addf %299, %300 : vector<8x512xf32>
    %c0_178 = arith.constant 0 : index
    %c8704_179 = arith.constant 8704 : index
    %302 = vector.load %arg2[%c0_178, %c8704_179] : memref<8x16896xf32, #tpu.memory_space<vmem>>, vector<8x512xf32>
    %303 = arith.mulf %302, %301 : vector<8x512xf32>
    %304 = arith.addf %298, %303 : vector<8x512xf32>
    %c0_180 = arith.constant 0 : index
    %c526 = arith.constant 526 : index
    %305 = vector.load %arg6[%c0_180, %c526] : memref<8x2176xf32, #tpu.memory_space<vmem>>, vector<8x512xf32>
    %c0_181 = arith.constant 0 : index
    %c562 = arith.constant 562 : index
    %306 = vector.load %arg6[%c0_181, %c562] : memref<8x2176xf32, #tpu.memory_space<vmem>>, vector<8x512xf32>
    %307 = arith.addf %305, %306 : vector<8x512xf32>
    %c0_182 = arith.constant 0 : index
    %c9216_183 = arith.constant 9216 : index
    %308 = vector.load %arg2[%c0_182, %c9216_183] : memref<8x16896xf32, #tpu.memory_space<vmem>>, vector<8x512xf32>
    %309 = arith.mulf %308, %307 : vector<8x512xf32>
    %310 = arith.addf %304, %309 : vector<8x512xf32>
    %c0_184 = arith.constant 0 : index
    %c525 = arith.constant 525 : index
    %311 = vector.load %arg6[%c0_184, %c525] : memref<8x2176xf32, #tpu.memory_space<vmem>>, vector<8x512xf32>
    %c0_185 = arith.constant 0 : index
    %c563 = arith.constant 563 : index
    %312 = vector.load %arg6[%c0_185, %c563] : memref<8x2176xf32, #tpu.memory_space<vmem>>, vector<8x512xf32>
    %313 = arith.addf %311, %312 : vector<8x512xf32>
    %c0_186 = arith.constant 0 : index
    %c9728_187 = arith.constant 9728 : index
    %314 = vector.load %arg2[%c0_186, %c9728_187] : memref<8x16896xf32, #tpu.memory_space<vmem>>, vector<8x512xf32>
    %315 = arith.mulf %314, %313 : vector<8x512xf32>
    %316 = arith.addf %310, %315 : vector<8x512xf32>
    %c0_188 = arith.constant 0 : index
    %c524 = arith.constant 524 : index
    %317 = vector.load %arg6[%c0_188, %c524] : memref<8x2176xf32, #tpu.memory_space<vmem>>, vector<8x512xf32>
    %c0_189 = arith.constant 0 : index
    %c564 = arith.constant 564 : index
    %318 = vector.load %arg6[%c0_189, %c564] : memref<8x2176xf32, #tpu.memory_space<vmem>>, vector<8x512xf32>
    %319 = arith.addf %317, %318 : vector<8x512xf32>
    %c0_190 = arith.constant 0 : index
    %c10240_191 = arith.constant 10240 : index
    %320 = vector.load %arg2[%c0_190, %c10240_191] : memref<8x16896xf32, #tpu.memory_space<vmem>>, vector<8x512xf32>
    %321 = arith.mulf %320, %319 : vector<8x512xf32>
    %322 = arith.addf %316, %321 : vector<8x512xf32>
    %c0_192 = arith.constant 0 : index
    %c523 = arith.constant 523 : index
    %323 = vector.load %arg6[%c0_192, %c523] : memref<8x2176xf32, #tpu.memory_space<vmem>>, vector<8x512xf32>
    %c0_193 = arith.constant 0 : index
    %c565 = arith.constant 565 : index
    %324 = vector.load %arg6[%c0_193, %c565] : memref<8x2176xf32, #tpu.memory_space<vmem>>, vector<8x512xf32>
    %325 = arith.addf %323, %324 : vector<8x512xf32>
    %c0_194 = arith.constant 0 : index
    %c10752_195 = arith.constant 10752 : index
    %326 = vector.load %arg2[%c0_194, %c10752_195] : memref<8x16896xf32, #tpu.memory_space<vmem>>, vector<8x512xf32>
    %327 = arith.mulf %326, %325 : vector<8x512xf32>
    %328 = arith.addf %322, %327 : vector<8x512xf32>
    %c0_196 = arith.constant 0 : index
    %c522 = arith.constant 522 : index
    %329 = vector.load %arg6[%c0_196, %c522] : memref<8x2176xf32, #tpu.memory_space<vmem>>, vector<8x512xf32>
    %c0_197 = arith.constant 0 : index
    %c566 = arith.constant 566 : index
    %330 = vector.load %arg6[%c0_197, %c566] : memref<8x2176xf32, #tpu.memory_space<vmem>>, vector<8x512xf32>
    %331 = arith.addf %329, %330 : vector<8x512xf32>
    %c0_198 = arith.constant 0 : index
    %c11264_199 = arith.constant 11264 : index
    %332 = vector.load %arg2[%c0_198, %c11264_199] : memref<8x16896xf32, #tpu.memory_space<vmem>>, vector<8x512xf32>
    %333 = arith.mulf %332, %331 : vector<8x512xf32>
    %334 = arith.addf %328, %333 : vector<8x512xf32>
    %c0_200 = arith.constant 0 : index
    %c521 = arith.constant 521 : index
    %335 = vector.load %arg6[%c0_200, %c521] : memref<8x2176xf32, #tpu.memory_space<vmem>>, vector<8x512xf32>
    %c0_201 = arith.constant 0 : index
    %c567 = arith.constant 567 : index
    %336 = vector.load %arg6[%c0_201, %c567] : memref<8x2176xf32, #tpu.memory_space<vmem>>, vector<8x512xf32>
    %337 = arith.addf %335, %336 : vector<8x512xf32>
    %c0_202 = arith.constant 0 : index
    %c11776_203 = arith.constant 11776 : index
    %338 = vector.load %arg2[%c0_202, %c11776_203] : memref<8x16896xf32, #tpu.memory_space<vmem>>, vector<8x512xf32>
    %339 = arith.mulf %338, %337 : vector<8x512xf32>
    %340 = arith.addf %334, %339 : vector<8x512xf32>
    %c0_204 = arith.constant 0 : index
    %c520 = arith.constant 520 : index
    %341 = vector.load %arg6[%c0_204, %c520] : memref<8x2176xf32, #tpu.memory_space<vmem>>, vector<8x512xf32>
    %c0_205 = arith.constant 0 : index
    %c568 = arith.constant 568 : index
    %342 = vector.load %arg6[%c0_205, %c568] : memref<8x2176xf32, #tpu.memory_space<vmem>>, vector<8x512xf32>
    %343 = arith.addf %341, %342 : vector<8x512xf32>
    %c0_206 = arith.constant 0 : index
    %c12288_207 = arith.constant 12288 : index
    %344 = vector.load %arg2[%c0_206, %c12288_207] : memref<8x16896xf32, #tpu.memory_space<vmem>>, vector<8x512xf32>
    %345 = arith.mulf %344, %343 : vector<8x512xf32>
    %346 = arith.addf %340, %345 : vector<8x512xf32>
    %c0_208 = arith.constant 0 : index
    %c519 = arith.constant 519 : index
    %347 = vector.load %arg6[%c0_208, %c519] : memref<8x2176xf32, #tpu.memory_space<vmem>>, vector<8x512xf32>
    %c0_209 = arith.constant 0 : index
    %c569 = arith.constant 569 : index
    %348 = vector.load %arg6[%c0_209, %c569] : memref<8x2176xf32, #tpu.memory_space<vmem>>, vector<8x512xf32>
    %349 = arith.addf %347, %348 : vector<8x512xf32>
    %c0_210 = arith.constant 0 : index
    %c12800_211 = arith.constant 12800 : index
    %350 = vector.load %arg2[%c0_210, %c12800_211] : memref<8x16896xf32, #tpu.memory_space<vmem>>, vector<8x512xf32>
    %351 = arith.mulf %350, %349 : vector<8x512xf32>
    %352 = arith.addf %346, %351 : vector<8x512xf32>
    %c0_212 = arith.constant 0 : index
    %c518 = arith.constant 518 : index
    %353 = vector.load %arg6[%c0_212, %c518] : memref<8x2176xf32, #tpu.memory_space<vmem>>, vector<8x512xf32>
    %c0_213 = arith.constant 0 : index
    %c570 = arith.constant 570 : index
    %354 = vector.load %arg6[%c0_213, %c570] : memref<8x2176xf32, #tpu.memory_space<vmem>>, vector<8x512xf32>
    %355 = arith.addf %353, %354 : vector<8x512xf32>
    %c0_214 = arith.constant 0 : index
    %c13312_215 = arith.constant 13312 : index
    %356 = vector.load %arg2[%c0_214, %c13312_215] : memref<8x16896xf32, #tpu.memory_space<vmem>>, vector<8x512xf32>
    %357 = arith.mulf %356, %355 : vector<8x512xf32>
    %358 = arith.addf %352, %357 : vector<8x512xf32>
    %c0_216 = arith.constant 0 : index
    %c517 = arith.constant 517 : index
    %359 = vector.load %arg6[%c0_216, %c517] : memref<8x2176xf32, #tpu.memory_space<vmem>>, vector<8x512xf32>
    %c0_217 = arith.constant 0 : index
    %c571 = arith.constant 571 : index
    %360 = vector.load %arg6[%c0_217, %c571] : memref<8x2176xf32, #tpu.memory_space<vmem>>, vector<8x512xf32>
    %361 = arith.addf %359, %360 : vector<8x512xf32>
    %c0_218 = arith.constant 0 : index
    %c13824_219 = arith.constant 13824 : index
    %362 = vector.load %arg2[%c0_218, %c13824_219] : memref<8x16896xf32, #tpu.memory_space<vmem>>, vector<8x512xf32>
    %363 = arith.mulf %362, %361 : vector<8x512xf32>
    %364 = arith.addf %358, %363 : vector<8x512xf32>
    %c0_220 = arith.constant 0 : index
    %c516 = arith.constant 516 : index
    %365 = vector.load %arg6[%c0_220, %c516] : memref<8x2176xf32, #tpu.memory_space<vmem>>, vector<8x512xf32>
    %c0_221 = arith.constant 0 : index
    %c572 = arith.constant 572 : index
    %366 = vector.load %arg6[%c0_221, %c572] : memref<8x2176xf32, #tpu.memory_space<vmem>>, vector<8x512xf32>
    %367 = arith.addf %365, %366 : vector<8x512xf32>
    %c0_222 = arith.constant 0 : index
    %c14336_223 = arith.constant 14336 : index
    %368 = vector.load %arg2[%c0_222, %c14336_223] : memref<8x16896xf32, #tpu.memory_space<vmem>>, vector<8x512xf32>
    %369 = arith.mulf %368, %367 : vector<8x512xf32>
    %370 = arith.addf %364, %369 : vector<8x512xf32>
    %c0_224 = arith.constant 0 : index
    %c515 = arith.constant 515 : index
    %371 = vector.load %arg6[%c0_224, %c515] : memref<8x2176xf32, #tpu.memory_space<vmem>>, vector<8x512xf32>
    %c0_225 = arith.constant 0 : index
    %c573 = arith.constant 573 : index
    %372 = vector.load %arg6[%c0_225, %c573] : memref<8x2176xf32, #tpu.memory_space<vmem>>, vector<8x512xf32>
    %373 = arith.addf %371, %372 : vector<8x512xf32>
    %c0_226 = arith.constant 0 : index
    %c14848_227 = arith.constant 14848 : index
    %374 = vector.load %arg2[%c0_226, %c14848_227] : memref<8x16896xf32, #tpu.memory_space<vmem>>, vector<8x512xf32>
    %375 = arith.mulf %374, %373 : vector<8x512xf32>
    %376 = arith.addf %370, %375 : vector<8x512xf32>
    %c0_228 = arith.constant 0 : index
    %c514 = arith.constant 514 : index
    %377 = vector.load %arg6[%c0_228, %c514] : memref<8x2176xf32, #tpu.memory_space<vmem>>, vector<8x512xf32>
    %c0_229 = arith.constant 0 : index
    %c574 = arith.constant 574 : index
    %378 = vector.load %arg6[%c0_229, %c574] : memref<8x2176xf32, #tpu.memory_space<vmem>>, vector<8x512xf32>
    %379 = arith.addf %377, %378 : vector<8x512xf32>
    %c0_230 = arith.constant 0 : index
    %c15360_231 = arith.constant 15360 : index
    %380 = vector.load %arg2[%c0_230, %c15360_231] : memref<8x16896xf32, #tpu.memory_space<vmem>>, vector<8x512xf32>
    %381 = arith.mulf %380, %379 : vector<8x512xf32>
    %382 = arith.addf %376, %381 : vector<8x512xf32>
    %c0_232 = arith.constant 0 : index
    %c513 = arith.constant 513 : index
    %383 = vector.load %arg6[%c0_232, %c513] : memref<8x2176xf32, #tpu.memory_space<vmem>>, vector<8x512xf32>
    %c0_233 = arith.constant 0 : index
    %c575 = arith.constant 575 : index
    %384 = vector.load %arg6[%c0_233, %c575] : memref<8x2176xf32, #tpu.memory_space<vmem>>, vector<8x512xf32>
    %385 = arith.addf %383, %384 : vector<8x512xf32>
    %c0_234 = arith.constant 0 : index
    %c15872_235 = arith.constant 15872 : index
    %386 = vector.load %arg2[%c0_234, %c15872_235] : memref<8x16896xf32, #tpu.memory_space<vmem>>, vector<8x512xf32>
    %387 = arith.mulf %386, %385 : vector<8x512xf32>
    %388 = arith.addf %382, %387 : vector<8x512xf32>
    %c0_236 = arith.constant 0 : index
    %c512_237 = arith.constant 512 : index
    %389 = vector.load %arg6[%c0_236, %c512_237] : memref<8x2176xf32, #tpu.memory_space<vmem>>, vector<8x512xf32>
    %c0_238 = arith.constant 0 : index
    %c576 = arith.constant 576 : index
    %390 = vector.load %arg6[%c0_238, %c576] : memref<8x2176xf32, #tpu.memory_space<vmem>>, vector<8x512xf32>
    %391 = arith.addf %389, %390 : vector<8x512xf32>
    %c0_239 = arith.constant 0 : index
    %c16384_240 = arith.constant 16384 : index
    %392 = vector.load %arg2[%c0_239, %c16384_240] : memref<8x16896xf32, #tpu.memory_space<vmem>>, vector<8x512xf32>
    %393 = arith.mulf %392, %391 : vector<8x512xf32>
    %394 = arith.addf %388, %393 : vector<8x512xf32>
    %c0_241 = arith.constant 0 : index
    %c512_242 = arith.constant 512 : index
    %395 = vector.load %arg5[%c0_241, %c512_242] : memref<8x2048xf32, #tpu.memory_space<vmem>>, vector<8x512xf32>
    tpu.vector_store %arg5[%c0_241, %c512_242], %394 {strides = array<i32>} : memref<8x2048xf32, #tpu.memory_space<vmem>>, vector<8x512xf32>,
    %c0_243 = arith.constant 0 : index
    %c0_244 = arith.constant 0 : index
    %396 = vector.load %arg2[%c0_243, %c0_244] : memref<8x16896xf32, #tpu.memory_space<vmem>>, vector<8x512xf32>
    %c0_245 = arith.constant 0 : index
    %c1056 = arith.constant 1056 : index
    %397 = vector.load %arg6[%c0_245, %c1056] : memref<8x2176xf32, #tpu.memory_space<vmem>>, vector<8x512xf32>
    %398 = arith.mulf %396, %397 : vector<8x512xf32>
    %c0_246 = arith.constant 0 : index
    %c1055 = arith.constant 1055 : index
    %399 = vector.load %arg6[%c0_246, %c1055] : memref<8x2176xf32, #tpu.memory_space<vmem>>, vector<8x512xf32>
    %c0_247 = arith.constant 0 : index
    %c1057 = arith.constant 1057 : index
    %400 = vector.load %arg6[%c0_247, %c1057] : memref<8x2176xf32, #tpu.memory_space<vmem>>, vector<8x512xf32>
    %401 = arith.addf %399, %400 : vector<8x512xf32>
    %c0_248 = arith.constant 0 : index
    %c512_249 = arith.constant 512 : index
    %402 = vector.load %arg2[%c0_248, %c512_249] : memref<8x16896xf32, #tpu.memory_space<vmem>>, vector<8x512xf32>
    %403 = arith.mulf %402, %401 : vector<8x512xf32>
    %404 = arith.addf %398, %403 : vector<8x512xf32>
    %c0_250 = arith.constant 0 : index
    %c1054 = arith.constant 1054 : index
    %405 = vector.load %arg6[%c0_250, %c1054] : memref<8x2176xf32, #tpu.memory_space<vmem>>, vector<8x512xf32>
    %c0_251 = arith.constant 0 : index
    %c1058 = arith.constant 1058 : index
    %406 = vector.load %arg6[%c0_251, %c1058] : memref<8x2176xf32, #tpu.memory_space<vmem>>, vector<8x512xf32>
    %407 = arith.addf %405, %406 : vector<8x512xf32>
    %c0_252 = arith.constant 0 : index
    %c1024_253 = arith.constant 1024 : index
    %408 = vector.load %arg2[%c0_252, %c1024_253] : memref<8x16896xf32, #tpu.memory_space<vmem>>, vector<8x512xf32>
    %409 = arith.mulf %408, %407 : vector<8x512xf32>
    %410 = arith.addf %404, %409 : vector<8x512xf32>
    %c0_254 = arith.constant 0 : index
    %c1053 = arith.constant 1053 : index
    %411 = vector.load %arg6[%c0_254, %c1053] : memref<8x2176xf32, #tpu.memory_space<vmem>>, vector<8x512xf32>
    %c0_255 = arith.constant 0 : index
    %c1059 = arith.constant 1059 : index
    %412 = vector.load %arg6[%c0_255, %c1059] : memref<8x2176xf32, #tpu.memory_space<vmem>>, vector<8x512xf32>
    %413 = arith.addf %411, %412 : vector<8x512xf32>
    %c0_256 = arith.constant 0 : index
    %c1536_257 = arith.constant 1536 : index
    %414 = vector.load %arg2[%c0_256, %c1536_257] : memref<8x16896xf32, #tpu.memory_space<vmem>>, vector<8x512xf32>
    %415 = arith.mulf %414, %413 : vector<8x512xf32>
    %416 = arith.addf %410, %415 : vector<8x512xf32>
    %c0_258 = arith.constant 0 : index
    %c1052 = arith.constant 1052 : index
    %417 = vector.load %arg6[%c0_258, %c1052] : memref<8x2176xf32, #tpu.memory_space<vmem>>, vector<8x512xf32>
    %c0_259 = arith.constant 0 : index
    %c1060 = arith.constant 1060 : index
    %418 = vector.load %arg6[%c0_259, %c1060] : memref<8x2176xf32, #tpu.memory_space<vmem>>, vector<8x512xf32>
    %419 = arith.addf %417, %418 : vector<8x512xf32>
    %c0_260 = arith.constant 0 : index
    %c2048_261 = arith.constant 2048 : index
    %420 = vector.load %arg2[%c0_260, %c2048_261] : memref<8x16896xf32, #tpu.memory_space<vmem>>, vector<8x512xf32>
    %421 = arith.mulf %420, %419 : vector<8x512xf32>
    %422 = arith.addf %416, %421 : vector<8x512xf32>
    %c0_262 = arith.constant 0 : index
    %c1051 = arith.constant 1051 : index
    %423 = vector.load %arg6[%c0_262, %c1051] : memref<8x2176xf32, #tpu.memory_space<vmem>>, vector<8x512xf32>
    %c0_263 = arith.constant 0 : index
    %c1061 = arith.constant 1061 : index
    %424 = vector.load %arg6[%c0_263, %c1061] : memref<8x2176xf32, #tpu.memory_space<vmem>>, vector<8x512xf32>
    %425 = arith.addf %423, %424 : vector<8x512xf32>
    %c0_264 = arith.constant 0 : index
    %c2560_265 = arith.constant 2560 : index
    %426 = vector.load %arg2[%c0_264, %c2560_265] : memref<8x16896xf32, #tpu.memory_space<vmem>>, vector<8x512xf32>
    %427 = arith.mulf %426, %425 : vector<8x512xf32>
    %428 = arith.addf %422, %427 : vector<8x512xf32>
    %c0_266 = arith.constant 0 : index
    %c1050 = arith.constant 1050 : index
    %429 = vector.load %arg6[%c0_266, %c1050] : memref<8x2176xf32, #tpu.memory_space<vmem>>, vector<8x512xf32>
    %c0_267 = arith.constant 0 : index
    %c1062 = arith.constant 1062 : index
    %430 = vector.load %arg6[%c0_267, %c1062] : memref<8x2176xf32, #tpu.memory_space<vmem>>, vector<8x512xf32>
    %431 = arith.addf %429, %430 : vector<8x512xf32>
    %c0_268 = arith.constant 0 : index
    %c3072_269 = arith.constant 3072 : index
    %432 = vector.load %arg2[%c0_268, %c3072_269] : memref<8x16896xf32, #tpu.memory_space<vmem>>, vector<8x512xf32>
    %433 = arith.mulf %432, %431 : vector<8x512xf32>
    %434 = arith.addf %428, %433 : vector<8x512xf32>
    %c0_270 = arith.constant 0 : index
    %c1049 = arith.constant 1049 : index
    %435 = vector.load %arg6[%c0_270, %c1049] : memref<8x2176xf32, #tpu.memory_space<vmem>>, vector<8x512xf32>
    %c0_271 = arith.constant 0 : index
    %c1063 = arith.constant 1063 : index
    %436 = vector.load %arg6[%c0_271, %c1063] : memref<8x2176xf32, #tpu.memory_space<vmem>>, vector<8x512xf32>
    %437 = arith.addf %435, %436 : vector<8x512xf32>
    %c0_272 = arith.constant 0 : index
    %c3584_273 = arith.constant 3584 : index
    %438 = vector.load %arg2[%c0_272, %c3584_273] : memref<8x16896xf32, #tpu.memory_space<vmem>>, vector<8x512xf32>
    %439 = arith.mulf %438, %437 : vector<8x512xf32>
    %440 = arith.addf %434, %439 : vector<8x512xf32>
    %c0_274 = arith.constant 0 : index
    %c1048 = arith.constant 1048 : index
    %441 = vector.load %arg6[%c0_274, %c1048] : memref<8x2176xf32, #tpu.memory_space<vmem>>, vector<8x512xf32>
    %c0_275 = arith.constant 0 : index
    %c1064 = arith.constant 1064 : index
    %442 = vector.load %arg6[%c0_275, %c1064] : memref<8x2176xf32, #tpu.memory_space<vmem>>, vector<8x512xf32>
    %443 = arith.addf %441, %442 : vector<8x512xf32>
    %c0_276 = arith.constant 0 : index
    %c4096_277 = arith.constant 4096 : index
    %444 = vector.load %arg2[%c0_276, %c4096_277] : memref<8x16896xf32, #tpu.memory_space<vmem>>, vector<8x512xf32>
    %445 = arith.mulf %444, %443 : vector<8x512xf32>
    %446 = arith.addf %440, %445 : vector<8x512xf32>
    %c0_278 = arith.constant 0 : index
    %c1047 = arith.constant 1047 : index
    %447 = vector.load %arg6[%c0_278, %c1047] : memref<8x2176xf32, #tpu.memory_space<vmem>>, vector<8x512xf32>
    %c0_279 = arith.constant 0 : index
    %c1065 = arith.constant 1065 : index
    %448 = vector.load %arg6[%c0_279, %c1065] : memref<8x2176xf32, #tpu.memory_space<vmem>>, vector<8x512xf32>
    %449 = arith.addf %447, %448 : vector<8x512xf32>
    %c0_280 = arith.constant 0 : index
    %c4608_281 = arith.constant 4608 : index
    %450 = vector.load %arg2[%c0_280, %c4608_281] : memref<8x16896xf32, #tpu.memory_space<vmem>>, vector<8x512xf32>
    %451 = arith.mulf %450, %449 : vector<8x512xf32>
    %452 = arith.addf %446, %451 : vector<8x512xf32>
    %c0_282 = arith.constant 0 : index
    %c1046 = arith.constant 1046 : index
    %453 = vector.load %arg6[%c0_282, %c1046] : memref<8x2176xf32, #tpu.memory_space<vmem>>, vector<8x512xf32>
    %c0_283 = arith.constant 0 : index
    %c1066 = arith.constant 1066 : index
    %454 = vector.load %arg6[%c0_283, %c1066] : memref<8x2176xf32, #tpu.memory_space<vmem>>, vector<8x512xf32>
    %455 = arith.addf %453, %454 : vector<8x512xf32>
    %c0_284 = arith.constant 0 : index
    %c5120_285 = arith.constant 5120 : index
    %456 = vector.load %arg2[%c0_284, %c5120_285] : memref<8x16896xf32, #tpu.memory_space<vmem>>, vector<8x512xf32>
    %457 = arith.mulf %456, %455 : vector<8x512xf32>
    %458 = arith.addf %452, %457 : vector<8x512xf32>
    %c0_286 = arith.constant 0 : index
    %c1045 = arith.constant 1045 : index
    %459 = vector.load %arg6[%c0_286, %c1045] : memref<8x2176xf32, #tpu.memory_space<vmem>>, vector<8x512xf32>
    %c0_287 = arith.constant 0 : index
    %c1067 = arith.constant 1067 : index
    %460 = vector.load %arg6[%c0_287, %c1067] : memref<8x2176xf32, #tpu.memory_space<vmem>>, vector<8x512xf32>
    %461 = arith.addf %459, %460 : vector<8x512xf32>
    %c0_288 = arith.constant 0 : index
    %c5632_289 = arith.constant 5632 : index
    %462 = vector.load %arg2[%c0_288, %c5632_289] : memref<8x16896xf32, #tpu.memory_space<vmem>>, vector<8x512xf32>
    %463 = arith.mulf %462, %461 : vector<8x512xf32>
    %464 = arith.addf %458, %463 : vector<8x512xf32>
    %c0_290 = arith.constant 0 : index
    %c1044 = arith.constant 1044 : index
    %465 = vector.load %arg6[%c0_290, %c1044] : memref<8x2176xf32, #tpu.memory_space<vmem>>, vector<8x512xf32>
    %c0_291 = arith.constant 0 : index
    %c1068 = arith.constant 1068 : index
    %466 = vector.load %arg6[%c0_291, %c1068] : memref<8x2176xf32, #tpu.memory_space<vmem>>, vector<8x512xf32>
    %467 = arith.addf %465, %466 : vector<8x512xf32>
    %c0_292 = arith.constant 0 : index
    %c6144_293 = arith.constant 6144 : index
    %468 = vector.load %arg2[%c0_292, %c6144_293] : memref<8x16896xf32, #tpu.memory_space<vmem>>, vector<8x512xf32>
    %469 = arith.mulf %468, %467 : vector<8x512xf32>
    %470 = arith.addf %464, %469 : vector<8x512xf32>
    %c0_294 = arith.constant 0 : index
    %c1043 = arith.constant 1043 : index
    %471 = vector.load %arg6[%c0_294, %c1043] : memref<8x2176xf32, #tpu.memory_space<vmem>>, vector<8x512xf32>
    %c0_295 = arith.constant 0 : index
    %c1069 = arith.constant 1069 : index
    %472 = vector.load %arg6[%c0_295, %c1069] : memref<8x2176xf32, #tpu.memory_space<vmem>>, vector<8x512xf32>
    %473 = arith.addf %471, %472 : vector<8x512xf32>
    %c0_296 = arith.constant 0 : index
    %c6656_297 = arith.constant 6656 : index
    %474 = vector.load %arg2[%c0_296, %c6656_297] : memref<8x16896xf32, #tpu.memory_space<vmem>>, vector<8x512xf32>
    %475 = arith.mulf %474, %473 : vector<8x512xf32>
    %476 = arith.addf %470, %475 : vector<8x512xf32>
    %c0_298 = arith.constant 0 : index
    %c1042 = arith.constant 1042 : index
    %477 = vector.load %arg6[%c0_298, %c1042] : memref<8x2176xf32, #tpu.memory_space<vmem>>, vector<8x512xf32>
    %c0_299 = arith.constant 0 : index
    %c1070 = arith.constant 1070 : index
    %478 = vector.load %arg6[%c0_299, %c1070] : memref<8x2176xf32, #tpu.memory_space<vmem>>, vector<8x512xf32>
    %479 = arith.addf %477, %478 : vector<8x512xf32>
    %c0_300 = arith.constant 0 : index
    %c7168_301 = arith.constant 7168 : index
    %480 = vector.load %arg2[%c0_300, %c7168_301] : memref<8x16896xf32, #tpu.memory_space<vmem>>, vector<8x512xf32>
    %481 = arith.mulf %480, %479 : vector<8x512xf32>
    %482 = arith.addf %476, %481 : vector<8x512xf32>
    %c0_302 = arith.constant 0 : index
    %c1041 = arith.constant 1041 : index
    %483 = vector.load %arg6[%c0_302, %c1041] : memref<8x2176xf32, #tpu.memory_space<vmem>>, vector<8x512xf32>
    %c0_303 = arith.constant 0 : index
    %c1071 = arith.constant 1071 : index
    %484 = vector.load %arg6[%c0_303, %c1071] : memref<8x2176xf32, #tpu.memory_space<vmem>>, vector<8x512xf32>
    %485 = arith.addf %483, %484 : vector<8x512xf32>
    %c0_304 = arith.constant 0 : index
    %c7680_305 = arith.constant 7680 : index
    %486 = vector.load %arg2[%c0_304, %c7680_305] : memref<8x16896xf32, #tpu.memory_space<vmem>>, vector<8x512xf32>
    %487 = arith.mulf %486, %485 : vector<8x512xf32>
    %488 = arith.addf %482, %487 : vector<8x512xf32>
    %c0_306 = arith.constant 0 : index
    %c1040 = arith.constant 1040 : index
    %489 = vector.load %arg6[%c0_306, %c1040] : memref<8x2176xf32, #tpu.memory_space<vmem>>, vector<8x512xf32>
    %c0_307 = arith.constant 0 : index
    %c1072 = arith.constant 1072 : index
    %490 = vector.load %arg6[%c0_307, %c1072] : memref<8x2176xf32, #tpu.memory_space<vmem>>, vector<8x512xf32>
    %491 = arith.addf %489, %490 : vector<8x512xf32>
    %c0_308 = arith.constant 0 : index
    %c8192_309 = arith.constant 8192 : index
    %492 = vector.load %arg2[%c0_308, %c8192_309] : memref<8x16896xf32, #tpu.memory_space<vmem>>, vector<8x512xf32>
    %493 = arith.mulf %492, %491 : vector<8x512xf32>
    %494 = arith.addf %488, %493 : vector<8x512xf32>
    %c0_310 = arith.constant 0 : index
    %c1039 = arith.constant 1039 : index
    %495 = vector.load %arg6[%c0_310, %c1039] : memref<8x2176xf32, #tpu.memory_space<vmem>>, vector<8x512xf32>
    %c0_311 = arith.constant 0 : index
    %c1073 = arith.constant 1073 : index
    %496 = vector.load %arg6[%c0_311, %c1073] : memref<8x2176xf32, #tpu.memory_space<vmem>>, vector<8x512xf32>
    %497 = arith.addf %495, %496 : vector<8x512xf32>
    %c0_312 = arith.constant 0 : index
    %c8704_313 = arith.constant 8704 : index
    %498 = vector.load %arg2[%c0_312, %c8704_313] : memref<8x16896xf32, #tpu.memory_space<vmem>>, vector<8x512xf32>
    %499 = arith.mulf %498, %497 : vector<8x512xf32>
    %500 = arith.addf %494, %499 : vector<8x512xf32>
    %c0_314 = arith.constant 0 : index
    %c1038 = arith.constant 1038 : index
    %501 = vector.load %arg6[%c0_314, %c1038] : memref<8x2176xf32, #tpu.memory_space<vmem>>, vector<8x512xf32>
    %c0_315 = arith.constant 0 : index
    %c1074 = arith.constant 1074 : index
    %502 = vector.load %arg6[%c0_315, %c1074] : memref<8x2176xf32, #tpu.memory_space<vmem>>, vector<8x512xf32>
    %503 = arith.addf %501, %502 : vector<8x512xf32>
    %c0_316 = arith.constant 0 : index
    %c9216_317 = arith.constant 9216 : index
    %504 = vector.load %arg2[%c0_316, %c9216_317] : memref<8x16896xf32, #tpu.memory_space<vmem>>, vector<8x512xf32>
    %505 = arith.mulf %504, %503 : vector<8x512xf32>
    %506 = arith.addf %500, %505 : vector<8x512xf32>
    %c0_318 = arith.constant 0 : index
    %c1037 = arith.constant 1037 : index
    %507 = vector.load %arg6[%c0_318, %c1037] : memref<8x2176xf32, #tpu.memory_space<vmem>>, vector<8x512xf32>
    %c0_319 = arith.constant 0 : index
    %c1075 = arith.constant 1075 : index
    %508 = vector.load %arg6[%c0_319, %c1075] : memref<8x2176xf32, #tpu.memory_space<vmem>>, vector<8x512xf32>
    %509 = arith.addf %507, %508 : vector<8x512xf32>
    %c0_320 = arith.constant 0 : index
    %c9728_321 = arith.constant 9728 : index
    %510 = vector.load %arg2[%c0_320, %c9728_321] : memref<8x16896xf32, #tpu.memory_space<vmem>>, vector<8x512xf32>
    %511 = arith.mulf %510, %509 : vector<8x512xf32>
    %512 = arith.addf %506, %511 : vector<8x512xf32>
    %c0_322 = arith.constant 0 : index
    %c1036 = arith.constant 1036 : index
    %513 = vector.load %arg6[%c0_322, %c1036] : memref<8x2176xf32, #tpu.memory_space<vmem>>, vector<8x512xf32>
    %c0_323 = arith.constant 0 : index
    %c1076 = arith.constant 1076 : index
    %514 = vector.load %arg6[%c0_323, %c1076] : memref<8x2176xf32, #tpu.memory_space<vmem>>, vector<8x512xf32>
    %515 = arith.addf %513, %514 : vector<8x512xf32>
    %c0_324 = arith.constant 0 : index
    %c10240_325 = arith.constant 10240 : index
    %516 = vector.load %arg2[%c0_324, %c10240_325] : memref<8x16896xf32, #tpu.memory_space<vmem>>, vector<8x512xf32>
    %517 = arith.mulf %516, %515 : vector<8x512xf32>
    %518 = arith.addf %512, %517 : vector<8x512xf32>
    %c0_326 = arith.constant 0 : index
    %c1035 = arith.constant 1035 : index
    %519 = vector.load %arg6[%c0_326, %c1035] : memref<8x2176xf32, #tpu.memory_space<vmem>>, vector<8x512xf32>
    %c0_327 = arith.constant 0 : index
    %c1077 = arith.constant 1077 : index
    %520 = vector.load %arg6[%c0_327, %c1077] : memref<8x2176xf32, #tpu.memory_space<vmem>>, vector<8x512xf32>
    %521 = arith.addf %519, %520 : vector<8x512xf32>
    %c0_328 = arith.constant 0 : index
    %c10752_329 = arith.constant 10752 : index
    %522 = vector.load %arg2[%c0_328, %c10752_329] : memref<8x16896xf32, #tpu.memory_space<vmem>>, vector<8x512xf32>
    %523 = arith.mulf %522, %521 : vector<8x512xf32>
    %524 = arith.addf %518, %523 : vector<8x512xf32>
    %c0_330 = arith.constant 0 : index
    %c1034 = arith.constant 1034 : index
    %525 = vector.load %arg6[%c0_330, %c1034] : memref<8x2176xf32, #tpu.memory_space<vmem>>, vector<8x512xf32>
    %c0_331 = arith.constant 0 : index
    %c1078 = arith.constant 1078 : index
    %526 = vector.load %arg6[%c0_331, %c1078] : memref<8x2176xf32, #tpu.memory_space<vmem>>, vector<8x512xf32>
    %527 = arith.addf %525, %526 : vector<8x512xf32>
    %c0_332 = arith.constant 0 : index
    %c11264_333 = arith.constant 11264 : index
    %528 = vector.load %arg2[%c0_332, %c11264_333] : memref<8x16896xf32, #tpu.memory_space<vmem>>, vector<8x512xf32>
    %529 = arith.mulf %528, %527 : vector<8x512xf32>
    %530 = arith.addf %524, %529 : vector<8x512xf32>
    %c0_334 = arith.constant 0 : index
    %c1033 = arith.constant 1033 : index
    %531 = vector.load %arg6[%c0_334, %c1033] : memref<8x2176xf32, #tpu.memory_space<vmem>>, vector<8x512xf32>
    %c0_335 = arith.constant 0 : index
    %c1079 = arith.constant 1079 : index
    %532 = vector.load %arg6[%c0_335, %c1079] : memref<8x2176xf32, #tpu.memory_space<vmem>>, vector<8x512xf32>
    %533 = arith.addf %531, %532 : vector<8x512xf32>
    %c0_336 = arith.constant 0 : index
    %c11776_337 = arith.constant 11776 : index
    %534 = vector.load %arg2[%c0_336, %c11776_337] : memref<8x16896xf32, #tpu.memory_space<vmem>>, vector<8x512xf32>
    %535 = arith.mulf %534, %533 : vector<8x512xf32>
    %536 = arith.addf %530, %535 : vector<8x512xf32>
    %c0_338 = arith.constant 0 : index
    %c1032 = arith.constant 1032 : index
    %537 = vector.load %arg6[%c0_338, %c1032] : memref<8x2176xf32, #tpu.memory_space<vmem>>, vector<8x512xf32>
    %c0_339 = arith.constant 0 : index
    %c1080 = arith.constant 1080 : index
    %538 = vector.load %arg6[%c0_339, %c1080] : memref<8x2176xf32, #tpu.memory_space<vmem>>, vector<8x512xf32>
    %539 = arith.addf %537, %538 : vector<8x512xf32>
    %c0_340 = arith.constant 0 : index
    %c12288_341 = arith.constant 12288 : index
    %540 = vector.load %arg2[%c0_340, %c12288_341] : memref<8x16896xf32, #tpu.memory_space<vmem>>, vector<8x512xf32>
    %541 = arith.mulf %540, %539 : vector<8x512xf32>
    %542 = arith.addf %536, %541 : vector<8x512xf32>
    %c0_342 = arith.constant 0 : index
    %c1031 = arith.constant 1031 : index
    %543 = vector.load %arg6[%c0_342, %c1031] : memref<8x2176xf32, #tpu.memory_space<vmem>>, vector<8x512xf32>
    %c0_343 = arith.constant 0 : index
    %c1081 = arith.constant 1081 : index
    %544 = vector.load %arg6[%c0_343, %c1081] : memref<8x2176xf32, #tpu.memory_space<vmem>>, vector<8x512xf32>
    %545 = arith.addf %543, %544 : vector<8x512xf32>
    %c0_344 = arith.constant 0 : index
    %c12800_345 = arith.constant 12800 : index
    %546 = vector.load %arg2[%c0_344, %c12800_345] : memref<8x16896xf32, #tpu.memory_space<vmem>>, vector<8x512xf32>
    %547 = arith.mulf %546, %545 : vector<8x512xf32>
    %548 = arith.addf %542, %547 : vector<8x512xf32>
    %c0_346 = arith.constant 0 : index
    %c1030 = arith.constant 1030 : index
    %549 = vector.load %arg6[%c0_346, %c1030] : memref<8x2176xf32, #tpu.memory_space<vmem>>, vector<8x512xf32>
    %c0_347 = arith.constant 0 : index
    %c1082 = arith.constant 1082 : index
    %550 = vector.load %arg6[%c0_347, %c1082] : memref<8x2176xf32, #tpu.memory_space<vmem>>, vector<8x512xf32>
    %551 = arith.addf %549, %550 : vector<8x512xf32>
    %c0_348 = arith.constant 0 : index
    %c13312_349 = arith.constant 13312 : index
    %552 = vector.load %arg2[%c0_348, %c13312_349] : memref<8x16896xf32, #tpu.memory_space<vmem>>, vector<8x512xf32>
    %553 = arith.mulf %552, %551 : vector<8x512xf32>
    %554 = arith.addf %548, %553 : vector<8x512xf32>
    %c0_350 = arith.constant 0 : index
    %c1029 = arith.constant 1029 : index
    %555 = vector.load %arg6[%c0_350, %c1029] : memref<8x2176xf32, #tpu.memory_space<vmem>>, vector<8x512xf32>
    %c0_351 = arith.constant 0 : index
    %c1083 = arith.constant 1083 : index
    %556 = vector.load %arg6[%c0_351, %c1083] : memref<8x2176xf32, #tpu.memory_space<vmem>>, vector<8x512xf32>
    %557 = arith.addf %555, %556 : vector<8x512xf32>
    %c0_352 = arith.constant 0 : index
    %c13824_353 = arith.constant 13824 : index
    %558 = vector.load %arg2[%c0_352, %c13824_353] : memref<8x16896xf32, #tpu.memory_space<vmem>>, vector<8x512xf32>
    %559 = arith.mulf %558, %557 : vector<8x512xf32>
    %560 = arith.addf %554, %559 : vector<8x512xf32>
    %c0_354 = arith.constant 0 : index
    %c1028 = arith.constant 1028 : index
    %561 = vector.load %arg6[%c0_354, %c1028] : memref<8x2176xf32, #tpu.memory_space<vmem>>, vector<8x512xf32>
    %c0_355 = arith.constant 0 : index
    %c1084 = arith.constant 1084 : index
    %562 = vector.load %arg6[%c0_355, %c1084] : memref<8x2176xf32, #tpu.memory_space<vmem>>, vector<8x512xf32>
    %563 = arith.addf %561, %562 : vector<8x512xf32>
    %c0_356 = arith.constant 0 : index
    %c14336_357 = arith.constant 14336 : index
    %564 = vector.load %arg2[%c0_356, %c14336_357] : memref<8x16896xf32, #tpu.memory_space<vmem>>, vector<8x512xf32>
    %565 = arith.mulf %564, %563 : vector<8x512xf32>
    %566 = arith.addf %560, %565 : vector<8x512xf32>
    %c0_358 = arith.constant 0 : index
    %c1027 = arith.constant 1027 : index
    %567 = vector.load %arg6[%c0_358, %c1027] : memref<8x2176xf32, #tpu.memory_space<vmem>>, vector<8x512xf32>
    %c0_359 = arith.constant 0 : index
    %c1085 = arith.constant 1085 : index
    %568 = vector.load %arg6[%c0_359, %c1085] : memref<8x2176xf32, #tpu.memory_space<vmem>>, vector<8x512xf32>
    %569 = arith.addf %567, %568 : vector<8x512xf32>
    %c0_360 = arith.constant 0 : index
    %c14848_361 = arith.constant 14848 : index
    %570 = vector.load %arg2[%c0_360, %c14848_361] : memref<8x16896xf32, #tpu.memory_space<vmem>>, vector<8x512xf32>
    %571 = arith.mulf %570, %569 : vector<8x512xf32>
    %572 = arith.addf %566, %571 : vector<8x512xf32>
    %c0_362 = arith.constant 0 : index
    %c1026 = arith.constant 1026 : index
    %573 = vector.load %arg6[%c0_362, %c1026] : memref<8x2176xf32, #tpu.memory_space<vmem>>, vector<8x512xf32>
    %c0_363 = arith.constant 0 : index
    %c1086 = arith.constant 1086 : index
    %574 = vector.load %arg6[%c0_363, %c1086] : memref<8x2176xf32, #tpu.memory_space<vmem>>, vector<8x512xf32>
    %575 = arith.addf %573, %574 : vector<8x512xf32>
    %c0_364 = arith.constant 0 : index
    %c15360_365 = arith.constant 15360 : index
    %576 = vector.load %arg2[%c0_364, %c15360_365] : memref<8x16896xf32, #tpu.memory_space<vmem>>, vector<8x512xf32>
    %577 = arith.mulf %576, %575 : vector<8x512xf32>
    %578 = arith.addf %572, %577 : vector<8x512xf32>
    %c0_366 = arith.constant 0 : index
    %c1025 = arith.constant 1025 : index
    %579 = vector.load %arg6[%c0_366, %c1025] : memref<8x2176xf32, #tpu.memory_space<vmem>>, vector<8x512xf32>
    %c0_367 = arith.constant 0 : index
    %c1087 = arith.constant 1087 : index
    %580 = vector.load %arg6[%c0_367, %c1087] : memref<8x2176xf32, #tpu.memory_space<vmem>>, vector<8x512xf32>
    %581 = arith.addf %579, %580 : vector<8x512xf32>
    %c0_368 = arith.constant 0 : index
    %c15872_369 = arith.constant 15872 : index
    %582 = vector.load %arg2[%c0_368, %c15872_369] : memref<8x16896xf32, #tpu.memory_space<vmem>>, vector<8x512xf32>
    %583 = arith.mulf %582, %581 : vector<8x512xf32>
    %584 = arith.addf %578, %583 : vector<8x512xf32>
    %c0_370 = arith.constant 0 : index
    %c1024_371 = arith.constant 1024 : index
    %585 = vector.load %arg6[%c0_370, %c1024_371] : memref<8x2176xf32, #tpu.memory_space<vmem>>, vector<8x512xf32>
    %c0_372 = arith.constant 0 : index
    %c1088 = arith.constant 1088 : index
    %586 = vector.load %arg6[%c0_372, %c1088] : memref<8x2176xf32, #tpu.memory_space<vmem>>, vector<8x512xf32>
    %587 = arith.addf %585, %586 : vector<8x512xf32>
    %c0_373 = arith.constant 0 : index
    %c16384_374 = arith.constant 16384 : index
    %588 = vector.load %arg2[%c0_373, %c16384_374] : memref<8x16896xf32, #tpu.memory_space<vmem>>, vector<8x512xf32>
    %589 = arith.mulf %588, %587 : vector<8x512xf32>
    %590 = arith.addf %584, %589 : vector<8x512xf32>
    %c0_375 = arith.constant 0 : index
    %c1024_376 = arith.constant 1024 : index
    %591 = vector.load %arg5[%c0_375, %c1024_376] : memref<8x2048xf32, #tpu.memory_space<vmem>>, vector<8x512xf32>
    tpu.vector_store %arg5[%c0_375, %c1024_376], %590 {strides = array<i32>} : memref<8x2048xf32, #tpu.memory_space<vmem>>, vector<8x512xf32>,
    %c0_377 = arith.constant 0 : index
    %c0_378 = arith.constant 0 : index
    %592 = vector.load %arg2[%c0_377, %c0_378] : memref<8x16896xf32, #tpu.memory_space<vmem>>, vector<8x512xf32>
    %c0_379 = arith.constant 0 : index
    %c1568 = arith.constant 1568 : index
    %593 = vector.load %arg6[%c0_379, %c1568] : memref<8x2176xf32, #tpu.memory_space<vmem>>, vector<8x512xf32>
    %594 = arith.mulf %592, %593 : vector<8x512xf32>
    %c0_380 = arith.constant 0 : index
    %c1567 = arith.constant 1567 : index
    %595 = vector.load %arg6[%c0_380, %c1567] : memref<8x2176xf32, #tpu.memory_space<vmem>>, vector<8x512xf32>
    %c0_381 = arith.constant 0 : index
    %c1569 = arith.constant 1569 : index
    %596 = vector.load %arg6[%c0_381, %c1569] : memref<8x2176xf32, #tpu.memory_space<vmem>>, vector<8x512xf32>
    %597 = arith.addf %595, %596 : vector<8x512xf32>
    %c0_382 = arith.constant 0 : index
    %c512_383 = arith.constant 512 : index
    %598 = vector.load %arg2[%c0_382, %c512_383] : memref<8x16896xf32, #tpu.memory_space<vmem>>, vector<8x512xf32>
    %599 = arith.mulf %598, %597 : vector<8x512xf32>
    %600 = arith.addf %594, %599 : vector<8x512xf32>
    %c0_384 = arith.constant 0 : index
    %c1566 = arith.constant 1566 : index
    %601 = vector.load %arg6[%c0_384, %c1566] : memref<8x2176xf32, #tpu.memory_space<vmem>>, vector<8x512xf32>
    %c0_385 = arith.constant 0 : index
    %c1570 = arith.constant 1570 : index
    %602 = vector.load %arg6[%c0_385, %c1570] : memref<8x2176xf32, #tpu.memory_space<vmem>>, vector<8x512xf32>
    %603 = arith.addf %601, %602 : vector<8x512xf32>
    %c0_386 = arith.constant 0 : index
    %c1024_387 = arith.constant 1024 : index
    %604 = vector.load %arg2[%c0_386, %c1024_387] : memref<8x16896xf32, #tpu.memory_space<vmem>>, vector<8x512xf32>
    %605 = arith.mulf %604, %603 : vector<8x512xf32>
    %606 = arith.addf %600, %605 : vector<8x512xf32>
    %c0_388 = arith.constant 0 : index
    %c1565 = arith.constant 1565 : index
    %607 = vector.load %arg6[%c0_388, %c1565] : memref<8x2176xf32, #tpu.memory_space<vmem>>, vector<8x512xf32>
    %c0_389 = arith.constant 0 : index
    %c1571 = arith.constant 1571 : index
    %608 = vector.load %arg6[%c0_389, %c1571] : memref<8x2176xf32, #tpu.memory_space<vmem>>, vector<8x512xf32>
    %609 = arith.addf %607, %608 : vector<8x512xf32>
    %c0_390 = arith.constant 0 : index
    %c1536_391 = arith.constant 1536 : index
    %610 = vector.load %arg2[%c0_390, %c1536_391] : memref<8x16896xf32, #tpu.memory_space<vmem>>, vector<8x512xf32>
    %611 = arith.mulf %610, %609 : vector<8x512xf32>
    %612 = arith.addf %606, %611 : vector<8x512xf32>
    %c0_392 = arith.constant 0 : index
    %c1564 = arith.constant 1564 : index
    %613 = vector.load %arg6[%c0_392, %c1564] : memref<8x2176xf32, #tpu.memory_space<vmem>>, vector<8x512xf32>
    %c0_393 = arith.constant 0 : index
    %c1572 = arith.constant 1572 : index
    %614 = vector.load %arg6[%c0_393, %c1572] : memref<8x2176xf32, #tpu.memory_space<vmem>>, vector<8x512xf32>
    %615 = arith.addf %613, %614 : vector<8x512xf32>
    %c0_394 = arith.constant 0 : index
    %c2048_395 = arith.constant 2048 : index
    %616 = vector.load %arg2[%c0_394, %c2048_395] : memref<8x16896xf32, #tpu.memory_space<vmem>>, vector<8x512xf32>
    %617 = arith.mulf %616, %615 : vector<8x512xf32>
    %618 = arith.addf %612, %617 : vector<8x512xf32>
    %c0_396 = arith.constant 0 : index
    %c1563 = arith.constant 1563 : index
    %619 = vector.load %arg6[%c0_396, %c1563] : memref<8x2176xf32, #tpu.memory_space<vmem>>, vector<8x512xf32>
    %c0_397 = arith.constant 0 : index
    %c1573 = arith.constant 1573 : index
    %620 = vector.load %arg6[%c0_397, %c1573] : memref<8x2176xf32, #tpu.memory_space<vmem>>, vector<8x512xf32>
    %621 = arith.addf %619, %620 : vector<8x512xf32>
    %c0_398 = arith.constant 0 : index
    %c2560_399 = arith.constant 2560 : index
    %622 = vector.load %arg2[%c0_398, %c2560_399] : memref<8x16896xf32, #tpu.memory_space<vmem>>, vector<8x512xf32>
    %623 = arith.mulf %622, %621 : vector<8x512xf32>
    %624 = arith.addf %618, %623 : vector<8x512xf32>
    %c0_400 = arith.constant 0 : index
    %c1562 = arith.constant 1562 : index
    %625 = vector.load %arg6[%c0_400, %c1562] : memref<8x2176xf32, #tpu.memory_space<vmem>>, vector<8x512xf32>
    %c0_401 = arith.constant 0 : index
    %c1574 = arith.constant 1574 : index
    %626 = vector.load %arg6[%c0_401, %c1574] : memref<8x2176xf32, #tpu.memory_space<vmem>>, vector<8x512xf32>
    %627 = arith.addf %625, %626 : vector<8x512xf32>
    %c0_402 = arith.constant 0 : index
    %c3072_403 = arith.constant 3072 : index
    %628 = vector.load %arg2[%c0_402, %c3072_403] : memref<8x16896xf32, #tpu.memory_space<vmem>>, vector<8x512xf32>
    %629 = arith.mulf %628, %627 : vector<8x512xf32>
    %630 = arith.addf %624, %629 : vector<8x512xf32>
    %c0_404 = arith.constant 0 : index
    %c1561 = arith.constant 1561 : index
    %631 = vector.load %arg6[%c0_404, %c1561] : memref<8x2176xf32, #tpu.memory_space<vmem>>, vector<8x512xf32>
    %c0_405 = arith.constant 0 : index
    %c1575 = arith.constant 1575 : index
    %632 = vector.load %arg6[%c0_405, %c1575] : memref<8x2176xf32, #tpu.memory_space<vmem>>, vector<8x512xf32>
    %633 = arith.addf %631, %632 : vector<8x512xf32>
    %c0_406 = arith.constant 0 : index
    %c3584_407 = arith.constant 3584 : index
    %634 = vector.load %arg2[%c0_406, %c3584_407] : memref<8x16896xf32, #tpu.memory_space<vmem>>, vector<8x512xf32>
    %635 = arith.mulf %634, %633 : vector<8x512xf32>
    %636 = arith.addf %630, %635 : vector<8x512xf32>
    %c0_408 = arith.constant 0 : index
    %c1560 = arith.constant 1560 : index
    %637 = vector.load %arg6[%c0_408, %c1560] : memref<8x2176xf32, #tpu.memory_space<vmem>>, vector<8x512xf32>
    %c0_409 = arith.constant 0 : index
    %c1576 = arith.constant 1576 : index
    %638 = vector.load %arg6[%c0_409, %c1576] : memref<8x2176xf32, #tpu.memory_space<vmem>>, vector<8x512xf32>
    %639 = arith.addf %637, %638 : vector<8x512xf32>
    %c0_410 = arith.constant 0 : index
    %c4096_411 = arith.constant 4096 : index
    %640 = vector.load %arg2[%c0_410, %c4096_411] : memref<8x16896xf32, #tpu.memory_space<vmem>>, vector<8x512xf32>
    %641 = arith.mulf %640, %639 : vector<8x512xf32>
    %642 = arith.addf %636, %641 : vector<8x512xf32>
    %c0_412 = arith.constant 0 : index
    %c1559 = arith.constant 1559 : index
    %643 = vector.load %arg6[%c0_412, %c1559] : memref<8x2176xf32, #tpu.memory_space<vmem>>, vector<8x512xf32>
    %c0_413 = arith.constant 0 : index
    %c1577 = arith.constant 1577 : index
    %644 = vector.load %arg6[%c0_413, %c1577] : memref<8x2176xf32, #tpu.memory_space<vmem>>, vector<8x512xf32>
    %645 = arith.addf %643, %644 : vector<8x512xf32>
    %c0_414 = arith.constant 0 : index
    %c4608_415 = arith.constant 4608 : index
    %646 = vector.load %arg2[%c0_414, %c4608_415] : memref<8x16896xf32, #tpu.memory_space<vmem>>, vector<8x512xf32>
    %647 = arith.mulf %646, %645 : vector<8x512xf32>
    %648 = arith.addf %642, %647 : vector<8x512xf32>
    %c0_416 = arith.constant 0 : index
    %c1558 = arith.constant 1558 : index
    %649 = vector.load %arg6[%c0_416, %c1558] : memref<8x2176xf32, #tpu.memory_space<vmem>>, vector<8x512xf32>
    %c0_417 = arith.constant 0 : index
    %c1578 = arith.constant 1578 : index
    %650 = vector.load %arg6[%c0_417, %c1578] : memref<8x2176xf32, #tpu.memory_space<vmem>>, vector<8x512xf32>
    %651 = arith.addf %649, %650 : vector<8x512xf32>
    %c0_418 = arith.constant 0 : index
    %c5120_419 = arith.constant 5120 : index
    %652 = vector.load %arg2[%c0_418, %c5120_419] : memref<8x16896xf32, #tpu.memory_space<vmem>>, vector<8x512xf32>
    %653 = arith.mulf %652, %651 : vector<8x512xf32>
    %654 = arith.addf %648, %653 : vector<8x512xf32>
    %c0_420 = arith.constant 0 : index
    %c1557 = arith.constant 1557 : index
    %655 = vector.load %arg6[%c0_420, %c1557] : memref<8x2176xf32, #tpu.memory_space<vmem>>, vector<8x512xf32>
    %c0_421 = arith.constant 0 : index
    %c1579 = arith.constant 1579 : index
    %656 = vector.load %arg6[%c0_421, %c1579] : memref<8x2176xf32, #tpu.memory_space<vmem>>, vector<8x512xf32>
    %657 = arith.addf %655, %656 : vector<8x512xf32>
    %c0_422 = arith.constant 0 : index
    %c5632_423 = arith.constant 5632 : index
    %658 = vector.load %arg2[%c0_422, %c5632_423] : memref<8x16896xf32, #tpu.memory_space<vmem>>, vector<8x512xf32>
    %659 = arith.mulf %658, %657 : vector<8x512xf32>
    %660 = arith.addf %654, %659 : vector<8x512xf32>
    %c0_424 = arith.constant 0 : index
    %c1556 = arith.constant 1556 : index
    %661 = vector.load %arg6[%c0_424, %c1556] : memref<8x2176xf32, #tpu.memory_space<vmem>>, vector<8x512xf32>
    %c0_425 = arith.constant 0 : index
    %c1580 = arith.constant 1580 : index
    %662 = vector.load %arg6[%c0_425, %c1580] : memref<8x2176xf32, #tpu.memory_space<vmem>>, vector<8x512xf32>
    %663 = arith.addf %661, %662 : vector<8x512xf32>
    %c0_426 = arith.constant 0 : index
    %c6144_427 = arith.constant 6144 : index
    %664 = vector.load %arg2[%c0_426, %c6144_427] : memref<8x16896xf32, #tpu.memory_space<vmem>>, vector<8x512xf32>
    %665 = arith.mulf %664, %663 : vector<8x512xf32>
    %666 = arith.addf %660, %665 : vector<8x512xf32>
    %c0_428 = arith.constant 0 : index
    %c1555 = arith.constant 1555 : index
    %667 = vector.load %arg6[%c0_428, %c1555] : memref<8x2176xf32, #tpu.memory_space<vmem>>, vector<8x512xf32>
    %c0_429 = arith.constant 0 : index
    %c1581 = arith.constant 1581 : index
    %668 = vector.load %arg6[%c0_429, %c1581] : memref<8x2176xf32, #tpu.memory_space<vmem>>, vector<8x512xf32>
    %669 = arith.addf %667, %668 : vector<8x512xf32>
    %c0_430 = arith.constant 0 : index
    %c6656_431 = arith.constant 6656 : index
    %670 = vector.load %arg2[%c0_430, %c6656_431] : memref<8x16896xf32, #tpu.memory_space<vmem>>, vector<8x512xf32>
    %671 = arith.mulf %670, %669 : vector<8x512xf32>
    %672 = arith.addf %666, %671 : vector<8x512xf32>
    %c0_432 = arith.constant 0 : index
    %c1554 = arith.constant 1554 : index
    %673 = vector.load %arg6[%c0_432, %c1554] : memref<8x2176xf32, #tpu.memory_space<vmem>>, vector<8x512xf32>
    %c0_433 = arith.constant 0 : index
    %c1582 = arith.constant 1582 : index
    %674 = vector.load %arg6[%c0_433, %c1582] : memref<8x2176xf32, #tpu.memory_space<vmem>>, vector<8x512xf32>
    %675 = arith.addf %673, %674 : vector<8x512xf32>
    %c0_434 = arith.constant 0 : index
    %c7168_435 = arith.constant 7168 : index
    %676 = vector.load %arg2[%c0_434, %c7168_435] : memref<8x16896xf32, #tpu.memory_space<vmem>>, vector<8x512xf32>
    %677 = arith.mulf %676, %675 : vector<8x512xf32>
    %678 = arith.addf %672, %677 : vector<8x512xf32>
    %c0_436 = arith.constant 0 : index
    %c1553 = arith.constant 1553 : index
    %679 = vector.load %arg6[%c0_436, %c1553] : memref<8x2176xf32, #tpu.memory_space<vmem>>, vector<8x512xf32>
    %c0_437 = arith.constant 0 : index
    %c1583 = arith.constant 1583 : index
    %680 = vector.load %arg6[%c0_437, %c1583] : memref<8x2176xf32, #tpu.memory_space<vmem>>, vector<8x512xf32>
    %681 = arith.addf %679, %680 : vector<8x512xf32>
    %c0_438 = arith.constant 0 : index
    %c7680_439 = arith.constant 7680 : index
    %682 = vector.load %arg2[%c0_438, %c7680_439] : memref<8x16896xf32, #tpu.memory_space<vmem>>, vector<8x512xf32>
    %683 = arith.mulf %682, %681 : vector<8x512xf32>
    %684 = arith.addf %678, %683 : vector<8x512xf32>
    %c0_440 = arith.constant 0 : index
    %c1552 = arith.constant 1552 : index
    %685 = vector.load %arg6[%c0_440, %c1552] : memref<8x2176xf32, #tpu.memory_space<vmem>>, vector<8x512xf32>
    %c0_441 = arith.constant 0 : index
    %c1584 = arith.constant 1584 : index
    %686 = vector.load %arg6[%c0_441, %c1584] : memref<8x2176xf32, #tpu.memory_space<vmem>>, vector<8x512xf32>
    %687 = arith.addf %685, %686 : vector<8x512xf32>
    %c0_442 = arith.constant 0 : index
    %c8192_443 = arith.constant 8192 : index
    %688 = vector.load %arg2[%c0_442, %c8192_443] : memref<8x16896xf32, #tpu.memory_space<vmem>>, vector<8x512xf32>
    %689 = arith.mulf %688, %687 : vector<8x512xf32>
    %690 = arith.addf %684, %689 : vector<8x512xf32>
    %c0_444 = arith.constant 0 : index
    %c1551 = arith.constant 1551 : index
    %691 = vector.load %arg6[%c0_444, %c1551] : memref<8x2176xf32, #tpu.memory_space<vmem>>, vector<8x512xf32>
    %c0_445 = arith.constant 0 : index
    %c1585 = arith.constant 1585 : index
    %692 = vector.load %arg6[%c0_445, %c1585] : memref<8x2176xf32, #tpu.memory_space<vmem>>, vector<8x512xf32>
    %693 = arith.addf %691, %692 : vector<8x512xf32>
    %c0_446 = arith.constant 0 : index
    %c8704_447 = arith.constant 8704 : index
    %694 = vector.load %arg2[%c0_446, %c8704_447] : memref<8x16896xf32, #tpu.memory_space<vmem>>, vector<8x512xf32>
    %695 = arith.mulf %694, %693 : vector<8x512xf32>
    %696 = arith.addf %690, %695 : vector<8x512xf32>
    %c0_448 = arith.constant 0 : index
    %c1550 = arith.constant 1550 : index
    %697 = vector.load %arg6[%c0_448, %c1550] : memref<8x2176xf32, #tpu.memory_space<vmem>>, vector<8x512xf32>
    %c0_449 = arith.constant 0 : index
    %c1586 = arith.constant 1586 : index
    %698 = vector.load %arg6[%c0_449, %c1586] : memref<8x2176xf32, #tpu.memory_space<vmem>>, vector<8x512xf32>
    %699 = arith.addf %697, %698 : vector<8x512xf32>
    %c0_450 = arith.constant 0 : index
    %c9216_451 = arith.constant 9216 : index
    %700 = vector.load %arg2[%c0_450, %c9216_451] : memref<8x16896xf32, #tpu.memory_space<vmem>>, vector<8x512xf32>
    %701 = arith.mulf %700, %699 : vector<8x512xf32>
    %702 = arith.addf %696, %701 : vector<8x512xf32>
    %c0_452 = arith.constant 0 : index
    %c1549 = arith.constant 1549 : index
    %703 = vector.load %arg6[%c0_452, %c1549] : memref<8x2176xf32, #tpu.memory_space<vmem>>, vector<8x512xf32>
    %c0_453 = arith.constant 0 : index
    %c1587 = arith.constant 1587 : index
    %704 = vector.load %arg6[%c0_453, %c1587] : memref<8x2176xf32, #tpu.memory_space<vmem>>, vector<8x512xf32>
    %705 = arith.addf %703, %704 : vector<8x512xf32>
    %c0_454 = arith.constant 0 : index
    %c9728_455 = arith.constant 9728 : index
    %706 = vector.load %arg2[%c0_454, %c9728_455] : memref<8x16896xf32, #tpu.memory_space<vmem>>, vector<8x512xf32>
    %707 = arith.mulf %706, %705 : vector<8x512xf32>
    %708 = arith.addf %702, %707 : vector<8x512xf32>
    %c0_456 = arith.constant 0 : index
    %c1548 = arith.constant 1548 : index
    %709 = vector.load %arg6[%c0_456, %c1548] : memref<8x2176xf32, #tpu.memory_space<vmem>>, vector<8x512xf32>
    %c0_457 = arith.constant 0 : index
    %c1588 = arith.constant 1588 : index
    %710 = vector.load %arg6[%c0_457, %c1588] : memref<8x2176xf32, #tpu.memory_space<vmem>>, vector<8x512xf32>
    %711 = arith.addf %709, %710 : vector<8x512xf32>
    %c0_458 = arith.constant 0 : index
    %c10240_459 = arith.constant 10240 : index
    %712 = vector.load %arg2[%c0_458, %c10240_459] : memref<8x16896xf32, #tpu.memory_space<vmem>>, vector<8x512xf32>
    %713 = arith.mulf %712, %711 : vector<8x512xf32>
    %714 = arith.addf %708, %713 : vector<8x512xf32>
    %c0_460 = arith.constant 0 : index
    %c1547 = arith.constant 1547 : index
    %715 = vector.load %arg6[%c0_460, %c1547] : memref<8x2176xf32, #tpu.memory_space<vmem>>, vector<8x512xf32>
    %c0_461 = arith.constant 0 : index
    %c1589 = arith.constant 1589 : index
    %716 = vector.load %arg6[%c0_461, %c1589] : memref<8x2176xf32, #tpu.memory_space<vmem>>, vector<8x512xf32>
    %717 = arith.addf %715, %716 : vector<8x512xf32>
    %c0_462 = arith.constant 0 : index
    %c10752_463 = arith.constant 10752 : index
    %718 = vector.load %arg2[%c0_462, %c10752_463] : memref<8x16896xf32, #tpu.memory_space<vmem>>, vector<8x512xf32>
    %719 = arith.mulf %718, %717 : vector<8x512xf32>
    %720 = arith.addf %714, %719 : vector<8x512xf32>
    %c0_464 = arith.constant 0 : index
    %c1546 = arith.constant 1546 : index
    %721 = vector.load %arg6[%c0_464, %c1546] : memref<8x2176xf32, #tpu.memory_space<vmem>>, vector<8x512xf32>
    %c0_465 = arith.constant 0 : index
    %c1590 = arith.constant 1590 : index
    %722 = vector.load %arg6[%c0_465, %c1590] : memref<8x2176xf32, #tpu.memory_space<vmem>>, vector<8x512xf32>
    %723 = arith.addf %721, %722 : vector<8x512xf32>
    %c0_466 = arith.constant 0 : index
    %c11264_467 = arith.constant 11264 : index
    %724 = vector.load %arg2[%c0_466, %c11264_467] : memref<8x16896xf32, #tpu.memory_space<vmem>>, vector<8x512xf32>
    %725 = arith.mulf %724, %723 : vector<8x512xf32>
    %726 = arith.addf %720, %725 : vector<8x512xf32>
    %c0_468 = arith.constant 0 : index
    %c1545 = arith.constant 1545 : index
    %727 = vector.load %arg6[%c0_468, %c1545] : memref<8x2176xf32, #tpu.memory_space<vmem>>, vector<8x512xf32>
    %c0_469 = arith.constant 0 : index
    %c1591 = arith.constant 1591 : index
    %728 = vector.load %arg6[%c0_469, %c1591] : memref<8x2176xf32, #tpu.memory_space<vmem>>, vector<8x512xf32>
    %729 = arith.addf %727, %728 : vector<8x512xf32>
    %c0_470 = arith.constant 0 : index
    %c11776_471 = arith.constant 11776 : index
    %730 = vector.load %arg2[%c0_470, %c11776_471] : memref<8x16896xf32, #tpu.memory_space<vmem>>, vector<8x512xf32>
    %731 = arith.mulf %730, %729 : vector<8x512xf32>
    %732 = arith.addf %726, %731 : vector<8x512xf32>
    %c0_472 = arith.constant 0 : index
    %c1544 = arith.constant 1544 : index
    %733 = vector.load %arg6[%c0_472, %c1544] : memref<8x2176xf32, #tpu.memory_space<vmem>>, vector<8x512xf32>
    %c0_473 = arith.constant 0 : index
    %c1592 = arith.constant 1592 : index
    %734 = vector.load %arg6[%c0_473, %c1592] : memref<8x2176xf32, #tpu.memory_space<vmem>>, vector<8x512xf32>
    %735 = arith.addf %733, %734 : vector<8x512xf32>
    %c0_474 = arith.constant 0 : index
    %c12288_475 = arith.constant 12288 : index
    %736 = vector.load %arg2[%c0_474, %c12288_475] : memref<8x16896xf32, #tpu.memory_space<vmem>>, vector<8x512xf32>
    %737 = arith.mulf %736, %735 : vector<8x512xf32>
    %738 = arith.addf %732, %737 : vector<8x512xf32>
    %c0_476 = arith.constant 0 : index
    %c1543 = arith.constant 1543 : index
    %739 = vector.load %arg6[%c0_476, %c1543] : memref<8x2176xf32, #tpu.memory_space<vmem>>, vector<8x512xf32>
    %c0_477 = arith.constant 0 : index
    %c1593 = arith.constant 1593 : index
    %740 = vector.load %arg6[%c0_477, %c1593] : memref<8x2176xf32, #tpu.memory_space<vmem>>, vector<8x512xf32>
    %741 = arith.addf %739, %740 : vector<8x512xf32>
    %c0_478 = arith.constant 0 : index
    %c12800_479 = arith.constant 12800 : index
    %742 = vector.load %arg2[%c0_478, %c12800_479] : memref<8x16896xf32, #tpu.memory_space<vmem>>, vector<8x512xf32>
    %743 = arith.mulf %742, %741 : vector<8x512xf32>
    %744 = arith.addf %738, %743 : vector<8x512xf32>
    %c0_480 = arith.constant 0 : index
    %c1542 = arith.constant 1542 : index
    %745 = vector.load %arg6[%c0_480, %c1542] : memref<8x2176xf32, #tpu.memory_space<vmem>>, vector<8x512xf32>
    %c0_481 = arith.constant 0 : index
    %c1594 = arith.constant 1594 : index
    %746 = vector.load %arg6[%c0_481, %c1594] : memref<8x2176xf32, #tpu.memory_space<vmem>>, vector<8x512xf32>
    %747 = arith.addf %745, %746 : vector<8x512xf32>
    %c0_482 = arith.constant 0 : index
    %c13312_483 = arith.constant 13312 : index
    %748 = vector.load %arg2[%c0_482, %c13312_483] : memref<8x16896xf32, #tpu.memory_space<vmem>>, vector<8x512xf32>
    %749 = arith.mulf %748, %747 : vector<8x512xf32>
    %750 = arith.addf %744, %749 : vector<8x512xf32>
    %c0_484 = arith.constant 0 : index
    %c1541 = arith.constant 1541 : index
    %751 = vector.load %arg6[%c0_484, %c1541] : memref<8x2176xf32, #tpu.memory_space<vmem>>, vector<8x512xf32>
    %c0_485 = arith.constant 0 : index
    %c1595 = arith.constant 1595 : index
    %752 = vector.load %arg6[%c0_485, %c1595] : memref<8x2176xf32, #tpu.memory_space<vmem>>, vector<8x512xf32>
    %753 = arith.addf %751, %752 : vector<8x512xf32>
    %c0_486 = arith.constant 0 : index
    %c13824_487 = arith.constant 13824 : index
    %754 = vector.load %arg2[%c0_486, %c13824_487] : memref<8x16896xf32, #tpu.memory_space<vmem>>, vector<8x512xf32>
    %755 = arith.mulf %754, %753 : vector<8x512xf32>
    %756 = arith.addf %750, %755 : vector<8x512xf32>
    %c0_488 = arith.constant 0 : index
    %c1540 = arith.constant 1540 : index
    %757 = vector.load %arg6[%c0_488, %c1540] : memref<8x2176xf32, #tpu.memory_space<vmem>>, vector<8x512xf32>
    %c0_489 = arith.constant 0 : index
    %c1596 = arith.constant 1596 : index
    %758 = vector.load %arg6[%c0_489, %c1596] : memref<8x2176xf32, #tpu.memory_space<vmem>>, vector<8x512xf32>
    %759 = arith.addf %757, %758 : vector<8x512xf32>
    %c0_490 = arith.constant 0 : index
    %c14336_491 = arith.constant 14336 : index
    %760 = vector.load %arg2[%c0_490, %c14336_491] : memref<8x16896xf32, #tpu.memory_space<vmem>>, vector<8x512xf32>
    %761 = arith.mulf %760, %759 : vector<8x512xf32>
    %762 = arith.addf %756, %761 : vector<8x512xf32>
    %c0_492 = arith.constant 0 : index
    %c1539 = arith.constant 1539 : index
    %763 = vector.load %arg6[%c0_492, %c1539] : memref<8x2176xf32, #tpu.memory_space<vmem>>, vector<8x512xf32>
    %c0_493 = arith.constant 0 : index
    %c1597 = arith.constant 1597 : index
    %764 = vector.load %arg6[%c0_493, %c1597] : memref<8x2176xf32, #tpu.memory_space<vmem>>, vector<8x512xf32>
    %765 = arith.addf %763, %764 : vector<8x512xf32>
    %c0_494 = arith.constant 0 : index
    %c14848_495 = arith.constant 14848 : index
    %766 = vector.load %arg2[%c0_494, %c14848_495] : memref<8x16896xf32, #tpu.memory_space<vmem>>, vector<8x512xf32>
    %767 = arith.mulf %766, %765 : vector<8x512xf32>
    %768 = arith.addf %762, %767 : vector<8x512xf32>
    %c0_496 = arith.constant 0 : index
    %c1538 = arith.constant 1538 : index
    %769 = vector.load %arg6[%c0_496, %c1538] : memref<8x2176xf32, #tpu.memory_space<vmem>>, vector<8x512xf32>
    %c0_497 = arith.constant 0 : index
    %c1598 = arith.constant 1598 : index
    %770 = vector.load %arg6[%c0_497, %c1598] : memref<8x2176xf32, #tpu.memory_space<vmem>>, vector<8x512xf32>
    %771 = arith.addf %769, %770 : vector<8x512xf32>
    %c0_498 = arith.constant 0 : index
    %c15360_499 = arith.constant 15360 : index
    %772 = vector.load %arg2[%c0_498, %c15360_499] : memref<8x16896xf32, #tpu.memory_space<vmem>>, vector<8x512xf32>
    %773 = arith.mulf %772, %771 : vector<8x512xf32>
    %774 = arith.addf %768, %773 : vector<8x512xf32>
    %c0_500 = arith.constant 0 : index
    %c1537 = arith.constant 1537 : index
    %775 = vector.load %arg6[%c0_500, %c1537] : memref<8x2176xf32, #tpu.memory_space<vmem>>, vector<8x512xf32>
    %c0_501 = arith.constant 0 : index
    %c1599 = arith.constant 1599 : index
    %776 = vector.load %arg6[%c0_501, %c1599] : memref<8x2176xf32, #tpu.memory_space<vmem>>, vector<8x512xf32>
    %777 = arith.addf %775, %776 : vector<8x512xf32>
    %c0_502 = arith.constant 0 : index
    %c15872_503 = arith.constant 15872 : index
    %778 = vector.load %arg2[%c0_502, %c15872_503] : memref<8x16896xf32, #tpu.memory_space<vmem>>, vector<8x512xf32>
    %779 = arith.mulf %778, %777 : vector<8x512xf32>
    %780 = arith.addf %774, %779 : vector<8x512xf32>
    %c0_504 = arith.constant 0 : index
    %c1536_505 = arith.constant 1536 : index
    %781 = vector.load %arg6[%c0_504, %c1536_505] : memref<8x2176xf32, #tpu.memory_space<vmem>>, vector<8x512xf32>
    %c0_506 = arith.constant 0 : index
    %c1600 = arith.constant 1600 : index
    %782 = vector.load %arg6[%c0_506, %c1600] : memref<8x2176xf32, #tpu.memory_space<vmem>>, vector<8x512xf32>
    %783 = arith.addf %781, %782 : vector<8x512xf32>
    %c0_507 = arith.constant 0 : index
    %c16384_508 = arith.constant 16384 : index
    %784 = vector.load %arg2[%c0_507, %c16384_508] : memref<8x16896xf32, #tpu.memory_space<vmem>>, vector<8x512xf32>
    %785 = arith.mulf %784, %783 : vector<8x512xf32>
    %786 = arith.addf %780, %785 : vector<8x512xf32>
    %c0_509 = arith.constant 0 : index
    %c1536_510 = arith.constant 1536 : index
    %787 = vector.load %arg5[%c0_509, %c1536_510] : memref<8x2048xf32, #tpu.memory_space<vmem>>, vector<8x512xf32>
    tpu.vector_store %arg5[%c0_509, %c1536_510], %786 {strides = array<i32>} : memref<8x2048xf32, #tpu.memory_space<vmem>>, vector<8x512xf32>,
    return
  }
  func.func @transform_0(%arg0: i32, %arg1: i32) -> (i32, i32) {
    %c0_i32 = arith.constant 0 : i32
    %c0_i32_0 = arith.constant 0 : i32
    return %arg0, %c0_i32 : i32, i32
  }
  func.func @transform_1(%arg0: i32, %arg1: i32) -> (i32, i32) {
    %c0_i32 = arith.constant 0 : i32
    return %arg0, %arg1 : i32, i32
  }
  func.func @transform_2(%arg0: i32, %arg1: i32) -> (i32, i32) {
    %c1_i32 = arith.constant 1 : i32
    %0 = arith.addi %arg1, %c1_i32 : i32
    %c16_i32 = arith.constant 16 : i32
    %1 = arith.muli %0, %c16_i32 : i32
    %c0_i32 = arith.constant 0 : i32
    return %arg0, %1 : i32, i32
  }
  func.func @transform_3(%arg0: i32, %arg1: i32) -> (i32, i32) {
    %c0_i32 = arith.constant 0 : i32
    return %arg0, %arg1 : i32, i32
  }
}

</mosaic_0001>

<llo_original>
// kernel: tpu_custom_call.1
$region0: #{tpu_custom_call.1}
  #allocation0 [shape = 'u32[]', space=smem, size = 0x4, offset = 0x4, fixed_abs, tag = 'smem constant byte address 0x4 - core index']
  #allocation1 [shape = 'u32[72,128]{1,0:T(1,128)}', space=vmem, size = 0x9000, scoped, tag = 'internal scratch']
  #allocation2 [shape = 'f32[8,2176]{1,0:T(8,128)}', space=vmem, size = 0x11000, scoped, tag = 'scratch operand']
  %s0 = inlined_call_operand.hbm [shape: f32[8,16896], index: 0, kind: input, shape index: {}]
  %s1 = inlined_call_operand.hbm [shape: f32[8,2176], index: 1, kind: input, shape index: {}]
  %s2 = inlined_call_operand.hbm [shape: f32[8,2176], index: 2, kind: input, shape index: {}]
  %s3 = inlined_call_operand.hbm [shape: f32[8,2000], index: 3, kind: output, shape index: {}]
  %s4 = sld [smem:[#allocation0]]
  $region34: #{tpu_custom_call.1} parent=0
    _
  %s6 = ssub.s32 1, %s4
  %s7 = scalar_select 0, %s6, %s4
  $region1: #{tpu_custom_call.1} parent=0
    #allocation3 [shape = 'u8[540672]{0}', space=vmem, size = 0x84000, scoped, tag = 'input window, operand 0, single buffered']
    #allocation4 [shape = 's32[1]{0}', space=sflag, size = 0x4, scoped, tag = 'scoped memory for tpu_custom_call.1']
    #allocation5 [shape = 's32[1]{0}', space=sflag, size = 0x4, scoped, tag = 'scoped memory for tpu_custom_call.1']
    #allocation6 [shape = 'u8[65536]{0}', space=vmem, size = 0x10000, scoped, tag = 'input window, operand 1, single buffered']
    #allocation7 [shape = 's32[1]{0}', space=sflag, size = 0x4, scoped, tag = 'scoped memory for tpu_custom_call.1']
    #allocation8 [shape = 'u8[4096]{0}', space=vmem, size = 0x1000, scoped, tag = 'input window, operand 2, single buffered']
    #allocation9 [shape = 'u8[65536]{0}', space=vmem, size = 0x10000, scoped, tag = 'output window, operand 0, single buffered']
    %8 = vsyncpa [#allocation4], 0
    %9 = vsyncpa [#allocation7], 0
    %10 = vsyncpa [#allocation5], 0
    // Predicated region
    $region2: #{tpu_custom_call.1} parent=1 // pred_check
      _
    $region3: #{tpu_custom_call.1} parent=1 // pred_check_branch
      %12 = sbr.rel (0) target = $region5
    $region4: #{tpu_custom_call.1} parent=1 // pred_region
      %14 = vsyncadd [#allocation4], 0
      %s16 = sshll.u32 %s0, 4
      %s17 = int_to_ptr.hbm [resolvable:$true] %s16
      %s18 = sshll.u32 [#allocation3], 4
      %s19 = int_to_ptr.vmem [resolvable:$true] %s18
      %21 = dma.hbm_to_vmem [thread:$0]  %s17, 16896, %s19, [#allocation4]
    $region5: #{tpu_custom_call.1} parent=1 // pred_fallthru
      _
    // Predicated region
    $region6: #{tpu_custom_call.1} parent=1 // pred_check
      _
    $region7: #{tpu_custom_call.1} parent=1 // pred_check_branch
      %23 = sbr.rel (0) target = $region9
    $region8: #{tpu_custom_call.1} parent=1 // pred_region
      %25 = vsyncadd [#allocation7], 0
      %s27 = sshll.u32 %s1, 4
      %s28 = int_to_ptr.hbm [resolvable:$true] %s27
      %s29 = sshll.u32 [#allocation6], 4
      %s30 = int_to_ptr.vmem [resolvable:$true] %s29
      %32 = dma.hbm_to_vmem [thread:$0]  %s28, 2048, %s30, [#allocation7]
    $region9: #{tpu_custom_call.1} parent=1 // pred_fallthru
      _
    // Predicated region
    $region10: #{tpu_custom_call.1} parent=1 // pred_check
      _
    $region11: #{tpu_custom_call.1} parent=1 // pred_check_branch
      %34 = sbr.rel (0) target = $region13
    $region12: #{tpu_custom_call.1} parent=1 // pred_region
      %s35 = sadd.s32 0, 1
      %s36 = smul.u32 %s35, 16
      %38 = vsyncadd [#allocation7], 0
      %s39 = smul.addr %s36, 8
      %s40 = scalar_lea.hbm %s2, %s39
      %s42 = sshll.u32 %s40, 4
      %s43 = int_to_ptr.hbm [resolvable:$true] %s42
      %s44 = sshll.u32 [#allocation8], 4
      %s45 = int_to_ptr.vmem [resolvable:$true] %s44
      %47 = dma.hbm_to_vmem [thread:$0]  %s43, 128, %s45, [#allocation7]
    $region13: #{tpu_custom_call.1} parent=1 // pred_fallthru
      _
    // Predicated region
    $region14: #{tpu_custom_call.1} parent=1 // pred_check
      _
    $region15: #{tpu_custom_call.1} parent=1 // pred_check_branch
      %49 = sbr.rel (0) target = $region17
    $region16: #{tpu_custom_call.1} parent=1 // pred_region
      %51 = dma.done [#allocation4], 16896
    $region17: #{tpu_custom_call.1} parent=1 // pred_fallthru
      _
    // Predicated region
    $region18: #{tpu_custom_call.1} parent=1 // pred_check
      _
    $region19: #{tpu_custom_call.1} parent=1 // pred_check_branch
      %53 = sbr.rel (0) target = $region21
    $region20: #{tpu_custom_call.1} parent=1 // pred_region
      %55 = dma.done [#allocation7], 2048
    $region21: #{tpu_custom_call.1} parent=1 // pred_fallthru
      _
    // Predicated region
    $region22: #{tpu_custom_call.1} parent=1 // pred_check
      _
    $region23: #{tpu_custom_call.1} parent=1 // pred_check_branch
      %57 = sbr.rel (0) target = $region25
    $region24: #{tpu_custom_call.1} parent=1 // pred_region
      %59 = dma.done [#allocation7], 128
    $region25: #{tpu_custom_call.1} parent=1 // pred_fallthru
      _
    %s60 = sadd.s32 0, 1
    %s61 = smul.u32 %s60, 16
    %v62 = vld [vmem:[#allocation6] sm:$0xff]
    %v63 = vld [vmem:[#allocation6 + $0x8] sm:$0xff]
    %v64 = vld [vmem:[#allocation6 + $0x10] sm:$0xff]
    %v65 = vld [vmem:[#allocation6 + $0x18] sm:$0xff]
    %v66 = vld [vmem:[#allocation6 + $0x20] sm:$0xff]
    %v67 = vld [vmem:[#allocation6 + $0x28] sm:$0xff]
    %v68 = vld [vmem:[#allocation6 + $0x30] sm:$0xff]
    %v69 = vld [vmem:[#allocation6 + $0x38] sm:$0xff]
    %v70 = vld [vmem:[#allocation6 + $0x40] sm:$0xff]
    %v71 = vld [vmem:[#allocation6 + $0x48] sm:$0xff]
    %v72 = vld [vmem:[#allocation6 + $0x50] sm:$0xff]
    %v73 = vld [vmem:[#allocation6 + $0x58] sm:$0xff]
    %v74 = vld [vmem:[#allocation6 + $0x60] sm:$0xff]
    %v75 = vld [vmem:[#allocation6 + $0x68] sm:$0xff]
    %v76 = vld [vmem:[#allocation6 + $0x70] sm:$0xff]
    %v77 = vld [vmem:[#allocation6 + $0x78] sm:$0xff]
    %78 = vst [vmem:[#allocation2] sm:$0xff] %v62
    %79 = vst [vmem:[#allocation2 + $0x8] sm:$0xff] %v63
    %80 = vst [vmem:[#allocation2 + $0x10] sm:$0xff] %v64
    %81 = vst [vmem:[#allocation2 + $0x18] sm:$0xff] %v65
    %82 = vst [vmem:[#allocation2 + $0x20] sm:$0xff] %v66
    %83 = vst [vmem:[#allocation2 + $0x28] sm:$0xff] %v67
    %84 = vst [vmem:[#allocation2 + $0x30] sm:$0xff] %v68
    %85 = vst [vmem:[#allocation2 + $0x38] sm:$0xff] %v69
    %86 = vst [vmem:[#allocation2 + $0x40] sm:$0xff] %v70
    %87 = vst [vmem:[#allocation2 + $0x48] sm:$0xff] %v71
    %88 = vst [vmem:[#allocation2 + $0x50] sm:$0xff] %v72
    %89 = vst [vmem:[#allocation2 + $0x58] sm:$0xff] %v73
    %90 = vst [vmem:[#allocation2 + $0x60] sm:$0xff] %v74
    %91 = vst [vmem:[#allocation2 + $0x68] sm:$0xff] %v75
    %92 = vst [vmem:[#allocation2 + $0x70] sm:$0xff] %v76
    %93 = vst [vmem:[#allocation2 + $0x78] sm:$0xff] %v77
    %v94 = vld [vmem:[#allocation8] sm:$0xff]
    %95 = vst [vmem:[#allocation2 + $0x80] sm:$0xff] %v94
    %v96 = vld [vmem:[#allocation3] sm:$0xff]
    %v97 = vld [vmem:[#allocation3 + $0x8] sm:$0xff]
    %v98 = vld [vmem:[#allocation3 + $0x10] sm:$0xff]
    %v99 = vld [vmem:[#allocation3 + $0x18] sm:$0xff]
    %v100 = vld [vmem:[#allocation2] sm:$0xff]
    %v101 = vld [vmem:[#allocation2 + $0x8] sm:$0xff]
    %v102 = vld [vmem:[#allocation2 + $0x10] sm:$0xff]
    %v103 = vld [vmem:[#allocation2 + $0x18] sm:$0xff]
    %v104 = vld [vmem:[#allocation2 + $0x20] sm:$0xff]
    %110 = vrot.lane.b32.xlu0 %v100, 96
    %v111 = vpop.permute.xlu0 %110
    %112 = vrot.lane.b32.xlu0 %v101, 96
    %v113 = vpop.permute.xlu0 %112
    %114 = vrot.lane.b32.xlu0 %v102, 96
    %v115 = vpop.permute.xlu0 %114
    %116 = vrot.lane.b32.xlu0 %v103, 96
    %v117 = vpop.permute.xlu0 %116
    %118 = vrot.lane.b32.xlu0 %v104, 96
    %v119 = vpop.permute.xlu0 %118
    %vm120 = vcmask 785408
    %v121 = vsel %vm120, %v111, %v113
    %v122 = vsel %vm120, %v113, %v115
    %v123 = vsel %vm120, %v115, %v117
    %v124 = vsel %vm120, %v117, %v119
    %v129 = vmul.f32 %v96, %v121
    %v130 = vmul.f32 %v97, %v122
    %v131 = vmul.f32 %v98, %v123
    %v132 = vmul.f32 %v99, %v124
    %133 = vrot.lane.b32.xlu0 %v100, 126
    %v134 = vpop.permute.xlu0 %133
    %135 = vrot.lane.b32.xlu0 %v101, 126
    %v136 = vpop.permute.xlu0 %135
    %137 = vrot.lane.b32.xlu0 %v102, 126
    %v138 = vpop.permute.xlu0 %137
    %139 = vrot.lane.b32.xlu0 %v103, 126
    %v140 = vpop.permute.xlu0 %139
    %141 = vrot.lane.b32.xlu0 %v104, 126
    %v142 = vpop.permute.xlu0 %141
    %vm143 = vcmask 1031168
    %v144 = vsel %vm143, %v134, %v136
    %v145 = vsel %vm143, %v136, %v138
    %v146 = vsel %vm143, %v138, %v140
    %v147 = vsel %vm143, %v140, %v142
    %v153 = vadd.f32 %v100, %v144
    %v154 = vadd.f32 %v101, %v145
    %v155 = vadd.f32 %v102, %v146
    %v156 = vadd.f32 %v103, %v147
    %v157 = vadd.f32 %v104, %v142
    %v158 = vld [vmem:[#allocation3 + $0x20] sm:$0xff]
    %v159 = vld [vmem:[#allocation3 + $0x28] sm:$0xff]
    %v160 = vld [vmem:[#allocation3 + $0x30] sm:$0xff]
    %v161 = vld [vmem:[#allocation3 + $0x38] sm:$0xff]
    %167 = vrot.lane.b32.xlu0 %v153, 97
    %v168 = vpop.permute.xlu0 %167
    %169 = vrot.lane.b32.xlu0 %v154, 97
    %v170 = vpop.permute.xlu0 %169
    %171 = vrot.lane.b32.xlu0 %v155, 97
    %v172 = vpop.permute.xlu0 %171
    %173 = vrot.lane.b32.xlu0 %v156, 97
    %v174 = vpop.permute.xlu0 %173
    %175 = vrot.lane.b32.xlu0 %v157, 97
    %v176 = vpop.permute.xlu0 %175
    %vm177 = vcmask 793600
    %v178 = vsel %vm177, %v168, %v170
    %v179 = vsel %vm177, %v170, %v172
    %v180 = vsel %vm177, %v172, %v174
    %v181 = vsel %vm177, %v174, %v176
    %v186 = vmul.f32 %v158, %v178
    %v187 = vmul.f32 %v159, %v179
    %v188 = vmul.f32 %v160, %v180
    %v189 = vmul.f32 %v161, %v181
    %v190 = vadd.f32 %v129, %v186
    %v191 = vadd.f32 %v130, %v187
    %v192 = vadd.f32 %v131, %v188
    %v193 = vadd.f32 %v132, %v189
    %194 = vrot.lane.b32.xlu0 %v100, 124
    %v195 = vpop.permute.xlu0 %194
    %196 = vrot.lane.b32.xlu0 %v101, 124
    %v197 = vpop.permute.xlu0 %196
    %198 = vrot.lane.b32.xlu0 %v102, 124
    %v199 = vpop.permute.xlu0 %198
    %200 = vrot.lane.b32.xlu0 %v103, 124
    %v201 = vpop.permute.xlu0 %200
    %202 = vrot.lane.b32.xlu0 %v104, 124
    %v203 = vpop.permute.xlu0 %202
    %vm204 = vcmask 1014784
    %v205 = vsel %vm204, %v195, %v197
    %v206 = vsel %vm204, %v197, %v199
    %v207 = vsel %vm204, %v199, %v201
    %v208 = vsel %vm204, %v201, %v203
    %v214 = vadd.f32 %v100, %v205
    %v215 = vadd.f32 %v101, %v206
    %v216 = vadd.f32 %v102, %v207
    %v217 = vadd.f32 %v103, %v208
    %v218 = vadd.f32 %v104, %v203
    %v219 = vld [vmem:[#allocation3 + $0x40] sm:$0xff]
    %v220 = vld [vmem:[#allocation3 + $0x48] sm:$0xff]
    %v221 = vld [vmem:[#allocation3 + $0x50] sm:$0xff]
    %v222 = vld [vmem:[#allocation3 + $0x58] sm:$0xff]
    %228 = vrot.lane.b32.xlu0 %v214, 98
    %v229 = vpop.permute.xlu0 %228
    %230 = vrot.lane.b32.xlu0 %v215, 98
    %v231 = vpop.permute.xlu0 %230
    %232 = vrot.lane.b32.xlu0 %v216, 98
    %v233 = vpop.permute.xlu0 %232
    %234 = vrot.lane.b32.xlu0 %v217, 98
    %v235 = vpop.permute.xlu0 %234
    %236 = vrot.lane.b32.xlu0 %v218, 98
    %v237 = vpop.permute.xlu0 %236
    %vm238 = vcmask 801792
    %v239 = vsel %vm238, %v229, %v231
    %v240 = vsel %vm238, %v231, %v233
    %v241 = vsel %vm238, %v233, %v235
    %v242 = vsel %vm238, %v235, %v237
    %v247 = vmul.f32 %v219, %v239
    %v248 = vmul.f32 %v220, %v240
    %v249 = vmul.f32 %v221, %v241
    %v250 = vmul.f32 %v222, %v242
    %v251 = vadd.f32 %v190, %v247
    %v252 = vadd.f32 %v191, %v248
    %v253 = vadd.f32 %v192, %v249
    %v254 = vadd.f32 %v193, %v250
    %255 = vrot.lane.b32.xlu0 %v100, 122
    %v256 = vpop.permute.xlu0 %255
    %257 = vrot.lane.b32.xlu0 %v101, 122
    %v258 = vpop.permute.xlu0 %257
    %259 = vrot.lane.b32.xlu0 %v102, 122
    %v260 = vpop.permute.xlu0 %259
    %261 = vrot.lane.b32.xlu0 %v103, 122
    %v262 = vpop.permute.xlu0 %261
    %263 = vrot.lane.b32.xlu0 %v104, 122
    %v264 = vpop.permute.xlu0 %263
    %vm265 = vcmask 998400
    %v266 = vsel %vm265, %v256, %v258
    %v267 = vsel %vm265, %v258, %v260
    %v268 = vsel %vm265, %v260, %v262
    %v269 = vsel %vm265, %v262, %v264
    %v275 = vadd.f32 %v100, %v266
    %v276 = vadd.f32 %v101, %v267
    %v277 = vadd.f32 %v102, %v268
    %v278 = vadd.f32 %v103, %v269
    %v279 = vadd.f32 %v104, %v264
    %v280 = vld [vmem:[#allocation3 + $0x60] sm:$0xff]
    %v281 = vld [vmem:[#allocation3 + $0x68] sm:$0xff]
    %v282 = vld [vmem:[#allocation3 + $0x70] sm:$0xff]
    %v283 = vld [vmem:[#allocation3 + $0x78] sm:$0xff]
    %289 = vrot.lane.b32.xlu0 %v275, 99
    %v290 = vpop.permute.xlu0 %289
    %291 = vrot.lane.b32.xlu0 %v276, 99
    %v292 = vpop.permute.xlu0 %291
    %293 = vrot.lane.b32.xlu0 %v277, 99
    %v294 = vpop.permute.xlu0 %293
    %295 = vrot.lane.b32.xlu0 %v278, 99
    %v296 = vpop.permute.xlu0 %295
    %297 = vrot.lane.b32.xlu0 %v279, 99
    %v298 = vpop.permute.xlu0 %297
    %vm299 = vcmask 809984
    %v300 = vsel %vm299, %v290, %v292
    %v301 = vsel %vm299, %v292, %v294
    %v302 = vsel %vm299, %v294, %v296
    %v303 = vsel %vm299, %v296, %v298
    %v308 = vmul.f32 %v280, %v300
    %v309 = vmul.f32 %v281, %v301
    %v310 = vmul.f32 %v282, %v302
    %v311 = vmul.f32 %v283, %v303
    %v312 = vadd.f32 %v251, %v308
    %v313 = vadd.f32 %v252, %v309
    %v314 = vadd.f32 %v253, %v310
    %v315 = vadd.f32 %v254, %v311
    %316 = vrot.lane.b32.xlu0 %v100, 120
    %v317 = vpop.permute.xlu0 %316
    %318 = vrot.lane.b32.xlu0 %v101, 120
    %v319 = vpop.permute.xlu0 %318
    %320 = vrot.lane.b32.xlu0 %v102, 120
    %v321 = vpop.permute.xlu0 %320
    %322 = vrot.lane.b32.xlu0 %v103, 120
    %v323 = vpop.permute.xlu0 %322
    %324 = vrot.lane.b32.xlu0 %v104, 120
    %v325 = vpop.permute.xlu0 %324
    %vm326 = vcmask 982016
    %v327 = vsel %vm326, %v317, %v319
    %v328 = vsel %vm326, %v319, %v321
    %v329 = vsel %vm326, %v321, %v323
    %v330 = vsel %vm326, %v323, %v325
    %v336 = vadd.f32 %v100, %v327
    %v337 = vadd.f32 %v101, %v328
    %v338 = vadd.f32 %v102, %v329
    %v339 = vadd.f32 %v103, %v330
    %v340 = vadd.f32 %v104, %v325
    %v341 = vld [vmem:[#allocation3 + $0x80] sm:$0xff]
    %v342 = vld [vmem:[#allocation3 + $0x88] sm:$0xff]
    %v343 = vld [vmem:[#allocation3 + $0x90] sm:$0xff]
    %v344 = vld [vmem:[#allocation3 + $0x98] sm:$0xff]
    %350 = vrot.lane.b32.xlu0 %v336, 100
    %v351 = vpop.permute.xlu0 %350
    %352 = vrot.lane.b32.xlu0 %v337, 100
    %v353 = vpop.permute.xlu0 %352
    %354 = vrot.lane.b32.xlu0 %v338, 100
    %v355 = vpop.permute.xlu0 %354
    %356 = vrot.lane.b32.xlu0 %v339, 100
    %v357 = vpop.permute.xlu0 %356
    %358 = vrot.lane.b32.xlu0 %v340, 100
    %v359 = vpop.permute.xlu0 %358
    %vm360 = vcmask 818176
    %v361 = vsel %vm360, %v351, %v353
    %v362 = vsel %vm360, %v353, %v355
    %v363 = vsel %vm360, %v355, %v357
    %v364 = vsel %vm360, %v357, %v359
    %v369 = vmul.f32 %v341, %v361
    %v370 = vmul.f32 %v342, %v362
    %v371 = vmul.f32 %v343, %v363
    %v372 = vmul.f32 %v344, %v364
    %v373 = vadd.f32 %v312, %v369
    %v374 = vadd.f32 %v313, %v370
    %v375 = vadd.f32 %v314, %v371
    %v376 = vadd.f32 %v315, %v372
    %377 = vrot.lane.b32.xlu0 %v100, 118
    %v378 = vpop.permute.xlu0 %377
    %379 = vrot.lane.b32.xlu0 %v101, 118
    %v380 = vpop.permute.xlu0 %379
    %381 = vrot.lane.b32.xlu0 %v102, 118
    %v382 = vpop.permute.xlu0 %381
    %383 = vrot.lane.b32.xlu0 %v103, 118
    %v384 = vpop.permute.xlu0 %383
    %385 = vrot.lane.b32.xlu0 %v104, 118
    %v386 = vpop.permute.xlu0 %385
    %vm387 = vcmask 965632
    %v388 = vsel %vm387, %v378, %v380
    %v389 = vsel %vm387, %v380, %v382
    %v390 = vsel %vm387, %v382, %v384
    %v391 = vsel %vm387, %v384, %v386
    %v397 = vadd.f32 %v100, %v388
    %v398 = vadd.f32 %v101, %v389
    %v399 = vadd.f32 %v102, %v390
    %v400 = vadd.f32 %v103, %v391
    %v401 = vadd.f32 %v104, %v386
    %v402 = vld [vmem:[#allocation3 + $0xa0] sm:$0xff]
    %v403 = vld [vmem:[#allocation3 + $0xa8] sm:$0xff]
    %v404 = vld [vmem:[#allocation3 + $0xb0] sm:$0xff]
    %v405 = vld [vmem:[#allocation3 + $0xb8] sm:$0xff]
    %411 = vrot.lane.b32.xlu0 %v397, 101
    %v412 = vpop.permute.xlu0 %411
    %413 = vrot.lane.b32.xlu0 %v398, 101
    %v414 = vpop.permute.xlu0 %413
    %415 = vrot.lane.b32.xlu0 %v399, 101
    %v416 = vpop.permute.xlu0 %415
    %417 = vrot.lane.b32.xlu0 %v400, 101
    %v418 = vpop.permute.xlu0 %417
    %419 = vrot.lane.b32.xlu0 %v401, 101
    %v420 = vpop.permute.xlu0 %419
    %vm421 = vcmask 826368
    %v422 = vsel %vm421, %v412, %v414
    %v423 = vsel %vm421, %v414, %v416
    %v424 = vsel %vm421, %v416, %v418
    %v425 = vsel %vm421, %v418, %v420
    %v430 = vmul.f32 %v402, %v422
    %v431 = vmul.f32 %v403, %v423
    %v432 = vmul.f32 %v404, %v424
    %v433 = vmul.f32 %v405, %v425
    %v434 = vadd.f32 %v373, %v430
    %v435 = vadd.f32 %v374, %v431
    %v436 = vadd.f32 %v375, %v432
    %v437 = vadd.f32 %v376, %v433
    %438 = vrot.lane.b32.xlu0 %v100, 116
    %v439 = vpop.permute.xlu0 %438
    %440 = vrot.lane.b32.xlu0 %v101, 116
    %v441 = vpop.permute.xlu0 %440
    %442 = vrot.lane.b32.xlu0 %v102, 116
    %v443 = vpop.permute.xlu0 %442
    %444 = vrot.lane.b32.xlu0 %v103, 116
    %v445 = vpop.permute.xlu0 %444
    %446 = vrot.lane.b32.xlu0 %v104, 116
    %v447 = vpop.permute.xlu0 %446
    %vm448 = vcmask 949248
    %v449 = vsel %vm448, %v439, %v441
    %v450 = vsel %vm448, %v441, %v443
    %v451 = vsel %vm448, %v443, %v445
    %v452 = vsel %vm448, %v445, %v447
    %v458 = vadd.f32 %v100, %v449
    %v459 = vadd.f32 %v101, %v450
    %v460 = vadd.f32 %v102, %v451
    %v461 = vadd.f32 %v103, %v452
    %v462 = vadd.f32 %v104, %v447
    %v463 = vld [vmem:[#allocation3 + $0xc0] sm:$0xff]
    %v464 = vld [vmem:[#allocation3 + $0xc8] sm:$0xff]
    %v465 = vld [vmem:[#allocation3 + $0xd0] sm:$0xff]
    %v466 = vld [vmem:[#allocation3 + $0xd8] sm:$0xff]
    %472 = vrot.lane.b32.xlu0 %v458, 102
    %v473 = vpop.permute.xlu0 %472
    %474 = vrot.lane.b32.xlu0 %v459, 102
    %v475 = vpop.permute.xlu0 %474
    %476 = vrot.lane.b32.xlu0 %v460, 102
    %v477 = vpop.permute.xlu0 %476
    %478 = vrot.lane.b32.xlu0 %v461, 102
    %v479 = vpop.permute.xlu0 %478
    %480 = vrot.lane.b32.xlu0 %v462, 102
    %v481 = vpop.permute.xlu0 %480
    %vm482 = vcmask 834560
    %v483 = vsel %vm482, %v473, %v475
    %v484 = vsel %vm482, %v475, %v477
    %v485 = vsel %vm482, %v477, %v479
    %v486 = vsel %vm482, %v479, %v481
    %v491 = vmul.f32 %v463, %v483
    %v492 = vmul.f32 %v464, %v484
    %v493 = vmul.f32 %v465, %v485
    %v494 = vmul.f32 %v466, %v486
    %v495 = vadd.f32 %v434, %v491
    %v496 = vadd.f32 %v435, %v492
    %v497 = vadd.f32 %v436, %v493
    %v498 = vadd.f32 %v437, %v494
    %499 = vrot.lane.b32.xlu0 %v100, 114
    %v500 = vpop.permute.xlu0 %499
    %501 = vrot.lane.b32.xlu0 %v101, 114
    %v502 = vpop.permute.xlu0 %501
    %503 = vrot.lane.b32.xlu0 %v102, 114
    %v504 = vpop.permute.xlu0 %503
    %505 = vrot.lane.b32.xlu0 %v103, 114
    %v506 = vpop.permute.xlu0 %505
    %507 = vrot.lane.b32.xlu0 %v104, 114
    %v508 = vpop.permute.xlu0 %507
    %vm509 = vcmask 932864
    %v510 = vsel %vm509, %v500, %v502
    %v511 = vsel %vm509, %v502, %v504
    %v512 = vsel %vm509, %v504, %v506
    %v513 = vsel %vm509, %v506, %v508
    %v519 = vadd.f32 %v100, %v510
    %v520 = vadd.f32 %v101, %v511
    %v521 = vadd.f32 %v102, %v512
    %v522 = vadd.f32 %v103, %v513
    %v523 = vadd.f32 %v104, %v508
    %v524 = vld [vmem:[#allocation3 + $0xe0] sm:$0xff]
    %v525 = vld [vmem:[#allocation3 + $0xe8] sm:$0xff]
    %v526 = vld [vmem:[#allocation3 + $0xf0] sm:$0xff]
    %v527 = vld [vmem:[#allocation3 + $0xf8] sm:$0xff]
    %533 = vrot.lane.b32.xlu0 %v519, 103
    %v534 = vpop.permute.xlu0 %533
    %535 = vrot.lane.b32.xlu0 %v520, 103
    %v536 = vpop.permute.xlu0 %535
    %537 = vrot.lane.b32.xlu0 %v521, 103
    %v538 = vpop.permute.xlu0 %537
    %539 = vrot.lane.b32.xlu0 %v522, 103
    %v540 = vpop.permute.xlu0 %539
    %541 = vrot.lane.b32.xlu0 %v523, 103
    %v542 = vpop.permute.xlu0 %541
    %vm543 = vcmask 842752
    %v544 = vsel %vm543, %v534, %v536
    %v545 = vsel %vm543, %v536, %v538
    %v546 = vsel %vm543, %v538, %v540
    %v547 = vsel %vm543, %v540, %v542
    %v552 = vmul.f32 %v524, %v544
    %v553 = vmul.f32 %v525, %v545
    %v554 = vmul.f32 %v526, %v546
    %v555 = vmul.f32 %v527, %v547
    %v556 = vadd.f32 %v495, %v552
    %v557 = vadd.f32 %v496, %v553
    %v558 = vadd.f32 %v497, %v554
    %v559 = vadd.f32 %v498, %v555
    %560 = vrot.lane.b32.xlu0 %v100, 112
    %v561 = vpop.permute.xlu0 %560
    %562 = vrot.lane.b32.xlu0 %v101, 112
    %v563 = vpop.permute.xlu0 %562
    %564 = vrot.lane.b32.xlu0 %v102, 112
    %v565 = vpop.permute.xlu0 %564
    %566 = vrot.lane.b32.xlu0 %v103, 112
    %v567 = vpop.permute.xlu0 %566
    %568 = vrot.lane.b32.xlu0 %v104, 112
    %v569 = vpop.permute.xlu0 %568
    %vm570 = vcmask 916480
    %v571 = vsel %vm570, %v561, %v563
    %v572 = vsel %vm570, %v563, %v565
    %v573 = vsel %vm570, %v565, %v567
    %v574 = vsel %vm570, %v567, %v569
    %v580 = vadd.f32 %v100, %v571
    %v581 = vadd.f32 %v101, %v572
    %v582 = vadd.f32 %v102, %v573
    %v583 = vadd.f32 %v103, %v574
    %v584 = vadd.f32 %v104, %v569
    %v585 = vld [vmem:[#allocation3 + $0x100] sm:$0xff]
    %v586 = vld [vmem:[#allocation3 + $0x108] sm:$0xff]
    %v587 = vld [vmem:[#allocation3 + $0x110] sm:$0xff]
    %v588 = vld [vmem:[#allocation3 + $0x118] sm:$0xff]
    %594 = vrot.lane.b32.xlu0 %v580, 104
    %v595 = vpop.permute.xlu0 %594
    %596 = vrot.lane.b32.xlu0 %v581, 104
    %v597 = vpop.permute.xlu0 %596
    %598 = vrot.lane.b32.xlu0 %v582, 104
    %v599 = vpop.permute.xlu0 %598
    %600 = vrot.lane.b32.xlu0 %v583, 104
    %v601 = vpop.permute.xlu0 %600
    %602 = vrot.lane.b32.xlu0 %v584, 104
    %v603 = vpop.permute.xlu0 %602
    %vm604 = vcmask 850944
    %v605 = vsel %vm604, %v595, %v597
    %v606 = vsel %vm604, %v597, %v599
    %v607 = vsel %vm604, %v599, %v601
    %v608 = vsel %vm604, %v601, %v603
    %v613 = vmul.f32 %v585, %v605
    %v614 = vmul.f32 %v586, %v606
    %v615 = vmul.f32 %v587, %v607
    %v616 = vmul.f32 %v588, %v608
    %v617 = vadd.f32 %v556, %v613
    %v618 = vadd.f32 %v557, %v614
    %v619 = vadd.f32 %v558, %v615
    %v620 = vadd.f32 %v559, %v616
    %621 = vrot.lane.b32.xlu0 %v100, 110
    %v622 = vpop.permute.xlu0 %621
    %623 = vrot.lane.b32.xlu0 %v101, 110
    %v624 = vpop.permute.xlu0 %623
    %625 = vrot.lane.b32.xlu0 %v102, 110
    %v626 = vpop.permute.xlu0 %625
    %627 = vrot.lane.b32.xlu0 %v103, 110
    %v628 = vpop.permute.xlu0 %627
    %629 = vrot.lane.b32.xlu0 %v104, 110
    %v630 = vpop.permute.xlu0 %629
    %vm631 = vcmask 900096
    %v632 = vsel %vm631, %v622, %v624
    %v633 = vsel %vm631, %v624, %v626
    %v634 = vsel %vm631, %v626, %v628
    %v635 = vsel %vm631, %v628, %v630
    %v641 = vadd.f32 %v100, %v632
    %v642 = vadd.f32 %v101, %v633
    %v643 = vadd.f32 %v102, %v634
    %v644 = vadd.f32 %v103, %v635
    %v645 = vadd.f32 %v104, %v630
    %v646 = vld [vmem:[#allocation3 + $0x120] sm:$0xff]
    %v647 = vld [vmem:[#allocation3 + $0x128] sm:$0xff]
    %v648 = vld [vmem:[#allocation3 + $0x130] sm:$0xff]
    %v649 = vld [vmem:[#allocation3 + $0x138] sm:$0xff]
    %655 = vrot.lane.b32.xlu0 %v641, 105
    %v656 = vpop.permute.xlu0 %655
    %657 = vrot.lane.b32.xlu0 %v642, 105
    %v658 = vpop.permute.xlu0 %657
    %659 = vrot.lane.b32.xlu0 %v643, 105
    %v660 = vpop.permute.xlu0 %659
    %661 = vrot.lane.b32.xlu0 %v644, 105
    %v662 = vpop.permute.xlu0 %661
    %663 = vrot.lane.b32.xlu0 %v645, 105
    %v664 = vpop.permute.xlu0 %663
    %vm665 = vcmask 859136
    %v666 = vsel %vm665, %v656, %v658
    %v667 = vsel %vm665, %v658, %v660
    %v668 = vsel %vm665, %v660, %v662
    %v669 = vsel %vm665, %v662, %v664
    %v674 = vmul.f32 %v646, %v666
    %v675 = vmul.f32 %v647, %v667
    %v676 = vmul.f32 %v648, %v668
    %v677 = vmul.f32 %v649, %v669
    %v678 = vadd.f32 %v617, %v674
    %v679 = vadd.f32 %v618, %v675
    %v680 = vadd.f32 %v619, %v676
    %v681 = vadd.f32 %v620, %v677
    %682 = vrot.lane.b32.xlu0 %v100, 108
    %v683 = vpop.permute.xlu0 %682
    %684 = vrot.lane.b32.xlu0 %v101, 108
    %v685 = vpop.permute.xlu0 %684
    %686 = vrot.lane.b32.xlu0 %v102, 108
    %v687 = vpop.permute.xlu0 %686
    %688 = vrot.lane.b32.xlu0 %v103, 108
    %v689 = vpop.permute.xlu0 %688
    %690 = vrot.lane.b32.xlu0 %v104, 108
    %v691 = vpop.permute.xlu0 %690
    %vm692 = vcmask 883712
    %v693 = vsel %vm692, %v683, %v685
    %v694 = vsel %vm692, %v685, %v687
    %v695 = vsel %vm692, %v687, %v689
    %v696 = vsel %vm692, %v689, %v691
    %v702 = vadd.f32 %v100, %v693
    %v703 = vadd.f32 %v101, %v694
    %v704 = vadd.f32 %v102, %v695
    %v705 = vadd.f32 %v103, %v696
    %v706 = vadd.f32 %v104, %v691
    %v707 = vld [vmem:[#allocation3 + $0x140] sm:$0xff]
    %v708 = vld [vmem:[#allocation3 + $0x148] sm:$0xff]
    %v709 = vld [vmem:[#allocation3 + $0x150] sm:$0xff]
    %v710 = vld [vmem:[#allocation3 + $0x158] sm:$0xff]
    %716 = vrot.lane.b32.xlu0 %v702, 106
    %v717 = vpop.permute.xlu0 %716
    %718 = vrot.lane.b32.xlu0 %v703, 106
    %v719 = vpop.permute.xlu0 %718
    %720 = vrot.lane.b32.xlu0 %v704, 106
    %v721 = vpop.permute.xlu0 %720
    %722 = vrot.lane.b32.xlu0 %v705, 106
    %v723 = vpop.permute.xlu0 %722
    %724 = vrot.lane.b32.xlu0 %v706, 106
    %v725 = vpop.permute.xlu0 %724
    %vm726 = vcmask 867328
    %v727 = vsel %vm726, %v717, %v719
    %v728 = vsel %vm726, %v719, %v721
    %v729 = vsel %vm726, %v721, %v723
    %v730 = vsel %vm726, %v723, %v725
    %v735 = vmul.f32 %v707, %v727
    %v736 = vmul.f32 %v708, %v728
    %v737 = vmul.f32 %v709, %v729
    %v738 = vmul.f32 %v710, %v730
    %v739 = vadd.f32 %v678, %v735
    %v740 = vadd.f32 %v679, %v736
    %v741 = vadd.f32 %v680, %v737
    %v742 = vadd.f32 %v681, %v738
    %743 = vrot.lane.b32.xlu0 %v100, 106
    %v744 = vpop.permute.xlu0 %743
    %745 = vrot.lane.b32.xlu0 %v101, 106
    %v746 = vpop.permute.xlu0 %745
    %747 = vrot.lane.b32.xlu0 %v102, 106
    %v748 = vpop.permute.xlu0 %747
    %749 = vrot.lane.b32.xlu0 %v103, 106
    %v750 = vpop.permute.xlu0 %749
    %751 = vrot.lane.b32.xlu0 %v104, 106
    %v752 = vpop.permute.xlu0 %751
    %v753 = vsel %vm726, %v744, %v746
    %v754 = vsel %vm726, %v746, %v748
    %v755 = vsel %vm726, %v748, %v750
    %v756 = vsel %vm726, %v750, %v752
    %v762 = vadd.f32 %v100, %v753
    %v763 = vadd.f32 %v101, %v754
    %v764 = vadd.f32 %v102, %v755
    %v765 = vadd.f32 %v103, %v756
    %v766 = vadd.f32 %v104, %v752
    %v767 = vld [vmem:[#allocation3 + $0x160] sm:$0xff]
    %v768 = vld [vmem:[#allocation3 + $0x168] sm:$0xff]
    %v769 = vld [vmem:[#allocation3 + $0x170] sm:$0xff]
    %v770 = vld [vmem:[#allocation3 + $0x178] sm:$0xff]
    %776 = vrot.lane.b32.xlu0 %v762, 107
    %v777 = vpop.permute.xlu0 %776
    %778 = vrot.lane.b32.xlu0 %v763, 107
    %v779 = vpop.permute.xlu0 %778
    %780 = vrot.lane.b32.xlu0 %v764, 107
    %v781 = vpop.permute.xlu0 %780
    %782 = vrot.lane.b32.xlu0 %v765, 107
    %v783 = vpop.permute.xlu0 %782
    %784 = vrot.lane.b32.xlu0 %v766, 107
    %v785 = vpop.permute.xlu0 %784
    %vm786 = vcmask 875520
    %v787 = vsel %vm786, %v777, %v779
    %v788 = vsel %vm786, %v779, %v781
    %v789 = vsel %vm786, %v781, %v783
    %v790 = vsel %vm786, %v783, %v785
    %v795 = vmul.f32 %v767, %v787
    %v796 = vmul.f32 %v768, %v788
    %v797 = vmul.f32 %v769, %v789
    %v798 = vmul.f32 %v770, %v790
    %v799 = vadd.f32 %v739, %v795
    %v800 = vadd.f32 %v740, %v796
    %v801 = vadd.f32 %v741, %v797
    %v802 = vadd.f32 %v742, %v798
    %803 = vrot.lane.b32.xlu0 %v100, 104
    %v804 = vpop.permute.xlu0 %803
    %805 = vrot.lane.b32.xlu0 %v101, 104
    %v806 = vpop.permute.xlu0 %805
    %807 = vrot.lane.b32.xlu0 %v102, 104
    %v808 = vpop.permute.xlu0 %807
    %809 = vrot.lane.b32.xlu0 %v103, 104
    %v810 = vpop.permute.xlu0 %809
    %811 = vrot.lane.b32.xlu0 %v104, 104
    %v812 = vpop.permute.xlu0 %811
    %v813 = vsel %vm604, %v804, %v806
    %v814 = vsel %vm604, %v806, %v808
    %v815 = vsel %vm604, %v808, %v810
    %v816 = vsel %vm604, %v810, %v812
    %v822 = vadd.f32 %v100, %v813
    %v823 = vadd.f32 %v101, %v814
    %v824 = vadd.f32 %v102, %v815
    %v825 = vadd.f32 %v103, %v816
    %v826 = vadd.f32 %v104, %v812
    %v827 = vld [vmem:[#allocation3 + $0x180] sm:$0xff]
    %v828 = vld [vmem:[#allocation3 + $0x188] sm:$0xff]
    %v829 = vld [vmem:[#allocation3 + $0x190] sm:$0xff]
    %v830 = vld [vmem:[#allocation3 + $0x198] sm:$0xff]
    %836 = vrot.lane.b32.xlu0 %v822, 108
    %v837 = vpop.permute.xlu0 %836
    %838 = vrot.lane.b32.xlu0 %v823, 108
    %v839 = vpop.permute.xlu0 %838
    %840 = vrot.lane.b32.xlu0 %v824, 108
    %v841 = vpop.permute.xlu0 %840
    %842 = vrot.lane.b32.xlu0 %v825, 108
    %v843 = vpop.permute.xlu0 %842
    %844 = vrot.lane.b32.xlu0 %v826, 108
    %v845 = vpop.permute.xlu0 %844
    %v846 = vsel %vm692, %v837, %v839
    %v847 = vsel %vm692, %v839, %v841
    %v848 = vsel %vm692, %v841, %v843
    %v849 = vsel %vm692, %v843, %v845
    %v854 = vmul.f32 %v827, %v846
    %v855 = vmul.f32 %v828, %v847
    %v856 = vmul.f32 %v829, %v848
    %v857 = vmul.f32 %v830, %v849
    %v858 = vadd.f32 %v799, %v854
    %v859 = vadd.f32 %v800, %v855
    %v860 = vadd.f32 %v801, %v856
    %v861 = vadd.f32 %v802, %v857
    %862 = vrot.lane.b32.xlu0 %v100, 102
    %v863 = vpop.permute.xlu0 %862
    %864 = vrot.lane.b32.xlu0 %v101, 102
    %v865 = vpop.permute.xlu0 %864
    %866 = vrot.lane.b32.xlu0 %v102, 102
    %v867 = vpop.permute.xlu0 %866
    %868 = vrot.lane.b32.xlu0 %v103, 102
    %v869 = vpop.permute.xlu0 %868
    %870 = vrot.lane.b32.xlu0 %v104, 102
    %v871 = vpop.permute.xlu0 %870
    %v872 = vsel %vm482, %v863, %v865
    %v873 = vsel %vm482, %v865, %v867
    %v874 = vsel %vm482, %v867, %v869
    %v875 = vsel %vm482, %v869, %v871
    %v881 = vadd.f32 %v100, %v872
    %v882 = vadd.f32 %v101, %v873
    %v883 = vadd.f32 %v102, %v874
    %v884 = vadd.f32 %v103, %v875
    %v885 = vadd.f32 %v104, %v871
    %v886 = vld [vmem:[#allocation3 + $0x1a0] sm:$0xff]
    %v887 = vld [vmem:[#allocation3 + $0x1a8] sm:$0xff]
    %v888 = vld [vmem:[#allocation3 + $0x1b0] sm:$0xff]
    %v889 = vld [vmem:[#allocation3 + $0x1b8] sm:$0xff]
    %895 = vrot.lane.b32.xlu0 %v881, 109
    %v896 = vpop.permute.xlu0 %895
    %897 = vrot.lane.b32.xlu0 %v882, 109
    %v898 = vpop.permute.xlu0 %897
    %899 = vrot.lane.b32.xlu0 %v883, 109
    %v900 = vpop.permute.xlu0 %899
    %901 = vrot.lane.b32.xlu0 %v884, 109
    %v902 = vpop.permute.xlu0 %901
    %903 = vrot.lane.b32.xlu0 %v885, 109
    %v904 = vpop.permute.xlu0 %903
    %vm905 = vcmask 891904
    %v906 = vsel %vm905, %v896, %v898
    %v907 = vsel %vm905, %v898, %v900
    %v908 = vsel %vm905, %v900, %v902
    %v909 = vsel %vm905, %v902, %v904
    %v914 = vmul.f32 %v886, %v906
    %v915 = vmul.f32 %v887, %v907
    %v916 = vmul.f32 %v888, %v908
    %v917 = vmul.f32 %v889, %v909
    %v918 = vadd.f32 %v858, %v914
    %v919 = vadd.f32 %v859, %v915
    %v920 = vadd.f32 %v860, %v916
    %v921 = vadd.f32 %v861, %v917
    %922 = vrot.lane.b32.xlu0 %v100, 100
    %v923 = vpop.permute.xlu0 %922
    %924 = vrot.lane.b32.xlu0 %v101, 100
    %v925 = vpop.permute.xlu0 %924
    %926 = vrot.lane.b32.xlu0 %v102, 100
    %v927 = vpop.permute.xlu0 %926
    %928 = vrot.lane.b32.xlu0 %v103, 100
    %v929 = vpop.permute.xlu0 %928
    %930 = vrot.lane.b32.xlu0 %v104, 100
    %v931 = vpop.permute.xlu0 %930
    %v932 = vsel %vm360, %v923, %v925
    %v933 = vsel %vm360, %v925, %v927
    %v934 = vsel %vm360, %v927, %v929
    %v935 = vsel %vm360, %v929, %v931
    %v941 = vadd.f32 %v100, %v932
    %v942 = vadd.f32 %v101, %v933
    %v943 = vadd.f32 %v102, %v934
    %v944 = vadd.f32 %v103, %v935
    %v945 = vadd.f32 %v104, %v931
    %v946 = vld [vmem:[#allocation3 + $0x1c0] sm:$0xff]
    %v947 = vld [vmem:[#allocation3 + $0x1c8] sm:$0xff]
    %v948 = vld [vmem:[#allocation3 + $0x1d0] sm:$0xff]
    %v949 = vld [vmem:[#allocation3 + $0x1d8] sm:$0xff]
    %955 = vrot.lane.b32.xlu0 %v941, 110
    %v956 = vpop.permute.xlu0 %955
    %957 = vrot.lane.b32.xlu0 %v942, 110
    %v958 = vpop.permute.xlu0 %957
    %959 = vrot.lane.b32.xlu0 %v943, 110
    %v960 = vpop.permute.xlu0 %959
    %961 = vrot.lane.b32.xlu0 %v944, 110
    %v962 = vpop.permute.xlu0 %961
    %963 = vrot.lane.b32.xlu0 %v945, 110
    %v964 = vpop.permute.xlu0 %963
    %v965 = vsel %vm631, %v956, %v958
    %v966 = vsel %vm631, %v958, %v960
    %v967 = vsel %vm631, %v960, %v962
    %v968 = vsel %vm631, %v962, %v964
    %v973 = vmul.f32 %v946, %v965
    %v974 = vmul.f32 %v947, %v966
    %v975 = vmul.f32 %v948, %v967
    %v976 = vmul.f32 %v949, %v968
    %v977 = vadd.f32 %v918, %v973
    %v978 = vadd.f32 %v919, %v974
    %v979 = vadd.f32 %v920, %v975
    %v980 = vadd.f32 %v921, %v976
    %981 = vrot.lane.b32.xlu0 %v100, 98
    %v982 = vpop.permute.xlu0 %981
    %983 = vrot.lane.b32.xlu0 %v101, 98
    %v984 = vpop.permute.xlu0 %983
    %985 = vrot.lane.b32.xlu0 %v102, 98
    %v986 = vpop.permute.xlu0 %985
    %987 = vrot.lane.b32.xlu0 %v103, 98
    %v988 = vpop.permute.xlu0 %987
    %989 = vrot.lane.b32.xlu0 %v104, 98
    %v990 = vpop.permute.xlu0 %989
    %v991 = vsel %vm238, %v982, %v984
    %v992 = vsel %vm238, %v984, %v986
    %v993 = vsel %vm238, %v986, %v988
    %v994 = vsel %vm238, %v988, %v990
    %v1000 = vadd.f32 %v100, %v991
    %v1001 = vadd.f32 %v101, %v992
    %v1002 = vadd.f32 %v102, %v993
    %v1003 = vadd.f32 %v103, %v994
    %v1004 = vadd.f32 %v104, %v990
    %v1005 = vld [vmem:[#allocation3 + $0x1e0] sm:$0xff]
    %v1006 = vld [vmem:[#allocation3 + $0x1e8] sm:$0xff]
    %v1007 = vld [vmem:[#allocation3 + $0x1f0] sm:$0xff]
    %v1008 = vld [vmem:[#allocation3 + $0x1f8] sm:$0xff]
    %1014 = vrot.lane.b32.xlu0 %v1000, 111
    %v1015 = vpop.permute.xlu0 %1014
    %1016 = vrot.lane.b32.xlu0 %v1001, 111
    %v1017 = vpop.permute.xlu0 %1016
    %1018 = vrot.lane.b32.xlu0 %v1002, 111
    %v1019 = vpop.permute.xlu0 %1018
    %1020 = vrot.lane.b32.xlu0 %v1003, 111
    %v1021 = vpop.permute.xlu0 %1020
    %1022 = vrot.lane.b32.xlu0 %v1004, 111
    %v1023 = vpop.permute.xlu0 %1022
    %vm1024 = vcmask 908288
    %v1025 = vsel %vm1024, %v1015, %v1017
    %v1026 = vsel %vm1024, %v1017, %v1019
    %v1027 = vsel %vm1024, %v1019, %v1021
    %v1028 = vsel %vm1024, %v1021, %v1023
    %v1033 = vmul.f32 %v1005, %v1025
    %v1034 = vmul.f32 %v1006, %v1026
    %v1035 = vmul.f32 %v1007, %v1027
    %v1036 = vmul.f32 %v1008, %v1028
    %v1037 = vadd.f32 %v977, %v1033
    %v1038 = vadd.f32 %v978, %v1034
    %v1039 = vadd.f32 %v979, %v1035
    %v1040 = vadd.f32 %v980, %v1036
    %v1042 = vadd.f32 %v100, %v121
    %v1043 = vadd.f32 %v101, %v122
    %v1044 = vadd.f32 %v102, %v123
    %v1045 = vadd.f32 %v103, %v124
    %v1046 = vadd.f32 %v104, %v119
    %v1047 = vld [vmem:[#allocation3 + $0x200] sm:$0xff]
    %v1048 = vld [vmem:[#allocation3 + $0x208] sm:$0xff]
    %v1049 = vld [vmem:[#allocation3 + $0x210] sm:$0xff]
    %v1050 = vld [vmem:[#allocation3 + $0x218] sm:$0xff]
    %1056 = vrot.lane.b32.xlu0 %v1042, 112
    %v1057 = vpop.permute.xlu0 %1056
    %1058 = vrot.lane.b32.xlu0 %v1043, 112
    %v1059 = vpop.permute.xlu0 %1058
    %1060 = vrot.lane.b32.xlu0 %v1044, 112
    %v1061 = vpop.permute.xlu0 %1060
    %1062 = vrot.lane.b32.xlu0 %v1045, 112
    %v1063 = vpop.permute.xlu0 %1062
    %1064 = vrot.lane.b32.xlu0 %v1046, 112
    %v1065 = vpop.permute.xlu0 %1064
    %v1066 = vsel %vm570, %v1057, %v1059
    %v1067 = vsel %vm570, %v1059, %v1061
    %v1068 = vsel %vm570, %v1061, %v1063
    %v1069 = vsel %vm570, %v1063, %v1065
    %v1074 = vmul.f32 %v1047, %v1066
    %v1075 = vmul.f32 %v1048, %v1067
    %v1076 = vmul.f32 %v1049, %v1068
    %v1077 = vmul.f32 %v1050, %v1069
    %v1078 = vadd.f32 %v1037, %v1074
    %v1079 = vadd.f32 %v1038, %v1075
    %v1080 = vadd.f32 %v1039, %v1076
    %v1081 = vadd.f32 %v1040, %v1077
    %1082 = vrot.lane.b32.xlu0 %v100, 94
    %v1083 = vpop.permute.xlu0 %1082
    %1084 = vrot.lane.b32.xlu0 %v101, 94
    %v1085 = vpop.permute.xlu0 %1084
    %1086 = vrot.lane.b32.xlu0 %v102, 94
    %v1087 = vpop.permute.xlu0 %1086
    %1088 = vrot.lane.b32.xlu0 %v103, 94
    %v1089 = vpop.permute.xlu0 %1088
    %1090 = vrot.lane.b32.xlu0 %v104, 94
    %v1091 = vpop.permute.xlu0 %1090
    %vm1092 = vcmask 769024
    %v1093 = vsel %vm1092, %v1083, %v1085
    %v1094 = vsel %vm1092, %v1085, %v1087
    %v1095 = vsel %vm1092, %v1087, %v1089
    %v1096 = vsel %vm1092, %v1089, %v1091
    %v1102 = vadd.f32 %v100, %v1093
    %v1103 = vadd.f32 %v101, %v1094
    %v1104 = vadd.f32 %v102, %v1095
    %v1105 = vadd.f32 %v103, %v1096
    %v1106 = vadd.f32 %v104, %v1091
    %v1107 = vld [vmem:[#allocation3 + $0x220] sm:$0xff]
    %v1108 = vld [vmem:[#allocation3 + $0x228] sm:$0xff]
    %v1109 = vld [vmem:[#allocation3 + $0x230] sm:$0xff]
    %v1110 = vld [vmem:[#allocation3 + $0x238] sm:$0xff]
    %1116 = vrot.lane.b32.xlu0 %v1102, 113
    %v1117 = vpop.permute.xlu0 %1116
    %1118 = vrot.lane.b32.xlu0 %v1103, 113
    %v1119 = vpop.permute.xlu0 %1118
    %1120 = vrot.lane.b32.xlu0 %v1104, 113
    %v1121 = vpop.permute.xlu0 %1120
    %1122 = vrot.lane.b32.xlu0 %v1105, 113
    %v1123 = vpop.permute.xlu0 %1122
    %1124 = vrot.lane.b32.xlu0 %v1106, 113
    %v1125 = vpop.permute.xlu0 %1124
    %vm1126 = vcmask 924672
    %v1127 = vsel %vm1126, %v1117, %v1119
    %v1128 = vsel %vm1126, %v1119, %v1121
    %v1129 = vsel %vm1126, %v1121, %v1123
    %v1130 = vsel %vm1126, %v1123, %v1125
    %v1135 = vmul.f32 %v1107, %v1127
    %v1136 = vmul.f32 %v1108, %v1128
    %v1137 = vmul.f32 %v1109, %v1129
    %v1138 = vmul.f32 %v1110, %v1130
    %v1139 = vadd.f32 %v1078, %v1135
    %v1140 = vadd.f32 %v1079, %v1136
    %v1141 = vadd.f32 %v1080, %v1137
    %v1142 = vadd.f32 %v1081, %v1138
    %1143 = vrot.lane.b32.xlu0 %v100, 92
    %v1144 = vpop.permute.xlu0 %1143
    %1145 = vrot.lane.b32.xlu0 %v101, 92
    %v1146 = vpop.permute.xlu0 %1145
    %1147 = vrot.lane.b32.xlu0 %v102, 92
    %v1148 = vpop.permute.xlu0 %1147
    %1149 = vrot.lane.b32.xlu0 %v103, 92
    %v1150 = vpop.permute.xlu0 %1149
    %1151 = vrot.lane.b32.xlu0 %v104, 92
    %v1152 = vpop.permute.xlu0 %1151
    %vm1153 = vcmask 752640
    %v1154 = vsel %vm1153, %v1144, %v1146
    %v1155 = vsel %vm1153, %v1146, %v1148
    %v1156 = vsel %vm1153, %v1148, %v1150
    %v1157 = vsel %vm1153, %v1150, %v1152
    %v1163 = vadd.f32 %v100, %v1154
    %v1164 = vadd.f32 %v101, %v1155
    %v1165 = vadd.f32 %v102, %v1156
    %v1166 = vadd.f32 %v103, %v1157
    %v1167 = vadd.f32 %v104, %v1152
    %v1168 = vld [vmem:[#allocation3 + $0x240] sm:$0xff]
    %v1169 = vld [vmem:[#allocation3 + $0x248] sm:$0xff]
    %v1170 = vld [vmem:[#allocation3 + $0x250] sm:$0xff]
    %v1171 = vld [vmem:[#allocation3 + $0x258] sm:$0xff]
    %1177 = vrot.lane.b32.xlu0 %v1163, 114
    %v1178 = vpop.permute.xlu0 %1177
    %1179 = vrot.lane.b32.xlu0 %v1164, 114
    %v1180 = vpop.permute.xlu0 %1179
    %1181 = vrot.lane.b32.xlu0 %v1165, 114
    %v1182 = vpop.permute.xlu0 %1181
    %1183 = vrot.lane.b32.xlu0 %v1166, 114
    %v1184 = vpop.permute.xlu0 %1183
    %1185 = vrot.lane.b32.xlu0 %v1167, 114
    %v1186 = vpop.permute.xlu0 %1185
    %v1187 = vsel %vm509, %v1178, %v1180
    %v1188 = vsel %vm509, %v1180, %v1182
    %v1189 = vsel %vm509, %v1182, %v1184
    %v1190 = vsel %vm509, %v1184, %v1186
    %v1195 = vmul.f32 %v1168, %v1187
    %v1196 = vmul.f32 %v1169, %v1188
    %v1197 = vmul.f32 %v1170, %v1189
    %v1198 = vmul.f32 %v1171, %v1190
    %v1199 = vadd.f32 %v1139, %v1195
    %v1200 = vadd.f32 %v1140, %v1196
    %v1201 = vadd.f32 %v1141, %v1197
    %v1202 = vadd.f32 %v1142, %v1198
    %1203 = vrot.lane.b32.xlu0 %v100, 90
    %v1204 = vpop.permute.xlu0 %1203
    %1205 = vrot.lane.b32.xlu0 %v101, 90
    %v1206 = vpop.permute.xlu0 %1205
    %1207 = vrot.lane.b32.xlu0 %v102, 90
    %v1208 = vpop.permute.xlu0 %1207
    %1209 = vrot.lane.b32.xlu0 %v103, 90
    %v1210 = vpop.permute.xlu0 %1209
    %1211 = vrot.lane.b32.xlu0 %v104, 90
    %v1212 = vpop.permute.xlu0 %1211
    %vm1213 = vcmask 736256
    %v1214 = vsel %vm1213, %v1204, %v1206
    %v1215 = vsel %vm1213, %v1206, %v1208
    %v1216 = vsel %vm1213, %v1208, %v1210
    %v1217 = vsel %vm1213, %v1210, %v1212
    %v1223 = vadd.f32 %v100, %v1214
    %v1224 = vadd.f32 %v101, %v1215
    %v1225 = vadd.f32 %v102, %v1216
    %v1226 = vadd.f32 %v103, %v1217
    %v1227 = vadd.f32 %v104, %v1212
    %v1228 = vld [vmem:[#allocation3 + $0x260] sm:$0xff]
    %v1229 = vld [vmem:[#allocation3 + $0x268] sm:$0xff]
    %v1230 = vld [vmem:[#allocation3 + $0x270] sm:$0xff]
    %v1231 = vld [vmem:[#allocation3 + $0x278] sm:$0xff]
    %1237 = vrot.lane.b32.xlu0 %v1223, 115
    %v1238 = vpop.permute.xlu0 %1237
    %1239 = vrot.lane.b32.xlu0 %v1224, 115
    %v1240 = vpop.permute.xlu0 %1239
    %1241 = vrot.lane.b32.xlu0 %v1225, 115
    %v1242 = vpop.permute.xlu0 %1241
    %1243 = vrot.lane.b32.xlu0 %v1226, 115
    %v1244 = vpop.permute.xlu0 %1243
    %1245 = vrot.lane.b32.xlu0 %v1227, 115
    %v1246 = vpop.permute.xlu0 %1245
    %vm1247 = vcmask 941056
    %v1248 = vsel %vm1247, %v1238, %v1240
    %v1249 = vsel %vm1247, %v1240, %v1242
    %v1250 = vsel %vm1247, %v1242, %v1244
    %v1251 = vsel %vm1247, %v1244, %v1246
    %v1256 = vmul.f32 %v1228, %v1248
    %v1257 = vmul.f32 %v1229, %v1249
    %v1258 = vmul.f32 %v1230, %v1250
    %v1259 = vmul.f32 %v1231, %v1251
    %v1260 = vadd.f32 %v1199, %v1256
    %v1261 = vadd.f32 %v1200, %v1257
    %v1262 = vadd.f32 %v1201, %v1258
    %v1263 = vadd.f32 %v1202, %v1259
    %1264 = vrot.lane.b32.xlu0 %v100, 88
    %v1265 = vpop.permute.xlu0 %1264
    %1266 = vrot.lane.b32.xlu0 %v101, 88
    %v1267 = vpop.permute.xlu0 %1266
    %1268 = vrot.lane.b32.xlu0 %v102, 88
    %v1269 = vpop.permute.xlu0 %1268
    %1270 = vrot.lane.b32.xlu0 %v103, 88
    %v1271 = vpop.permute.xlu0 %1270
    %1272 = vrot.lane.b32.xlu0 %v104, 88
    %v1273 = vpop.permute.xlu0 %1272
    %vm1274 = vcmask 719872
    %v1275 = vsel %vm1274, %v1265, %v1267
    %v1276 = vsel %vm1274, %v1267, %v1269
    %v1277 = vsel %vm1274, %v1269, %v1271
    %v1278 = vsel %vm1274, %v1271, %v1273
    %v1284 = vadd.f32 %v100, %v1275
    %v1285 = vadd.f32 %v101, %v1276
    %v1286 = vadd.f32 %v102, %v1277
    %v1287 = vadd.f32 %v103, %v1278
    %v1288 = vadd.f32 %v104, %v1273
    %v1289 = vld [vmem:[#allocation3 + $0x280] sm:$0xff]
    %v1290 = vld [vmem:[#allocation3 + $0x288] sm:$0xff]
    %v1291 = vld [vmem:[#allocation3 + $0x290] sm:$0xff]
    %v1292 = vld [vmem:[#allocation3 + $0x298] sm:$0xff]
    %1298 = vrot.lane.b32.xlu0 %v1284, 116
    %v1299 = vpop.permute.xlu0 %1298
    %1300 = vrot.lane.b32.xlu0 %v1285, 116
    %v1301 = vpop.permute.xlu0 %1300
    %1302 = vrot.lane.b32.xlu0 %v1286, 116
    %v1303 = vpop.permute.xlu0 %1302
    %1304 = vrot.lane.b32.xlu0 %v1287, 116
    %v1305 = vpop.permute.xlu0 %1304
    %1306 = vrot.lane.b32.xlu0 %v1288, 116
    %v1307 = vpop.permute.xlu0 %1306
    %v1308 = vsel %vm448, %v1299, %v1301
    %v1309 = vsel %vm448, %v1301, %v1303
    %v1310 = vsel %vm448, %v1303, %v1305
    %v1311 = vsel %vm448, %v1305, %v1307
    %v1316 = vmul.f32 %v1289, %v1308
    %v1317 = vmul.f32 %v1290, %v1309
    %v1318 = vmul.f32 %v1291, %v1310
    %v1319 = vmul.f32 %v1292, %v1311
    %v1320 = vadd.f32 %v1260, %v1316
    %v1321 = vadd.f32 %v1261, %v1317
    %v1322 = vadd.f32 %v1262, %v1318
    %v1323 = vadd.f32 %v1263, %v1319
    %1324 = vrot.lane.b32.xlu0 %v100, 86
    %v1325 = vpop.permute.xlu0 %1324
    %1326 = vrot.lane.b32.xlu0 %v101, 86
    %v1327 = vpop.permute.xlu0 %1326
    %1328 = vrot.lane.b32.xlu0 %v102, 86
    %v1329 = vpop.permute.xlu0 %1328
    %1330 = vrot.lane.b32.xlu0 %v103, 86
    %v1331 = vpop.permute.xlu0 %1330
    %1332 = vrot.lane.b32.xlu0 %v104, 86
    %v1333 = vpop.permute.xlu0 %1332
    %vm1334 = vcmask 703488
    %v1335 = vsel %vm1334, %v1325, %v1327
    %v1336 = vsel %vm1334, %v1327, %v1329
    %v1337 = vsel %vm1334, %v1329, %v1331
    %v1338 = vsel %vm1334, %v1331, %v1333
    %v1344 = vadd.f32 %v100, %v1335
    %v1345 = vadd.f32 %v101, %v1336
    %v1346 = vadd.f32 %v102, %v1337
    %v1347 = vadd.f32 %v103, %v1338
    %v1348 = vadd.f32 %v104, %v1333
    %v1349 = vld [vmem:[#allocation3 + $0x2a0] sm:$0xff]
    %v1350 = vld [vmem:[#allocation3 + $0x2a8] sm:$0xff]
    %v1351 = vld [vmem:[#allocation3 + $0x2b0] sm:$0xff]
    %v1352 = vld [vmem:[#allocation3 + $0x2b8] sm:$0xff]
    %1358 = vrot.lane.b32.xlu0 %v1344, 117
    %v1359 = vpop.permute.xlu0 %1358
    %1360 = vrot.lane.b32.xlu0 %v1345, 117
    %v1361 = vpop.permute.xlu0 %1360
    %1362 = vrot.lane.b32.xlu0 %v1346, 117
    %v1363 = vpop.permute.xlu0 %1362
    %1364 = vrot.lane.b32.xlu0 %v1347, 117
    %v1365 = vpop.permute.xlu0 %1364
    %1366 = vrot.lane.b32.xlu0 %v1348, 117
    %v1367 = vpop.permute.xlu0 %1366
    %vm1368 = vcmask 957440
    %v1369 = vsel %vm1368, %v1359, %v1361
    %v1370 = vsel %vm1368, %v1361, %v1363
    %v1371 = vsel %vm1368, %v1363, %v1365
    %v1372 = vsel %vm1368, %v1365, %v1367
    %v1377 = vmul.f32 %v1349, %v1369
    %v1378 = vmul.f32 %v1350, %v1370
    %v1379 = vmul.f32 %v1351, %v1371
    %v1380 = vmul.f32 %v1352, %v1372
    %v1381 = vadd.f32 %v1320, %v1377
    %v1382 = vadd.f32 %v1321, %v1378
    %v1383 = vadd.f32 %v1322, %v1379
    %v1384 = vadd.f32 %v1323, %v1380
    %1385 = vrot.lane.b32.xlu0 %v100, 84
    %v1386 = vpop.permute.xlu0 %1385
    %1387 = vrot.lane.b32.xlu0 %v101, 84
    %v1388 = vpop.permute.xlu0 %1387
    %1389 = vrot.lane.b32.xlu0 %v102, 84
    %v1390 = vpop.permute.xlu0 %1389
    %1391 = vrot.lane.b32.xlu0 %v103, 84
    %v1392 = vpop.permute.xlu0 %1391
    %1393 = vrot.lane.b32.xlu0 %v104, 84
    %v1394 = vpop.permute.xlu0 %1393
    %vm1395 = vcmask 687104
    %v1396 = vsel %vm1395, %v1386, %v1388
    %v1397 = vsel %vm1395, %v1388, %v1390
    %v1398 = vsel %vm1395, %v1390, %v1392
    %v1399 = vsel %vm1395, %v1392, %v1394
    %v1405 = vadd.f32 %v100, %v1396
    %v1406 = vadd.f32 %v101, %v1397
    %v1407 = vadd.f32 %v102, %v1398
    %v1408 = vadd.f32 %v103, %v1399
    %v1409 = vadd.f32 %v104, %v1394
    %v1410 = vld [vmem:[#allocation3 + $0x2c0] sm:$0xff]
    %v1411 = vld [vmem:[#allocation3 + $0x2c8] sm:$0xff]
    %v1412 = vld [vmem:[#allocation3 + $0x2d0] sm:$0xff]
    %v1413 = vld [vmem:[#allocation3 + $0x2d8] sm:$0xff]
    %1419 = vrot.lane.b32.xlu0 %v1405, 118
    %v1420 = vpop.permute.xlu0 %1419
    %1421 = vrot.lane.b32.xlu0 %v1406, 118
    %v1422 = vpop.permute.xlu0 %1421
    %1423 = vrot.lane.b32.xlu0 %v1407, 118
    %v1424 = vpop.permute.xlu0 %1423
    %1425 = vrot.lane.b32.xlu0 %v1408, 118
    %v1426 = vpop.permute.xlu0 %1425
    %1427 = vrot.lane.b32.xlu0 %v1409, 118
    %v1428 = vpop.permute.xlu0 %1427
    %v1429 = vsel %vm387, %v1420, %v1422
    %v1430 = vsel %vm387, %v1422, %v1424
    %v1431 = vsel %vm387, %v1424, %v1426
    %v1432 = vsel %vm387, %v1426, %v1428
    %v1437 = vmul.f32 %v1410, %v1429
    %v1438 = vmul.f32 %v1411, %v1430
    %v1439 = vmul.f32 %v1412, %v1431
    %v1440 = vmul.f32 %v1413, %v1432
    %v1441 = vadd.f32 %v1381, %v1437
    %v1442 = vadd.f32 %v1382, %v1438
    %v1443 = vadd.f32 %v1383, %v1439
    %v1444 = vadd.f32 %v1384, %v1440
    %1445 = vrot.lane.b32.xlu0 %v100, 82
    %v1446 = vpop.permute.xlu0 %1445
    %1447 = vrot.lane.b32.xlu0 %v101, 82
    %v1448 = vpop.permute.xlu0 %1447
    %1449 = vrot.lane.b32.xlu0 %v102, 82
    %v1450 = vpop.permute.xlu0 %1449
    %1451 = vrot.lane.b32.xlu0 %v103, 82
    %v1452 = vpop.permute.xlu0 %1451
    %1453 = vrot.lane.b32.xlu0 %v104, 82
    %v1454 = vpop.permute.xlu0 %1453
    %vm1455 = vcmask 670720
    %v1456 = vsel %vm1455, %v1446, %v1448
    %v1457 = vsel %vm1455, %v1448, %v1450
    %v1458 = vsel %vm1455, %v1450, %v1452
    %v1459 = vsel %vm1455, %v1452, %v1454
    %v1465 = vadd.f32 %v100, %v1456
    %v1466 = vadd.f32 %v101, %v1457
    %v1467 = vadd.f32 %v102, %v1458
    %v1468 = vadd.f32 %v103, %v1459
    %v1469 = vadd.f32 %v104, %v1454
    %v1470 = vld [vmem:[#allocation3 + $0x2e0] sm:$0xff]
    %v1471 = vld [vmem:[#allocation3 + $0x2e8] sm:$0xff]
    %v1472 = vld [vmem:[#allocation3 + $0x2f0] sm:$0xff]
    %v1473 = vld [vmem:[#allocation3 + $0x2f8] sm:$0xff]
    %1479 = vrot.lane.b32.xlu0 %v1465, 119
    %v1480 = vpop.permute.xlu0 %1479
    %1481 = vrot.lane.b32.xlu0 %v1466, 119
    %v1482 = vpop.permute.xlu0 %1481
    %1483 = vrot.lane.b32.xlu0 %v1467, 119
    %v1484 = vpop.permute.xlu0 %1483
    %1485 = vrot.lane.b32.xlu0 %v1468, 119
    %v1486 = vpop.permute.xlu0 %1485
    %1487 = vrot.lane.b32.xlu0 %v1469, 119
    %v1488 = vpop.permute.xlu0 %1487
    %vm1489 = vcmask 973824
    %v1490 = vsel %vm1489, %v1480, %v1482
    %v1491 = vsel %vm1489, %v1482, %v1484
    %v1492 = vsel %vm1489, %v1484, %v1486
    %v1493 = vsel %vm1489, %v1486, %v1488
    %v1498 = vmul.f32 %v1470, %v1490
    %v1499 = vmul.f32 %v1471, %v1491
    %v1500 = vmul.f32 %v1472, %v1492
    %v1501 = vmul.f32 %v1473, %v1493
    %v1502 = vadd.f32 %v1441, %v1498
    %v1503 = vadd.f32 %v1442, %v1499
    %v1504 = vadd.f32 %v1443, %v1500
    %v1505 = vadd.f32 %v1444, %v1501
    %1506 = vrot.lane.b32.xlu0 %v100, 80
    %v1507 = vpop.permute.xlu0 %1506
    %1508 = vrot.lane.b32.xlu0 %v101, 80
    %v1509 = vpop.permute.xlu0 %1508
    %1510 = vrot.lane.b32.xlu0 %v102, 80
    %v1511 = vpop.permute.xlu0 %1510
    %1512 = vrot.lane.b32.xlu0 %v103, 80
    %v1513 = vpop.permute.xlu0 %1512
    %1514 = vrot.lane.b32.xlu0 %v104, 80
    %v1515 = vpop.permute.xlu0 %1514
    %vm1516 = vcmask 654336
    %v1517 = vsel %vm1516, %v1507, %v1509
    %v1518 = vsel %vm1516, %v1509, %v1511
    %v1519 = vsel %vm1516, %v1511, %v1513
    %v1520 = vsel %vm1516, %v1513, %v1515
    %v1526 = vadd.f32 %v100, %v1517
    %v1527 = vadd.f32 %v101, %v1518
    %v1528 = vadd.f32 %v102, %v1519
    %v1529 = vadd.f32 %v103, %v1520
    %v1530 = vadd.f32 %v104, %v1515
    %v1531 = vld [vmem:[#allocation3 + $0x300] sm:$0xff]
    %v1532 = vld [vmem:[#allocation3 + $0x308] sm:$0xff]
    %v1533 = vld [vmem:[#allocation3 + $0x310] sm:$0xff]
    %v1534 = vld [vmem:[#allocation3 + $0x318] sm:$0xff]
    %1540 = vrot.lane.b32.xlu0 %v1526, 120
    %v1541 = vpop.permute.xlu0 %1540
    %1542 = vrot.lane.b32.xlu0 %v1527, 120
    %v1543 = vpop.permute.xlu0 %1542
    %1544 = vrot.lane.b32.xlu0 %v1528, 120
    %v1545 = vpop.permute.xlu0 %1544
    %1546 = vrot.lane.b32.xlu0 %v1529, 120
    %v1547 = vpop.permute.xlu0 %1546
    %1548 = vrot.lane.b32.xlu0 %v1530, 120
    %v1549 = vpop.permute.xlu0 %1548
    %v1550 = vsel %vm326, %v1541, %v1543
    %v1551 = vsel %vm326, %v1543, %v1545
    %v1552 = vsel %vm326, %v1545, %v1547
    %v1553 = vsel %vm326, %v1547, %v1549
    %v1558 = vmul.f32 %v1531, %v1550
    %v1559 = vmul.f32 %v1532, %v1551
    %v1560 = vmul.f32 %v1533, %v1552
    %v1561 = vmul.f32 %v1534, %v1553
    %v1562 = vadd.f32 %v1502, %v1558
    %v1563 = vadd.f32 %v1503, %v1559
    %v1564 = vadd.f32 %v1504, %v1560
    %v1565 = vadd.f32 %v1505, %v1561
    %1566 = vrot.lane.b32.xlu0 %v100, 78
    %v1567 = vpop.permute.xlu0 %1566
    %1568 = vrot.lane.b32.xlu0 %v101, 78
    %v1569 = vpop.permute.xlu0 %1568
    %1570 = vrot.lane.b32.xlu0 %v102, 78
    %v1571 = vpop.permute.xlu0 %1570
    %1572 = vrot.lane.b32.xlu0 %v103, 78
    %v1573 = vpop.permute.xlu0 %1572
    %1574 = vrot.lane.b32.xlu0 %v104, 78
    %v1575 = vpop.permute.xlu0 %1574
    %vm1576 = vcmask 637952
    %v1577 = vsel %vm1576, %v1567, %v1569
    %v1578 = vsel %vm1576, %v1569, %v1571
    %v1579 = vsel %vm1576, %v1571, %v1573
    %v1580 = vsel %vm1576, %v1573, %v1575
    %v1586 = vadd.f32 %v100, %v1577
    %v1587 = vadd.f32 %v101, %v1578
    %v1588 = vadd.f32 %v102, %v1579
    %v1589 = vadd.f32 %v103, %v1580
    %v1590 = vadd.f32 %v104, %v1575
    %v1591 = vld [vmem:[#allocation3 + $0x320] sm:$0xff]
    %v1592 = vld [vmem:[#allocation3 + $0x328] sm:$0xff]
    %v1593 = vld [vmem:[#allocation3 + $0x330] sm:$0xff]
    %v1594 = vld [vmem:[#allocation3 + $0x338] sm:$0xff]
    %1600 = vrot.lane.b32.xlu0 %v1586, 121
    %v1601 = vpop.permute.xlu0 %1600
    %1602 = vrot.lane.b32.xlu0 %v1587, 121
    %v1603 = vpop.permute.xlu0 %1602
    %1604 = vrot.lane.b32.xlu0 %v1588, 121
    %v1605 = vpop.permute.xlu0 %1604
    %1606 = vrot.lane.b32.xlu0 %v1589, 121
    %v1607 = vpop.permute.xlu0 %1606
    %1608 = vrot.lane.b32.xlu0 %v1590, 121
    %v1609 = vpop.permute.xlu0 %1608
    %vm1610 = vcmask 990208
    %v1611 = vsel %vm1610, %v1601, %v1603
    %v1612 = vsel %vm1610, %v1603, %v1605
    %v1613 = vsel %vm1610, %v1605, %v1607
    %v1614 = vsel %vm1610, %v1607, %v1609
    %v1619 = vmul.f32 %v1591, %v1611
    %v1620 = vmul.f32 %v1592, %v1612
    %v1621 = vmul.f32 %v1593, %v1613
    %v1622 = vmul.f32 %v1594, %v1614
    %v1623 = vadd.f32 %v1562, %v1619
    %v1624 = vadd.f32 %v1563, %v1620
    %v1625 = vadd.f32 %v1564, %v1621
    %v1626 = vadd.f32 %v1565, %v1622
    %1627 = vrot.lane.b32.xlu0 %v100, 76
    %v1628 = vpop.permute.xlu0 %1627
    %1629 = vrot.lane.b32.xlu0 %v101, 76
    %v1630 = vpop.permute.xlu0 %1629
    %1631 = vrot.lane.b32.xlu0 %v102, 76
    %v1632 = vpop.permute.xlu0 %1631
    %1633 = vrot.lane.b32.xlu0 %v103, 76
    %v1634 = vpop.permute.xlu0 %1633
    %1635 = vrot.lane.b32.xlu0 %v104, 76
    %v1636 = vpop.permute.xlu0 %1635
    %vm1637 = vcmask 621568
    %v1638 = vsel %vm1637, %v1628, %v1630
    %v1639 = vsel %vm1637, %v1630, %v1632
    %v1640 = vsel %vm1637, %v1632, %v1634
    %v1641 = vsel %vm1637, %v1634, %v1636
    %v1647 = vadd.f32 %v100, %v1638
    %v1648 = vadd.f32 %v101, %v1639
    %v1649 = vadd.f32 %v102, %v1640
    %v1650 = vadd.f32 %v103, %v1641
    %v1651 = vadd.f32 %v104, %v1636
    %v1652 = vld [vmem:[#allocation3 + $0x340] sm:$0xff]
    %v1653 = vld [vmem:[#allocation3 + $0x348] sm:$0xff]
    %v1654 = vld [vmem:[#allocation3 + $0x350] sm:$0xff]
    %v1655 = vld [vmem:[#allocation3 + $0x358] sm:$0xff]
    %1661 = vrot.lane.b32.xlu0 %v1647, 122
    %v1662 = vpop.permute.xlu0 %1661
    %1663 = vrot.lane.b32.xlu0 %v1648, 122
    %v1664 = vpop.permute.xlu0 %1663
    %1665 = vrot.lane.b32.xlu0 %v1649, 122
    %v1666 = vpop.permute.xlu0 %1665
    %1667 = vrot.lane.b32.xlu0 %v1650, 122
    %v1668 = vpop.permute.xlu0 %1667
    %1669 = vrot.lane.b32.xlu0 %v1651, 122
    %v1670 = vpop.permute.xlu0 %1669
    %v1671 = vsel %vm265, %v1662, %v1664
    %v1672 = vsel %vm265, %v1664, %v1666
    %v1673 = vsel %vm265, %v1666, %v1668
    %v1674 = vsel %vm265, %v1668, %v1670
    %v1679 = vmul.f32 %v1652, %v1671
    %v1680 = vmul.f32 %v1653, %v1672
    %v1681 = vmul.f32 %v1654, %v1673
    %v1682 = vmul.f32 %v1655, %v1674
    %v1683 = vadd.f32 %v1623, %v1679
    %v1684 = vadd.f32 %v1624, %v1680
    %v1685 = vadd.f32 %v1625, %v1681
    %v1686 = vadd.f32 %v1626, %v1682
    %1687 = vrot.lane.b32.xlu0 %v100, 74
    %v1688 = vpop.permute.xlu0 %1687
    %1689 = vrot.lane.b32.xlu0 %v101, 74
    %v1690 = vpop.permute.xlu0 %1689
    %1691 = vrot.lane.b32.xlu0 %v102, 74
    %v1692 = vpop.permute.xlu0 %1691
    %1693 = vrot.lane.b32.xlu0 %v103, 74
    %v1694 = vpop.permute.xlu0 %1693
    %1695 = vrot.lane.b32.xlu0 %v104, 74
    %v1696 = vpop.permute.xlu0 %1695
    %vm1697 = vcmask 605184
    %v1698 = vsel %vm1697, %v1688, %v1690
    %v1699 = vsel %vm1697, %v1690, %v1692
    %v1700 = vsel %vm1697, %v1692, %v1694
    %v1701 = vsel %vm1697, %v1694, %v1696
    %v1707 = vadd.f32 %v100, %v1698
    %v1708 = vadd.f32 %v101, %v1699
    %v1709 = vadd.f32 %v102, %v1700
    %v1710 = vadd.f32 %v103, %v1701
    %v1711 = vadd.f32 %v104, %v1696
    %v1712 = vld [vmem:[#allocation3 + $0x360] sm:$0xff]
    %v1713 = vld [vmem:[#allocation3 + $0x368] sm:$0xff]
    %v1714 = vld [vmem:[#allocation3 + $0x370] sm:$0xff]
    %v1715 = vld [vmem:[#allocation3 + $0x378] sm:$0xff]
    %1721 = vrot.lane.b32.xlu0 %v1707, 123
    %v1722 = vpop.permute.xlu0 %1721
    %1723 = vrot.lane.b32.xlu0 %v1708, 123
    %v1724 = vpop.permute.xlu0 %1723
    %1725 = vrot.lane.b32.xlu0 %v1709, 123
    %v1726 = vpop.permute.xlu0 %1725
    %1727 = vrot.lane.b32.xlu0 %v1710, 123
    %v1728 = vpop.permute.xlu0 %1727
    %1729 = vrot.lane.b32.xlu0 %v1711, 123
    %v1730 = vpop.permute.xlu0 %1729
    %vm1731 = vcmask 1006592
    %v1732 = vsel %vm1731, %v1722, %v1724
    %v1733 = vsel %vm1731, %v1724, %v1726
    %v1734 = vsel %vm1731, %v1726, %v1728
    %v1735 = vsel %vm1731, %v1728, %v1730
    %v1740 = vmul.f32 %v1712, %v1732
    %v1741 = vmul.f32 %v1713, %v1733
    %v1742 = vmul.f32 %v1714, %v1734
    %v1743 = vmul.f32 %v1715, %v1735
    %v1744 = vadd.f32 %v1683, %v1740
    %v1745 = vadd.f32 %v1684, %v1741
    %v1746 = vadd.f32 %v1685, %v1742
    %v1747 = vadd.f32 %v1686, %v1743
    %1748 = vrot.lane.b32.xlu0 %v100, 72
    %v1749 = vpop.permute.xlu0 %1748
    %1750 = vrot.lane.b32.xlu0 %v101, 72
    %v1751 = vpop.permute.xlu0 %1750
    %1752 = vrot.lane.b32.xlu0 %v102, 72
    %v1753 = vpop.permute.xlu0 %1752
    %1754 = vrot.lane.b32.xlu0 %v103, 72
    %v1755 = vpop.permute.xlu0 %1754
    %1756 = vrot.lane.b32.xlu0 %v104, 72
    %v1757 = vpop.permute.xlu0 %1756
    %vm1758 = vcmask 588800
    %v1759 = vsel %vm1758, %v1749, %v1751
    %v1760 = vsel %vm1758, %v1751, %v1753
    %v1761 = vsel %vm1758, %v1753, %v1755
    %v1762 = vsel %vm1758, %v1755, %v1757
    %v1768 = vadd.f32 %v100, %v1759
    %v1769 = vadd.f32 %v101, %v1760
    %v1770 = vadd.f32 %v102, %v1761
    %v1771 = vadd.f32 %v103, %v1762
    %v1772 = vadd.f32 %v104, %v1757
    %v1773 = vld [vmem:[#allocation3 + $0x380] sm:$0xff]
    %v1774 = vld [vmem:[#allocation3 + $0x388] sm:$0xff]
    %v1775 = vld [vmem:[#allocation3 + $0x390] sm:$0xff]
    %v1776 = vld [vmem:[#allocation3 + $0x398] sm:$0xff]
    %1782 = vrot.lane.b32.xlu0 %v1768, 124
    %v1783 = vpop.permute.xlu0 %1782
    %1784 = vrot.lane.b32.xlu0 %v1769, 124
    %v1785 = vpop.permute.xlu0 %1784
    %1786 = vrot.lane.b32.xlu0 %v1770, 124
    %v1787 = vpop.permute.xlu0 %1786
    %1788 = vrot.lane.b32.xlu0 %v1771, 124
    %v1789 = vpop.permute.xlu0 %1788
    %1790 = vrot.lane.b32.xlu0 %v1772, 124
    %v1791 = vpop.permute.xlu0 %1790
    %v1792 = vsel %vm204, %v1783, %v1785
    %v1793 = vsel %vm204, %v1785, %v1787
    %v1794 = vsel %vm204, %v1787, %v1789
    %v1795 = vsel %vm204, %v1789, %v1791
    %v1800 = vmul.f32 %v1773, %v1792
    %v1801 = vmul.f32 %v1774, %v1793
    %v1802 = vmul.f32 %v1775, %v1794
    %v1803 = vmul.f32 %v1776, %v1795
    %v1804 = vadd.f32 %v1744, %v1800
    %v1805 = vadd.f32 %v1745, %v1801
    %v1806 = vadd.f32 %v1746, %v1802
    %v1807 = vadd.f32 %v1747, %v1803
    %1808 = vrot.lane.b32.xlu0 %v100, 70
    %v1809 = vpop.permute.xlu0 %1808
    %1810 = vrot.lane.b32.xlu0 %v101, 70
    %v1811 = vpop.permute.xlu0 %1810
    %1812 = vrot.lane.b32.xlu0 %v102, 70
    %v1813 = vpop.permute.xlu0 %1812
    %1814 = vrot.lane.b32.xlu0 %v103, 70
    %v1815 = vpop.permute.xlu0 %1814
    %1816 = vrot.lane.b32.xlu0 %v104, 70
    %v1817 = vpop.permute.xlu0 %1816
    %vm1818 = vcmask 572416
    %v1819 = vsel %vm1818, %v1809, %v1811
    %v1820 = vsel %vm1818, %v1811, %v1813
    %v1821 = vsel %vm1818, %v1813, %v1815
    %v1822 = vsel %vm1818, %v1815, %v1817
    %v1828 = vadd.f32 %v100, %v1819
    %v1829 = vadd.f32 %v101, %v1820
    %v1830 = vadd.f32 %v102, %v1821
    %v1831 = vadd.f32 %v103, %v1822
    %v1832 = vadd.f32 %v104, %v1817
    %v1833 = vld [vmem:[#allocation3 + $0x3a0] sm:$0xff]
    %v1834 = vld [vmem:[#allocation3 + $0x3a8] sm:$0xff]
    %v1835 = vld [vmem:[#allocation3 + $0x3b0] sm:$0xff]
    %v1836 = vld [vmem:[#allocation3 + $0x3b8] sm:$0xff]
    %1842 = vrot.lane.b32.xlu0 %v1828, 125
    %v1843 = vpop.permute.xlu0 %1842
    %1844 = vrot.lane.b32.xlu0 %v1829, 125
    %v1845 = vpop.permute.xlu0 %1844
    %1846 = vrot.lane.b32.xlu0 %v1830, 125
    %v1847 = vpop.permute.xlu0 %1846
    %1848 = vrot.lane.b32.xlu0 %v1831, 125
    %v1849 = vpop.permute.xlu0 %1848
    %1850 = vrot.lane.b32.xlu0 %v1832, 125
    %v1851 = vpop.permute.xlu0 %1850
    %vm1852 = vcmask 1022976
    %v1853 = vsel %vm1852, %v1843, %v1845
    %v1854 = vsel %vm1852, %v1845, %v1847
    %v1855 = vsel %vm1852, %v1847, %v1849
    %v1856 = vsel %vm1852, %v1849, %v1851
    %v1861 = vmul.f32 %v1833, %v1853
    %v1862 = vmul.f32 %v1834, %v1854
    %v1863 = vmul.f32 %v1835, %v1855
    %v1864 = vmul.f32 %v1836, %v1856
    %v1865 = vadd.f32 %v1804, %v1861
    %v1866 = vadd.f32 %v1805, %v1862
    %v1867 = vadd.f32 %v1806, %v1863
    %v1868 = vadd.f32 %v1807, %v1864
    %1869 = vrot.lane.b32.xlu0 %v100, 68
    %v1870 = vpop.permute.xlu0 %1869
    %1871 = vrot.lane.b32.xlu0 %v101, 68
    %v1872 = vpop.permute.xlu0 %1871
    %1873 = vrot.lane.b32.xlu0 %v102, 68
    %v1874 = vpop.permute.xlu0 %1873
    %1875 = vrot.lane.b32.xlu0 %v103, 68
    %v1876 = vpop.permute.xlu0 %1875
    %1877 = vrot.lane.b32.xlu0 %v104, 68
    %v1878 = vpop.permute.xlu0 %1877
    %vm1879 = vcmask 556032
    %v1880 = vsel %vm1879, %v1870, %v1872
    %v1881 = vsel %vm1879, %v1872, %v1874
    %v1882 = vsel %vm1879, %v1874, %v1876
    %v1883 = vsel %vm1879, %v1876, %v1878
    %v1889 = vadd.f32 %v100, %v1880
    %v1890 = vadd.f32 %v101, %v1881
    %v1891 = vadd.f32 %v102, %v1882
    %v1892 = vadd.f32 %v103, %v1883
    %v1893 = vadd.f32 %v104, %v1878
    %v1894 = vld [vmem:[#allocation3 + $0x3c0] sm:$0xff]
    %v1895 = vld [vmem:[#allocation3 + $0x3c8] sm:$0xff]
    %v1896 = vld [vmem:[#allocation3 + $0x3d0] sm:$0xff]
    %v1897 = vld [vmem:[#allocation3 + $0x3d8] sm:$0xff]
    %1903 = vrot.lane.b32.xlu0 %v1889, 126
    %v1904 = vpop.permute.xlu0 %1903
    %1905 = vrot.lane.b32.xlu0 %v1890, 126
    %v1906 = vpop.permute.xlu0 %1905
    %1907 = vrot.lane.b32.xlu0 %v1891, 126
    %v1908 = vpop.permute.xlu0 %1907
    %1909 = vrot.lane.b32.xlu0 %v1892, 126
    %v1910 = vpop.permute.xlu0 %1909
    %1911 = vrot.lane.b32.xlu0 %v1893, 126
    %v1912 = vpop.permute.xlu0 %1911
    %v1913 = vsel %vm143, %v1904, %v1906
    %v1914 = vsel %vm143, %v1906, %v1908
    %v1915 = vsel %vm143, %v1908, %v1910
    %v1916 = vsel %vm143, %v1910, %v1912
    %v1921 = vmul.f32 %v1894, %v1913
    %v1922 = vmul.f32 %v1895, %v1914
    %v1923 = vmul.f32 %v1896, %v1915
    %v1924 = vmul.f32 %v1897, %v1916
    %v1925 = vadd.f32 %v1865, %v1921
    %v1926 = vadd.f32 %v1866, %v1922
    %v1927 = vadd.f32 %v1867, %v1923
    %v1928 = vadd.f32 %v1868, %v1924
    %1929 = vrot.lane.b32.xlu0 %v100, 66
    %v1930 = vpop.permute.xlu0 %1929
    %1931 = vrot.lane.b32.xlu0 %v101, 66
    %v1932 = vpop.permute.xlu0 %1931
    %1933 = vrot.lane.b32.xlu0 %v102, 66
    %v1934 = vpop.permute.xlu0 %1933
    %1935 = vrot.lane.b32.xlu0 %v103, 66
    %v1936 = vpop.permute.xlu0 %1935
    %1937 = vrot.lane.b32.xlu0 %v104, 66
    %v1938 = vpop.permute.xlu0 %1937
    %vm1939 = vcmask 539648
    %v1940 = vsel %vm1939, %v1930, %v1932
    %v1941 = vsel %vm1939, %v1932, %v1934
    %v1942 = vsel %vm1939, %v1934, %v1936
    %v1943 = vsel %vm1939, %v1936, %v1938
    %v1949 = vadd.f32 %v100, %v1940
    %v1950 = vadd.f32 %v101, %v1941
    %v1951 = vadd.f32 %v102, %v1942
    %v1952 = vadd.f32 %v103, %v1943
    %v1953 = vadd.f32 %v104, %v1938
    %v1954 = vld [vmem:[#allocation3 + $0x3e0] sm:$0xff]
    %v1955 = vld [vmem:[#allocation3 + $0x3e8] sm:$0xff]
    %v1956 = vld [vmem:[#allocation3 + $0x3f0] sm:$0xff]
    %v1957 = vld [vmem:[#allocation3 + $0x3f8] sm:$0xff]
    %1963 = vrot.lane.b32.xlu0 %v1949, 127
    %v1964 = vpop.permute.xlu0 %1963
    %1965 = vrot.lane.b32.xlu0 %v1950, 127
    %v1966 = vpop.permute.xlu0 %1965
    %1967 = vrot.lane.b32.xlu0 %v1951, 127
    %v1968 = vpop.permute.xlu0 %1967
    %1969 = vrot.lane.b32.xlu0 %v1952, 127
    %v1970 = vpop.permute.xlu0 %1969
    %1971 = vrot.lane.b32.xlu0 %v1953, 127
    %v1972 = vpop.permute.xlu0 %1971
    %vm1973 = vcmask 1039360
    %v1974 = vsel %vm1973, %v1964, %v1966
    %v1975 = vsel %vm1973, %v1966, %v1968
    %v1976 = vsel %vm1973, %v1968, %v1970
    %v1977 = vsel %vm1973, %v1970, %v1972
    %v1982 = vmul.f32 %v1954, %v1974
    %v1983 = vmul.f32 %v1955, %v1975
    %v1984 = vmul.f32 %v1956, %v1976
    %v1985 = vmul.f32 %v1957, %v1977
    %v1986 = vadd.f32 %v1925, %v1982
    %v1987 = vadd.f32 %v1926, %v1983
    %v1988 = vadd.f32 %v1927, %v1984
    %v1989 = vadd.f32 %v1928, %v1985
    %1990 = vrot.lane.b32.xlu0 %v100, 64
    %v1991 = vpop.permute.xlu0 %1990
    %1992 = vrot.lane.b32.xlu0 %v101, 64
    %v1993 = vpop.permute.xlu0 %1992
    %1994 = vrot.lane.b32.xlu0 %v102, 64
    %v1995 = vpop.permute.xlu0 %1994
    %1996 = vrot.lane.b32.xlu0 %v103, 64
    %v1997 = vpop.permute.xlu0 %1996
    %1998 = vrot.lane.b32.xlu0 %v104, 64
    %v1999 = vpop.permute.xlu0 %1998
    %vm2000 = vcmask 523264
    %v2001 = vsel %vm2000, %v1991, %v1993
    %v2002 = vsel %vm2000, %v1993, %v1995
    %v2003 = vsel %vm2000, %v1995, %v1997
    %v2004 = vsel %vm2000, %v1997, %v1999
    %v2009 = vadd.f32 %v100, %v2001
    %v2010 = vadd.f32 %v101, %v2002
    %v2011 = vadd.f32 %v102, %v2003
    %v2012 = vadd.f32 %v103, %v2004
    %v2013 = vld [vmem:[#allocation3 + $0x400] sm:$0xff]
    %v2014 = vld [vmem:[#allocation3 + $0x408] sm:$0xff]
    %v2015 = vld [vmem:[#allocation3 + $0x410] sm:$0xff]
    %v2016 = vld [vmem:[#allocation3 + $0x418] sm:$0xff]
    %v2017 = vmul.f32 %v2013, %v2009
    %v2018 = vmul.f32 %v2014, %v2010
    %v2019 = vmul.f32 %v2015, %v2011
    %v2020 = vmul.f32 %v2016, %v2012
    %v2021 = vadd.f32 %v1986, %v2017
    %v2022 = vadd.f32 %v1987, %v2018
    %v2023 = vadd.f32 %v1988, %v2019
    %v2024 = vadd.f32 %v1989, %v2020
    %2025 = vst [vmem:[#allocation9] sm:$0xff] %v2021
    %2026 = vst [vmem:[#allocation9 + $0x8] sm:$0xff] %v2022
    %2027 = vst [vmem:[#allocation9 + $0x10] sm:$0xff] %v2023
    %2028 = vst [vmem:[#allocation9 + $0x18] sm:$0xff] %v2024
    %v2029 = vld [vmem:[#allocation3] sm:$0xff]
    %v2030 = vld [vmem:[#allocation3 + $0x8] sm:$0xff]
    %v2031 = vld [vmem:[#allocation3 + $0x10] sm:$0xff]
    %v2032 = vld [vmem:[#allocation3 + $0x18] sm:$0xff]
    %v2033 = vld [vmem:[#allocation2 + $0x20] sm:$0xff]
    %v2034 = vld [vmem:[#allocation2 + $0x28] sm:$0xff]
    %v2035 = vld [vmem:[#allocation2 + $0x30] sm:$0xff]
    %v2036 = vld [vmem:[#allocation2 + $0x38] sm:$0xff]
    %v2037 = vld [vmem:[#allocation2 + $0x40] sm:$0xff]
    %2043 = vrot.lane.b32.xlu0 %v2033, 96
    %v2044 = vpop.permute.xlu0 %2043
    %2045 = vrot.lane.b32.xlu0 %v2034, 96
    %v2046 = vpop.permute.xlu0 %2045
    %2047 = vrot.lane.b32.xlu0 %v2035, 96
    %v2048 = vpop.permute.xlu0 %2047
    %2049 = vrot.lane.b32.xlu0 %v2036, 96
    %v2050 = vpop.permute.xlu0 %2049
    %2051 = vrot.lane.b32.xlu0 %v2037, 96
    %v2052 = vpop.permute.xlu0 %2051
    %v2053 = vsel %vm120, %v2044, %v2046
    %v2054 = vsel %vm120, %v2046, %v2048
    %v2055 = vsel %vm120, %v2048, %v2050
    %v2056 = vsel %vm120, %v2050, %v2052
    %v2061 = vmul.f32 %v2029, %v2053
    %v2062 = vmul.f32 %v2030, %v2054
    %v2063 = vmul.f32 %v2031, %v2055
    %v2064 = vmul.f32 %v2032, %v2056
    %2065 = vrot.lane.b32.xlu0 %v2033, 126
    %v2066 = vpop.permute.xlu0 %2065
    %2067 = vrot.lane.b32.xlu0 %v2034, 126
    %v2068 = vpop.permute.xlu0 %2067
    %2069 = vrot.lane.b32.xlu0 %v2035, 126
    %v2070 = vpop.permute.xlu0 %2069
    %2071 = vrot.lane.b32.xlu0 %v2036, 126
    %v2072 = vpop.permute.xlu0 %2071
    %2073 = vrot.lane.b32.xlu0 %v2037, 126
    %v2074 = vpop.permute.xlu0 %2073
    %v2075 = vsel %vm143, %v2066, %v2068
    %v2076 = vsel %vm143, %v2068, %v2070
    %v2077 = vsel %vm143, %v2070, %v2072
    %v2078 = vsel %vm143, %v2072, %v2074
    %v2084 = vadd.f32 %v2033, %v2075
    %v2085 = vadd.f32 %v2034, %v2076
    %v2086 = vadd.f32 %v2035, %v2077
    %v2087 = vadd.f32 %v2036, %v2078
    %v2088 = vadd.f32 %v2037, %v2074
    %v2089 = vld [vmem:[#allocation3 + $0x20] sm:$0xff]
    %v2090 = vld [vmem:[#allocation3 + $0x28] sm:$0xff]
    %v2091 = vld [vmem:[#allocation3 + $0x30] sm:$0xff]
    %v2092 = vld [vmem:[#allocation3 + $0x38] sm:$0xff]
    %2098 = vrot.lane.b32.xlu0 %v2084, 97
    %v2099 = vpop.permute.xlu0 %2098
    %2100 = vrot.lane.b32.xlu0 %v2085, 97
    %v2101 = vpop.permute.xlu0 %2100
    %2102 = vrot.lane.b32.xlu0 %v2086, 97
    %v2103 = vpop.permute.xlu0 %2102
    %2104 = vrot.lane.b32.xlu0 %v2087, 97
    %v2105 = vpop.permute.xlu0 %2104
    %2106 = vrot.lane.b32.xlu0 %v2088, 97
    %v2107 = vpop.permute.xlu0 %2106
    %v2108 = vsel %vm177, %v2099, %v2101
    %v2109 = vsel %vm177, %v2101, %v2103
    %v2110 = vsel %vm177, %v2103, %v2105
    %v2111 = vsel %vm177, %v2105, %v2107
    %v2116 = vmul.f32 %v2089, %v2108
    %v2117 = vmul.f32 %v2090, %v2109
    %v2118 = vmul.f32 %v2091, %v2110
    %v2119 = vmul.f32 %v2092, %v2111
    %v2120 = vadd.f32 %v2061, %v2116
    %v2121 = vadd.f32 %v2062, %v2117
    %v2122 = vadd.f32 %v2063, %v2118
    %v2123 = vadd.f32 %v2064, %v2119
    %2124 = vrot.lane.b32.xlu0 %v2033, 124
    %v2125 = vpop.permute.xlu0 %2124
    %2126 = vrot.lane.b32.xlu0 %v2034, 124
    %v2127 = vpop.permute.xlu0 %2126
    %2128 = vrot.lane.b32.xlu0 %v2035, 124
    %v2129 = vpop.permute.xlu0 %2128
    %2130 = vrot.lane.b32.xlu0 %v2036, 124
    %v2131 = vpop.permute.xlu0 %2130
    %2132 = vrot.lane.b32.xlu0 %v2037, 124
    %v2133 = vpop.permute.xlu0 %2132
    %v2134 = vsel %vm204, %v2125, %v2127
    %v2135 = vsel %vm204, %v2127, %v2129
    %v2136 = vsel %vm204, %v2129, %v2131
    %v2137 = vsel %vm204, %v2131, %v2133
    %v2143 = vadd.f32 %v2033, %v2134
    %v2144 = vadd.f32 %v2034, %v2135
    %v2145 = vadd.f32 %v2035, %v2136
    %v2146 = vadd.f32 %v2036, %v2137
    %v2147 = vadd.f32 %v2037, %v2133
    %v2148 = vld [vmem:[#allocation3 + $0x40] sm:$0xff]
    %v2149 = vld [vmem:[#allocation3 + $0x48] sm:$0xff]
    %v2150 = vld [vmem:[#allocation3 + $0x50] sm:$0xff]
    %v2151 = vld [vmem:[#allocation3 + $0x58] sm:$0xff]
    %2157 = vrot.lane.b32.xlu0 %v2143, 98
    %v2158 = vpop.permute.xlu0 %2157
    %2159 = vrot.lane.b32.xlu0 %v2144, 98
    %v2160 = vpop.permute.xlu0 %2159
    %2161 = vrot.lane.b32.xlu0 %v2145, 98
    %v2162 = vpop.permute.xlu0 %2161
    %2163 = vrot.lane.b32.xlu0 %v2146, 98
    %v2164 = vpop.permute.xlu0 %2163
    %2165 = vrot.lane.b32.xlu0 %v2147, 98
    %v2166 = vpop.permute.xlu0 %2165
    %v2167 = vsel %vm238, %v2158, %v2160
    %v2168 = vsel %vm238, %v2160, %v2162
    %v2169 = vsel %vm238, %v2162, %v2164
    %v2170 = vsel %vm238, %v2164, %v2166
    %v2175 = vmul.f32 %v2148, %v2167
    %v2176 = vmul.f32 %v2149, %v2168
    %v2177 = vmul.f32 %v2150, %v2169
    %v2178 = vmul.f32 %v2151, %v2170
    %v2179 = vadd.f32 %v2120, %v2175
    %v2180 = vadd.f32 %v2121, %v2176
    %v2181 = vadd.f32 %v2122, %v2177
    %v2182 = vadd.f32 %v2123, %v2178
    %2183 = vrot.lane.b32.xlu0 %v2033, 122
    %v2184 = vpop.permute.xlu0 %2183
    %2185 = vrot.lane.b32.xlu0 %v2034, 122
    %v2186 = vpop.permute.xlu0 %2185
    %2187 = vrot.lane.b32.xlu0 %v2035, 122
    %v2188 = vpop.permute.xlu0 %2187
    %2189 = vrot.lane.b32.xlu0 %v2036, 122
    %v2190 = vpop.permute.xlu0 %2189
    %2191 = vrot.lane.b32.xlu0 %v2037, 122
    %v2192 = vpop.permute.xlu0 %2191
    %v2193 = vsel %vm265, %v2184, %v2186
    %v2194 = vsel %vm265, %v2186, %v2188
    %v2195 = vsel %vm265, %v2188, %v2190
    %v2196 = vsel %vm265, %v2190, %v2192
    %v2202 = vadd.f32 %v2033, %v2193
    %v2203 = vadd.f32 %v2034, %v2194
    %v2204 = vadd.f32 %v2035, %v2195
    %v2205 = vadd.f32 %v2036, %v2196
    %v2206 = vadd.f32 %v2037, %v2192
    %v2207 = vld [vmem:[#allocation3 + $0x60] sm:$0xff]
    %v2208 = vld [vmem:[#allocation3 + $0x68] sm:$0xff]
    %v2209 = vld [vmem:[#allocation3 + $0x70] sm:$0xff]
    %v2210 = vld [vmem:[#allocation3 + $0x78] sm:$0xff]
    %2216 = vrot.lane.b32.xlu0 %v2202, 99
    %v2217 = vpop.permute.xlu0 %2216
    %2218 = vrot.lane.b32.xlu0 %v2203, 99
    %v2219 = vpop.permute.xlu0 %2218
    %2220 = vrot.lane.b32.xlu0 %v2204, 99
    %v2221 = vpop.permute.xlu0 %2220
    %2222 = vrot.lane.b32.xlu0 %v2205, 99
    %v2223 = vpop.permute.xlu0 %2222
    %2224 = vrot.lane.b32.xlu0 %v2206, 99
    %v2225 = vpop.permute.xlu0 %2224
    %v2226 = vsel %vm299, %v2217, %v2219
    %v2227 = vsel %vm299, %v2219, %v2221
    %v2228 = vsel %vm299, %v2221, %v2223
    %v2229 = vsel %vm299, %v2223, %v2225
    %v2234 = vmul.f32 %v2207, %v2226
    %v2235 = vmul.f32 %v2208, %v2227
    %v2236 = vmul.f32 %v2209, %v2228
    %v2237 = vmul.f32 %v2210, %v2229
    %v2238 = vadd.f32 %v2179, %v2234
    %v2239 = vadd.f32 %v2180, %v2235
    %v2240 = vadd.f32 %v2181, %v2236
    %v2241 = vadd.f32 %v2182, %v2237
    %2242 = vrot.lane.b32.xlu0 %v2033, 120
    %v2243 = vpop.permute.xlu0 %2242
    %2244 = vrot.lane.b32.xlu0 %v2034, 120
    %v2245 = vpop.permute.xlu0 %2244
    %2246 = vrot.lane.b32.xlu0 %v2035, 120
    %v2247 = vpop.permute.xlu0 %2246
    %2248 = vrot.lane.b32.xlu0 %v2036, 120
    %v2249 = vpop.permute.xlu0 %2248
    %2250 = vrot.lane.b32.xlu0 %v2037, 120
    %v2251 = vpop.permute.xlu0 %2250
    %v2252 = vsel %vm326, %v2243, %v2245
    %v2253 = vsel %vm326, %v2245, %v2247
    %v2254 = vsel %vm326, %v2247, %v2249
    %v2255 = vsel %vm326, %v2249, %v2251
    %v2261 = vadd.f32 %v2033, %v2252
    %v2262 = vadd.f32 %v2034, %v2253
    %v2263 = vadd.f32 %v2035, %v2254
    %v2264 = vadd.f32 %v2036, %v2255
    %v2265 = vadd.f32 %v2037, %v2251
    %v2266 = vld [vmem:[#allocation3 + $0x80] sm:$0xff]
    %v2267 = vld [vmem:[#allocation3 + $0x88] sm:$0xff]
    %v2268 = vld [vmem:[#allocation3 + $0x90] sm:$0xff]
    %v2269 = vld [vmem:[#allocation3 + $0x98] sm:$0xff]
    %2275 = vrot.lane.b32.xlu0 %v2261, 100
    %v2276 = vpop.permute.xlu0 %2275
    %2277 = vrot.lane.b32.xlu0 %v2262, 100
    %v2278 = vpop.permute.xlu0 %2277
    %2279 = vrot.lane.b32.xlu0 %v2263, 100
    %v2280 = vpop.permute.xlu0 %2279
    %2281 = vrot.lane.b32.xlu0 %v2264, 100
    %v2282 = vpop.permute.xlu0 %2281
    %2283 = vrot.lane.b32.xlu0 %v2265, 100
    %v2284 = vpop.permute.xlu0 %2283
    %v2285 = vsel %vm360, %v2276, %v2278
    %v2286 = vsel %vm360, %v2278, %v2280
    %v2287 = vsel %vm360, %v2280, %v2282
    %v2288 = vsel %vm360, %v2282, %v2284
    %v2293 = vmul.f32 %v2266, %v2285
    %v2294 = vmul.f32 %v2267, %v2286
    %v2295 = vmul.f32 %v2268, %v2287
    %v2296 = vmul.f32 %v2269, %v2288
    %v2297 = vadd.f32 %v2238, %v2293
    %v2298 = vadd.f32 %v2239, %v2294
    %v2299 = vadd.f32 %v2240, %v2295
    %v2300 = vadd.f32 %v2241, %v2296
    %2301 = vrot.lane.b32.xlu0 %v2033, 118
    %v2302 = vpop.permute.xlu0 %2301
    %2303 = vrot.lane.b32.xlu0 %v2034, 118
    %v2304 = vpop.permute.xlu0 %2303
    %2305 = vrot.lane.b32.xlu0 %v2035, 118
    %v2306 = vpop.permute.xlu0 %2305
    %2307 = vrot.lane.b32.xlu0 %v2036, 118
    %v2308 = vpop.permute.xlu0 %2307
    %2309 = vrot.lane.b32.xlu0 %v2037, 118
    %v2310 = vpop.permute.xlu0 %2309
    %v2311 = vsel %vm387, %v2302, %v2304
    %v2312 = vsel %vm387, %v2304, %v2306
    %v2313 = vsel %vm387, %v2306, %v2308
    %v2314 = vsel %vm387, %v2308, %v2310
    %v2320 = vadd.f32 %v2033, %v2311
    %v2321 = vadd.f32 %v2034, %v2312
    %v2322 = vadd.f32 %v2035, %v2313
    %v2323 = vadd.f32 %v2036, %v2314
    %v2324 = vadd.f32 %v2037, %v2310
    %v2325 = vld [vmem:[#allocation3 + $0xa0] sm:$0xff]
    %v2326 = vld [vmem:[#allocation3 + $0xa8] sm:$0xff]
    %v2327 = vld [vmem:[#allocation3 + $0xb0] sm:$0xff]
    %v2328 = vld [vmem:[#allocation3 + $0xb8] sm:$0xff]
    %2334 = vrot.lane.b32.xlu0 %v2320, 101
    %v2335 = vpop.permute.xlu0 %2334
    %2336 = vrot.lane.b32.xlu0 %v2321, 101
    %v2337 = vpop.permute.xlu0 %2336
    %2338 = vrot.lane.b32.xlu0 %v2322, 101
    %v2339 = vpop.permute.xlu0 %2338
    %2340 = vrot.lane.b32.xlu0 %v2323, 101
    %v2341 = vpop.permute.xlu0 %2340
    %2342 = vrot.lane.b32.xlu0 %v2324, 101
    %v2343 = vpop.permute.xlu0 %2342
    %v2344 = vsel %vm421, %v2335, %v2337
    %v2345 = vsel %vm421, %v2337, %v2339
    %v2346 = vsel %vm421, %v2339, %v2341
    %v2347 = vsel %vm421, %v2341, %v2343
    %v2352 = vmul.f32 %v2325, %v2344
    %v2353 = vmul.f32 %v2326, %v2345
    %v2354 = vmul.f32 %v2327, %v2346
    %v2355 = vmul.f32 %v2328, %v2347
    %v2356 = vadd.f32 %v2297, %v2352
    %v2357 = vadd.f32 %v2298, %v2353
    %v2358 = vadd.f32 %v2299, %v2354
    %v2359 = vadd.f32 %v2300, %v2355
    %2360 = vrot.lane.b32.xlu0 %v2033, 116
    %v2361 = vpop.permute.xlu0 %2360
    %2362 = vrot.lane.b32.xlu0 %v2034, 116
    %v2363 = vpop.permute.xlu0 %2362
    %2364 = vrot.lane.b32.xlu0 %v2035, 116
    %v2365 = vpop.permute.xlu0 %2364
    %2366 = vrot.lane.b32.xlu0 %v2036, 116
    %v2367 = vpop.permute.xlu0 %2366
    %2368 = vrot.lane.b32.xlu0 %v2037, 116
    %v2369 = vpop.permute.xlu0 %2368
    %v2370 = vsel %vm448, %v2361, %v2363
    %v2371 = vsel %vm448, %v2363, %v2365
    %v2372 = vsel %vm448, %v2365, %v2367
    %v2373 = vsel %vm448, %v2367, %v2369
    %v2379 = vadd.f32 %v2033, %v2370
    %v2380 = vadd.f32 %v2034, %v2371
    %v2381 = vadd.f32 %v2035, %v2372
    %v2382 = vadd.f32 %v2036, %v2373
    %v2383 = vadd.f32 %v2037, %v2369
    %v2384 = vld [vmem:[#allocation3 + $0xc0] sm:$0xff]
    %v2385 = vld [vmem:[#allocation3 + $0xc8] sm:$0xff]
    %v2386 = vld [vmem:[#allocation3 + $0xd0] sm:$0xff]
    %v2387 = vld [vmem:[#allocation3 + $0xd8] sm:$0xff]
    %2393 = vrot.lane.b32.xlu0 %v2379, 102
    %v2394 = vpop.permute.xlu0 %2393
    %2395 = vrot.lane.b32.xlu0 %v2380, 102
    %v2396 = vpop.permute.xlu0 %2395
    %2397 = vrot.lane.b32.xlu0 %v2381, 102
    %v2398 = vpop.permute.xlu0 %2397
    %2399 = vrot.lane.b32.xlu0 %v2382, 102
    %v2400 = vpop.permute.xlu0 %2399
    %2401 = vrot.lane.b32.xlu0 %v2383, 102
    %v2402 = vpop.permute.xlu0 %2401
    %v2403 = vsel %vm482, %v2394, %v2396
    %v2404 = vsel %vm482, %v2396, %v2398
    %v2405 = vsel %vm482, %v2398, %v2400
    %v2406 = vsel %vm482, %v2400, %v2402
    %v2411 = vmul.f32 %v2384, %v2403
    %v2412 = vmul.f32 %v2385, %v2404
    %v2413 = vmul.f32 %v2386, %v2405
    %v2414 = vmul.f32 %v2387, %v2406
    %v2415 = vadd.f32 %v2356, %v2411
    %v2416 = vadd.f32 %v2357, %v2412
    %v2417 = vadd.f32 %v2358, %v2413
    %v2418 = vadd.f32 %v2359, %v2414
    %2419 = vrot.lane.b32.xlu0 %v2033, 114
    %v2420 = vpop.permute.xlu0 %2419
    %2421 = vrot.lane.b32.xlu0 %v2034, 114
    %v2422 = vpop.permute.xlu0 %2421
    %2423 = vrot.lane.b32.xlu0 %v2035, 114
    %v2424 = vpop.permute.xlu0 %2423
    %2425 = vrot.lane.b32.xlu0 %v2036, 114
    %v2426 = vpop.permute.xlu0 %2425
    %2427 = vrot.lane.b32.xlu0 %v2037, 114
    %v2428 = vpop.permute.xlu0 %2427
    %v2429 = vsel %vm509, %v2420, %v2422
    %v2430 = vsel %vm509, %v2422, %v2424
    %v2431 = vsel %vm509, %v2424, %v2426
    %v2432 = vsel %vm509, %v2426, %v2428
    %v2438 = vadd.f32 %v2033, %v2429
    %v2439 = vadd.f32 %v2034, %v2430
    %v2440 = vadd.f32 %v2035, %v2431
    %v2441 = vadd.f32 %v2036, %v2432
    %v2442 = vadd.f32 %v2037, %v2428
    %v2443 = vld [vmem:[#allocation3 + $0xe0] sm:$0xff]
    %v2444 = vld [vmem:[#allocation3 + $0xe8] sm:$0xff]
    %v2445 = vld [vmem:[#allocation3 + $0xf0] sm:$0xff]
    %v2446 = vld [vmem:[#allocation3 + $0xf8] sm:$0xff]
    %2452 = vrot.lane.b32.xlu0 %v2438, 103
    %v2453 = vpop.permute.xlu0 %2452
    %2454 = vrot.lane.b32.xlu0 %v2439, 103
    %v2455 = vpop.permute.xlu0 %2454
    %2456 = vrot.lane.b32.xlu0 %v2440, 103
    %v2457 = vpop.permute.xlu0 %2456
    %2458 = vrot.lane.b32.xlu0 %v2441, 103
    %v2459 = vpop.permute.xlu0 %2458
    %2460 = vrot.lane.b32.xlu0 %v2442, 103
    %v2461 = vpop.permute.xlu0 %2460
    %v2462 = vsel %vm543, %v2453, %v2455
    %v2463 = vsel %vm543, %v2455, %v2457
    %v2464 = vsel %vm543, %v2457, %v2459
    %v2465 = vsel %vm543, %v2459, %v2461
    %v2470 = vmul.f32 %v2443, %v2462
    %v2471 = vmul.f32 %v2444, %v2463
    %v2472 = vmul.f32 %v2445, %v2464
    %v2473 = vmul.f32 %v2446, %v2465
    %v2474 = vadd.f32 %v2415, %v2470
    %v2475 = vadd.f32 %v2416, %v2471
    %v2476 = vadd.f32 %v2417, %v2472
    %v2477 = vadd.f32 %v2418, %v2473
    %2478 = vrot.lane.b32.xlu0 %v2033, 112
    %v2479 = vpop.permute.xlu0 %2478
    %2480 = vrot.lane.b32.xlu0 %v2034, 112
    %v2481 = vpop.permute.xlu0 %2480
    %2482 = vrot.lane.b32.xlu0 %v2035, 112
    %v2483 = vpop.permute.xlu0 %2482
    %2484 = vrot.lane.b32.xlu0 %v2036, 112
    %v2485 = vpop.permute.xlu0 %2484
    %2486 = vrot.lane.b32.xlu0 %v2037, 112
    %v2487 = vpop.permute.xlu0 %2486
    %v2488 = vsel %vm570, %v2479, %v2481
    %v2489 = vsel %vm570, %v2481, %v2483
    %v2490 = vsel %vm570, %v2483, %v2485
    %v2491 = vsel %vm570, %v2485, %v2487
    %v2497 = vadd.f32 %v2033, %v2488
    %v2498 = vadd.f32 %v2034, %v2489
    %v2499 = vadd.f32 %v2035, %v2490
    %v2500 = vadd.f32 %v2036, %v2491
    %v2501 = vadd.f32 %v2037, %v2487
    %v2502 = vld [vmem:[#allocation3 + $0x100] sm:$0xff]
    %v2503 = vld [vmem:[#allocation3 + $0x108] sm:$0xff]
    %v2504 = vld [vmem:[#allocation3 + $0x110] sm:$0xff]
    %v2505 = vld [vmem:[#allocation3 + $0x118] sm:$0xff]
    %2511 = vrot.lane.b32.xlu0 %v2497, 104
    %v2512 = vpop.permute.xlu0 %2511
    %2513 = vrot.lane.b32.xlu0 %v2498, 104
    %v2514 = vpop.permute.xlu0 %2513
    %2515 = vrot.lane.b32.xlu0 %v2499, 104
    %v2516 = vpop.permute.xlu0 %2515
    %2517 = vrot.lane.b32.xlu0 %v2500, 104
    %v2518 = vpop.permute.xlu0 %2517
    %2519 = vrot.lane.b32.xlu0 %v2501, 104
    %v2520 = vpop.permute.xlu0 %2519
    %v2521 = vsel %vm604, %v2512, %v2514
    %v2522 = vsel %vm604, %v2514, %v2516
    %v2523 = vsel %vm604, %v2516, %v2518
    %v2524 = vsel %vm604, %v2518, %v2520
    %v2529 = vmul.f32 %v2502, %v2521
    %v2530 = vmul.f32 %v2503, %v2522
    %v2531 = vmul.f32 %v2504, %v2523
    %v2532 = vmul.f32 %v2505, %v2524
    %v2533 = vadd.f32 %v2474, %v2529
    %v2534 = vadd.f32 %v2475, %v2530
    %v2535 = vadd.f32 %v2476, %v2531
    %v2536 = vadd.f32 %v2477, %v2532
    %2537 = vrot.lane.b32.xlu0 %v2033, 110
    %v2538 = vpop.permute.xlu0 %2537
    %2539 = vrot.lane.b32.xlu0 %v2034, 110
    %v2540 = vpop.permute.xlu0 %2539
    %2541 = vrot.lane.b32.xlu0 %v2035, 110
    %v2542 = vpop.permute.xlu0 %2541
    %2543 = vrot.lane.b32.xlu0 %v2036, 110
    %v2544 = vpop.permute.xlu0 %2543
    %2545 = vrot.lane.b32.xlu0 %v2037, 110
    %v2546 = vpop.permute.xlu0 %2545
    %v2547 = vsel %vm631, %v2538, %v2540
    %v2548 = vsel %vm631, %v2540, %v2542
    %v2549 = vsel %vm631, %v2542, %v2544
    %v2550 = vsel %vm631, %v2544, %v2546
    %v2556 = vadd.f32 %v2033, %v2547
    %v2557 = vadd.f32 %v2034, %v2548
    %v2558 = vadd.f32 %v2035, %v2549
    %v2559 = vadd.f32 %v2036, %v2550
    %v2560 = vadd.f32 %v2037, %v2546
    %v2561 = vld [vmem:[#allocation3 + $0x120] sm:$0xff]
    %v2562 = vld [vmem:[#allocation3 + $0x128] sm:$0xff]
    %v2563 = vld [vmem:[#allocation3 + $0x130] sm:$0xff]
    %v2564 = vld [vmem:[#allocation3 + $0x138] sm:$0xff]
    %2570 = vrot.lane.b32.xlu0 %v2556, 105
    %v2571 = vpop.permute.xlu0 %2570
    %2572 = vrot.lane.b32.xlu0 %v2557, 105
    %v2573 = vpop.permute.xlu0 %2572
    %2574 = vrot.lane.b32.xlu0 %v2558, 105
    %v2575 = vpop.permute.xlu0 %2574
    %2576 = vrot.lane.b32.xlu0 %v2559, 105
    %v2577 = vpop.permute.xlu0 %2576
    %2578 = vrot.lane.b32.xlu0 %v2560, 105
    %v2579 = vpop.permute.xlu0 %2578
    %v2580 = vsel %vm665, %v2571, %v2573
    %v2581 = vsel %vm665, %v2573, %v2575
    %v2582 = vsel %vm665, %v2575, %v2577
    %v2583 = vsel %vm665, %v2577, %v2579
    %v2588 = vmul.f32 %v2561, %v2580
    %v2589 = vmul.f32 %v2562, %v2581
    %v2590 = vmul.f32 %v2563, %v2582
    %v2591 = vmul.f32 %v2564, %v2583
    %v2592 = vadd.f32 %v2533, %v2588
    %v2593 = vadd.f32 %v2534, %v2589
    %v2594 = vadd.f32 %v2535, %v2590
    %v2595 = vadd.f32 %v2536, %v2591
    %2596 = vrot.lane.b32.xlu0 %v2033, 108
    %v2597 = vpop.permute.xlu0 %2596
    %2598 = vrot.lane.b32.xlu0 %v2034, 108
    %v2599 = vpop.permute.xlu0 %2598
    %2600 = vrot.lane.b32.xlu0 %v2035, 108
    %v2601 = vpop.permute.xlu0 %2600
    %2602 = vrot.lane.b32.xlu0 %v2036, 108
    %v2603 = vpop.permute.xlu0 %2602
    %2604 = vrot.lane.b32.xlu0 %v2037, 108
    %v2605 = vpop.permute.xlu0 %2604
    %v2606 = vsel %vm692, %v2597, %v2599
    %v2607 = vsel %vm692, %v2599, %v2601
    %v2608 = vsel %vm692, %v2601, %v2603
    %v2609 = vsel %vm692, %v2603, %v2605
    %v2615 = vadd.f32 %v2033, %v2606
    %v2616 = vadd.f32 %v2034, %v2607
    %v2617 = vadd.f32 %v2035, %v2608
    %v2618 = vadd.f32 %v2036, %v2609
    %v2619 = vadd.f32 %v2037, %v2605
    %v2620 = vld [vmem:[#allocation3 + $0x140] sm:$0xff]
    %v2621 = vld [vmem:[#allocation3 + $0x148] sm:$0xff]
    %v2622 = vld [vmem:[#allocation3 + $0x150] sm:$0xff]
    %v2623 = vld [vmem:[#allocation3 + $0x158] sm:$0xff]
    %2629 = vrot.lane.b32.xlu0 %v2615, 106
    %v2630 = vpop.permute.xlu0 %2629
    %2631 = vrot.lane.b32.xlu0 %v2616, 106
    %v2632 = vpop.permute.xlu0 %2631
    %2633 = vrot.lane.b32.xlu0 %v2617, 106
    %v2634 = vpop.permute.xlu0 %2633
    %2635 = vrot.lane.b32.xlu0 %v2618, 106
    %v2636 = vpop.permute.xlu0 %2635
    %2637 = vrot.lane.b32.xlu0 %v2619, 106
    %v2638 = vpop.permute.xlu0 %2637
    %v2639 = vsel %vm726, %v2630, %v2632
    %v2640 = vsel %vm726, %v2632, %v2634
    %v2641 = vsel %vm726, %v2634, %v2636
    %v2642 = vsel %vm726, %v2636, %v2638
    %v2647 = vmul.f32 %v2620, %v2639
    %v2648 = vmul.f32 %v2621, %v2640
    %v2649 = vmul.f32 %v2622, %v2641
    %v2650 = vmul.f32 %v2623, %v2642
    %v2651 = vadd.f32 %v2592, %v2647
    %v2652 = vadd.f32 %v2593, %v2648
    %v2653 = vadd.f32 %v2594, %v2649
    %v2654 = vadd.f32 %v2595, %v2650
    %2655 = vrot.lane.b32.xlu0 %v2033, 106
    %v2656 = vpop.permute.xlu0 %2655
    %2657 = vrot.lane.b32.xlu0 %v2034, 106
    %v2658 = vpop.permute.xlu0 %2657
    %2659 = vrot.lane.b32.xlu0 %v2035, 106
    %v2660 = vpop.permute.xlu0 %2659
    %2661 = vrot.lane.b32.xlu0 %v2036, 106
    %v2662 = vpop.permute.xlu0 %2661
    %2663 = vrot.lane.b32.xlu0 %v2037, 106
    %v2664 = vpop.permute.xlu0 %2663
    %v2665 = vsel %vm726, %v2656, %v2658
    %v2666 = vsel %vm726, %v2658, %v2660
    %v2667 = vsel %vm726, %v2660, %v2662
    %v2668 = vsel %vm726, %v2662, %v2664
    %v2674 = vadd.f32 %v2033, %v2665
    %v2675 = vadd.f32 %v2034, %v2666
    %v2676 = vadd.f32 %v2035, %v2667
    %v2677 = vadd.f32 %v2036, %v2668
    %v2678 = vadd.f32 %v2037, %v2664
    %v2679 = vld [vmem:[#allocation3 + $0x160] sm:$0xff]
    %v2680 = vld [vmem:[#allocation3 + $0x168] sm:$0xff]
    %v2681 = vld [vmem:[#allocation3 + $0x170] sm:$0xff]
    %v2682 = vld [vmem:[#allocation3 + $0x178] sm:$0xff]
    %2688 = vrot.lane.b32.xlu0 %v2674, 107
    %v2689 = vpop.permute.xlu0 %2688
    %2690 = vrot.lane.b32.xlu0 %v2675, 107
    %v2691 = vpop.permute.xlu0 %2690
    %2692 = vrot.lane.b32.xlu0 %v2676, 107
    %v2693 = vpop.permute.xlu0 %2692
    %2694 = vrot.lane.b32.xlu0 %v2677, 107
    %v2695 = vpop.permute.xlu0 %2694
    %2696 = vrot.lane.b32.xlu0 %v2678, 107
    %v2697 = vpop.permute.xlu0 %2696
    %v2698 = vsel %vm786, %v2689, %v2691
    %v2699 = vsel %vm786, %v2691, %v2693
    %v2700 = vsel %vm786, %v2693, %v2695
    %v2701 = vsel %vm786, %v2695, %v2697
    %v2706 = vmul.f32 %v2679, %v2698
    %v2707 = vmul.f32 %v2680, %v2699
    %v2708 = vmul.f32 %v2681, %v2700
    %v2709 = vmul.f32 %v2682, %v2701
    %v2710 = vadd.f32 %v2651, %v2706
    %v2711 = vadd.f32 %v2652, %v2707
    %v2712 = vadd.f32 %v2653, %v2708
    %v2713 = vadd.f32 %v2654, %v2709
    %2714 = vrot.lane.b32.xlu0 %v2033, 104
    %v2715 = vpop.permute.xlu0 %2714
    %2716 = vrot.lane.b32.xlu0 %v2034, 104
    %v2717 = vpop.permute.xlu0 %2716
    %2718 = vrot.lane.b32.xlu0 %v2035, 104
    %v2719 = vpop.permute.xlu0 %2718
    %2720 = vrot.lane.b32.xlu0 %v2036, 104
    %v2721 = vpop.permute.xlu0 %2720
    %2722 = vrot.lane.b32.xlu0 %v2037, 104
    %v2723 = vpop.permute.xlu0 %2722
    %v2724 = vsel %vm604, %v2715, %v2717
    %v2725 = vsel %vm604, %v2717, %v2719
    %v2726 = vsel %vm604, %v2719, %v2721
    %v2727 = vsel %vm604, %v2721, %v2723
    %v2733 = vadd.f32 %v2033, %v2724
    %v2734 = vadd.f32 %v2034, %v2725
    %v2735 = vadd.f32 %v2035, %v2726
    %v2736 = vadd.f32 %v2036, %v2727
    %v2737 = vadd.f32 %v2037, %v2723
    %v2738 = vld [vmem:[#allocation3 + $0x180] sm:$0xff]
    %v2739 = vld [vmem:[#allocation3 + $0x188] sm:$0xff]
    %v2740 = vld [vmem:[#allocation3 + $0x190] sm:$0xff]
    %v2741 = vld [vmem:[#allocation3 + $0x198] sm:$0xff]
    %2747 = vrot.lane.b32.xlu0 %v2733, 108
    %v2748 = vpop.permute.xlu0 %2747
    %2749 = vrot.lane.b32.xlu0 %v2734, 108
    %v2750 = vpop.permute.xlu0 %2749
    %2751 = vrot.lane.b32.xlu0 %v2735, 108
    %v2752 = vpop.permute.xlu0 %2751
    %2753 = vrot.lane.b32.xlu0 %v2736, 108
    %v2754 = vpop.permute.xlu0 %2753
    %2755 = vrot.lane.b32.xlu0 %v2737, 108
    %v2756 = vpop.permute.xlu0 %2755
    %v2757 = vsel %vm692, %v2748, %v2750
    %v2758 = vsel %vm692, %v2750, %v2752
    %v2759 = vsel %vm692, %v2752, %v2754
    %v2760 = vsel %vm692, %v2754, %v2756
    %v2765 = vmul.f32 %v2738, %v2757
    %v2766 = vmul.f32 %v2739, %v2758
    %v2767 = vmul.f32 %v2740, %v2759
    %v2768 = vmul.f32 %v2741, %v2760
    %v2769 = vadd.f32 %v2710, %v2765
    %v2770 = vadd.f32 %v2711, %v2766
    %v2771 = vadd.f32 %v2712, %v2767
    %v2772 = vadd.f32 %v2713, %v2768
    %2773 = vrot.lane.b32.xlu0 %v2033, 102
    %v2774 = vpop.permute.xlu0 %2773
    %2775 = vrot.lane.b32.xlu0 %v2034, 102
    %v2776 = vpop.permute.xlu0 %2775
    %2777 = vrot.lane.b32.xlu0 %v2035, 102
    %v2778 = vpop.permute.xlu0 %2777
    %2779 = vrot.lane.b32.xlu0 %v2036, 102
    %v2780 = vpop.permute.xlu0 %2779
    %2781 = vrot.lane.b32.xlu0 %v2037, 102
    %v2782 = vpop.permute.xlu0 %2781
    %v2783 = vsel %vm482, %v2774, %v2776
    %v2784 = vsel %vm482, %v2776, %v2778
    %v2785 = vsel %vm482, %v2778, %v2780
    %v2786 = vsel %vm482, %v2780, %v2782
    %v2792 = vadd.f32 %v2033, %v2783
    %v2793 = vadd.f32 %v2034, %v2784
    %v2794 = vadd.f32 %v2035, %v2785
    %v2795 = vadd.f32 %v2036, %v2786
    %v2796 = vadd.f32 %v2037, %v2782
    %v2797 = vld [vmem:[#allocation3 + $0x1a0] sm:$0xff]
    %v2798 = vld [vmem:[#allocation3 + $0x1a8] sm:$0xff]
    %v2799 = vld [vmem:[#allocation3 + $0x1b0] sm:$0xff]
    %v2800 = vld [vmem:[#allocation3 + $0x1b8] sm:$0xff]
    %2806 = vrot.lane.b32.xlu0 %v2792, 109
    %v2807 = vpop.permute.xlu0 %2806
    %2808 = vrot.lane.b32.xlu0 %v2793, 109
    %v2809 = vpop.permute.xlu0 %2808
    %2810 = vrot.lane.b32.xlu0 %v2794, 109
    %v2811 = vpop.permute.xlu0 %2810
    %2812 = vrot.lane.b32.xlu0 %v2795, 109
    %v2813 = vpop.permute.xlu0 %2812
    %2814 = vrot.lane.b32.xlu0 %v2796, 109
    %v2815 = vpop.permute.xlu0 %2814
    %v2816 = vsel %vm905, %v2807, %v2809
    %v2817 = vsel %vm905, %v2809, %v2811
    %v2818 = vsel %vm905, %v2811, %v2813
    %v2819 = vsel %vm905, %v2813, %v2815
    %v2824 = vmul.f32 %v2797, %v2816
    %v2825 = vmul.f32 %v2798, %v2817
    %v2826 = vmul.f32 %v2799, %v2818
    %v2827 = vmul.f32 %v2800, %v2819
    %v2828 = vadd.f32 %v2769, %v2824
    %v2829 = vadd.f32 %v2770, %v2825
    %v2830 = vadd.f32 %v2771, %v2826
    %v2831 = vadd.f32 %v2772, %v2827
    %2832 = vrot.lane.b32.xlu0 %v2033, 100
    %v2833 = vpop.permute.xlu0 %2832
    %2834 = vrot.lane.b32.xlu0 %v2034, 100
    %v2835 = vpop.permute.xlu0 %2834
    %2836 = vrot.lane.b32.xlu0 %v2035, 100
    %v2837 = vpop.permute.xlu0 %2836
    %2838 = vrot.lane.b32.xlu0 %v2036, 100
    %v2839 = vpop.permute.xlu0 %2838
    %2840 = vrot.lane.b32.xlu0 %v2037, 100
    %v2841 = vpop.permute.xlu0 %2840
    %v2842 = vsel %vm360, %v2833, %v2835
    %v2843 = vsel %vm360, %v2835, %v2837
    %v2844 = vsel %vm360, %v2837, %v2839
    %v2845 = vsel %vm360, %v2839, %v2841
    %v2851 = vadd.f32 %v2033, %v2842
    %v2852 = vadd.f32 %v2034, %v2843
    %v2853 = vadd.f32 %v2035, %v2844
    %v2854 = vadd.f32 %v2036, %v2845
    %v2855 = vadd.f32 %v2037, %v2841
    %v2856 = vld [vmem:[#allocation3 + $0x1c0] sm:$0xff]
    %v2857 = vld [vmem:[#allocation3 + $0x1c8] sm:$0xff]
    %v2858 = vld [vmem:[#allocation3 + $0x1d0] sm:$0xff]
    %v2859 = vld [vmem:[#allocation3 + $0x1d8] sm:$0xff]
    %2865 = vrot.lane.b32.xlu0 %v2851, 110
    %v2866 = vpop.permute.xlu0 %2865
    %2867 = vrot.lane.b32.xlu0 %v2852, 110
    %v2868 = vpop.permute.xlu0 %2867
    %2869 = vrot.lane.b32.xlu0 %v2853, 110
    %v2870 = vpop.permute.xlu0 %2869
    %2871 = vrot.lane.b32.xlu0 %v2854, 110
    %v2872 = vpop.permute.xlu0 %2871
    %2873 = vrot.lane.b32.xlu0 %v2855, 110
    %v2874 = vpop.permute.xlu0 %2873
    %v2875 = vsel %vm631, %v2866, %v2868
    %v2876 = vsel %vm631, %v2868, %v2870
    %v2877 = vsel %vm631, %v2870, %v2872
    %v2878 = vsel %vm631, %v2872, %v2874
    %v2883 = vmul.f32 %v2856, %v2875
    %v2884 = vmul.f32 %v2857, %v2876
    %v2885 = vmul.f32 %v2858, %v2877
    %v2886 = vmul.f32 %v2859, %v2878
    %v2887 = vadd.f32 %v2828, %v2883
    %v2888 = vadd.f32 %v2829, %v2884
    %v2889 = vadd.f32 %v2830, %v2885
    %v2890 = vadd.f32 %v2831, %v2886
    %2891 = vrot.lane.b32.xlu0 %v2033, 98
    %v2892 = vpop.permute.xlu0 %2891
    %2893 = vrot.lane.b32.xlu0 %v2034, 98
    %v2894 = vpop.permute.xlu0 %2893
    %2895 = vrot.lane.b32.xlu0 %v2035, 98
    %v2896 = vpop.permute.xlu0 %2895
    %2897 = vrot.lane.b32.xlu0 %v2036, 98
    %v2898 = vpop.permute.xlu0 %2897
    %2899 = vrot.lane.b32.xlu0 %v2037, 98
    %v2900 = vpop.permute.xlu0 %2899
    %v2901 = vsel %vm238, %v2892, %v2894
    %v2902 = vsel %vm238, %v2894, %v2896
    %v2903 = vsel %vm238, %v2896, %v2898
    %v2904 = vsel %vm238, %v2898, %v2900
    %v2910 = vadd.f32 %v2033, %v2901
    %v2911 = vadd.f32 %v2034, %v2902
    %v2912 = vadd.f32 %v2035, %v2903
    %v2913 = vadd.f32 %v2036, %v2904
    %v2914 = vadd.f32 %v2037, %v2900
    %v2915 = vld [vmem:[#allocation3 + $0x1e0] sm:$0xff]
    %v2916 = vld [vmem:[#allocation3 + $0x1e8] sm:$0xff]
    %v2917 = vld [vmem:[#allocation3 + $0x1f0] sm:$0xff]
    %v2918 = vld [vmem:[#allocation3 + $0x1f8] sm:$0xff]
    %2924 = vrot.lane.b32.xlu0 %v2910, 111
    %v2925 = vpop.permute.xlu0 %2924
    %2926 = vrot.lane.b32.xlu0 %v2911, 111
    %v2927 = vpop.permute.xlu0 %2926
    %2928 = vrot.lane.b32.xlu0 %v2912, 111
    %v2929 = vpop.permute.xlu0 %2928
    %2930 = vrot.lane.b32.xlu0 %v2913, 111
    %v2931 = vpop.permute.xlu0 %2930
    %2932 = vrot.lane.b32.xlu0 %v2914, 111
    %v2933 = vpop.permute.xlu0 %2932
    %v2934 = vsel %vm1024, %v2925, %v2927
    %v2935 = vsel %vm1024, %v2927, %v2929
    %v2936 = vsel %vm1024, %v2929, %v2931
    %v2937 = vsel %vm1024, %v2931, %v2933
    %v2942 = vmul.f32 %v2915, %v2934
    %v2943 = vmul.f32 %v2916, %v2935
    %v2944 = vmul.f32 %v2917, %v2936
    %v2945 = vmul.f32 %v2918, %v2937
    %v2946 = vadd.f32 %v2887, %v2942
    %v2947 = vadd.f32 %v2888, %v2943
    %v2948 = vadd.f32 %v2889, %v2944
    %v2949 = vadd.f32 %v2890, %v2945
    %v2951 = vadd.f32 %v2033, %v2053
    %v2952 = vadd.f32 %v2034, %v2054
    %v2953 = vadd.f32 %v2035, %v2055
    %v2954 = vadd.f32 %v2036, %v2056
    %v2955 = vadd.f32 %v2037, %v2052
    %v2956 = vld [vmem:[#allocation3 + $0x200] sm:$0xff]
    %v2957 = vld [vmem:[#allocation3 + $0x208] sm:$0xff]
    %v2958 = vld [vmem:[#allocation3 + $0x210] sm:$0xff]
    %v2959 = vld [vmem:[#allocation3 + $0x218] sm:$0xff]
    %2965 = vrot.lane.b32.xlu0 %v2951, 112
    %v2966 = vpop.permute.xlu0 %2965
    %2967 = vrot.lane.b32.xlu0 %v2952, 112
    %v2968 = vpop.permute.xlu0 %2967
    %2969 = vrot.lane.b32.xlu0 %v2953, 112
    %v2970 = vpop.permute.xlu0 %2969
    %2971 = vrot.lane.b32.xlu0 %v2954, 112
    %v2972 = vpop.permute.xlu0 %2971
    %2973 = vrot.lane.b32.xlu0 %v2955, 112
    %v2974 = vpop.permute.xlu0 %2973
    %v2975 = vsel %vm570, %v2966, %v2968
    %v2976 = vsel %vm570, %v2968, %v2970
    %v2977 = vsel %vm570, %v2970, %v2972
    %v2978 = vsel %vm570, %v2972, %v2974
    %v2983 = vmul.f32 %v2956, %v2975
    %v2984 = vmul.f32 %v2957, %v2976
    %v2985 = vmul.f32 %v2958, %v2977
    %v2986 = vmul.f32 %v2959, %v2978
    %v2987 = vadd.f32 %v2946, %v2983
    %v2988 = vadd.f32 %v2947, %v2984
    %v2989 = vadd.f32 %v2948, %v2985
    %v2990 = vadd.f32 %v2949, %v2986
    %2991 = vrot.lane.b32.xlu0 %v2033, 94
    %v2992 = vpop.permute.xlu0 %2991
    %2993 = vrot.lane.b32.xlu0 %v2034, 94
    %v2994 = vpop.permute.xlu0 %2993
    %2995 = vrot.lane.b32.xlu0 %v2035, 94
    %v2996 = vpop.permute.xlu0 %2995
    %2997 = vrot.lane.b32.xlu0 %v2036, 94
    %v2998 = vpop.permute.xlu0 %2997
    %2999 = vrot.lane.b32.xlu0 %v2037, 94
    %v3000 = vpop.permute.xlu0 %2999
    %v3001 = vsel %vm1092, %v2992, %v2994
    %v3002 = vsel %vm1092, %v2994, %v2996
    %v3003 = vsel %vm1092, %v2996, %v2998
    %v3004 = vsel %vm1092, %v2998, %v3000
    %v3010 = vadd.f32 %v2033, %v3001
    %v3011 = vadd.f32 %v2034, %v3002
    %v3012 = vadd.f32 %v2035, %v3003
    %v3013 = vadd.f32 %v2036, %v3004
    %v3014 = vadd.f32 %v2037, %v3000
    %v3015 = vld [vmem:[#allocation3 + $0x220] sm:$0xff]
    %v3016 = vld [vmem:[#allocation3 + $0x228] sm:$0xff]
    %v3017 = vld [vmem:[#allocation3 + $0x230] sm:$0xff]
    %v3018 = vld [vmem:[#allocation3 + $0x238] sm:$0xff]
    %3024 = vrot.lane.b32.xlu0 %v3010, 113
    %v3025 = vpop.permute.xlu0 %3024
    %3026 = vrot.lane.b32.xlu0 %v3011, 113
    %v3027 = vpop.permute.xlu0 %3026
    %3028 = vrot.lane.b32.xlu0 %v3012, 113
    %v3029 = vpop.permute.xlu0 %3028
    %3030 = vrot.lane.b32.xlu0 %v3013, 113
    %v3031 = vpop.permute.xlu0 %3030
    %3032 = vrot.lane.b32.xlu0 %v3014, 113
    %v3033 = vpop.permute.xlu0 %3032
    %v3034 = vsel %vm1126, %v3025, %v3027
    %v3035 = vsel %vm1126, %v3027, %v3029
    %v3036 = vsel %vm1126, %v3029, %v3031
    %v3037 = vsel %vm1126, %v3031, %v3033
    %v3042 = vmul.f32 %v3015, %v3034
    %v3043 = vmul.f32 %v3016, %v3035
    %v3044 = vmul.f32 %v3017, %v3036
    %v3045 = vmul.f32 %v3018, %v3037
    %v3046 = vadd.f32 %v2987, %v3042
    %v3047 = vadd.f32 %v2988, %v3043
    %v3048 = vadd.f32 %v2989, %v3044
    %v3049 = vadd.f32 %v2990, %v3045
    %3050 = vrot.lane.b32.xlu0 %v2033, 92
    %v3051 = vpop.permute.xlu0 %3050
    %3052 = vrot.lane.b32.xlu0 %v2034, 92
    %v3053 = vpop.permute.xlu0 %3052
    %3054 = vrot.lane.b32.xlu0 %v2035, 92
    %v3055 = vpop.permute.xlu0 %3054
    %3056 = vrot.lane.b32.xlu0 %v2036, 92
    %v3057 = vpop.permute.xlu0 %3056
    %3058 = vrot.lane.b32.xlu0 %v2037, 92
    %v3059 = vpop.permute.xlu0 %3058
    %v3060 = vsel %vm1153, %v3051, %v3053
    %v3061 = vsel %vm1153, %v3053, %v3055
    %v3062 = vsel %vm1153, %v3055, %v3057
    %v3063 = vsel %vm1153, %v3057, %v3059
    %v3069 = vadd.f32 %v2033, %v3060
    %v3070 = vadd.f32 %v2034, %v3061
    %v3071 = vadd.f32 %v2035, %v3062
    %v3072 = vadd.f32 %v2036, %v3063
    %v3073 = vadd.f32 %v2037, %v3059
    %v3074 = vld [vmem:[#allocation3 + $0x240] sm:$0xff]
    %v3075 = vld [vmem:[#allocation3 + $0x248] sm:$0xff]
    %v3076 = vld [vmem:[#allocation3 + $0x250] sm:$0xff]
    %v3077 = vld [vmem:[#allocation3 + $0x258] sm:$0xff]
    %3083 = vrot.lane.b32.xlu0 %v3069, 114
    %v3084 = vpop.permute.xlu0 %3083
    %3085 = vrot.lane.b32.xlu0 %v3070, 114
    %v3086 = vpop.permute.xlu0 %3085
    %3087 = vrot.lane.b32.xlu0 %v3071, 114
    %v3088 = vpop.permute.xlu0 %3087
    %3089 = vrot.lane.b32.xlu0 %v3072, 114
    %v3090 = vpop.permute.xlu0 %3089
    %3091 = vrot.lane.b32.xlu0 %v3073, 114
    %v3092 = vpop.permute.xlu0 %3091
    %v3093 = vsel %vm509, %v3084, %v3086
    %v3094 = vsel %vm509, %v3086, %v3088
    %v3095 = vsel %vm509, %v3088, %v3090
    %v3096 = vsel %vm509, %v3090, %v3092
    %v3101 = vmul.f32 %v3074, %v3093
    %v3102 = vmul.f32 %v3075, %v3094
    %v3103 = vmul.f32 %v3076, %v3095
    %v3104 = vmul.f32 %v3077, %v3096
    %v3105 = vadd.f32 %v3046, %v3101
    %v3106 = vadd.f32 %v3047, %v3102
    %v3107 = vadd.f32 %v3048, %v3103
    %v3108 = vadd.f32 %v3049, %v3104
    %3109 = vrot.lane.b32.xlu0 %v2033, 90
    %v3110 = vpop.permute.xlu0 %3109
    %3111 = vrot.lane.b32.xlu0 %v2034, 90
    %v3112 = vpop.permute.xlu0 %3111
    %3113 = vrot.lane.b32.xlu0 %v2035, 90
    %v3114 = vpop.permute.xlu0 %3113
    %3115 = vrot.lane.b32.xlu0 %v2036, 90
    %v3116 = vpop.permute.xlu0 %3115
    %3117 = vrot.lane.b32.xlu0 %v2037, 90
    %v3118 = vpop.permute.xlu0 %3117
    %v3119 = vsel %vm1213, %v3110, %v3112
    %v3120 = vsel %vm1213, %v3112, %v3114
    %v3121 = vsel %vm1213, %v3114, %v3116
    %v3122 = vsel %vm1213, %v3116, %v3118
    %v3128 = vadd.f32 %v2033, %v3119
    %v3129 = vadd.f32 %v2034, %v3120
    %v3130 = vadd.f32 %v2035, %v3121
    %v3131 = vadd.f32 %v2036, %v3122
    %v3132 = vadd.f32 %v2037, %v3118
    %v3133 = vld [vmem:[#allocation3 + $0x260] sm:$0xff]
    %v3134 = vld [vmem:[#allocation3 + $0x268] sm:$0xff]
    %v3135 = vld [vmem:[#allocation3 + $0x270] sm:$0xff]
    %v3136 = vld [vmem:[#allocation3 + $0x278] sm:$0xff]
    %3142 = vrot.lane.b32.xlu0 %v3128, 115
    %v3143 = vpop.permute.xlu0 %3142
    %3144 = vrot.lane.b32.xlu0 %v3129, 115
    %v3145 = vpop.permute.xlu0 %3144
    %3146 = vrot.lane.b32.xlu0 %v3130, 115
    %v3147 = vpop.permute.xlu0 %3146
    %3148 = vrot.lane.b32.xlu0 %v3131, 115
    %v3149 = vpop.permute.xlu0 %3148
    %3150 = vrot.lane.b32.xlu0 %v3132, 115
    %v3151 = vpop.permute.xlu0 %3150
    %v3152 = vsel %vm1247, %v3143, %v3145
    %v3153 = vsel %vm1247, %v3145, %v3147
    %v3154 = vsel %vm1247, %v3147, %v3149
    %v3155 = vsel %vm1247, %v3149, %v3151
    %v3160 = vmul.f32 %v3133, %v3152
    %v3161 = vmul.f32 %v3134, %v3153
    %v3162 = vmul.f32 %v3135, %v3154
    %v3163 = vmul.f32 %v3136, %v3155
    %v3164 = vadd.f32 %v3105, %v3160
    %v3165 = vadd.f32 %v3106, %v3161
    %v3166 = vadd.f32 %v3107, %v3162
    %v3167 = vadd.f32 %v3108, %v3163
    %3168 = vrot.lane.b32.xlu0 %v2033, 88
    %v3169 = vpop.permute.xlu0 %3168
    %3170 = vrot.lane.b32.xlu0 %v2034, 88
    %v3171 = vpop.permute.xlu0 %3170
    %3172 = vrot.lane.b32.xlu0 %v2035, 88
    %v3173 = vpop.permute.xlu0 %3172
    %3174 = vrot.lane.b32.xlu0 %v2036, 88
    %v3175 = vpop.permute.xlu0 %3174
    %3176 = vrot.lane.b32.xlu0 %v2037, 88
    %v3177 = vpop.permute.xlu0 %3176
    %v3178 = vsel %vm1274, %v3169, %v3171
    %v3179 = vsel %vm1274, %v3171, %v3173
    %v3180 = vsel %vm1274, %v3173, %v3175
    %v3181 = vsel %vm1274, %v3175, %v3177
    %v3187 = vadd.f32 %v2033, %v3178
    %v3188 = vadd.f32 %v2034, %v3179
    %v3189 = vadd.f32 %v2035, %v3180
    %v3190 = vadd.f32 %v2036, %v3181
    %v3191 = vadd.f32 %v2037, %v3177
    %v3192 = vld [vmem:[#allocation3 + $0x280] sm:$0xff]
    %v3193 = vld [vmem:[#allocation3 + $0x288] sm:$0xff]
    %v3194 = vld [vmem:[#allocation3 + $0x290] sm:$0xff]
    %v3195 = vld [vmem:[#allocation3 + $0x298] sm:$0xff]
    %3201 = vrot.lane.b32.xlu0 %v3187, 116
    %v3202 = vpop.permute.xlu0 %3201
    %3203 = vrot.lane.b32.xlu0 %v3188, 116
    %v3204 = vpop.permute.xlu0 %3203
    %3205 = vrot.lane.b32.xlu0 %v3189, 116
    %v3206 = vpop.permute.xlu0 %3205
    %3207 = vrot.lane.b32.xlu0 %v3190, 116
    %v3208 = vpop.permute.xlu0 %3207
    %3209 = vrot.lane.b32.xlu0 %v3191, 116
    %v3210 = vpop.permute.xlu0 %3209
    %v3211 = vsel %vm448, %v3202, %v3204
    %v3212 = vsel %vm448, %v3204, %v3206
    %v3213 = vsel %vm448, %v3206, %v3208
    %v3214 = vsel %vm448, %v3208, %v3210
    %v3219 = vmul.f32 %v3192, %v3211
    %v3220 = vmul.f32 %v3193, %v3212
    %v3221 = vmul.f32 %v3194, %v3213
    %v3222 = vmul.f32 %v3195, %v3214
    %v3223 = vadd.f32 %v3164, %v3219
    %v3224 = vadd.f32 %v3165, %v3220
    %v3225 = vadd.f32 %v3166, %v3221
    %v3226 = vadd.f32 %v3167, %v3222
    %3227 = vrot.lane.b32.xlu0 %v2033, 86
    %v3228 = vpop.permute.xlu0 %3227
    %3229 = vrot.lane.b32.xlu0 %v2034, 86
    %v3230 = vpop.permute.xlu0 %3229
    %3231 = vrot.lane.b32.xlu0 %v2035, 86
    %v3232 = vpop.permute.xlu0 %3231
    %3233 = vrot.lane.b32.xlu0 %v2036, 86
    %v3234 = vpop.permute.xlu0 %3233
    %3235 = vrot.lane.b32.xlu0 %v2037, 86
    %v3236 = vpop.permute.xlu0 %3235
    %v3237 = vsel %vm1334, %v3228, %v3230
    %v3238 = vsel %vm1334, %v3230, %v3232
    %v3239 = vsel %vm1334, %v3232, %v3234
    %v3240 = vsel %vm1334, %v3234, %v3236
    %v3246 = vadd.f32 %v2033, %v3237
    %v3247 = vadd.f32 %v2034, %v3238
    %v3248 = vadd.f32 %v2035, %v3239
    %v3249 = vadd.f32 %v2036, %v3240
    %v3250 = vadd.f32 %v2037, %v3236
    %v3251 = vld [vmem:[#allocation3 + $0x2a0] sm:$0xff]
    %v3252 = vld [vmem:[#allocation3 + $0x2a8] sm:$0xff]
    %v3253 = vld [vmem:[#allocation3 + $0x2b0] sm:$0xff]
    %v3254 = vld [vmem:[#allocation3 + $0x2b8] sm:$0xff]
    %3260 = vrot.lane.b32.xlu0 %v3246, 117
    %v3261 = vpop.permute.xlu0 %3260
    %3262 = vrot.lane.b32.xlu0 %v3247, 117
    %v3263 = vpop.permute.xlu0 %3262
    %3264 = vrot.lane.b32.xlu0 %v3248, 117
    %v3265 = vpop.permute.xlu0 %3264
    %3266 = vrot.lane.b32.xlu0 %v3249, 117
    %v3267 = vpop.permute.xlu0 %3266
    %3268 = vrot.lane.b32.xlu0 %v3250, 117
    %v3269 = vpop.permute.xlu0 %3268
    %v3270 = vsel %vm1368, %v3261, %v3263
    %v3271 = vsel %vm1368, %v3263, %v3265
    %v3272 = vsel %vm1368, %v3265, %v3267
    %v3273 = vsel %vm1368, %v3267, %v3269
    %v3278 = vmul.f32 %v3251, %v3270
    %v3279 = vmul.f32 %v3252, %v3271
    %v3280 = vmul.f32 %v3253, %v3272
    %v3281 = vmul.f32 %v3254, %v3273
    %v3282 = vadd.f32 %v3223, %v3278
    %v3283 = vadd.f32 %v3224, %v3279
    %v3284 = vadd.f32 %v3225, %v3280
    %v3285 = vadd.f32 %v3226, %v3281
    %3286 = vrot.lane.b32.xlu0 %v2033, 84
    %v3287 = vpop.permute.xlu0 %3286
    %3288 = vrot.lane.b32.xlu0 %v2034, 84
    %v3289 = vpop.permute.xlu0 %3288
    %3290 = vrot.lane.b32.xlu0 %v2035, 84
    %v3291 = vpop.permute.xlu0 %3290
    %3292 = vrot.lane.b32.xlu0 %v2036, 84
    %v3293 = vpop.permute.xlu0 %3292
    %3294 = vrot.lane.b32.xlu0 %v2037, 84
    %v3295 = vpop.permute.xlu0 %3294
    %v3296 = vsel %vm1395, %v3287, %v3289
    %v3297 = vsel %vm1395, %v3289, %v3291
    %v3298 = vsel %vm1395, %v3291, %v3293
    %v3299 = vsel %vm1395, %v3293, %v3295
    %v3305 = vadd.f32 %v2033, %v3296
    %v3306 = vadd.f32 %v2034, %v3297
    %v3307 = vadd.f32 %v2035, %v3298
    %v3308 = vadd.f32 %v2036, %v3299
    %v3309 = vadd.f32 %v2037, %v3295
    %v3310 = vld [vmem:[#allocation3 + $0x2c0] sm:$0xff]
    %v3311 = vld [vmem:[#allocation3 + $0x2c8] sm:$0xff]
    %v3312 = vld [vmem:[#allocation3 + $0x2d0] sm:$0xff]
    %v3313 = vld [vmem:[#allocation3 + $0x2d8] sm:$0xff]
    %3319 = vrot.lane.b32.xlu0 %v3305, 118
    %v3320 = vpop.permute.xlu0 %3319
    %3321 = vrot.lane.b32.xlu0 %v3306, 118
    %v3322 = vpop.permute.xlu0 %3321
    %3323 = vrot.lane.b32.xlu0 %v3307, 118
    %v3324 = vpop.permute.xlu0 %3323
    %3325 = vrot.lane.b32.xlu0 %v3308, 118
    %v3326 = vpop.permute.xlu0 %3325
    %3327 = vrot.lane.b32.xlu0 %v3309, 118
    %v3328 = vpop.permute.xlu0 %3327
    %v3329 = vsel %vm387, %v3320, %v3322
    %v3330 = vsel %vm387, %v3322, %v3324
    %v3331 = vsel %vm387, %v3324, %v3326
    %v3332 = vsel %vm387, %v3326, %v3328
    %v3337 = vmul.f32 %v3310, %v3329
    %v3338 = vmul.f32 %v3311, %v3330
    %v3339 = vmul.f32 %v3312, %v3331
    %v3340 = vmul.f32 %v3313, %v3332
    %v3341 = vadd.f32 %v3282, %v3337
    %v3342 = vadd.f32 %v3283, %v3338
    %v3343 = vadd.f32 %v3284, %v3339
    %v3344 = vadd.f32 %v3285, %v3340
    %3345 = vrot.lane.b32.xlu0 %v2033, 82
    %v3346 = vpop.permute.xlu0 %3345
    %3347 = vrot.lane.b32.xlu0 %v2034, 82
    %v3348 = vpop.permute.xlu0 %3347
    %3349 = vrot.lane.b32.xlu0 %v2035, 82
    %v3350 = vpop.permute.xlu0 %3349
    %3351 = vrot.lane.b32.xlu0 %v2036, 82
    %v3352 = vpop.permute.xlu0 %3351
    %3353 = vrot.lane.b32.xlu0 %v2037, 82
    %v3354 = vpop.permute.xlu0 %3353
    %v3355 = vsel %vm1455, %v3346, %v3348
    %v3356 = vsel %vm1455, %v3348, %v3350
    %v3357 = vsel %vm1455, %v3350, %v3352
    %v3358 = vsel %vm1455, %v3352, %v3354
    %v3364 = vadd.f32 %v2033, %v3355
    %v3365 = vadd.f32 %v2034, %v3356
    %v3366 = vadd.f32 %v2035, %v3357
    %v3367 = vadd.f32 %v2036, %v3358
    %v3368 = vadd.f32 %v2037, %v3354
    %v3369 = vld [vmem:[#allocation3 + $0x2e0] sm:$0xff]
    %v3370 = vld [vmem:[#allocation3 + $0x2e8] sm:$0xff]
    %v3371 = vld [vmem:[#allocation3 + $0x2f0] sm:$0xff]
    %v3372 = vld [vmem:[#allocation3 + $0x2f8] sm:$0xff]
    %3378 = vrot.lane.b32.xlu0 %v3364, 119
    %v3379 = vpop.permute.xlu0 %3378
    %3380 = vrot.lane.b32.xlu0 %v3365, 119
    %v3381 = vpop.permute.xlu0 %3380
    %3382 = vrot.lane.b32.xlu0 %v3366, 119
    %v3383 = vpop.permute.xlu0 %3382
    %3384 = vrot.lane.b32.xlu0 %v3367, 119
    %v3385 = vpop.permute.xlu0 %3384
    %3386 = vrot.lane.b32.xlu0 %v3368, 119
    %v3387 = vpop.permute.xlu0 %3386
    %v3388 = vsel %vm1489, %v3379, %v3381
    %v3389 = vsel %vm1489, %v3381, %v3383
    %v3390 = vsel %vm1489, %v3383, %v3385
    %v3391 = vsel %vm1489, %v3385, %v3387
    %v3396 = vmul.f32 %v3369, %v3388
    %v3397 = vmul.f32 %v3370, %v3389
    %v3398 = vmul.f32 %v3371, %v3390
    %v3399 = vmul.f32 %v3372, %v3391
    %v3400 = vadd.f32 %v3341, %v3396
    %v3401 = vadd.f32 %v3342, %v3397
    %v3402 = vadd.f32 %v3343, %v3398
    %v3403 = vadd.f32 %v3344, %v3399
    %3404 = vrot.lane.b32.xlu0 %v2033, 80
    %v3405 = vpop.permute.xlu0 %3404
    %3406 = vrot.lane.b32.xlu0 %v2034, 80
    %v3407 = vpop.permute.xlu0 %3406
    %3408 = vrot.lane.b32.xlu0 %v2035, 80
    %v3409 = vpop.permute.xlu0 %3408
    %3410 = vrot.lane.b32.xlu0 %v2036, 80
    %v3411 = vpop.permute.xlu0 %3410
    %3412 = vrot.lane.b32.xlu0 %v2037, 80
    %v3413 = vpop.permute.xlu0 %3412
    %v3414 = vsel %vm1516, %v3405, %v3407
    %v3415 = vsel %vm1516, %v3407, %v3409
    %v3416 = vsel %vm1516, %v3409, %v3411
    %v3417 = vsel %vm1516, %v3411, %v3413
    %v3423 = vadd.f32 %v2033, %v3414
    %v3424 = vadd.f32 %v2034, %v3415
    %v3425 = vadd.f32 %v2035, %v3416
    %v3426 = vadd.f32 %v2036, %v3417
    %v3427 = vadd.f32 %v2037, %v3413
    %v3428 = vld [vmem:[#allocation3 + $0x300] sm:$0xff]
    %v3429 = vld [vmem:[#allocation3 + $0x308] sm:$0xff]
    %v3430 = vld [vmem:[#allocation3 + $0x310] sm:$0xff]
    %v3431 = vld [vmem:[#allocation3 + $0x318] sm:$0xff]
    %3437 = vrot.lane.b32.xlu0 %v3423, 120
    %v3438 = vpop.permute.xlu0 %3437
    %3439 = vrot.lane.b32.xlu0 %v3424, 120
    %v3440 = vpop.permute.xlu0 %3439
    %3441 = vrot.lane.b32.xlu0 %v3425, 120
    %v3442 = vpop.permute.xlu0 %3441
    %3443 = vrot.lane.b32.xlu0 %v3426, 120
    %v3444 = vpop.permute.xlu0 %3443
    %3445 = vrot.lane.b32.xlu0 %v3427, 120
    %v3446 = vpop.permute.xlu0 %3445
    %v3447 = vsel %vm326, %v3438, %v3440
    %v3448 = vsel %vm326, %v3440, %v3442
    %v3449 = vsel %vm326, %v3442, %v3444
    %v3450 = vsel %vm326, %v3444, %v3446
    %v3455 = vmul.f32 %v3428, %v3447
    %v3456 = vmul.f32 %v3429, %v3448
    %v3457 = vmul.f32 %v3430, %v3449
    %v3458 = vmul.f32 %v3431, %v3450
    %v3459 = vadd.f32 %v3400, %v3455
    %v3460 = vadd.f32 %v3401, %v3456
    %v3461 = vadd.f32 %v3402, %v3457
    %v3462 = vadd.f32 %v3403, %v3458
    %3463 = vrot.lane.b32.xlu0 %v2033, 78
    %v3464 = vpop.permute.xlu0 %3463
    %3465 = vrot.lane.b32.xlu0 %v2034, 78
    %v3466 = vpop.permute.xlu0 %3465
    %3467 = vrot.lane.b32.xlu0 %v2035, 78
    %v3468 = vpop.permute.xlu0 %3467
    %3469 = vrot.lane.b32.xlu0 %v2036, 78
    %v3470 = vpop.permute.xlu0 %3469
    %3471 = vrot.lane.b32.xlu0 %v2037, 78
    %v3472 = vpop.permute.xlu0 %3471
    %v3473 = vsel %vm1576, %v3464, %v3466
    %v3474 = vsel %vm1576, %v3466, %v3468
    %v3475 = vsel %vm1576, %v3468, %v3470
    %v3476 = vsel %vm1576, %v3470, %v3472
    %v3482 = vadd.f32 %v2033, %v3473
    %v3483 = vadd.f32 %v2034, %v3474
    %v3484 = vadd.f32 %v2035, %v3475
    %v3485 = vadd.f32 %v2036, %v3476
    %v3486 = vadd.f32 %v2037, %v3472
    %v3487 = vld [vmem:[#allocation3 + $0x320] sm:$0xff]
    %v3488 = vld [vmem:[#allocation3 + $0x328] sm:$0xff]
    %v3489 = vld [vmem:[#allocation3 + $0x330] sm:$0xff]
    %v3490 = vld [vmem:[#allocation3 + $0x338] sm:$0xff]
    %3496 = vrot.lane.b32.xlu0 %v3482, 121
    %v3497 = vpop.permute.xlu0 %3496
    %3498 = vrot.lane.b32.xlu0 %v3483, 121
    %v3499 = vpop.permute.xlu0 %3498
    %3500 = vrot.lane.b32.xlu0 %v3484, 121
    %v3501 = vpop.permute.xlu0 %3500
    %3502 = vrot.lane.b32.xlu0 %v3485, 121
    %v3503 = vpop.permute.xlu0 %3502
    %3504 = vrot.lane.b32.xlu0 %v3486, 121
    %v3505 = vpop.permute.xlu0 %3504
    %v3506 = vsel %vm1610, %v3497, %v3499
    %v3507 = vsel %vm1610, %v3499, %v3501
    %v3508 = vsel %vm1610, %v3501, %v3503
    %v3509 = vsel %vm1610, %v3503, %v3505
    %v3514 = vmul.f32 %v3487, %v3506
    %v3515 = vmul.f32 %v3488, %v3507
    %v3516 = vmul.f32 %v3489, %v3508
    %v3517 = vmul.f32 %v3490, %v3509
    %v3518 = vadd.f32 %v3459, %v3514
    %v3519 = vadd.f32 %v3460, %v3515
    %v3520 = vadd.f32 %v3461, %v3516
    %v3521 = vadd.f32 %v3462, %v3517
    %3522 = vrot.lane.b32.xlu0 %v2033, 76
    %v3523 = vpop.permute.xlu0 %3522
    %3524 = vrot.lane.b32.xlu0 %v2034, 76
    %v3525 = vpop.permute.xlu0 %3524
    %3526 = vrot.lane.b32.xlu0 %v2035, 76
    %v3527 = vpop.permute.xlu0 %3526
    %3528 = vrot.lane.b32.xlu0 %v2036, 76
    %v3529 = vpop.permute.xlu0 %3528
    %3530 = vrot.lane.b32.xlu0 %v2037, 76
    %v3531 = vpop.permute.xlu0 %3530
    %v3532 = vsel %vm1637, %v3523, %v3525
    %v3533 = vsel %vm1637, %v3525, %v3527
    %v3534 = vsel %vm1637, %v3527, %v3529
    %v3535 = vsel %vm1637, %v3529, %v3531
    %v3541 = vadd.f32 %v2033, %v3532
    %v3542 = vadd.f32 %v2034, %v3533
    %v3543 = vadd.f32 %v2035, %v3534
    %v3544 = vadd.f32 %v2036, %v3535
    %v3545 = vadd.f32 %v2037, %v3531
    %v3546 = vld [vmem:[#allocation3 + $0x340] sm:$0xff]
    %v3547 = vld [vmem:[#allocation3 + $0x348] sm:$0xff]
    %v3548 = vld [vmem:[#allocation3 + $0x350] sm:$0xff]
    %v3549 = vld [vmem:[#allocation3 + $0x358] sm:$0xff]
    %3555 = vrot.lane.b32.xlu0 %v3541, 122
    %v3556 = vpop.permute.xlu0 %3555
    %3557 = vrot.lane.b32.xlu0 %v3542, 122
    %v3558 = vpop.permute.xlu0 %3557
    %3559 = vrot.lane.b32.xlu0 %v3543, 122
    %v3560 = vpop.permute.xlu0 %3559
    %3561 = vrot.lane.b32.xlu0 %v3544, 122
    %v3562 = vpop.permute.xlu0 %3561
    %3563 = vrot.lane.b32.xlu0 %v3545, 122
    %v3564 = vpop.permute.xlu0 %3563
    %v3565 = vsel %vm265, %v3556, %v3558
    %v3566 = vsel %vm265, %v3558, %v3560
    %v3567 = vsel %vm265, %v3560, %v3562
    %v3568 = vsel %vm265, %v3562, %v3564
    %v3573 = vmul.f32 %v3546, %v3565
    %v3574 = vmul.f32 %v3547, %v3566
    %v3575 = vmul.f32 %v3548, %v3567
    %v3576 = vmul.f32 %v3549, %v3568
    %v3577 = vadd.f32 %v3518, %v3573
    %v3578 = vadd.f32 %v3519, %v3574
    %v3579 = vadd.f32 %v3520, %v3575
    %v3580 = vadd.f32 %v3521, %v3576
    %3581 = vrot.lane.b32.xlu0 %v2033, 74
    %v3582 = vpop.permute.xlu0 %3581
    %3583 = vrot.lane.b32.xlu0 %v2034, 74
    %v3584 = vpop.permute.xlu0 %3583
    %3585 = vrot.lane.b32.xlu0 %v2035, 74
    %v3586 = vpop.permute.xlu0 %3585
    %3587 = vrot.lane.b32.xlu0 %v2036, 74
    %v3588 = vpop.permute.xlu0 %3587
    %3589 = vrot.lane.b32.xlu0 %v2037, 74
    %v3590 = vpop.permute.xlu0 %3589
    %v3591 = vsel %vm1697, %v3582, %v3584
    %v3592 = vsel %vm1697, %v3584, %v3586
    %v3593 = vsel %vm1697, %v3586, %v3588
    %v3594 = vsel %vm1697, %v3588, %v3590
    %v3600 = vadd.f32 %v2033, %v3591
    %v3601 = vadd.f32 %v2034, %v3592
    %v3602 = vadd.f32 %v2035, %v3593
    %v3603 = vadd.f32 %v2036, %v3594
    %v3604 = vadd.f32 %v2037, %v3590
    %v3605 = vld [vmem:[#allocation3 + $0x360] sm:$0xff]
    %v3606 = vld [vmem:[#allocation3 + $0x368] sm:$0xff]
    %v3607 = vld [vmem:[#allocation3 + $0x370] sm:$0xff]
    %v3608 = vld [vmem:[#allocation3 + $0x378] sm:$0xff]
    %3614 = vrot.lane.b32.xlu0 %v3600, 123
    %v3615 = vpop.permute.xlu0 %3614
    %3616 = vrot.lane.b32.xlu0 %v3601, 123
    %v3617 = vpop.permute.xlu0 %3616
    %3618 = vrot.lane.b32.xlu0 %v3602, 123
    %v3619 = vpop.permute.xlu0 %3618
    %3620 = vrot.lane.b32.xlu0 %v3603, 123
    %v3621 = vpop.permute.xlu0 %3620
    %3622 = vrot.lane.b32.xlu0 %v3604, 123
    %v3623 = vpop.permute.xlu0 %3622
    %v3624 = vsel %vm1731, %v3615, %v3617
    %v3625 = vsel %vm1731, %v3617, %v3619
    %v3626 = vsel %vm1731, %v3619, %v3621
    %v3627 = vsel %vm1731, %v3621, %v3623
    %v3632 = vmul.f32 %v3605, %v3624
    %v3633 = vmul.f32 %v3606, %v3625
    %v3634 = vmul.f32 %v3607, %v3626
    %v3635 = vmul.f32 %v3608, %v3627
    %v3636 = vadd.f32 %v3577, %v3632
    %v3637 = vadd.f32 %v3578, %v3633
    %v3638 = vadd.f32 %v3579, %v3634
    %v3639 = vadd.f32 %v3580, %v3635
    %3640 = vrot.lane.b32.xlu0 %v2033, 72
    %v3641 = vpop.permute.xlu0 %3640
    %3642 = vrot.lane.b32.xlu0 %v2034, 72
    %v3643 = vpop.permute.xlu0 %3642
    %3644 = vrot.lane.b32.xlu0 %v2035, 72
    %v3645 = vpop.permute.xlu0 %3644
    %3646 = vrot.lane.b32.xlu0 %v2036, 72
    %v3647 = vpop.permute.xlu0 %3646
    %3648 = vrot.lane.b32.xlu0 %v2037, 72
    %v3649 = vpop.permute.xlu0 %3648
    %v3650 = vsel %vm1758, %v3641, %v3643
    %v3651 = vsel %vm1758, %v3643, %v3645
    %v3652 = vsel %vm1758, %v3645, %v3647
    %v3653 = vsel %vm1758, %v3647, %v3649
    %v3659 = vadd.f32 %v2033, %v3650
    %v3660 = vadd.f32 %v2034, %v3651
    %v3661 = vadd.f32 %v2035, %v3652
    %v3662 = vadd.f32 %v2036, %v3653
    %v3663 = vadd.f32 %v2037, %v3649
    %v3664 = vld [vmem:[#allocation3 + $0x380] sm:$0xff]
    %v3665 = vld [vmem:[#allocation3 + $0x388] sm:$0xff]
    %v3666 = vld [vmem:[#allocation3 + $0x390] sm:$0xff]
    %v3667 = vld [vmem:[#allocation3 + $0x398] sm:$0xff]
    %3673 = vrot.lane.b32.xlu0 %v3659, 124
    %v3674 = vpop.permute.xlu0 %3673
    %3675 = vrot.lane.b32.xlu0 %v3660, 124
    %v3676 = vpop.permute.xlu0 %3675
    %3677 = vrot.lane.b32.xlu0 %v3661, 124
    %v3678 = vpop.permute.xlu0 %3677
    %3679 = vrot.lane.b32.xlu0 %v3662, 124
    %v3680 = vpop.permute.xlu0 %3679
    %3681 = vrot.lane.b32.xlu0 %v3663, 124
    %v3682 = vpop.permute.xlu0 %3681
    %v3683 = vsel %vm204, %v3674, %v3676
    %v3684 = vsel %vm204, %v3676, %v3678
    %v3685 = vsel %vm204, %v3678, %v3680
    %v3686 = vsel %vm204, %v3680, %v3682
    %v3691 = vmul.f32 %v3664, %v3683
    %v3692 = vmul.f32 %v3665, %v3684
    %v3693 = vmul.f32 %v3666, %v3685
    %v3694 = vmul.f32 %v3667, %v3686
    %v3695 = vadd.f32 %v3636, %v3691
    %v3696 = vadd.f32 %v3637, %v3692
    %v3697 = vadd.f32 %v3638, %v3693
    %v3698 = vadd.f32 %v3639, %v3694
    %3699 = vrot.lane.b32.xlu0 %v2033, 70
    %v3700 = vpop.permute.xlu0 %3699
    %3701 = vrot.lane.b32.xlu0 %v2034, 70
    %v3702 = vpop.permute.xlu0 %3701
    %3703 = vrot.lane.b32.xlu0 %v2035, 70
    %v3704 = vpop.permute.xlu0 %3703
    %3705 = vrot.lane.b32.xlu0 %v2036, 70
    %v3706 = vpop.permute.xlu0 %3705
    %3707 = vrot.lane.b32.xlu0 %v2037, 70
    %v3708 = vpop.permute.xlu0 %3707
    %v3709 = vsel %vm1818, %v3700, %v3702
    %v3710 = vsel %vm1818, %v3702, %v3704
    %v3711 = vsel %vm1818, %v3704, %v3706
    %v3712 = vsel %vm1818, %v3706, %v3708
    %v3718 = vadd.f32 %v2033, %v3709
    %v3719 = vadd.f32 %v2034, %v3710
    %v3720 = vadd.f32 %v2035, %v3711
    %v3721 = vadd.f32 %v2036, %v3712
    %v3722 = vadd.f32 %v2037, %v3708
    %v3723 = vld [vmem:[#allocation3 + $0x3a0] sm:$0xff]
    %v3724 = vld [vmem:[#allocation3 + $0x3a8] sm:$0xff]
    %v3725 = vld [vmem:[#allocation3 + $0x3b0] sm:$0xff]
    %v3726 = vld [vmem:[#allocation3 + $0x3b8] sm:$0xff]
    %3732 = vrot.lane.b32.xlu0 %v3718, 125
    %v3733 = vpop.permute.xlu0 %3732
    %3734 = vrot.lane.b32.xlu0 %v3719, 125
    %v3735 = vpop.permute.xlu0 %3734
    %3736 = vrot.lane.b32.xlu0 %v3720, 125
    %v3737 = vpop.permute.xlu0 %3736
    %3738 = vrot.lane.b32.xlu0 %v3721, 125
    %v3739 = vpop.permute.xlu0 %3738
    %3740 = vrot.lane.b32.xlu0 %v3722, 125
    %v3741 = vpop.permute.xlu0 %3740
    %v3742 = vsel %vm1852, %v3733, %v3735
    %v3743 = vsel %vm1852, %v3735, %v3737
    %v3744 = vsel %vm1852, %v3737, %v3739
    %v3745 = vsel %vm1852, %v3739, %v3741
    %v3750 = vmul.f32 %v3723, %v3742
    %v3751 = vmul.f32 %v3724, %v3743
    %v3752 = vmul.f32 %v3725, %v3744
    %v3753 = vmul.f32 %v3726, %v3745
    %v3754 = vadd.f32 %v3695, %v3750
    %v3755 = vadd.f32 %v3696, %v3751
    %v3756 = vadd.f32 %v3697, %v3752
    %v3757 = vadd.f32 %v3698, %v3753
    %3758 = vrot.lane.b32.xlu0 %v2033, 68
    %v3759 = vpop.permute.xlu0 %3758
    %3760 = vrot.lane.b32.xlu0 %v2034, 68
    %v3761 = vpop.permute.xlu0 %3760
    %3762 = vrot.lane.b32.xlu0 %v2035, 68
    %v3763 = vpop.permute.xlu0 %3762
    %3764 = vrot.lane.b32.xlu0 %v2036, 68
    %v3765 = vpop.permute.xlu0 %3764
    %3766 = vrot.lane.b32.xlu0 %v2037, 68
    %v3767 = vpop.permute.xlu0 %3766
    %v3768 = vsel %vm1879, %v3759, %v3761
    %v3769 = vsel %vm1879, %v3761, %v3763
    %v3770 = vsel %vm1879, %v3763, %v3765
    %v3771 = vsel %vm1879, %v3765, %v3767
    %v3777 = vadd.f32 %v2033, %v3768
    %v3778 = vadd.f32 %v2034, %v3769
    %v3779 = vadd.f32 %v2035, %v3770
    %v3780 = vadd.f32 %v2036, %v3771
    %v3781 = vadd.f32 %v2037, %v3767
    %v3782 = vld [vmem:[#allocation3 + $0x3c0] sm:$0xff]
    %v3783 = vld [vmem:[#allocation3 + $0x3c8] sm:$0xff]
    %v3784 = vld [vmem:[#allocation3 + $0x3d0] sm:$0xff]
    %v3785 = vld [vmem:[#allocation3 + $0x3d8] sm:$0xff]
    %3791 = vrot.lane.b32.xlu0 %v3777, 126
    %v3792 = vpop.permute.xlu0 %3791
    %3793 = vrot.lane.b32.xlu0 %v3778, 126
    %v3794 = vpop.permute.xlu0 %3793
    %3795 = vrot.lane.b32.xlu0 %v3779, 126
    %v3796 = vpop.permute.xlu0 %3795
    %3797 = vrot.lane.b32.xlu0 %v3780, 126
    %v3798 = vpop.permute.xlu0 %3797
    %3799 = vrot.lane.b32.xlu0 %v3781, 126
    %v3800 = vpop.permute.xlu0 %3799
    %v3801 = vsel %vm143, %v3792, %v3794
    %v3802 = vsel %vm143, %v3794, %v3796
    %v3803 = vsel %vm143, %v3796, %v3798
    %v3804 = vsel %vm143, %v3798, %v3800
    %v3809 = vmul.f32 %v3782, %v3801
    %v3810 = vmul.f32 %v3783, %v3802
    %v3811 = vmul.f32 %v3784, %v3803
    %v3812 = vmul.f32 %v3785, %v3804
    %v3813 = vadd.f32 %v3754, %v3809
    %v3814 = vadd.f32 %v3755, %v3810
    %v3815 = vadd.f32 %v3756, %v3811
    %v3816 = vadd.f32 %v3757, %v3812
    %3817 = vrot.lane.b32.xlu0 %v2033, 66
    %v3818 = vpop.permute.xlu0 %3817
    %3819 = vrot.lane.b32.xlu0 %v2034, 66
    %v3820 = vpop.permute.xlu0 %3819
    %3821 = vrot.lane.b32.xlu0 %v2035, 66
    %v3822 = vpop.permute.xlu0 %3821
    %3823 = vrot.lane.b32.xlu0 %v2036, 66
    %v3824 = vpop.permute.xlu0 %3823
    %3825 = vrot.lane.b32.xlu0 %v2037, 66
    %v3826 = vpop.permute.xlu0 %3825
    %v3827 = vsel %vm1939, %v3818, %v3820
    %v3828 = vsel %vm1939, %v3820, %v3822
    %v3829 = vsel %vm1939, %v3822, %v3824
    %v3830 = vsel %vm1939, %v3824, %v3826
    %v3836 = vadd.f32 %v2033, %v3827
    %v3837 = vadd.f32 %v2034, %v3828
    %v3838 = vadd.f32 %v2035, %v3829
    %v3839 = vadd.f32 %v2036, %v3830
    %v3840 = vadd.f32 %v2037, %v3826
    %v3841 = vld [vmem:[#allocation3 + $0x3e0] sm:$0xff]
    %v3842 = vld [vmem:[#allocation3 + $0x3e8] sm:$0xff]
    %v3843 = vld [vmem:[#allocation3 + $0x3f0] sm:$0xff]
    %v3844 = vld [vmem:[#allocation3 + $0x3f8] sm:$0xff]
    %3850 = vrot.lane.b32.xlu0 %v3836, 127
    %v3851 = vpop.permute.xlu0 %3850
    %3852 = vrot.lane.b32.xlu0 %v3837, 127
    %v3853 = vpop.permute.xlu0 %3852
    %3854 = vrot.lane.b32.xlu0 %v3838, 127
    %v3855 = vpop.permute.xlu0 %3854
    %3856 = vrot.lane.b32.xlu0 %v3839, 127
    %v3857 = vpop.permute.xlu0 %3856
    %3858 = vrot.lane.b32.xlu0 %v3840, 127
    %v3859 = vpop.permute.xlu0 %3858
    %v3860 = vsel %vm1973, %v3851, %v3853
    %v3861 = vsel %vm1973, %v3853, %v3855
    %v3862 = vsel %vm1973, %v3855, %v3857
    %v3863 = vsel %vm1973, %v3857, %v3859
    %v3868 = vmul.f32 %v3841, %v3860
    %v3869 = vmul.f32 %v3842, %v3861
    %v3870 = vmul.f32 %v3843, %v3862
    %v3871 = vmul.f32 %v3844, %v3863
    %v3872 = vadd.f32 %v3813, %v3868
    %v3873 = vadd.f32 %v3814, %v3869
    %v3874 = vadd.f32 %v3815, %v3870
    %v3875 = vadd.f32 %v3816, %v3871
    %3876 = vrot.lane.b32.xlu0 %v2033, 64
    %v3877 = vpop.permute.xlu0 %3876
    %3878 = vrot.lane.b32.xlu0 %v2034, 64
    %v3879 = vpop.permute.xlu0 %3878
    %3880 = vrot.lane.b32.xlu0 %v2035, 64
    %v3881 = vpop.permute.xlu0 %3880
    %3882 = vrot.lane.b32.xlu0 %v2036, 64
    %v3883 = vpop.permute.xlu0 %3882
    %3884 = vrot.lane.b32.xlu0 %v2037, 64
    %v3885 = vpop.permute.xlu0 %3884
    %v3886 = vsel %vm2000, %v3877, %v3879
    %v3887 = vsel %vm2000, %v3879, %v3881
    %v3888 = vsel %vm2000, %v3881, %v3883
    %v3889 = vsel %vm2000, %v3883, %v3885
    %v3894 = vadd.f32 %v2033, %v3886
    %v3895 = vadd.f32 %v2034, %v3887
    %v3896 = vadd.f32 %v2035, %v3888
    %v3897 = vadd.f32 %v2036, %v3889
    %v3898 = vld [vmem:[#allocation3 + $0x400] sm:$0xff]
    %v3899 = vld [vmem:[#allocation3 + $0x408] sm:$0xff]
    %v3900 = vld [vmem:[#allocation3 + $0x410] sm:$0xff]
    %v3901 = vld [vmem:[#allocation3 + $0x418] sm:$0xff]
    %v3902 = vmul.f32 %v3898, %v3894
    %v3903 = vmul.f32 %v3899, %v3895
    %v3904 = vmul.f32 %v3900, %v3896
    %v3905 = vmul.f32 %v3901, %v3897
    %v3906 = vadd.f32 %v3872, %v3902
    %v3907 = vadd.f32 %v3873, %v3903
    %v3908 = vadd.f32 %v3874, %v3904
    %v3909 = vadd.f32 %v3875, %v3905
    %3910 = vst [vmem:[#allocation9 + $0x20] sm:$0xff] %v3906
    %3911 = vst [vmem:[#allocation9 + $0x28] sm:$0xff] %v3907
    %3912 = vst [vmem:[#allocation9 + $0x30] sm:$0xff] %v3908
    %3913 = vst [vmem:[#allocation9 + $0x38] sm:$0xff] %v3909
    %v3914 = vld [vmem:[#allocation3] sm:$0xff]
    %v3915 = vld [vmem:[#allocation3 + $0x8] sm:$0xff]
    %v3916 = vld [vmem:[#allocation3 + $0x10] sm:$0xff]
    %v3917 = vld [vmem:[#allocation3 + $0x18] sm:$0xff]
    %v3918 = vld [vmem:[#allocation2 + $0x40] sm:$0xff]
    %v3919 = vld [vmem:[#allocation2 + $0x48] sm:$0xff]
    %v3920 = vld [vmem:[#allocation2 + $0x50] sm:$0xff]
    %v3921 = vld [vmem:[#allocation2 + $0x58] sm:$0xff]
    %v3922 = vld [vmem:[#allocation2 + $0x60] sm:$0xff]
    %3928 = vrot.lane.b32.xlu0 %v3918, 96
    %v3929 = vpop.permute.xlu0 %3928
    %3930 = vrot.lane.b32.xlu0 %v3919, 96
    %v3931 = vpop.permute.xlu0 %3930
    %3932 = vrot.lane.b32.xlu0 %v3920, 96
    %v3933 = vpop.permute.xlu0 %3932
    %3934 = vrot.lane.b32.xlu0 %v3921, 96
    %v3935 = vpop.permute.xlu0 %3934
    %3936 = vrot.lane.b32.xlu0 %v3922, 96
    %v3937 = vpop.permute.xlu0 %3936
    %v3938 = vsel %vm120, %v3929, %v3931
    %v3939 = vsel %vm120, %v3931, %v3933
    %v3940 = vsel %vm120, %v3933, %v3935
    %v3941 = vsel %vm120, %v3935, %v3937
    %v3946 = vmul.f32 %v3914, %v3938
    %v3947 = vmul.f32 %v3915, %v3939
    %v3948 = vmul.f32 %v3916, %v3940
    %v3949 = vmul.f32 %v3917, %v3941
    %3950 = vrot.lane.b32.xlu0 %v3918, 126
    %v3951 = vpop.permute.xlu0 %3950
    %3952 = vrot.lane.b32.xlu0 %v3919, 126
    %v3953 = vpop.permute.xlu0 %3952
    %3954 = vrot.lane.b32.xlu0 %v3920, 126
    %v3955 = vpop.permute.xlu0 %3954
    %3956 = vrot.lane.b32.xlu0 %v3921, 126
    %v3957 = vpop.permute.xlu0 %3956
    %3958 = vrot.lane.b32.xlu0 %v3922, 126
    %v3959 = vpop.permute.xlu0 %3958
    %v3960 = vsel %vm143, %v3951, %v3953
    %v3961 = vsel %vm143, %v3953, %v3955
    %v3962 = vsel %vm143, %v3955, %v3957
    %v3963 = vsel %vm143, %v3957, %v3959
    %v3969 = vadd.f32 %v3918, %v3960
    %v3970 = vadd.f32 %v3919, %v3961
    %v3971 = vadd.f32 %v3920, %v3962
    %v3972 = vadd.f32 %v3921, %v3963
    %v3973 = vadd.f32 %v3922, %v3959
    %v3974 = vld [vmem:[#allocation3 + $0x20] sm:$0xff]
    %v3975 = vld [vmem:[#allocation3 + $0x28] sm:$0xff]
    %v3976 = vld [vmem:[#allocation3 + $0x30] sm:$0xff]
    %v3977 = vld [vmem:[#allocation3 + $0x38] sm:$0xff]
    %3983 = vrot.lane.b32.xlu0 %v3969, 97
    %v3984 = vpop.permute.xlu0 %3983
    %3985 = vrot.lane.b32.xlu0 %v3970, 97
    %v3986 = vpop.permute.xlu0 %3985
    %3987 = vrot.lane.b32.xlu0 %v3971, 97
    %v3988 = vpop.permute.xlu0 %3987
    %3989 = vrot.lane.b32.xlu0 %v3972, 97
    %v3990 = vpop.permute.xlu0 %3989
    %3991 = vrot.lane.b32.xlu0 %v3973, 97
    %v3992 = vpop.permute.xlu0 %3991
    %v3993 = vsel %vm177, %v3984, %v3986
    %v3994 = vsel %vm177, %v3986, %v3988
    %v3995 = vsel %vm177, %v3988, %v3990
    %v3996 = vsel %vm177, %v3990, %v3992
    %v4001 = vmul.f32 %v3974, %v3993
    %v4002 = vmul.f32 %v3975, %v3994
    %v4003 = vmul.f32 %v3976, %v3995
    %v4004 = vmul.f32 %v3977, %v3996
    %v4005 = vadd.f32 %v3946, %v4001
    %v4006 = vadd.f32 %v3947, %v4002
    %v4007 = vadd.f32 %v3948, %v4003
    %v4008 = vadd.f32 %v3949, %v4004
    %4009 = vrot.lane.b32.xlu0 %v3918, 124
    %v4010 = vpop.permute.xlu0 %4009
    %4011 = vrot.lane.b32.xlu0 %v3919, 124
    %v4012 = vpop.permute.xlu0 %4011
    %4013 = vrot.lane.b32.xlu0 %v3920, 124
    %v4014 = vpop.permute.xlu0 %4013
    %4015 = vrot.lane.b32.xlu0 %v3921, 124
    %v4016 = vpop.permute.xlu0 %4015
    %4017 = vrot.lane.b32.xlu0 %v3922, 124
    %v4018 = vpop.permute.xlu0 %4017
    %v4019 = vsel %vm204, %v4010, %v4012
    %v4020 = vsel %vm204, %v4012, %v4014
    %v4021 = vsel %vm204, %v4014, %v4016
    %v4022 = vsel %vm204, %v4016, %v4018
    %v4028 = vadd.f32 %v3918, %v4019
    %v4029 = vadd.f32 %v3919, %v4020
    %v4030 = vadd.f32 %v3920, %v4021
    %v4031 = vadd.f32 %v3921, %v4022
    %v4032 = vadd.f32 %v3922, %v4018
    %v4033 = vld [vmem:[#allocation3 + $0x40] sm:$0xff]
    %v4034 = vld [vmem:[#allocation3 + $0x48] sm:$0xff]
    %v4035 = vld [vmem:[#allocation3 + $0x50] sm:$0xff]
    %v4036 = vld [vmem:[#allocation3 + $0x58] sm:$0xff]
    %4042 = vrot.lane.b32.xlu0 %v4028, 98
    %v4043 = vpop.permute.xlu0 %4042
    %4044 = vrot.lane.b32.xlu0 %v4029, 98
    %v4045 = vpop.permute.xlu0 %4044
    %4046 = vrot.lane.b32.xlu0 %v4030, 98
    %v4047 = vpop.permute.xlu0 %4046
    %4048 = vrot.lane.b32.xlu0 %v4031, 98
    %v4049 = vpop.permute.xlu0 %4048
    %4050 = vrot.lane.b32.xlu0 %v4032, 98
    %v4051 = vpop.permute.xlu0 %4050
    %v4052 = vsel %vm238, %v4043, %v4045
    %v4053 = vsel %vm238, %v4045, %v4047
    %v4054 = vsel %vm238, %v4047, %v4049
    %v4055 = vsel %vm238, %v4049, %v4051
    %v4060 = vmul.f32 %v4033, %v4052
    %v4061 = vmul.f32 %v4034, %v4053
    %v4062 = vmul.f32 %v4035, %v4054
    %v4063 = vmul.f32 %v4036, %v4055
    %v4064 = vadd.f32 %v4005, %v4060
    %v4065 = vadd.f32 %v4006, %v4061
    %v4066 = vadd.f32 %v4007, %v4062
    %v4067 = vadd.f32 %v4008, %v4063
    %4068 = vrot.lane.b32.xlu0 %v3918, 122
    %v4069 = vpop.permute.xlu0 %4068
    %4070 = vrot.lane.b32.xlu0 %v3919, 122
    %v4071 = vpop.permute.xlu0 %4070
    %4072 = vrot.lane.b32.xlu0 %v3920, 122
    %v4073 = vpop.permute.xlu0 %4072
    %4074 = vrot.lane.b32.xlu0 %v3921, 122
    %v4075 = vpop.permute.xlu0 %4074
    %4076 = vrot.lane.b32.xlu0 %v3922, 122
    %v4077 = vpop.permute.xlu0 %4076
    %v4078 = vsel %vm265, %v4069, %v4071
    %v4079 = vsel %vm265, %v4071, %v4073
    %v4080 = vsel %vm265, %v4073, %v4075
    %v4081 = vsel %vm265, %v4075, %v4077
    %v4087 = vadd.f32 %v3918, %v4078
    %v4088 = vadd.f32 %v3919, %v4079
    %v4089 = vadd.f32 %v3920, %v4080
    %v4090 = vadd.f32 %v3921, %v4081
    %v4091 = vadd.f32 %v3922, %v4077
    %v4092 = vld [vmem:[#allocation3 + $0x60] sm:$0xff]
    %v4093 = vld [vmem:[#allocation3 + $0x68] sm:$0xff]
    %v4094 = vld [vmem:[#allocation3 + $0x70] sm:$0xff]
    %v4095 = vld [vmem:[#allocation3 + $0x78] sm:$0xff]
    %4101 = vrot.lane.b32.xlu0 %v4087, 99
    %v4102 = vpop.permute.xlu0 %4101
    %4103 = vrot.lane.b32.xlu0 %v4088, 99
    %v4104 = vpop.permute.xlu0 %4103
    %4105 = vrot.lane.b32.xlu0 %v4089, 99
    %v4106 = vpop.permute.xlu0 %4105
    %4107 = vrot.lane.b32.xlu0 %v4090, 99
    %v4108 = vpop.permute.xlu0 %4107
    %4109 = vrot.lane.b32.xlu0 %v4091, 99
    %v4110 = vpop.permute.xlu0 %4109
    %v4111 = vsel %vm299, %v4102, %v4104
    %v4112 = vsel %vm299, %v4104, %v4106
    %v4113 = vsel %vm299, %v4106, %v4108
    %v4114 = vsel %vm299, %v4108, %v4110
    %v4119 = vmul.f32 %v4092, %v4111
    %v4120 = vmul.f32 %v4093, %v4112
    %v4121 = vmul.f32 %v4094, %v4113
    %v4122 = vmul.f32 %v4095, %v4114
    %v4123 = vadd.f32 %v4064, %v4119
    %v4124 = vadd.f32 %v4065, %v4120
    %v4125 = vadd.f32 %v4066, %v4121
    %v4126 = vadd.f32 %v4067, %v4122
    %4127 = vrot.lane.b32.xlu0 %v3918, 120
    %v4128 = vpop.permute.xlu0 %4127
    %4129 = vrot.lane.b32.xlu0 %v3919, 120
    %v4130 = vpop.permute.xlu0 %4129
    %4131 = vrot.lane.b32.xlu0 %v3920, 120
    %v4132 = vpop.permute.xlu0 %4131
    %4133 = vrot.lane.b32.xlu0 %v3921, 120
    %v4134 = vpop.permute.xlu0 %4133
    %4135 = vrot.lane.b32.xlu0 %v3922, 120
    %v4136 = vpop.permute.xlu0 %4135
    %v4137 = vsel %vm326, %v4128, %v4130
    %v4138 = vsel %vm326, %v4130, %v4132
    %v4139 = vsel %vm326, %v4132, %v4134
    %v4140 = vsel %vm326, %v4134, %v4136
    %v4146 = vadd.f32 %v3918, %v4137
    %v4147 = vadd.f32 %v3919, %v4138
    %v4148 = vadd.f32 %v3920, %v4139
    %v4149 = vadd.f32 %v3921, %v4140
    %v4150 = vadd.f32 %v3922, %v4136
    %v4151 = vld [vmem:[#allocation3 + $0x80] sm:$0xff]
    %v4152 = vld [vmem:[#allocation3 + $0x88] sm:$0xff]
    %v4153 = vld [vmem:[#allocation3 + $0x90] sm:$0xff]
    %v4154 = vld [vmem:[#allocation3 + $0x98] sm:$0xff]
    %4160 = vrot.lane.b32.xlu0 %v4146, 100
    %v4161 = vpop.permute.xlu0 %4160
    %4162 = vrot.lane.b32.xlu0 %v4147, 100
    %v4163 = vpop.permute.xlu0 %4162
    %4164 = vrot.lane.b32.xlu0 %v4148, 100
    %v4165 = vpop.permute.xlu0 %4164
    %4166 = vrot.lane.b32.xlu0 %v4149, 100
    %v4167 = vpop.permute.xlu0 %4166
    %4168 = vrot.lane.b32.xlu0 %v4150, 100
    %v4169 = vpop.permute.xlu0 %4168
    %v4170 = vsel %vm360, %v4161, %v4163
    %v4171 = vsel %vm360, %v4163, %v4165
    %v4172 = vsel %vm360, %v4165, %v4167
    %v4173 = vsel %vm360, %v4167, %v4169
    %v4178 = vmul.f32 %v4151, %v4170
    %v4179 = vmul.f32 %v4152, %v4171
    %v4180 = vmul.f32 %v4153, %v4172
    %v4181 = vmul.f32 %v4154, %v4173
    %v4182 = vadd.f32 %v4123, %v4178
    %v4183 = vadd.f32 %v4124, %v4179
    %v4184 = vadd.f32 %v4125, %v4180
    %v4185 = vadd.f32 %v4126, %v4181
    %4186 = vrot.lane.b32.xlu0 %v3918, 118
    %v4187 = vpop.permute.xlu0 %4186
    %4188 = vrot.lane.b32.xlu0 %v3919, 118
    %v4189 = vpop.permute.xlu0 %4188
    %4190 = vrot.lane.b32.xlu0 %v3920, 118
    %v4191 = vpop.permute.xlu0 %4190
    %4192 = vrot.lane.b32.xlu0 %v3921, 118
    %v4193 = vpop.permute.xlu0 %4192
    %4194 = vrot.lane.b32.xlu0 %v3922, 118
    %v4195 = vpop.permute.xlu0 %4194
    %v4196 = vsel %vm387, %v4187, %v4189
    %v4197 = vsel %vm387, %v4189, %v4191
    %v4198 = vsel %vm387, %v4191, %v4193
    %v4199 = vsel %vm387, %v4193, %v4195
    %v4205 = vadd.f32 %v3918, %v4196
    %v4206 = vadd.f32 %v3919, %v4197
    %v4207 = vadd.f32 %v3920, %v4198
    %v4208 = vadd.f32 %v3921, %v4199
    %v4209 = vadd.f32 %v3922, %v4195
    %v4210 = vld [vmem:[#allocation3 + $0xa0] sm:$0xff]
    %v4211 = vld [vmem:[#allocation3 + $0xa8] sm:$0xff]
    %v4212 = vld [vmem:[#allocation3 + $0xb0] sm:$0xff]
    %v4213 = vld [vmem:[#allocation3 + $0xb8] sm:$0xff]
    %4219 = vrot.lane.b32.xlu0 %v4205, 101
    %v4220 = vpop.permute.xlu0 %4219
    %4221 = vrot.lane.b32.xlu0 %v4206, 101
    %v4222 = vpop.permute.xlu0 %4221
    %4223 = vrot.lane.b32.xlu0 %v4207, 101
    %v4224 = vpop.permute.xlu0 %4223
    %4225 = vrot.lane.b32.xlu0 %v4208, 101
    %v4226 = vpop.permute.xlu0 %4225
    %4227 = vrot.lane.b32.xlu0 %v4209, 101
    %v4228 = vpop.permute.xlu0 %4227
    %v4229 = vsel %vm421, %v4220, %v4222
    %v4230 = vsel %vm421, %v4222, %v4224
    %v4231 = vsel %vm421, %v4224, %v4226
    %v4232 = vsel %vm421, %v4226, %v4228
    %v4237 = vmul.f32 %v4210, %v4229
    %v4238 = vmul.f32 %v4211, %v4230
    %v4239 = vmul.f32 %v4212, %v4231
    %v4240 = vmul.f32 %v4213, %v4232
    %v4241 = vadd.f32 %v4182, %v4237
    %v4242 = vadd.f32 %v4183, %v4238
    %v4243 = vadd.f32 %v4184, %v4239
    %v4244 = vadd.f32 %v4185, %v4240
    %4245 = vrot.lane.b32.xlu0 %v3918, 116
    %v4246 = vpop.permute.xlu0 %4245
    %4247 = vrot.lane.b32.xlu0 %v3919, 116
    %v4248 = vpop.permute.xlu0 %4247
    %4249 = vrot.lane.b32.xlu0 %v3920, 116
    %v4250 = vpop.permute.xlu0 %4249
    %4251 = vrot.lane.b32.xlu0 %v3921, 116
    %v4252 = vpop.permute.xlu0 %4251
    %4253 = vrot.lane.b32.xlu0 %v3922, 116
    %v4254 = vpop.permute.xlu0 %4253
    %v4255 = vsel %vm448, %v4246, %v4248
    %v4256 = vsel %vm448, %v4248, %v4250
    %v4257 = vsel %vm448, %v4250, %v4252
    %v4258 = vsel %vm448, %v4252, %v4254
    %v4264 = vadd.f32 %v3918, %v4255
    %v4265 = vadd.f32 %v3919, %v4256
    %v4266 = vadd.f32 %v3920, %v4257
    %v4267 = vadd.f32 %v3921, %v4258
    %v4268 = vadd.f32 %v3922, %v4254
    %v4269 = vld [vmem:[#allocation3 + $0xc0] sm:$0xff]
    %v4270 = vld [vmem:[#allocation3 + $0xc8] sm:$0xff]
    %v4271 = vld [vmem:[#allocation3 + $0xd0] sm:$0xff]
    %v4272 = vld [vmem:[#allocation3 + $0xd8] sm:$0xff]
    %4278 = vrot.lane.b32.xlu0 %v4264, 102
    %v4279 = vpop.permute.xlu0 %4278
    %4280 = vrot.lane.b32.xlu0 %v4265, 102
    %v4281 = vpop.permute.xlu0 %4280
    %4282 = vrot.lane.b32.xlu0 %v4266, 102
    %v4283 = vpop.permute.xlu0 %4282
    %4284 = vrot.lane.b32.xlu0 %v4267, 102
    %v4285 = vpop.permute.xlu0 %4284
    %4286 = vrot.lane.b32.xlu0 %v4268, 102
    %v4287 = vpop.permute.xlu0 %4286
    %v4288 = vsel %vm482, %v4279, %v4281
    %v4289 = vsel %vm482, %v4281, %v4283
    %v4290 = vsel %vm482, %v4283, %v4285
    %v4291 = vsel %vm482, %v4285, %v4287
    %v4296 = vmul.f32 %v4269, %v4288
    %v4297 = vmul.f32 %v4270, %v4289
    %v4298 = vmul.f32 %v4271, %v4290
    %v4299 = vmul.f32 %v4272, %v4291
    %v4300 = vadd.f32 %v4241, %v4296
    %v4301 = vadd.f32 %v4242, %v4297
    %v4302 = vadd.f32 %v4243, %v4298
    %v4303 = vadd.f32 %v4244, %v4299
    %4304 = vrot.lane.b32.xlu0 %v3918, 114
    %v4305 = vpop.permute.xlu0 %4304
    %4306 = vrot.lane.b32.xlu0 %v3919, 114
    %v4307 = vpop.permute.xlu0 %4306
    %4308 = vrot.lane.b32.xlu0 %v3920, 114
    %v4309 = vpop.permute.xlu0 %4308
    %4310 = vrot.lane.b32.xlu0 %v3921, 114
    %v4311 = vpop.permute.xlu0 %4310
    %4312 = vrot.lane.b32.xlu0 %v3922, 114
    %v4313 = vpop.permute.xlu0 %4312
    %v4314 = vsel %vm509, %v4305, %v4307
    %v4315 = vsel %vm509, %v4307, %v4309
    %v4316 = vsel %vm509, %v4309, %v4311
    %v4317 = vsel %vm509, %v4311, %v4313
    %v4323 = vadd.f32 %v3918, %v4314
    %v4324 = vadd.f32 %v3919, %v4315
    %v4325 = vadd.f32 %v3920, %v4316
    %v4326 = vadd.f32 %v3921, %v4317
    %v4327 = vadd.f32 %v3922, %v4313
    %v4328 = vld [vmem:[#allocation3 + $0xe0] sm:$0xff]
    %v4329 = vld [vmem:[#allocation3 + $0xe8] sm:$0xff]
    %v4330 = vld [vmem:[#allocation3 + $0xf0] sm:$0xff]
    %v4331 = vld [vmem:[#allocation3 + $0xf8] sm:$0xff]
    %4337 = vrot.lane.b32.xlu0 %v4323, 103
    %v4338 = vpop.permute.xlu0 %4337
    %4339 = vrot.lane.b32.xlu0 %v4324, 103
    %v4340 = vpop.permute.xlu0 %4339
    %4341 = vrot.lane.b32.xlu0 %v4325, 103
    %v4342 = vpop.permute.xlu0 %4341
    %4343 = vrot.lane.b32.xlu0 %v4326, 103
    %v4344 = vpop.permute.xlu0 %4343
    %4345 = vrot.lane.b32.xlu0 %v4327, 103
    %v4346 = vpop.permute.xlu0 %4345
    %v4347 = vsel %vm543, %v4338, %v4340
    %v4348 = vsel %vm543, %v4340, %v4342
    %v4349 = vsel %vm543, %v4342, %v4344
    %v4350 = vsel %vm543, %v4344, %v4346
    %v4355 = vmul.f32 %v4328, %v4347
    %v4356 = vmul.f32 %v4329, %v4348
    %v4357 = vmul.f32 %v4330, %v4349
    %v4358 = vmul.f32 %v4331, %v4350
    %v4359 = vadd.f32 %v4300, %v4355
    %v4360 = vadd.f32 %v4301, %v4356
    %v4361 = vadd.f32 %v4302, %v4357
    %v4362 = vadd.f32 %v4303, %v4358
    %4363 = vrot.lane.b32.xlu0 %v3918, 112
    %v4364 = vpop.permute.xlu0 %4363
    %4365 = vrot.lane.b32.xlu0 %v3919, 112
    %v4366 = vpop.permute.xlu0 %4365
    %4367 = vrot.lane.b32.xlu0 %v3920, 112
    %v4368 = vpop.permute.xlu0 %4367
    %4369 = vrot.lane.b32.xlu0 %v3921, 112
    %v4370 = vpop.permute.xlu0 %4369
    %4371 = vrot.lane.b32.xlu0 %v3922, 112
    %v4372 = vpop.permute.xlu0 %4371
    %v4373 = vsel %vm570, %v4364, %v4366
    %v4374 = vsel %vm570, %v4366, %v4368
    %v4375 = vsel %vm570, %v4368, %v4370
    %v4376 = vsel %vm570, %v4370, %v4372
    %v4382 = vadd.f32 %v3918, %v4373
    %v4383 = vadd.f32 %v3919, %v4374
    %v4384 = vadd.f32 %v3920, %v4375
    %v4385 = vadd.f32 %v3921, %v4376
    %v4386 = vadd.f32 %v3922, %v4372
    %v4387 = vld [vmem:[#allocation3 + $0x100] sm:$0xff]
    %v4388 = vld [vmem:[#allocation3 + $0x108] sm:$0xff]
    %v4389 = vld [vmem:[#allocation3 + $0x110] sm:$0xff]
    %v4390 = vld [vmem:[#allocation3 + $0x118] sm:$0xff]
    %4396 = vrot.lane.b32.xlu0 %v4382, 104
    %v4397 = vpop.permute.xlu0 %4396
    %4398 = vrot.lane.b32.xlu0 %v4383, 104
    %v4399 = vpop.permute.xlu0 %4398
    %4400 = vrot.lane.b32.xlu0 %v4384, 104
    %v4401 = vpop.permute.xlu0 %4400
    %4402 = vrot.lane.b32.xlu0 %v4385, 104
    %v4403 = vpop.permute.xlu0 %4402
    %4404 = vrot.lane.b32.xlu0 %v4386, 104
    %v4405 = vpop.permute.xlu0 %4404
    %v4406 = vsel %vm604, %v4397, %v4399
    %v4407 = vsel %vm604, %v4399, %v4401
    %v4408 = vsel %vm604, %v4401, %v4403
    %v4409 = vsel %vm604, %v4403, %v4405
    %v4414 = vmul.f32 %v4387, %v4406
    %v4415 = vmul.f32 %v4388, %v4407
    %v4416 = vmul.f32 %v4389, %v4408
    %v4417 = vmul.f32 %v4390, %v4409
    %v4418 = vadd.f32 %v4359, %v4414
    %v4419 = vadd.f32 %v4360, %v4415
    %v4420 = vadd.f32 %v4361, %v4416
    %v4421 = vadd.f32 %v4362, %v4417
    %4422 = vrot.lane.b32.xlu0 %v3918, 110
    %v4423 = vpop.permute.xlu0 %4422
    %4424 = vrot.lane.b32.xlu0 %v3919, 110
    %v4425 = vpop.permute.xlu0 %4424
    %4426 = vrot.lane.b32.xlu0 %v3920, 110
    %v4427 = vpop.permute.xlu0 %4426
    %4428 = vrot.lane.b32.xlu0 %v3921, 110
    %v4429 = vpop.permute.xlu0 %4428
    %4430 = vrot.lane.b32.xlu0 %v3922, 110
    %v4431 = vpop.permute.xlu0 %4430
    %v4432 = vsel %vm631, %v4423, %v4425
    %v4433 = vsel %vm631, %v4425, %v4427
    %v4434 = vsel %vm631, %v4427, %v4429
    %v4435 = vsel %vm631, %v4429, %v4431
    %v4441 = vadd.f32 %v3918, %v4432
    %v4442 = vadd.f32 %v3919, %v4433
    %v4443 = vadd.f32 %v3920, %v4434
    %v4444 = vadd.f32 %v3921, %v4435
    %v4445 = vadd.f32 %v3922, %v4431
    %v4446 = vld [vmem:[#allocation3 + $0x120] sm:$0xff]
    %v4447 = vld [vmem:[#allocation3 + $0x128] sm:$0xff]
    %v4448 = vld [vmem:[#allocation3 + $0x130] sm:$0xff]
    %v4449 = vld [vmem:[#allocation3 + $0x138] sm:$0xff]
    %4455 = vrot.lane.b32.xlu0 %v4441, 105
    %v4456 = vpop.permute.xlu0 %4455
    %4457 = vrot.lane.b32.xlu0 %v4442, 105
    %v4458 = vpop.permute.xlu0 %4457
    %4459 = vrot.lane.b32.xlu0 %v4443, 105
    %v4460 = vpop.permute.xlu0 %4459
    %4461 = vrot.lane.b32.xlu0 %v4444, 105
    %v4462 = vpop.permute.xlu0 %4461
    %4463 = vrot.lane.b32.xlu0 %v4445, 105
    %v4464 = vpop.permute.xlu0 %4463
    %v4465 = vsel %vm665, %v4456, %v4458
    %v4466 = vsel %vm665, %v4458, %v4460
    %v4467 = vsel %vm665, %v4460, %v4462
    %v4468 = vsel %vm665, %v4462, %v4464
    %v4473 = vmul.f32 %v4446, %v4465
    %v4474 = vmul.f32 %v4447, %v4466
    %v4475 = vmul.f32 %v4448, %v4467
    %v4476 = vmul.f32 %v4449, %v4468
    %v4477 = vadd.f32 %v4418, %v4473
    %v4478 = vadd.f32 %v4419, %v4474
    %v4479 = vadd.f32 %v4420, %v4475
    %v4480 = vadd.f32 %v4421, %v4476
    %4481 = vrot.lane.b32.xlu0 %v3918, 108
    %v4482 = vpop.permute.xlu0 %4481
    %4483 = vrot.lane.b32.xlu0 %v3919, 108
    %v4484 = vpop.permute.xlu0 %4483
    %4485 = vrot.lane.b32.xlu0 %v3920, 108
    %v4486 = vpop.permute.xlu0 %4485
    %4487 = vrot.lane.b32.xlu0 %v3921, 108
    %v4488 = vpop.permute.xlu0 %4487
    %4489 = vrot.lane.b32.xlu0 %v3922, 108
    %v4490 = vpop.permute.xlu0 %4489
    %v4491 = vsel %vm692, %v4482, %v4484
    %v4492 = vsel %vm692, %v4484, %v4486
    %v4493 = vsel %vm692, %v4486, %v4488
    %v4494 = vsel %vm692, %v4488, %v4490
    %v4500 = vadd.f32 %v3918, %v4491
    %v4501 = vadd.f32 %v3919, %v4492
    %v4502 = vadd.f32 %v3920, %v4493
    %v4503 = vadd.f32 %v3921, %v4494
    %v4504 = vadd.f32 %v3922, %v4490
    %v4505 = vld [vmem:[#allocation3 + $0x140] sm:$0xff]
    %v4506 = vld [vmem:[#allocation3 + $0x148] sm:$0xff]
    %v4507 = vld [vmem:[#allocation3 + $0x150] sm:$0xff]
    %v4508 = vld [vmem:[#allocation3 + $0x158] sm:$0xff]
    %4514 = vrot.lane.b32.xlu0 %v4500, 106
    %v4515 = vpop.permute.xlu0 %4514
    %4516 = vrot.lane.b32.xlu0 %v4501, 106
    %v4517 = vpop.permute.xlu0 %4516
    %4518 = vrot.lane.b32.xlu0 %v4502, 106
    %v4519 = vpop.permute.xlu0 %4518
    %4520 = vrot.lane.b32.xlu0 %v4503, 106
    %v4521 = vpop.permute.xlu0 %4520
    %4522 = vrot.lane.b32.xlu0 %v4504, 106
    %v4523 = vpop.permute.xlu0 %4522
    %v4524 = vsel %vm726, %v4515, %v4517
    %v4525 = vsel %vm726, %v4517, %v4519
    %v4526 = vsel %vm726, %v4519, %v4521
    %v4527 = vsel %vm726, %v4521, %v4523
    %v4532 = vmul.f32 %v4505, %v4524
    %v4533 = vmul.f32 %v4506, %v4525
    %v4534 = vmul.f32 %v4507, %v4526
    %v4535 = vmul.f32 %v4508, %v4527
    %v4536 = vadd.f32 %v4477, %v4532
    %v4537 = vadd.f32 %v4478, %v4533
    %v4538 = vadd.f32 %v4479, %v4534
    %v4539 = vadd.f32 %v4480, %v4535
    %4540 = vrot.lane.b32.xlu0 %v3918, 106
    %v4541 = vpop.permute.xlu0 %4540
    %4542 = vrot.lane.b32.xlu0 %v3919, 106
    %v4543 = vpop.permute.xlu0 %4542
    %4544 = vrot.lane.b32.xlu0 %v3920, 106
    %v4545 = vpop.permute.xlu0 %4544
    %4546 = vrot.lane.b32.xlu0 %v3921, 106
    %v4547 = vpop.permute.xlu0 %4546
    %4548 = vrot.lane.b32.xlu0 %v3922, 106
    %v4549 = vpop.permute.xlu0 %4548
    %v4550 = vsel %vm726, %v4541, %v4543
    %v4551 = vsel %vm726, %v4543, %v4545
    %v4552 = vsel %vm726, %v4545, %v4547
    %v4553 = vsel %vm726, %v4547, %v4549
    %v4559 = vadd.f32 %v3918, %v4550
    %v4560 = vadd.f32 %v3919, %v4551
    %v4561 = vadd.f32 %v3920, %v4552
    %v4562 = vadd.f32 %v3921, %v4553
    %v4563 = vadd.f32 %v3922, %v4549
    %v4564 = vld [vmem:[#allocation3 + $0x160] sm:$0xff]
    %v4565 = vld [vmem:[#allocation3 + $0x168] sm:$0xff]
    %v4566 = vld [vmem:[#allocation3 + $0x170] sm:$0xff]
    %v4567 = vld [vmem:[#allocation3 + $0x178] sm:$0xff]
    %4573 = vrot.lane.b32.xlu0 %v4559, 107
    %v4574 = vpop.permute.xlu0 %4573
    %4575 = vrot.lane.b32.xlu0 %v4560, 107
    %v4576 = vpop.permute.xlu0 %4575
    %4577 = vrot.lane.b32.xlu0 %v4561, 107
    %v4578 = vpop.permute.xlu0 %4577
    %4579 = vrot.lane.b32.xlu0 %v4562, 107
    %v4580 = vpop.permute.xlu0 %4579
    %4581 = vrot.lane.b32.xlu0 %v4563, 107
    %v4582 = vpop.permute.xlu0 %4581
    %v4583 = vsel %vm786, %v4574, %v4576
    %v4584 = vsel %vm786, %v4576, %v4578
    %v4585 = vsel %vm786, %v4578, %v4580
    %v4586 = vsel %vm786, %v4580, %v4582
    %v4591 = vmul.f32 %v4564, %v4583
    %v4592 = vmul.f32 %v4565, %v4584
    %v4593 = vmul.f32 %v4566, %v4585
    %v4594 = vmul.f32 %v4567, %v4586
    %v4595 = vadd.f32 %v4536, %v4591
    %v4596 = vadd.f32 %v4537, %v4592
    %v4597 = vadd.f32 %v4538, %v4593
    %v4598 = vadd.f32 %v4539, %v4594
    %4599 = vrot.lane.b32.xlu0 %v3918, 104
    %v4600 = vpop.permute.xlu0 %4599
    %4601 = vrot.lane.b32.xlu0 %v3919, 104
    %v4602 = vpop.permute.xlu0 %4601
    %4603 = vrot.lane.b32.xlu0 %v3920, 104
    %v4604 = vpop.permute.xlu0 %4603
    %4605 = vrot.lane.b32.xlu0 %v3921, 104
    %v4606 = vpop.permute.xlu0 %4605
    %4607 = vrot.lane.b32.xlu0 %v3922, 104
    %v4608 = vpop.permute.xlu0 %4607
    %v4609 = vsel %vm604, %v4600, %v4602
    %v4610 = vsel %vm604, %v4602, %v4604
    %v4611 = vsel %vm604, %v4604, %v4606
    %v4612 = vsel %vm604, %v4606, %v4608
    %v4618 = vadd.f32 %v3918, %v4609
    %v4619 = vadd.f32 %v3919, %v4610
    %v4620 = vadd.f32 %v3920, %v4611
    %v4621 = vadd.f32 %v3921, %v4612
    %v4622 = vadd.f32 %v3922, %v4608
    %v4623 = vld [vmem:[#allocation3 + $0x180] sm:$0xff]
    %v4624 = vld [vmem:[#allocation3 + $0x188] sm:$0xff]
    %v4625 = vld [vmem:[#allocation3 + $0x190] sm:$0xff]
    %v4626 = vld [vmem:[#allocation3 + $0x198] sm:$0xff]
    %4632 = vrot.lane.b32.xlu0 %v4618, 108
    %v4633 = vpop.permute.xlu0 %4632
    %4634 = vrot.lane.b32.xlu0 %v4619, 108
    %v4635 = vpop.permute.xlu0 %4634
    %4636 = vrot.lane.b32.xlu0 %v4620, 108
    %v4637 = vpop.permute.xlu0 %4636
    %4638 = vrot.lane.b32.xlu0 %v4621, 108
    %v4639 = vpop.permute.xlu0 %4638
    %4640 = vrot.lane.b32.xlu0 %v4622, 108
    %v4641 = vpop.permute.xlu0 %4640
    %v4642 = vsel %vm692, %v4633, %v4635
    %v4643 = vsel %vm692, %v4635, %v4637
    %v4644 = vsel %vm692, %v4637, %v4639
    %v4645 = vsel %vm692, %v4639, %v4641
    %v4650 = vmul.f32 %v4623, %v4642
    %v4651 = vmul.f32 %v4624, %v4643
    %v4652 = vmul.f32 %v4625, %v4644
    %v4653 = vmul.f32 %v4626, %v4645
    %v4654 = vadd.f32 %v4595, %v4650
    %v4655 = vadd.f32 %v4596, %v4651
    %v4656 = vadd.f32 %v4597, %v4652
    %v4657 = vadd.f32 %v4598, %v4653
    %4658 = vrot.lane.b32.xlu0 %v3918, 102
    %v4659 = vpop.permute.xlu0 %4658
    %4660 = vrot.lane.b32.xlu0 %v3919, 102
    %v4661 = vpop.permute.xlu0 %4660
    %4662 = vrot.lane.b32.xlu0 %v3920, 102
    %v4663 = vpop.permute.xlu0 %4662
    %4664 = vrot.lane.b32.xlu0 %v3921, 102
    %v4665 = vpop.permute.xlu0 %4664
    %4666 = vrot.lane.b32.xlu0 %v3922, 102
    %v4667 = vpop.permute.xlu0 %4666
    %v4668 = vsel %vm482, %v4659, %v4661
    %v4669 = vsel %vm482, %v4661, %v4663
    %v4670 = vsel %vm482, %v4663, %v4665
    %v4671 = vsel %vm482, %v4665, %v4667
    %v4677 = vadd.f32 %v3918, %v4668
    %v4678 = vadd.f32 %v3919, %v4669
    %v4679 = vadd.f32 %v3920, %v4670
    %v4680 = vadd.f32 %v3921, %v4671
    %v4681 = vadd.f32 %v3922, %v4667
    %v4682 = vld [vmem:[#allocation3 + $0x1a0] sm:$0xff]
    %v4683 = vld [vmem:[#allocation3 + $0x1a8] sm:$0xff]
    %v4684 = vld [vmem:[#allocation3 + $0x1b0] sm:$0xff]
    %v4685 = vld [vmem:[#allocation3 + $0x1b8] sm:$0xff]
    %4691 = vrot.lane.b32.xlu0 %v4677, 109
    %v4692 = vpop.permute.xlu0 %4691
    %4693 = vrot.lane.b32.xlu0 %v4678, 109
    %v4694 = vpop.permute.xlu0 %4693
    %4695 = vrot.lane.b32.xlu0 %v4679, 109
    %v4696 = vpop.permute.xlu0 %4695
    %4697 = vrot.lane.b32.xlu0 %v4680, 109
    %v4698 = vpop.permute.xlu0 %4697
    %4699 = vrot.lane.b32.xlu0 %v4681, 109
    %v4700 = vpop.permute.xlu0 %4699
    %v4701 = vsel %vm905, %v4692, %v4694
    %v4702 = vsel %vm905, %v4694, %v4696
    %v4703 = vsel %vm905, %v4696, %v4698
    %v4704 = vsel %vm905, %v4698, %v4700
    %v4709 = vmul.f32 %v4682, %v4701
    %v4710 = vmul.f32 %v4683, %v4702
    %v4711 = vmul.f32 %v4684, %v4703
    %v4712 = vmul.f32 %v4685, %v4704
    %v4713 = vadd.f32 %v4654, %v4709
    %v4714 = vadd.f32 %v4655, %v4710
    %v4715 = vadd.f32 %v4656, %v4711
    %v4716 = vadd.f32 %v4657, %v4712
    %4717 = vrot.lane.b32.xlu0 %v3918, 100
    %v4718 = vpop.permute.xlu0 %4717
    %4719 = vrot.lane.b32.xlu0 %v3919, 100
    %v4720 = vpop.permute.xlu0 %4719
    %4721 = vrot.lane.b32.xlu0 %v3920, 100
    %v4722 = vpop.permute.xlu0 %4721
    %4723 = vrot.lane.b32.xlu0 %v3921, 100
    %v4724 = vpop.permute.xlu0 %4723
    %4725 = vrot.lane.b32.xlu0 %v3922, 100
    %v4726 = vpop.permute.xlu0 %4725
    %v4727 = vsel %vm360, %v4718, %v4720
    %v4728 = vsel %vm360, %v4720, %v4722
    %v4729 = vsel %vm360, %v4722, %v4724
    %v4730 = vsel %vm360, %v4724, %v4726
    %v4736 = vadd.f32 %v3918, %v4727
    %v4737 = vadd.f32 %v3919, %v4728
    %v4738 = vadd.f32 %v3920, %v4729
    %v4739 = vadd.f32 %v3921, %v4730
    %v4740 = vadd.f32 %v3922, %v4726
    %v4741 = vld [vmem:[#allocation3 + $0x1c0] sm:$0xff]
    %v4742 = vld [vmem:[#allocation3 + $0x1c8] sm:$0xff]
    %v4743 = vld [vmem:[#allocation3 + $0x1d0] sm:$0xff]
    %v4744 = vld [vmem:[#allocation3 + $0x1d8] sm:$0xff]
    %4750 = vrot.lane.b32.xlu0 %v4736, 110
    %v4751 = vpop.permute.xlu0 %4750
    %4752 = vrot.lane.b32.xlu0 %v4737, 110
    %v4753 = vpop.permute.xlu0 %4752
    %4754 = vrot.lane.b32.xlu0 %v4738, 110
    %v4755 = vpop.permute.xlu0 %4754
    %4756 = vrot.lane.b32.xlu0 %v4739, 110
    %v4757 = vpop.permute.xlu0 %4756
    %4758 = vrot.lane.b32.xlu0 %v4740, 110
    %v4759 = vpop.permute.xlu0 %4758
    %v4760 = vsel %vm631, %v4751, %v4753
    %v4761 = vsel %vm631, %v4753, %v4755
    %v4762 = vsel %vm631, %v4755, %v4757
    %v4763 = vsel %vm631, %v4757, %v4759
    %v4768 = vmul.f32 %v4741, %v4760
    %v4769 = vmul.f32 %v4742, %v4761
    %v4770 = vmul.f32 %v4743, %v4762
    %v4771 = vmul.f32 %v4744, %v4763
    %v4772 = vadd.f32 %v4713, %v4768
    %v4773 = vadd.f32 %v4714, %v4769
    %v4774 = vadd.f32 %v4715, %v4770
    %v4775 = vadd.f32 %v4716, %v4771
    %4776 = vrot.lane.b32.xlu0 %v3918, 98
    %v4777 = vpop.permute.xlu0 %4776
    %4778 = vrot.lane.b32.xlu0 %v3919, 98
    %v4779 = vpop.permute.xlu0 %4778
    %4780 = vrot.lane.b32.xlu0 %v3920, 98
    %v4781 = vpop.permute.xlu0 %4780
    %4782 = vrot.lane.b32.xlu0 %v3921, 98
    %v4783 = vpop.permute.xlu0 %4782
    %4784 = vrot.lane.b32.xlu0 %v3922, 98
    %v4785 = vpop.permute.xlu0 %4784
    %v4786 = vsel %vm238, %v4777, %v4779
    %v4787 = vsel %vm238, %v4779, %v4781
    %v4788 = vsel %vm238, %v4781, %v4783
    %v4789 = vsel %vm238, %v4783, %v4785
    %v4795 = vadd.f32 %v3918, %v4786
    %v4796 = vadd.f32 %v3919, %v4787
    %v4797 = vadd.f32 %v3920, %v4788
    %v4798 = vadd.f32 %v3921, %v4789
    %v4799 = vadd.f32 %v3922, %v4785
    %v4800 = vld [vmem:[#allocation3 + $0x1e0] sm:$0xff]
    %v4801 = vld [vmem:[#allocation3 + $0x1e8] sm:$0xff]
    %v4802 = vld [vmem:[#allocation3 + $0x1f0] sm:$0xff]
    %v4803 = vld [vmem:[#allocation3 + $0x1f8] sm:$0xff]
    %4809 = vrot.lane.b32.xlu0 %v4795, 111
    %v4810 = vpop.permute.xlu0 %4809
    %4811 = vrot.lane.b32.xlu0 %v4796, 111
    %v4812 = vpop.permute.xlu0 %4811
    %4813 = vrot.lane.b32.xlu0 %v4797, 111
    %v4814 = vpop.permute.xlu0 %4813
    %4815 = vrot.lane.b32.xlu0 %v4798, 111
    %v4816 = vpop.permute.xlu0 %4815
    %4817 = vrot.lane.b32.xlu0 %v4799, 111
    %v4818 = vpop.permute.xlu0 %4817
    %v4819 = vsel %vm1024, %v4810, %v4812
    %v4820 = vsel %vm1024, %v4812, %v4814
    %v4821 = vsel %vm1024, %v4814, %v4816
    %v4822 = vsel %vm1024, %v4816, %v4818
    %v4827 = vmul.f32 %v4800, %v4819
    %v4828 = vmul.f32 %v4801, %v4820
    %v4829 = vmul.f32 %v4802, %v4821
    %v4830 = vmul.f32 %v4803, %v4822
    %v4831 = vadd.f32 %v4772, %v4827
    %v4832 = vadd.f32 %v4773, %v4828
    %v4833 = vadd.f32 %v4774, %v4829
    %v4834 = vadd.f32 %v4775, %v4830
    %v4836 = vadd.f32 %v3918, %v3938
    %v4837 = vadd.f32 %v3919, %v3939
    %v4838 = vadd.f32 %v3920, %v3940
    %v4839 = vadd.f32 %v3921, %v3941
    %v4840 = vadd.f32 %v3922, %v3937
    %v4841 = vld [vmem:[#allocation3 + $0x200] sm:$0xff]
    %v4842 = vld [vmem:[#allocation3 + $0x208] sm:$0xff]
    %v4843 = vld [vmem:[#allocation3 + $0x210] sm:$0xff]
    %v4844 = vld [vmem:[#allocation3 + $0x218] sm:$0xff]
    %4850 = vrot.lane.b32.xlu0 %v4836, 112
    %v4851 = vpop.permute.xlu0 %4850
    %4852 = vrot.lane.b32.xlu0 %v4837, 112
    %v4853 = vpop.permute.xlu0 %4852
    %4854 = vrot.lane.b32.xlu0 %v4838, 112
    %v4855 = vpop.permute.xlu0 %4854
    %4856 = vrot.lane.b32.xlu0 %v4839, 112
    %v4857 = vpop.permute.xlu0 %4856
    %4858 = vrot.lane.b32.xlu0 %v4840, 112
    %v4859 = vpop.permute.xlu0 %4858
    %v4860 = vsel %vm570, %v4851, %v4853
    %v4861 = vsel %vm570, %v4853, %v4855
    %v4862 = vsel %vm570, %v4855, %v4857
    %v4863 = vsel %vm570, %v4857, %v4859
    %v4868 = vmul.f32 %v4841, %v4860
    %v4869 = vmul.f32 %v4842, %v4861
    %v4870 = vmul.f32 %v4843, %v4862
    %v4871 = vmul.f32 %v4844, %v4863
    %v4872 = vadd.f32 %v4831, %v4868
    %v4873 = vadd.f32 %v4832, %v4869
    %v4874 = vadd.f32 %v4833, %v4870
    %v4875 = vadd.f32 %v4834, %v4871
    %4876 = vrot.lane.b32.xlu0 %v3918, 94
    %v4877 = vpop.permute.xlu0 %4876
    %4878 = vrot.lane.b32.xlu0 %v3919, 94
    %v4879 = vpop.permute.xlu0 %4878
    %4880 = vrot.lane.b32.xlu0 %v3920, 94
    %v4881 = vpop.permute.xlu0 %4880
    %4882 = vrot.lane.b32.xlu0 %v3921, 94
    %v4883 = vpop.permute.xlu0 %4882
    %4884 = vrot.lane.b32.xlu0 %v3922, 94
    %v4885 = vpop.permute.xlu0 %4884
    %v4886 = vsel %vm1092, %v4877, %v4879
    %v4887 = vsel %vm1092, %v4879, %v4881
    %v4888 = vsel %vm1092, %v4881, %v4883
    %v4889 = vsel %vm1092, %v4883, %v4885
    %v4895 = vadd.f32 %v3918, %v4886
    %v4896 = vadd.f32 %v3919, %v4887
    %v4897 = vadd.f32 %v3920, %v4888
    %v4898 = vadd.f32 %v3921, %v4889
    %v4899 = vadd.f32 %v3922, %v4885
    %v4900 = vld [vmem:[#allocation3 + $0x220] sm:$0xff]
    %v4901 = vld [vmem:[#allocation3 + $0x228] sm:$0xff]
    %v4902 = vld [vmem:[#allocation3 + $0x230] sm:$0xff]
    %v4903 = vld [vmem:[#allocation3 + $0x238] sm:$0xff]
    %4909 = vrot.lane.b32.xlu0 %v4895, 113
    %v4910 = vpop.permute.xlu0 %4909
    %4911 = vrot.lane.b32.xlu0 %v4896, 113
    %v4912 = vpop.permute.xlu0 %4911
    %4913 = vrot.lane.b32.xlu0 %v4897, 113
    %v4914 = vpop.permute.xlu0 %4913
    %4915 = vrot.lane.b32.xlu0 %v4898, 113
    %v4916 = vpop.permute.xlu0 %4915
    %4917 = vrot.lane.b32.xlu0 %v4899, 113
    %v4918 = vpop.permute.xlu0 %4917
    %v4919 = vsel %vm1126, %v4910, %v4912
    %v4920 = vsel %vm1126, %v4912, %v4914
    %v4921 = vsel %vm1126, %v4914, %v4916
    %v4922 = vsel %vm1126, %v4916, %v4918
    %v4927 = vmul.f32 %v4900, %v4919
    %v4928 = vmul.f32 %v4901, %v4920
    %v4929 = vmul.f32 %v4902, %v4921
    %v4930 = vmul.f32 %v4903, %v4922
    %v4931 = vadd.f32 %v4872, %v4927
    %v4932 = vadd.f32 %v4873, %v4928
    %v4933 = vadd.f32 %v4874, %v4929
    %v4934 = vadd.f32 %v4875, %v4930
    %4935 = vrot.lane.b32.xlu0 %v3918, 92
    %v4936 = vpop.permute.xlu0 %4935
    %4937 = vrot.lane.b32.xlu0 %v3919, 92
    %v4938 = vpop.permute.xlu0 %4937
    %4939 = vrot.lane.b32.xlu0 %v3920, 92
    %v4940 = vpop.permute.xlu0 %4939
    %4941 = vrot.lane.b32.xlu0 %v3921, 92
    %v4942 = vpop.permute.xlu0 %4941
    %4943 = vrot.lane.b32.xlu0 %v3922, 92
    %v4944 = vpop.permute.xlu0 %4943
    %v4945 = vsel %vm1153, %v4936, %v4938
    %v4946 = vsel %vm1153, %v4938, %v4940
    %v4947 = vsel %vm1153, %v4940, %v4942
    %v4948 = vsel %vm1153, %v4942, %v4944
    %v4954 = vadd.f32 %v3918, %v4945
    %v4955 = vadd.f32 %v3919, %v4946
    %v4956 = vadd.f32 %v3920, %v4947
    %v4957 = vadd.f32 %v3921, %v4948
    %v4958 = vadd.f32 %v3922, %v4944
    %v4959 = vld [vmem:[#allocation3 + $0x240] sm:$0xff]
    %v4960 = vld [vmem:[#allocation3 + $0x248] sm:$0xff]
    %v4961 = vld [vmem:[#allocation3 + $0x250] sm:$0xff]
    %v4962 = vld [vmem:[#allocation3 + $0x258] sm:$0xff]
    %4968 = vrot.lane.b32.xlu0 %v4954, 114
    %v4969 = vpop.permute.xlu0 %4968
    %4970 = vrot.lane.b32.xlu0 %v4955, 114
    %v4971 = vpop.permute.xlu0 %4970
    %4972 = vrot.lane.b32.xlu0 %v4956, 114
    %v4973 = vpop.permute.xlu0 %4972
    %4974 = vrot.lane.b32.xlu0 %v4957, 114
    %v4975 = vpop.permute.xlu0 %4974
    %4976 = vrot.lane.b32.xlu0 %v4958, 114
    %v4977 = vpop.permute.xlu0 %4976
    %v4978 = vsel %vm509, %v4969, %v4971
    %v4979 = vsel %vm509, %v4971, %v4973
    %v4980 = vsel %vm509, %v4973, %v4975
    %v4981 = vsel %vm509, %v4975, %v4977
    %v4986 = vmul.f32 %v4959, %v4978
    %v4987 = vmul.f32 %v4960, %v4979
    %v4988 = vmul.f32 %v4961, %v4980
    %v4989 = vmul.f32 %v4962, %v4981
    %v4990 = vadd.f32 %v4931, %v4986
    %v4991 = vadd.f32 %v4932, %v4987
    %v4992 = vadd.f32 %v4933, %v4988
    %v4993 = vadd.f32 %v4934, %v4989
    %4994 = vrot.lane.b32.xlu0 %v3918, 90
    %v4995 = vpop.permute.xlu0 %4994
    %4996 = vrot.lane.b32.xlu0 %v3919, 90
    %v4997 = vpop.permute.xlu0 %4996
    %4998 = vrot.lane.b32.xlu0 %v3920, 90
    %v4999 = vpop.permute.xlu0 %4998
    %5000 = vrot.lane.b32.xlu0 %v3921, 90
    %v5001 = vpop.permute.xlu0 %5000
    %5002 = vrot.lane.b32.xlu0 %v3922, 90
    %v5003 = vpop.permute.xlu0 %5002
    %v5004 = vsel %vm1213, %v4995, %v4997
    %v5005 = vsel %vm1213, %v4997, %v4999
    %v5006 = vsel %vm1213, %v4999, %v5001
    %v5007 = vsel %vm1213, %v5001, %v5003
    %v5013 = vadd.f32 %v3918, %v5004
    %v5014 = vadd.f32 %v3919, %v5005
    %v5015 = vadd.f32 %v3920, %v5006
    %v5016 = vadd.f32 %v3921, %v5007
    %v5017 = vadd.f32 %v3922, %v5003
    %v5018 = vld [vmem:[#allocation3 + $0x260] sm:$0xff]
    %v5019 = vld [vmem:[#allocation3 + $0x268] sm:$0xff]
    %v5020 = vld [vmem:[#allocation3 + $0x270] sm:$0xff]
    %v5021 = vld [vmem:[#allocation3 + $0x278] sm:$0xff]
    %5027 = vrot.lane.b32.xlu0 %v5013, 115
    %v5028 = vpop.permute.xlu0 %5027
    %5029 = vrot.lane.b32.xlu0 %v5014, 115
    %v5030 = vpop.permute.xlu0 %5029
    %5031 = vrot.lane.b32.xlu0 %v5015, 115
    %v5032 = vpop.permute.xlu0 %5031
    %5033 = vrot.lane.b32.xlu0 %v5016, 115
    %v5034 = vpop.permute.xlu0 %5033
    %5035 = vrot.lane.b32.xlu0 %v5017, 115
    %v5036 = vpop.permute.xlu0 %5035
    %v5037 = vsel %vm1247, %v5028, %v5030
    %v5038 = vsel %vm1247, %v5030, %v5032
    %v5039 = vsel %vm1247, %v5032, %v5034
    %v5040 = vsel %vm1247, %v5034, %v5036
    %v5045 = vmul.f32 %v5018, %v5037
    %v5046 = vmul.f32 %v5019, %v5038
    %v5047 = vmul.f32 %v5020, %v5039
    %v5048 = vmul.f32 %v5021, %v5040
    %v5049 = vadd.f32 %v4990, %v5045
    %v5050 = vadd.f32 %v4991, %v5046
    %v5051 = vadd.f32 %v4992, %v5047
    %v5052 = vadd.f32 %v4993, %v5048
    %5053 = vrot.lane.b32.xlu0 %v3918, 88
    %v5054 = vpop.permute.xlu0 %5053
    %5055 = vrot.lane.b32.xlu0 %v3919, 88
    %v5056 = vpop.permute.xlu0 %5055
    %5057 = vrot.lane.b32.xlu0 %v3920, 88
    %v5058 = vpop.permute.xlu0 %5057
    %5059 = vrot.lane.b32.xlu0 %v3921, 88
    %v5060 = vpop.permute.xlu0 %5059
    %5061 = vrot.lane.b32.xlu0 %v3922, 88
    %v5062 = vpop.permute.xlu0 %5061
    %v5063 = vsel %vm1274, %v5054, %v5056
    %v5064 = vsel %vm1274, %v5056, %v5058
    %v5065 = vsel %vm1274, %v5058, %v5060
    %v5066 = vsel %vm1274, %v5060, %v5062
    %v5072 = vadd.f32 %v3918, %v5063
    %v5073 = vadd.f32 %v3919, %v5064
    %v5074 = vadd.f32 %v3920, %v5065
    %v5075 = vadd.f32 %v3921, %v5066
    %v5076 = vadd.f32 %v3922, %v5062
    %v5077 = vld [vmem:[#allocation3 + $0x280] sm:$0xff]
    %v5078 = vld [vmem:[#allocation3 + $0x288] sm:$0xff]
    %v5079 = vld [vmem:[#allocation3 + $0x290] sm:$0xff]
    %v5080 = vld [vmem:[#allocation3 + $0x298] sm:$0xff]
    %5086 = vrot.lane.b32.xlu0 %v5072, 116
    %v5087 = vpop.permute.xlu0 %5086
    %5088 = vrot.lane.b32.xlu0 %v5073, 116
    %v5089 = vpop.permute.xlu0 %5088
    %5090 = vrot.lane.b32.xlu0 %v5074, 116
    %v5091 = vpop.permute.xlu0 %5090
    %5092 = vrot.lane.b32.xlu0 %v5075, 116
    %v5093 = vpop.permute.xlu0 %5092
    %5094 = vrot.lane.b32.xlu0 %v5076, 116
    %v5095 = vpop.permute.xlu0 %5094
    %v5096 = vsel %vm448, %v5087, %v5089
    %v5097 = vsel %vm448, %v5089, %v5091
    %v5098 = vsel %vm448, %v5091, %v5093
    %v5099 = vsel %vm448, %v5093, %v5095
    %v5104 = vmul.f32 %v5077, %v5096
    %v5105 = vmul.f32 %v5078, %v5097
    %v5106 = vmul.f32 %v5079, %v5098
    %v5107 = vmul.f32 %v5080, %v5099
    %v5108 = vadd.f32 %v5049, %v5104
    %v5109 = vadd.f32 %v5050, %v5105
    %v5110 = vadd.f32 %v5051, %v5106
    %v5111 = vadd.f32 %v5052, %v5107
    %5112 = vrot.lane.b32.xlu0 %v3918, 86
    %v5113 = vpop.permute.xlu0 %5112
    %5114 = vrot.lane.b32.xlu0 %v3919, 86
    %v5115 = vpop.permute.xlu0 %5114
    %5116 = vrot.lane.b32.xlu0 %v3920, 86
    %v5117 = vpop.permute.xlu0 %5116
    %5118 = vrot.lane.b32.xlu0 %v3921, 86
    %v5119 = vpop.permute.xlu0 %5118
    %5120 = vrot.lane.b32.xlu0 %v3922, 86
    %v5121 = vpop.permute.xlu0 %5120
    %v5122 = vsel %vm1334, %v5113, %v5115
    %v5123 = vsel %vm1334, %v5115, %v5117
    %v5124 = vsel %vm1334, %v5117, %v5119
    %v5125 = vsel %vm1334, %v5119, %v5121
    %v5131 = vadd.f32 %v3918, %v5122
    %v5132 = vadd.f32 %v3919, %v5123
    %v5133 = vadd.f32 %v3920, %v5124
    %v5134 = vadd.f32 %v3921, %v5125
    %v5135 = vadd.f32 %v3922, %v5121
    %v5136 = vld [vmem:[#allocation3 + $0x2a0] sm:$0xff]
    %v5137 = vld [vmem:[#allocation3 + $0x2a8] sm:$0xff]
    %v5138 = vld [vmem:[#allocation3 + $0x2b0] sm:$0xff]
    %v5139 = vld [vmem:[#allocation3 + $0x2b8] sm:$0xff]
    %5145 = vrot.lane.b32.xlu0 %v5131, 117
    %v5146 = vpop.permute.xlu0 %5145
    %5147 = vrot.lane.b32.xlu0 %v5132, 117
    %v5148 = vpop.permute.xlu0 %5147
    %5149 = vrot.lane.b32.xlu0 %v5133, 117
    %v5150 = vpop.permute.xlu0 %5149
    %5151 = vrot.lane.b32.xlu0 %v5134, 117
    %v5152 = vpop.permute.xlu0 %5151
    %5153 = vrot.lane.b32.xlu0 %v5135, 117
    %v5154 = vpop.permute.xlu0 %5153
    %v5155 = vsel %vm1368, %v5146, %v5148
    %v5156 = vsel %vm1368, %v5148, %v5150
    %v5157 = vsel %vm1368, %v5150, %v5152
    %v5158 = vsel %vm1368, %v5152, %v5154
    %v5163 = vmul.f32 %v5136, %v5155
    %v5164 = vmul.f32 %v5137, %v5156
    %v5165 = vmul.f32 %v5138, %v5157
    %v5166 = vmul.f32 %v5139, %v5158
    %v5167 = vadd.f32 %v5108, %v5163
    %v5168 = vadd.f32 %v5109, %v5164
    %v5169 = vadd.f32 %v5110, %v5165
    %v5170 = vadd.f32 %v5111, %v5166
    %5171 = vrot.lane.b32.xlu0 %v3918, 84
    %v5172 = vpop.permute.xlu0 %5171
    %5173 = vrot.lane.b32.xlu0 %v3919, 84
    %v5174 = vpop.permute.xlu0 %5173
    %5175 = vrot.lane.b32.xlu0 %v3920, 84
    %v5176 = vpop.permute.xlu0 %5175
    %5177 = vrot.lane.b32.xlu0 %v3921, 84
    %v5178 = vpop.permute.xlu0 %5177
    %5179 = vrot.lane.b32.xlu0 %v3922, 84
    %v5180 = vpop.permute.xlu0 %5179
    %v5181 = vsel %vm1395, %v5172, %v5174
    %v5182 = vsel %vm1395, %v5174, %v5176
    %v5183 = vsel %vm1395, %v5176, %v5178
    %v5184 = vsel %vm1395, %v5178, %v5180
    %v5190 = vadd.f32 %v3918, %v5181
    %v5191 = vadd.f32 %v3919, %v5182
    %v5192 = vadd.f32 %v3920, %v5183
    %v5193 = vadd.f32 %v3921, %v5184
    %v5194 = vadd.f32 %v3922, %v5180
    %v5195 = vld [vmem:[#allocation3 + $0x2c0] sm:$0xff]
    %v5196 = vld [vmem:[#allocation3 + $0x2c8] sm:$0xff]
    %v5197 = vld [vmem:[#allocation3 + $0x2d0] sm:$0xff]
    %v5198 = vld [vmem:[#allocation3 + $0x2d8] sm:$0xff]
    %5204 = vrot.lane.b32.xlu0 %v5190, 118
    %v5205 = vpop.permute.xlu0 %5204
    %5206 = vrot.lane.b32.xlu0 %v5191, 118
    %v5207 = vpop.permute.xlu0 %5206
    %5208 = vrot.lane.b32.xlu0 %v5192, 118
    %v5209 = vpop.permute.xlu0 %5208
    %5210 = vrot.lane.b32.xlu0 %v5193, 118
    %v5211 = vpop.permute.xlu0 %5210
    %5212 = vrot.lane.b32.xlu0 %v5194, 118
    %v5213 = vpop.permute.xlu0 %5212
    %v5214 = vsel %vm387, %v5205, %v5207
    %v5215 = vsel %vm387, %v5207, %v5209
    %v5216 = vsel %vm387, %v5209, %v5211
    %v5217 = vsel %vm387, %v5211, %v5213
    %v5222 = vmul.f32 %v5195, %v5214
    %v5223 = vmul.f32 %v5196, %v5215
    %v5224 = vmul.f32 %v5197, %v5216
    %v5225 = vmul.f32 %v5198, %v5217
    %v5226 = vadd.f32 %v5167, %v5222
    %v5227 = vadd.f32 %v5168, %v5223
    %v5228 = vadd.f32 %v5169, %v5224
    %v5229 = vadd.f32 %v5170, %v5225
    %5230 = vrot.lane.b32.xlu0 %v3918, 82
    %v5231 = vpop.permute.xlu0 %5230
    %5232 = vrot.lane.b32.xlu0 %v3919, 82
    %v5233 = vpop.permute.xlu0 %5232
    %5234 = vrot.lane.b32.xlu0 %v3920, 82
    %v5235 = vpop.permute.xlu0 %5234
    %5236 = vrot.lane.b32.xlu0 %v3921, 82
    %v5237 = vpop.permute.xlu0 %5236
    %5238 = vrot.lane.b32.xlu0 %v3922, 82
    %v5239 = vpop.permute.xlu0 %5238
    %v5240 = vsel %vm1455, %v5231, %v5233
    %v5241 = vsel %vm1455, %v5233, %v5235
    %v5242 = vsel %vm1455, %v5235, %v5237
    %v5243 = vsel %vm1455, %v5237, %v5239
    %v5249 = vadd.f32 %v3918, %v5240
    %v5250 = vadd.f32 %v3919, %v5241
    %v5251 = vadd.f32 %v3920, %v5242
    %v5252 = vadd.f32 %v3921, %v5243
    %v5253 = vadd.f32 %v3922, %v5239
    %v5254 = vld [vmem:[#allocation3 + $0x2e0] sm:$0xff]
    %v5255 = vld [vmem:[#allocation3 + $0x2e8] sm:$0xff]
    %v5256 = vld [vmem:[#allocation3 + $0x2f0] sm:$0xff]
    %v5257 = vld [vmem:[#allocation3 + $0x2f8] sm:$0xff]
    %5263 = vrot.lane.b32.xlu0 %v5249, 119
    %v5264 = vpop.permute.xlu0 %5263
    %5265 = vrot.lane.b32.xlu0 %v5250, 119
    %v5266 = vpop.permute.xlu0 %5265
    %5267 = vrot.lane.b32.xlu0 %v5251, 119
    %v5268 = vpop.permute.xlu0 %5267
    %5269 = vrot.lane.b32.xlu0 %v5252, 119
    %v5270 = vpop.permute.xlu0 %5269
    %5271 = vrot.lane.b32.xlu0 %v5253, 119
    %v5272 = vpop.permute.xlu0 %5271
    %v5273 = vsel %vm1489, %v5264, %v5266
    %v5274 = vsel %vm1489, %v5266, %v5268
    %v5275 = vsel %vm1489, %v5268, %v5270
    %v5276 = vsel %vm1489, %v5270, %v5272
    %v5281 = vmul.f32 %v5254, %v5273
    %v5282 = vmul.f32 %v5255, %v5274
    %v5283 = vmul.f32 %v5256, %v5275
    %v5284 = vmul.f32 %v5257, %v5276
    %v5285 = vadd.f32 %v5226, %v5281
    %v5286 = vadd.f32 %v5227, %v5282
    %v5287 = vadd.f32 %v5228, %v5283
    %v5288 = vadd.f32 %v5229, %v5284
    %5289 = vrot.lane.b32.xlu0 %v3918, 80
    %v5290 = vpop.permute.xlu0 %5289
    %5291 = vrot.lane.b32.xlu0 %v3919, 80
    %v5292 = vpop.permute.xlu0 %5291
    %5293 = vrot.lane.b32.xlu0 %v3920, 80
    %v5294 = vpop.permute.xlu0 %5293
    %5295 = vrot.lane.b32.xlu0 %v3921, 80
    %v5296 = vpop.permute.xlu0 %5295
    %5297 = vrot.lane.b32.xlu0 %v3922, 80
    %v5298 = vpop.permute.xlu0 %5297
    %v5299 = vsel %vm1516, %v5290, %v5292
    %v5300 = vsel %vm1516, %v5292, %v5294
    %v5301 = vsel %vm1516, %v5294, %v5296
    %v5302 = vsel %vm1516, %v5296, %v5298
    %v5308 = vadd.f32 %v3918, %v5299
    %v5309 = vadd.f32 %v3919, %v5300
    %v5310 = vadd.f32 %v3920, %v5301
    %v5311 = vadd.f32 %v3921, %v5302
    %v5312 = vadd.f32 %v3922, %v5298
    %v5313 = vld [vmem:[#allocation3 + $0x300] sm:$0xff]
    %v5314 = vld [vmem:[#allocation3 + $0x308] sm:$0xff]
    %v5315 = vld [vmem:[#allocation3 + $0x310] sm:$0xff]
    %v5316 = vld [vmem:[#allocation3 + $0x318] sm:$0xff]
    %5322 = vrot.lane.b32.xlu0 %v5308, 120
    %v5323 = vpop.permute.xlu0 %5322
    %5324 = vrot.lane.b32.xlu0 %v5309, 120
    %v5325 = vpop.permute.xlu0 %5324
    %5326 = vrot.lane.b32.xlu0 %v5310, 120
    %v5327 = vpop.permute.xlu0 %5326
    %5328 = vrot.lane.b32.xlu0 %v5311, 120
    %v5329 = vpop.permute.xlu0 %5328
    %5330 = vrot.lane.b32.xlu0 %v5312, 120
    %v5331 = vpop.permute.xlu0 %5330
    %v5332 = vsel %vm326, %v5323, %v5325
    %v5333 = vsel %vm326, %v5325, %v5327
    %v5334 = vsel %vm326, %v5327, %v5329
    %v5335 = vsel %vm326, %v5329, %v5331
    %v5340 = vmul.f32 %v5313, %v5332
    %v5341 = vmul.f32 %v5314, %v5333
    %v5342 = vmul.f32 %v5315, %v5334
    %v5343 = vmul.f32 %v5316, %v5335
    %v5344 = vadd.f32 %v5285, %v5340
    %v5345 = vadd.f32 %v5286, %v5341
    %v5346 = vadd.f32 %v5287, %v5342
    %v5347 = vadd.f32 %v5288, %v5343
    %5348 = vrot.lane.b32.xlu0 %v3918, 78
    %v5349 = vpop.permute.xlu0 %5348
    %5350 = vrot.lane.b32.xlu0 %v3919, 78
    %v5351 = vpop.permute.xlu0 %5350
    %5352 = vrot.lane.b32.xlu0 %v3920, 78
    %v5353 = vpop.permute.xlu0 %5352
    %5354 = vrot.lane.b32.xlu0 %v3921, 78
    %v5355 = vpop.permute.xlu0 %5354
    %5356 = vrot.lane.b32.xlu0 %v3922, 78
    %v5357 = vpop.permute.xlu0 %5356
    %v5358 = vsel %vm1576, %v5349, %v5351
    %v5359 = vsel %vm1576, %v5351, %v5353
    %v5360 = vsel %vm1576, %v5353, %v5355
    %v5361 = vsel %vm1576, %v5355, %v5357
    %v5367 = vadd.f32 %v3918, %v5358
    %v5368 = vadd.f32 %v3919, %v5359
    %v5369 = vadd.f32 %v3920, %v5360
    %v5370 = vadd.f32 %v3921, %v5361
    %v5371 = vadd.f32 %v3922, %v5357
    %v5372 = vld [vmem:[#allocation3 + $0x320] sm:$0xff]
    %v5373 = vld [vmem:[#allocation3 + $0x328] sm:$0xff]
    %v5374 = vld [vmem:[#allocation3 + $0x330] sm:$0xff]
    %v5375 = vld [vmem:[#allocation3 + $0x338] sm:$0xff]
    %5381 = vrot.lane.b32.xlu0 %v5367, 121
    %v5382 = vpop.permute.xlu0 %5381
    %5383 = vrot.lane.b32.xlu0 %v5368, 121
    %v5384 = vpop.permute.xlu0 %5383
    %5385 = vrot.lane.b32.xlu0 %v5369, 121
    %v5386 = vpop.permute.xlu0 %5385
    %5387 = vrot.lane.b32.xlu0 %v5370, 121
    %v5388 = vpop.permute.xlu0 %5387
    %5389 = vrot.lane.b32.xlu0 %v5371, 121
    %v5390 = vpop.permute.xlu0 %5389
    %v5391 = vsel %vm1610, %v5382, %v5384
    %v5392 = vsel %vm1610, %v5384, %v5386
    %v5393 = vsel %vm1610, %v5386, %v5388
    %v5394 = vsel %vm1610, %v5388, %v5390
    %v5399 = vmul.f32 %v5372, %v5391
    %v5400 = vmul.f32 %v5373, %v5392
    %v5401 = vmul.f32 %v5374, %v5393
    %v5402 = vmul.f32 %v5375, %v5394
    %v5403 = vadd.f32 %v5344, %v5399
    %v5404 = vadd.f32 %v5345, %v5400
    %v5405 = vadd.f32 %v5346, %v5401
    %v5406 = vadd.f32 %v5347, %v5402
    %5407 = vrot.lane.b32.xlu0 %v3918, 76
    %v5408 = vpop.permute.xlu0 %5407
    %5409 = vrot.lane.b32.xlu0 %v3919, 76
    %v5410 = vpop.permute.xlu0 %5409
    %5411 = vrot.lane.b32.xlu0 %v3920, 76
    %v5412 = vpop.permute.xlu0 %5411
    %5413 = vrot.lane.b32.xlu0 %v3921, 76
    %v5414 = vpop.permute.xlu0 %5413
    %5415 = vrot.lane.b32.xlu0 %v3922, 76
    %v5416 = vpop.permute.xlu0 %5415
    %v5417 = vsel %vm1637, %v5408, %v5410
    %v5418 = vsel %vm1637, %v5410, %v5412
    %v5419 = vsel %vm1637, %v5412, %v5414
    %v5420 = vsel %vm1637, %v5414, %v5416
    %v5426 = vadd.f32 %v3918, %v5417
    %v5427 = vadd.f32 %v3919, %v5418
    %v5428 = vadd.f32 %v3920, %v5419
    %v5429 = vadd.f32 %v3921, %v5420
    %v5430 = vadd.f32 %v3922, %v5416
    %v5431 = vld [vmem:[#allocation3 + $0x340] sm:$0xff]
    %v5432 = vld [vmem:[#allocation3 + $0x348] sm:$0xff]
    %v5433 = vld [vmem:[#allocation3 + $0x350] sm:$0xff]
    %v5434 = vld [vmem:[#allocation3 + $0x358] sm:$0xff]
    %5440 = vrot.lane.b32.xlu0 %v5426, 122
    %v5441 = vpop.permute.xlu0 %5440
    %5442 = vrot.lane.b32.xlu0 %v5427, 122
    %v5443 = vpop.permute.xlu0 %5442
    %5444 = vrot.lane.b32.xlu0 %v5428, 122
    %v5445 = vpop.permute.xlu0 %5444
    %5446 = vrot.lane.b32.xlu0 %v5429, 122
    %v5447 = vpop.permute.xlu0 %5446
    %5448 = vrot.lane.b32.xlu0 %v5430, 122
    %v5449 = vpop.permute.xlu0 %5448
    %v5450 = vsel %vm265, %v5441, %v5443
    %v5451 = vsel %vm265, %v5443, %v5445
    %v5452 = vsel %vm265, %v5445, %v5447
    %v5453 = vsel %vm265, %v5447, %v5449
    %v5458 = vmul.f32 %v5431, %v5450
    %v5459 = vmul.f32 %v5432, %v5451
    %v5460 = vmul.f32 %v5433, %v5452
    %v5461 = vmul.f32 %v5434, %v5453
    %v5462 = vadd.f32 %v5403, %v5458
    %v5463 = vadd.f32 %v5404, %v5459
    %v5464 = vadd.f32 %v5405, %v5460
    %v5465 = vadd.f32 %v5406, %v5461
    %5466 = vrot.lane.b32.xlu0 %v3918, 74
    %v5467 = vpop.permute.xlu0 %5466
    %5468 = vrot.lane.b32.xlu0 %v3919, 74
    %v5469 = vpop.permute.xlu0 %5468
    %5470 = vrot.lane.b32.xlu0 %v3920, 74
    %v5471 = vpop.permute.xlu0 %5470
    %5472 = vrot.lane.b32.xlu0 %v3921, 74
    %v5473 = vpop.permute.xlu0 %5472
    %5474 = vrot.lane.b32.xlu0 %v3922, 74
    %v5475 = vpop.permute.xlu0 %5474
    %v5476 = vsel %vm1697, %v5467, %v5469
    %v5477 = vsel %vm1697, %v5469, %v5471
    %v5478 = vsel %vm1697, %v5471, %v5473
    %v5479 = vsel %vm1697, %v5473, %v5475
    %v5485 = vadd.f32 %v3918, %v5476
    %v5486 = vadd.f32 %v3919, %v5477
    %v5487 = vadd.f32 %v3920, %v5478
    %v5488 = vadd.f32 %v3921, %v5479
    %v5489 = vadd.f32 %v3922, %v5475
    %v5490 = vld [vmem:[#allocation3 + $0x360] sm:$0xff]
    %v5491 = vld [vmem:[#allocation3 + $0x368] sm:$0xff]
    %v5492 = vld [vmem:[#allocation3 + $0x370] sm:$0xff]
    %v5493 = vld [vmem:[#allocation3 + $0x378] sm:$0xff]
    %5499 = vrot.lane.b32.xlu0 %v5485, 123
    %v5500 = vpop.permute.xlu0 %5499
    %5501 = vrot.lane.b32.xlu0 %v5486, 123
    %v5502 = vpop.permute.xlu0 %5501
    %5503 = vrot.lane.b32.xlu0 %v5487, 123
    %v5504 = vpop.permute.xlu0 %5503
    %5505 = vrot.lane.b32.xlu0 %v5488, 123
    %v5506 = vpop.permute.xlu0 %5505
    %5507 = vrot.lane.b32.xlu0 %v5489, 123
    %v5508 = vpop.permute.xlu0 %5507
    %v5509 = vsel %vm1731, %v5500, %v5502
    %v5510 = vsel %vm1731, %v5502, %v5504
    %v5511 = vsel %vm1731, %v5504, %v5506
    %v5512 = vsel %vm1731, %v5506, %v5508
    %v5517 = vmul.f32 %v5490, %v5509
    %v5518 = vmul.f32 %v5491, %v5510
    %v5519 = vmul.f32 %v5492, %v5511
    %v5520 = vmul.f32 %v5493, %v5512
    %v5521 = vadd.f32 %v5462, %v5517
    %v5522 = vadd.f32 %v5463, %v5518
    %v5523 = vadd.f32 %v5464, %v5519
    %v5524 = vadd.f32 %v5465, %v5520
    %5525 = vrot.lane.b32.xlu0 %v3918, 72
    %v5526 = vpop.permute.xlu0 %5525
    %5527 = vrot.lane.b32.xlu0 %v3919, 72
    %v5528 = vpop.permute.xlu0 %5527
    %5529 = vrot.lane.b32.xlu0 %v3920, 72
    %v5530 = vpop.permute.xlu0 %5529
    %5531 = vrot.lane.b32.xlu0 %v3921, 72
    %v5532 = vpop.permute.xlu0 %5531
    %5533 = vrot.lane.b32.xlu0 %v3922, 72
    %v5534 = vpop.permute.xlu0 %5533
    %v5535 = vsel %vm1758, %v5526, %v5528
    %v5536 = vsel %vm1758, %v5528, %v5530
    %v5537 = vsel %vm1758, %v5530, %v5532
    %v5538 = vsel %vm1758, %v5532, %v5534
    %v5544 = vadd.f32 %v3918, %v5535
    %v5545 = vadd.f32 %v3919, %v5536
    %v5546 = vadd.f32 %v3920, %v5537
    %v5547 = vadd.f32 %v3921, %v5538
    %v5548 = vadd.f32 %v3922, %v5534
    %v5549 = vld [vmem:[#allocation3 + $0x380] sm:$0xff]
    %v5550 = vld [vmem:[#allocation3 + $0x388] sm:$0xff]
    %v5551 = vld [vmem:[#allocation3 + $0x390] sm:$0xff]
    %v5552 = vld [vmem:[#allocation3 + $0x398] sm:$0xff]
    %5558 = vrot.lane.b32.xlu0 %v5544, 124
    %v5559 = vpop.permute.xlu0 %5558
    %5560 = vrot.lane.b32.xlu0 %v5545, 124
    %v5561 = vpop.permute.xlu0 %5560
    %5562 = vrot.lane.b32.xlu0 %v5546, 124
    %v5563 = vpop.permute.xlu0 %5562
    %5564 = vrot.lane.b32.xlu0 %v5547, 124
    %v5565 = vpop.permute.xlu0 %5564
    %5566 = vrot.lane.b32.xlu0 %v5548, 124
    %v5567 = vpop.permute.xlu0 %5566
    %v5568 = vsel %vm204, %v5559, %v5561
    %v5569 = vsel %vm204, %v5561, %v5563
    %v5570 = vsel %vm204, %v5563, %v5565
    %v5571 = vsel %vm204, %v5565, %v5567
    %v5576 = vmul.f32 %v5549, %v5568
    %v5577 = vmul.f32 %v5550, %v5569
    %v5578 = vmul.f32 %v5551, %v5570
    %v5579 = vmul.f32 %v5552, %v5571
    %v5580 = vadd.f32 %v5521, %v5576
    %v5581 = vadd.f32 %v5522, %v5577
    %v5582 = vadd.f32 %v5523, %v5578
    %v5583 = vadd.f32 %v5524, %v5579
    %5584 = vrot.lane.b32.xlu0 %v3918, 70
    %v5585 = vpop.permute.xlu0 %5584
    %5586 = vrot.lane.b32.xlu0 %v3919, 70
    %v5587 = vpop.permute.xlu0 %5586
    %5588 = vrot.lane.b32.xlu0 %v3920, 70
    %v5589 = vpop.permute.xlu0 %5588
    %5590 = vrot.lane.b32.xlu0 %v3921, 70
    %v5591 = vpop.permute.xlu0 %5590
    %5592 = vrot.lane.b32.xlu0 %v3922, 70
    %v5593 = vpop.permute.xlu0 %5592
    %v5594 = vsel %vm1818, %v5585, %v5587
    %v5595 = vsel %vm1818, %v5587, %v5589
    %v5596 = vsel %vm1818, %v5589, %v5591
    %v5597 = vsel %vm1818, %v5591, %v5593
    %v5603 = vadd.f32 %v3918, %v5594
    %v5604 = vadd.f32 %v3919, %v5595
    %v5605 = vadd.f32 %v3920, %v5596
    %v5606 = vadd.f32 %v3921, %v5597
    %v5607 = vadd.f32 %v3922, %v5593
    %v5608 = vld [vmem:[#allocation3 + $0x3a0] sm:$0xff]
    %v5609 = vld [vmem:[#allocation3 + $0x3a8] sm:$0xff]
    %v5610 = vld [vmem:[#allocation3 + $0x3b0] sm:$0xff]
    %v5611 = vld [vmem:[#allocation3 + $0x3b8] sm:$0xff]
    %5617 = vrot.lane.b32.xlu0 %v5603, 125
    %v5618 = vpop.permute.xlu0 %5617
    %5619 = vrot.lane.b32.xlu0 %v5604, 125
    %v5620 = vpop.permute.xlu0 %5619
    %5621 = vrot.lane.b32.xlu0 %v5605, 125
    %v5622 = vpop.permute.xlu0 %5621
    %5623 = vrot.lane.b32.xlu0 %v5606, 125
    %v5624 = vpop.permute.xlu0 %5623
    %5625 = vrot.lane.b32.xlu0 %v5607, 125
    %v5626 = vpop.permute.xlu0 %5625
    %v5627 = vsel %vm1852, %v5618, %v5620
    %v5628 = vsel %vm1852, %v5620, %v5622
    %v5629 = vsel %vm1852, %v5622, %v5624
    %v5630 = vsel %vm1852, %v5624, %v5626
    %v5635 = vmul.f32 %v5608, %v5627
    %v5636 = vmul.f32 %v5609, %v5628
    %v5637 = vmul.f32 %v5610, %v5629
    %v5638 = vmul.f32 %v5611, %v5630
    %v5639 = vadd.f32 %v5580, %v5635
    %v5640 = vadd.f32 %v5581, %v5636
    %v5641 = vadd.f32 %v5582, %v5637
    %v5642 = vadd.f32 %v5583, %v5638
    %5643 = vrot.lane.b32.xlu0 %v3918, 68
    %v5644 = vpop.permute.xlu0 %5643
    %5645 = vrot.lane.b32.xlu0 %v3919, 68
    %v5646 = vpop.permute.xlu0 %5645
    %5647 = vrot.lane.b32.xlu0 %v3920, 68
    %v5648 = vpop.permute.xlu0 %5647
    %5649 = vrot.lane.b32.xlu0 %v3921, 68
    %v5650 = vpop.permute.xlu0 %5649
    %5651 = vrot.lane.b32.xlu0 %v3922, 68
    %v5652 = vpop.permute.xlu0 %5651
    %v5653 = vsel %vm1879, %v5644, %v5646
    %v5654 = vsel %vm1879, %v5646, %v5648
    %v5655 = vsel %vm1879, %v5648, %v5650
    %v5656 = vsel %vm1879, %v5650, %v5652
    %v5662 = vadd.f32 %v3918, %v5653
    %v5663 = vadd.f32 %v3919, %v5654
    %v5664 = vadd.f32 %v3920, %v5655
    %v5665 = vadd.f32 %v3921, %v5656
    %v5666 = vadd.f32 %v3922, %v5652
    %v5667 = vld [vmem:[#allocation3 + $0x3c0] sm:$0xff]
    %v5668 = vld [vmem:[#allocation3 + $0x3c8] sm:$0xff]
    %v5669 = vld [vmem:[#allocation3 + $0x3d0] sm:$0xff]
    %v5670 = vld [vmem:[#allocation3 + $0x3d8] sm:$0xff]
    %5676 = vrot.lane.b32.xlu0 %v5662, 126
    %v5677 = vpop.permute.xlu0 %5676
    %5678 = vrot.lane.b32.xlu0 %v5663, 126
    %v5679 = vpop.permute.xlu0 %5678
    %5680 = vrot.lane.b32.xlu0 %v5664, 126
    %v5681 = vpop.permute.xlu0 %5680
    %5682 = vrot.lane.b32.xlu0 %v5665, 126
    %v5683 = vpop.permute.xlu0 %5682
    %5684 = vrot.lane.b32.xlu0 %v5666, 126
    %v5685 = vpop.permute.xlu0 %5684
    %v5686 = vsel %vm143, %v5677, %v5679
    %v5687 = vsel %vm143, %v5679, %v5681
    %v5688 = vsel %vm143, %v5681, %v5683
    %v5689 = vsel %vm143, %v5683, %v5685
    %v5694 = vmul.f32 %v5667, %v5686
    %v5695 = vmul.f32 %v5668, %v5687
    %v5696 = vmul.f32 %v5669, %v5688
    %v5697 = vmul.f32 %v5670, %v5689
    %v5698 = vadd.f32 %v5639, %v5694
    %v5699 = vadd.f32 %v5640, %v5695
    %v5700 = vadd.f32 %v5641, %v5696
    %v5701 = vadd.f32 %v5642, %v5697
    %5702 = vrot.lane.b32.xlu0 %v3918, 66
    %v5703 = vpop.permute.xlu0 %5702
    %5704 = vrot.lane.b32.xlu0 %v3919, 66
    %v5705 = vpop.permute.xlu0 %5704
    %5706 = vrot.lane.b32.xlu0 %v3920, 66
    %v5707 = vpop.permute.xlu0 %5706
    %5708 = vrot.lane.b32.xlu0 %v3921, 66
    %v5709 = vpop.permute.xlu0 %5708
    %5710 = vrot.lane.b32.xlu0 %v3922, 66
    %v5711 = vpop.permute.xlu0 %5710
    %v5712 = vsel %vm1939, %v5703, %v5705
    %v5713 = vsel %vm1939, %v5705, %v5707
    %v5714 = vsel %vm1939, %v5707, %v5709
    %v5715 = vsel %vm1939, %v5709, %v5711
    %v5721 = vadd.f32 %v3918, %v5712
    %v5722 = vadd.f32 %v3919, %v5713
    %v5723 = vadd.f32 %v3920, %v5714
    %v5724 = vadd.f32 %v3921, %v5715
    %v5725 = vadd.f32 %v3922, %v5711
    %v5726 = vld [vmem:[#allocation3 + $0x3e0] sm:$0xff]
    %v5727 = vld [vmem:[#allocation3 + $0x3e8] sm:$0xff]
    %v5728 = vld [vmem:[#allocation3 + $0x3f0] sm:$0xff]
    %v5729 = vld [vmem:[#allocation3 + $0x3f8] sm:$0xff]
    %5735 = vrot.lane.b32.xlu0 %v5721, 127
    %v5736 = vpop.permute.xlu0 %5735
    %5737 = vrot.lane.b32.xlu0 %v5722, 127
    %v5738 = vpop.permute.xlu0 %5737
    %5739 = vrot.lane.b32.xlu0 %v5723, 127
    %v5740 = vpop.permute.xlu0 %5739
    %5741 = vrot.lane.b32.xlu0 %v5724, 127
    %v5742 = vpop.permute.xlu0 %5741
    %5743 = vrot.lane.b32.xlu0 %v5725, 127
    %v5744 = vpop.permute.xlu0 %5743
    %v5745 = vsel %vm1973, %v5736, %v5738
    %v5746 = vsel %vm1973, %v5738, %v5740
    %v5747 = vsel %vm1973, %v5740, %v5742
    %v5748 = vsel %vm1973, %v5742, %v5744
    %v5753 = vmul.f32 %v5726, %v5745
    %v5754 = vmul.f32 %v5727, %v5746
    %v5755 = vmul.f32 %v5728, %v5747
    %v5756 = vmul.f32 %v5729, %v5748
    %v5757 = vadd.f32 %v5698, %v5753
    %v5758 = vadd.f32 %v5699, %v5754
    %v5759 = vadd.f32 %v5700, %v5755
    %v5760 = vadd.f32 %v5701, %v5756
    %5761 = vrot.lane.b32.xlu0 %v3918, 64
    %v5762 = vpop.permute.xlu0 %5761
    %5763 = vrot.lane.b32.xlu0 %v3919, 64
    %v5764 = vpop.permute.xlu0 %5763
    %5765 = vrot.lane.b32.xlu0 %v3920, 64
    %v5766 = vpop.permute.xlu0 %5765
    %5767 = vrot.lane.b32.xlu0 %v3921, 64
    %v5768 = vpop.permute.xlu0 %5767
    %5769 = vrot.lane.b32.xlu0 %v3922, 64
    %v5770 = vpop.permute.xlu0 %5769
    %v5771 = vsel %vm2000, %v5762, %v5764
    %v5772 = vsel %vm2000, %v5764, %v5766
    %v5773 = vsel %vm2000, %v5766, %v5768
    %v5774 = vsel %vm2000, %v5768, %v5770
    %v5779 = vadd.f32 %v3918, %v5771
    %v5780 = vadd.f32 %v3919, %v5772
    %v5781 = vadd.f32 %v3920, %v5773
    %v5782 = vadd.f32 %v3921, %v5774
    %v5783 = vld [vmem:[#allocation3 + $0x400] sm:$0xff]
    %v5784 = vld [vmem:[#allocation3 + $0x408] sm:$0xff]
    %v5785 = vld [vmem:[#allocation3 + $0x410] sm:$0xff]
    %v5786 = vld [vmem:[#allocation3 + $0x418] sm:$0xff]
    %v5787 = vmul.f32 %v5783, %v5779
    %v5788 = vmul.f32 %v5784, %v5780
    %v5789 = vmul.f32 %v5785, %v5781
    %v5790 = vmul.f32 %v5786, %v5782
    %v5791 = vadd.f32 %v5757, %v5787
    %v5792 = vadd.f32 %v5758, %v5788
    %v5793 = vadd.f32 %v5759, %v5789
    %v5794 = vadd.f32 %v5760, %v5790
    %5795 = vst [vmem:[#allocation9 + $0x40] sm:$0xff] %v5791
    %5796 = vst [vmem:[#allocation9 + $0x48] sm:$0xff] %v5792
    %5797 = vst [vmem:[#allocation9 + $0x50] sm:$0xff] %v5793
    %5798 = vst [vmem:[#allocation9 + $0x58] sm:$0xff] %v5794
    %v5799 = vld [vmem:[#allocation3] sm:$0xff]
    %v5800 = vld [vmem:[#allocation3 + $0x8] sm:$0xff]
    %v5801 = vld [vmem:[#allocation3 + $0x10] sm:$0xff]
    %v5802 = vld [vmem:[#allocation3 + $0x18] sm:$0xff]
    %v5803 = vld [vmem:[#allocation2 + $0x60] sm:$0xff]
    %v5804 = vld [vmem:[#allocation2 + $0x68] sm:$0xff]
    %v5805 = vld [vmem:[#allocation2 + $0x70] sm:$0xff]
    %v5806 = vld [vmem:[#allocation2 + $0x78] sm:$0xff]
    %v5807 = vld [vmem:[#allocation2 + $0x80] sm:$0xff]
    %5813 = vrot.lane.b32.xlu0 %v5803, 96
    %v5814 = vpop.permute.xlu0 %5813
    %5815 = vrot.lane.b32.xlu0 %v5804, 96
    %v5816 = vpop.permute.xlu0 %5815
    %5817 = vrot.lane.b32.xlu0 %v5805, 96
    %v5818 = vpop.permute.xlu0 %5817
    %5819 = vrot.lane.b32.xlu0 %v5806, 96
    %v5820 = vpop.permute.xlu0 %5819
    %5821 = vrot.lane.b32.xlu0 %v5807, 96
    %v5822 = vpop.permute.xlu0 %5821
    %v5823 = vsel %vm120, %v5814, %v5816
    %v5824 = vsel %vm120, %v5816, %v5818
    %v5825 = vsel %vm120, %v5818, %v5820
    %v5826 = vsel %vm120, %v5820, %v5822
    %v5831 = vmul.f32 %v5799, %v5823
    %v5832 = vmul.f32 %v5800, %v5824
    %v5833 = vmul.f32 %v5801, %v5825
    %v5834 = vmul.f32 %v5802, %v5826
    %5835 = vrot.lane.b32.xlu0 %v5803, 126
    %v5836 = vpop.permute.xlu0 %5835
    %5837 = vrot.lane.b32.xlu0 %v5804, 126
    %v5838 = vpop.permute.xlu0 %5837
    %5839 = vrot.lane.b32.xlu0 %v5805, 126
    %v5840 = vpop.permute.xlu0 %5839
    %5841 = vrot.lane.b32.xlu0 %v5806, 126
    %v5842 = vpop.permute.xlu0 %5841
    %5843 = vrot.lane.b32.xlu0 %v5807, 126
    %v5844 = vpop.permute.xlu0 %5843
    %v5845 = vsel %vm143, %v5836, %v5838
    %v5846 = vsel %vm143, %v5838, %v5840
    %v5847 = vsel %vm143, %v5840, %v5842
    %v5848 = vsel %vm143, %v5842, %v5844
    %v5854 = vadd.f32 %v5803, %v5845
    %v5855 = vadd.f32 %v5804, %v5846
    %v5856 = vadd.f32 %v5805, %v5847
    %v5857 = vadd.f32 %v5806, %v5848
    %v5858 = vadd.f32 %v5807, %v5844
    %v5859 = vld [vmem:[#allocation3 + $0x20] sm:$0xff]
    %v5860 = vld [vmem:[#allocation3 + $0x28] sm:$0xff]
    %v5861 = vld [vmem:[#allocation3 + $0x30] sm:$0xff]
    %v5862 = vld [vmem:[#allocation3 + $0x38] sm:$0xff]
    %5868 = vrot.lane.b32.xlu0 %v5854, 97
    %v5869 = vpop.permute.xlu0 %5868
    %5870 = vrot.lane.b32.xlu0 %v5855, 97
    %v5871 = vpop.permute.xlu0 %5870
    %5872 = vrot.lane.b32.xlu0 %v5856, 97
    %v5873 = vpop.permute.xlu0 %5872
    %5874 = vrot.lane.b32.xlu0 %v5857, 97
    %v5875 = vpop.permute.xlu0 %5874
    %5876 = vrot.lane.b32.xlu0 %v5858, 97
    %v5877 = vpop.permute.xlu0 %5876
    %v5878 = vsel %vm177, %v5869, %v5871
    %v5879 = vsel %vm177, %v5871, %v5873
    %v5880 = vsel %vm177, %v5873, %v5875
    %v5881 = vsel %vm177, %v5875, %v5877
    %v5886 = vmul.f32 %v5859, %v5878
    %v5887 = vmul.f32 %v5860, %v5879
    %v5888 = vmul.f32 %v5861, %v5880
    %v5889 = vmul.f32 %v5862, %v5881
    %v5890 = vadd.f32 %v5831, %v5886
    %v5891 = vadd.f32 %v5832, %v5887
    %v5892 = vadd.f32 %v5833, %v5888
    %v5893 = vadd.f32 %v5834, %v5889
    %5894 = vrot.lane.b32.xlu0 %v5803, 124
    %v5895 = vpop.permute.xlu0 %5894
    %5896 = vrot.lane.b32.xlu0 %v5804, 124
    %v5897 = vpop.permute.xlu0 %5896
    %5898 = vrot.lane.b32.xlu0 %v5805, 124
    %v5899 = vpop.permute.xlu0 %5898
    %5900 = vrot.lane.b32.xlu0 %v5806, 124
    %v5901 = vpop.permute.xlu0 %5900
    %5902 = vrot.lane.b32.xlu0 %v5807, 124
    %v5903 = vpop.permute.xlu0 %5902
    %v5904 = vsel %vm204, %v5895, %v5897
    %v5905 = vsel %vm204, %v5897, %v5899
    %v5906 = vsel %vm204, %v5899, %v5901
    %v5907 = vsel %vm204, %v5901, %v5903
    %v5913 = vadd.f32 %v5803, %v5904
    %v5914 = vadd.f32 %v5804, %v5905
    %v5915 = vadd.f32 %v5805, %v5906
    %v5916 = vadd.f32 %v5806, %v5907
    %v5917 = vadd.f32 %v5807, %v5903
    %v5918 = vld [vmem:[#allocation3 + $0x40] sm:$0xff]
    %v5919 = vld [vmem:[#allocation3 + $0x48] sm:$0xff]
    %v5920 = vld [vmem:[#allocation3 + $0x50] sm:$0xff]
    %v5921 = vld [vmem:[#allocation3 + $0x58] sm:$0xff]
    %5927 = vrot.lane.b32.xlu0 %v5913, 98
    %v5928 = vpop.permute.xlu0 %5927
    %5929 = vrot.lane.b32.xlu0 %v5914, 98
    %v5930 = vpop.permute.xlu0 %5929
    %5931 = vrot.lane.b32.xlu0 %v5915, 98
    %v5932 = vpop.permute.xlu0 %5931
    %5933 = vrot.lane.b32.xlu0 %v5916, 98
    %v5934 = vpop.permute.xlu0 %5933
    %5935 = vrot.lane.b32.xlu0 %v5917, 98
    %v5936 = vpop.permute.xlu0 %5935
    %v5937 = vsel %vm238, %v5928, %v5930
    %v5938 = vsel %vm238, %v5930, %v5932
    %v5939 = vsel %vm238, %v5932, %v5934
    %v5940 = vsel %vm238, %v5934, %v5936
    %v5945 = vmul.f32 %v5918, %v5937
    %v5946 = vmul.f32 %v5919, %v5938
    %v5947 = vmul.f32 %v5920, %v5939
    %v5948 = vmul.f32 %v5921, %v5940
    %v5949 = vadd.f32 %v5890, %v5945
    %v5950 = vadd.f32 %v5891, %v5946
    %v5951 = vadd.f32 %v5892, %v5947
    %v5952 = vadd.f32 %v5893, %v5948
    %5953 = vrot.lane.b32.xlu0 %v5803, 122
    %v5954 = vpop.permute.xlu0 %5953
    %5955 = vrot.lane.b32.xlu0 %v5804, 122
    %v5956 = vpop.permute.xlu0 %5955
    %5957 = vrot.lane.b32.xlu0 %v5805, 122
    %v5958 = vpop.permute.xlu0 %5957
    %5959 = vrot.lane.b32.xlu0 %v5806, 122
    %v5960 = vpop.permute.xlu0 %5959
    %5961 = vrot.lane.b32.xlu0 %v5807, 122
    %v5962 = vpop.permute.xlu0 %5961
    %v5963 = vsel %vm265, %v5954, %v5956
    %v5964 = vsel %vm265, %v5956, %v5958
    %v5965 = vsel %vm265, %v5958, %v5960
    %v5966 = vsel %vm265, %v5960, %v5962
    %v5972 = vadd.f32 %v5803, %v5963
    %v5973 = vadd.f32 %v5804, %v5964
    %v5974 = vadd.f32 %v5805, %v5965
    %v5975 = vadd.f32 %v5806, %v5966
    %v5976 = vadd.f32 %v5807, %v5962
    %v5977 = vld [vmem:[#allocation3 + $0x60] sm:$0xff]
    %v5978 = vld [vmem:[#allocation3 + $0x68] sm:$0xff]
    %v5979 = vld [vmem:[#allocation3 + $0x70] sm:$0xff]
    %v5980 = vld [vmem:[#allocation3 + $0x78] sm:$0xff]
    %5986 = vrot.lane.b32.xlu0 %v5972, 99
    %v5987 = vpop.permute.xlu0 %5986
    %5988 = vrot.lane.b32.xlu0 %v5973, 99
    %v5989 = vpop.permute.xlu0 %5988
    %5990 = vrot.lane.b32.xlu0 %v5974, 99
    %v5991 = vpop.permute.xlu0 %5990
    %5992 = vrot.lane.b32.xlu0 %v5975, 99
    %v5993 = vpop.permute.xlu0 %5992
    %5994 = vrot.lane.b32.xlu0 %v5976, 99
    %v5995 = vpop.permute.xlu0 %5994
    %v5996 = vsel %vm299, %v5987, %v5989
    %v5997 = vsel %vm299, %v5989, %v5991
    %v5998 = vsel %vm299, %v5991, %v5993
    %v5999 = vsel %vm299, %v5993, %v5995
    %v6004 = vmul.f32 %v5977, %v5996
    %v6005 = vmul.f32 %v5978, %v5997
    %v6006 = vmul.f32 %v5979, %v5998
    %v6007 = vmul.f32 %v5980, %v5999
    %v6008 = vadd.f32 %v5949, %v6004
    %v6009 = vadd.f32 %v5950, %v6005
    %v6010 = vadd.f32 %v5951, %v6006
    %v6011 = vadd.f32 %v5952, %v6007
    %6012 = vrot.lane.b32.xlu0 %v5803, 120
    %v6013 = vpop.permute.xlu0 %6012
    %6014 = vrot.lane.b32.xlu0 %v5804, 120
    %v6015 = vpop.permute.xlu0 %6014
    %6016 = vrot.lane.b32.xlu0 %v5805, 120
    %v6017 = vpop.permute.xlu0 %6016
    %6018 = vrot.lane.b32.xlu0 %v5806, 120
    %v6019 = vpop.permute.xlu0 %6018
    %6020 = vrot.lane.b32.xlu0 %v5807, 120
    %v6021 = vpop.permute.xlu0 %6020
    %v6022 = vsel %vm326, %v6013, %v6015
    %v6023 = vsel %vm326, %v6015, %v6017
    %v6024 = vsel %vm326, %v6017, %v6019
    %v6025 = vsel %vm326, %v6019, %v6021
    %v6031 = vadd.f32 %v5803, %v6022
    %v6032 = vadd.f32 %v5804, %v6023
    %v6033 = vadd.f32 %v5805, %v6024
    %v6034 = vadd.f32 %v5806, %v6025
    %v6035 = vadd.f32 %v5807, %v6021
    %v6036 = vld [vmem:[#allocation3 + $0x80] sm:$0xff]
    %v6037 = vld [vmem:[#allocation3 + $0x88] sm:$0xff]
    %v6038 = vld [vmem:[#allocation3 + $0x90] sm:$0xff]
    %v6039 = vld [vmem:[#allocation3 + $0x98] sm:$0xff]
    %6045 = vrot.lane.b32.xlu0 %v6031, 100
    %v6046 = vpop.permute.xlu0 %6045
    %6047 = vrot.lane.b32.xlu0 %v6032, 100
    %v6048 = vpop.permute.xlu0 %6047
    %6049 = vrot.lane.b32.xlu0 %v6033, 100
    %v6050 = vpop.permute.xlu0 %6049
    %6051 = vrot.lane.b32.xlu0 %v6034, 100
    %v6052 = vpop.permute.xlu0 %6051
    %6053 = vrot.lane.b32.xlu0 %v6035, 100
    %v6054 = vpop.permute.xlu0 %6053
    %v6055 = vsel %vm360, %v6046, %v6048
    %v6056 = vsel %vm360, %v6048, %v6050
    %v6057 = vsel %vm360, %v6050, %v6052
    %v6058 = vsel %vm360, %v6052, %v6054
    %v6063 = vmul.f32 %v6036, %v6055
    %v6064 = vmul.f32 %v6037, %v6056
    %v6065 = vmul.f32 %v6038, %v6057
    %v6066 = vmul.f32 %v6039, %v6058
    %v6067 = vadd.f32 %v6008, %v6063
    %v6068 = vadd.f32 %v6009, %v6064
    %v6069 = vadd.f32 %v6010, %v6065
    %v6070 = vadd.f32 %v6011, %v6066
    %6071 = vrot.lane.b32.xlu0 %v5803, 118
    %v6072 = vpop.permute.xlu0 %6071
    %6073 = vrot.lane.b32.xlu0 %v5804, 118
    %v6074 = vpop.permute.xlu0 %6073
    %6075 = vrot.lane.b32.xlu0 %v5805, 118
    %v6076 = vpop.permute.xlu0 %6075
    %6077 = vrot.lane.b32.xlu0 %v5806, 118
    %v6078 = vpop.permute.xlu0 %6077
    %6079 = vrot.lane.b32.xlu0 %v5807, 118
    %v6080 = vpop.permute.xlu0 %6079
    %v6081 = vsel %vm387, %v6072, %v6074
    %v6082 = vsel %vm387, %v6074, %v6076
    %v6083 = vsel %vm387, %v6076, %v6078
    %v6084 = vsel %vm387, %v6078, %v6080
    %v6090 = vadd.f32 %v5803, %v6081
    %v6091 = vadd.f32 %v5804, %v6082
    %v6092 = vadd.f32 %v5805, %v6083
    %v6093 = vadd.f32 %v5806, %v6084
    %v6094 = vadd.f32 %v5807, %v6080
    %v6095 = vld [vmem:[#allocation3 + $0xa0] sm:$0xff]
    %v6096 = vld [vmem:[#allocation3 + $0xa8] sm:$0xff]
    %v6097 = vld [vmem:[#allocation3 + $0xb0] sm:$0xff]
    %v6098 = vld [vmem:[#allocation3 + $0xb8] sm:$0xff]
    %6104 = vrot.lane.b32.xlu0 %v6090, 101
    %v6105 = vpop.permute.xlu0 %6104
    %6106 = vrot.lane.b32.xlu0 %v6091, 101
    %v6107 = vpop.permute.xlu0 %6106
    %6108 = vrot.lane.b32.xlu0 %v6092, 101
    %v6109 = vpop.permute.xlu0 %6108
    %6110 = vrot.lane.b32.xlu0 %v6093, 101
    %v6111 = vpop.permute.xlu0 %6110
    %6112 = vrot.lane.b32.xlu0 %v6094, 101
    %v6113 = vpop.permute.xlu0 %6112
    %v6114 = vsel %vm421, %v6105, %v6107
    %v6115 = vsel %vm421, %v6107, %v6109
    %v6116 = vsel %vm421, %v6109, %v6111
    %v6117 = vsel %vm421, %v6111, %v6113
    %v6122 = vmul.f32 %v6095, %v6114
    %v6123 = vmul.f32 %v6096, %v6115
    %v6124 = vmul.f32 %v6097, %v6116
    %v6125 = vmul.f32 %v6098, %v6117
    %v6126 = vadd.f32 %v6067, %v6122
    %v6127 = vadd.f32 %v6068, %v6123
    %v6128 = vadd.f32 %v6069, %v6124
    %v6129 = vadd.f32 %v6070, %v6125
    %6130 = vrot.lane.b32.xlu0 %v5803, 116
    %v6131 = vpop.permute.xlu0 %6130
    %6132 = vrot.lane.b32.xlu0 %v5804, 116
    %v6133 = vpop.permute.xlu0 %6132
    %6134 = vrot.lane.b32.xlu0 %v5805, 116
    %v6135 = vpop.permute.xlu0 %6134
    %6136 = vrot.lane.b32.xlu0 %v5806, 116
    %v6137 = vpop.permute.xlu0 %6136
    %6138 = vrot.lane.b32.xlu0 %v5807, 116
    %v6139 = vpop.permute.xlu0 %6138
    %v6140 = vsel %vm448, %v6131, %v6133
    %v6141 = vsel %vm448, %v6133, %v6135
    %v6142 = vsel %vm448, %v6135, %v6137
    %v6143 = vsel %vm448, %v6137, %v6139
    %v6149 = vadd.f32 %v5803, %v6140
    %v6150 = vadd.f32 %v5804, %v6141
    %v6151 = vadd.f32 %v5805, %v6142
    %v6152 = vadd.f32 %v5806, %v6143
    %v6153 = vadd.f32 %v5807, %v6139
    %v6154 = vld [vmem:[#allocation3 + $0xc0] sm:$0xff]
    %v6155 = vld [vmem:[#allocation3 + $0xc8] sm:$0xff]
    %v6156 = vld [vmem:[#allocation3 + $0xd0] sm:$0xff]
    %v6157 = vld [vmem:[#allocation3 + $0xd8] sm:$0xff]
    %6163 = vrot.lane.b32.xlu0 %v6149, 102
    %v6164 = vpop.permute.xlu0 %6163
    %6165 = vrot.lane.b32.xlu0 %v6150, 102
    %v6166 = vpop.permute.xlu0 %6165
    %6167 = vrot.lane.b32.xlu0 %v6151, 102
    %v6168 = vpop.permute.xlu0 %6167
    %6169 = vrot.lane.b32.xlu0 %v6152, 102
    %v6170 = vpop.permute.xlu0 %6169
    %6171 = vrot.lane.b32.xlu0 %v6153, 102
    %v6172 = vpop.permute.xlu0 %6171
    %v6173 = vsel %vm482, %v6164, %v6166
    %v6174 = vsel %vm482, %v6166, %v6168
    %v6175 = vsel %vm482, %v6168, %v6170
    %v6176 = vsel %vm482, %v6170, %v6172
    %v6181 = vmul.f32 %v6154, %v6173
    %v6182 = vmul.f32 %v6155, %v6174
    %v6183 = vmul.f32 %v6156, %v6175
    %v6184 = vmul.f32 %v6157, %v6176
    %v6185 = vadd.f32 %v6126, %v6181
    %v6186 = vadd.f32 %v6127, %v6182
    %v6187 = vadd.f32 %v6128, %v6183
    %v6188 = vadd.f32 %v6129, %v6184
    %6189 = vrot.lane.b32.xlu0 %v5803, 114
    %v6190 = vpop.permute.xlu0 %6189
    %6191 = vrot.lane.b32.xlu0 %v5804, 114
    %v6192 = vpop.permute.xlu0 %6191
    %6193 = vrot.lane.b32.xlu0 %v5805, 114
    %v6194 = vpop.permute.xlu0 %6193
    %6195 = vrot.lane.b32.xlu0 %v5806, 114
    %v6196 = vpop.permute.xlu0 %6195
    %6197 = vrot.lane.b32.xlu0 %v5807, 114
    %v6198 = vpop.permute.xlu0 %6197
    %v6199 = vsel %vm509, %v6190, %v6192
    %v6200 = vsel %vm509, %v6192, %v6194
    %v6201 = vsel %vm509, %v6194, %v6196
    %v6202 = vsel %vm509, %v6196, %v6198
    %v6208 = vadd.f32 %v5803, %v6199
    %v6209 = vadd.f32 %v5804, %v6200
    %v6210 = vadd.f32 %v5805, %v6201
    %v6211 = vadd.f32 %v5806, %v6202
    %v6212 = vadd.f32 %v5807, %v6198
    %v6213 = vld [vmem:[#allocation3 + $0xe0] sm:$0xff]
    %v6214 = vld [vmem:[#allocation3 + $0xe8] sm:$0xff]
    %v6215 = vld [vmem:[#allocation3 + $0xf0] sm:$0xff]
    %v6216 = vld [vmem:[#allocation3 + $0xf8] sm:$0xff]
    %6222 = vrot.lane.b32.xlu0 %v6208, 103
    %v6223 = vpop.permute.xlu0 %6222
    %6224 = vrot.lane.b32.xlu0 %v6209, 103
    %v6225 = vpop.permute.xlu0 %6224
    %6226 = vrot.lane.b32.xlu0 %v6210, 103
    %v6227 = vpop.permute.xlu0 %6226
    %6228 = vrot.lane.b32.xlu0 %v6211, 103
    %v6229 = vpop.permute.xlu0 %6228
    %6230 = vrot.lane.b32.xlu0 %v6212, 103
    %v6231 = vpop.permute.xlu0 %6230
    %v6232 = vsel %vm543, %v6223, %v6225
    %v6233 = vsel %vm543, %v6225, %v6227
    %v6234 = vsel %vm543, %v6227, %v6229
    %v6235 = vsel %vm543, %v6229, %v6231
    %v6240 = vmul.f32 %v6213, %v6232
    %v6241 = vmul.f32 %v6214, %v6233
    %v6242 = vmul.f32 %v6215, %v6234
    %v6243 = vmul.f32 %v6216, %v6235
    %v6244 = vadd.f32 %v6185, %v6240
    %v6245 = vadd.f32 %v6186, %v6241
    %v6246 = vadd.f32 %v6187, %v6242
    %v6247 = vadd.f32 %v6188, %v6243
    %6248 = vrot.lane.b32.xlu0 %v5803, 112
    %v6249 = vpop.permute.xlu0 %6248
    %6250 = vrot.lane.b32.xlu0 %v5804, 112
    %v6251 = vpop.permute.xlu0 %6250
    %6252 = vrot.lane.b32.xlu0 %v5805, 112
    %v6253 = vpop.permute.xlu0 %6252
    %6254 = vrot.lane.b32.xlu0 %v5806, 112
    %v6255 = vpop.permute.xlu0 %6254
    %6256 = vrot.lane.b32.xlu0 %v5807, 112
    %v6257 = vpop.permute.xlu0 %6256
    %v6258 = vsel %vm570, %v6249, %v6251
    %v6259 = vsel %vm570, %v6251, %v6253
    %v6260 = vsel %vm570, %v6253, %v6255
    %v6261 = vsel %vm570, %v6255, %v6257
    %v6267 = vadd.f32 %v5803, %v6258
    %v6268 = vadd.f32 %v5804, %v6259
    %v6269 = vadd.f32 %v5805, %v6260
    %v6270 = vadd.f32 %v5806, %v6261
    %v6271 = vadd.f32 %v5807, %v6257
    %v6272 = vld [vmem:[#allocation3 + $0x100] sm:$0xff]
    %v6273 = vld [vmem:[#allocation3 + $0x108] sm:$0xff]
    %v6274 = vld [vmem:[#allocation3 + $0x110] sm:$0xff]
    %v6275 = vld [vmem:[#allocation3 + $0x118] sm:$0xff]
    %6281 = vrot.lane.b32.xlu0 %v6267, 104
    %v6282 = vpop.permute.xlu0 %6281
    %6283 = vrot.lane.b32.xlu0 %v6268, 104
    %v6284 = vpop.permute.xlu0 %6283
    %6285 = vrot.lane.b32.xlu0 %v6269, 104
    %v6286 = vpop.permute.xlu0 %6285
    %6287 = vrot.lane.b32.xlu0 %v6270, 104
    %v6288 = vpop.permute.xlu0 %6287
    %6289 = vrot.lane.b32.xlu0 %v6271, 104
    %v6290 = vpop.permute.xlu0 %6289
    %v6291 = vsel %vm604, %v6282, %v6284
    %v6292 = vsel %vm604, %v6284, %v6286
    %v6293 = vsel %vm604, %v6286, %v6288
    %v6294 = vsel %vm604, %v6288, %v6290
    %v6299 = vmul.f32 %v6272, %v6291
    %v6300 = vmul.f32 %v6273, %v6292
    %v6301 = vmul.f32 %v6274, %v6293
    %v6302 = vmul.f32 %v6275, %v6294
    %v6303 = vadd.f32 %v6244, %v6299
    %v6304 = vadd.f32 %v6245, %v6300
    %v6305 = vadd.f32 %v6246, %v6301
    %v6306 = vadd.f32 %v6247, %v6302
    %6307 = vrot.lane.b32.xlu0 %v5803, 110
    %v6308 = vpop.permute.xlu0 %6307
    %6309 = vrot.lane.b32.xlu0 %v5804, 110
    %v6310 = vpop.permute.xlu0 %6309
    %6311 = vrot.lane.b32.xlu0 %v5805, 110
    %v6312 = vpop.permute.xlu0 %6311
    %6313 = vrot.lane.b32.xlu0 %v5806, 110
    %v6314 = vpop.permute.xlu0 %6313
    %6315 = vrot.lane.b32.xlu0 %v5807, 110
    %v6316 = vpop.permute.xlu0 %6315
    %v6317 = vsel %vm631, %v6308, %v6310
    %v6318 = vsel %vm631, %v6310, %v6312
    %v6319 = vsel %vm631, %v6312, %v6314
    %v6320 = vsel %vm631, %v6314, %v6316
    %v6326 = vadd.f32 %v5803, %v6317
    %v6327 = vadd.f32 %v5804, %v6318
    %v6328 = vadd.f32 %v5805, %v6319
    %v6329 = vadd.f32 %v5806, %v6320
    %v6330 = vadd.f32 %v5807, %v6316
    %v6331 = vld [vmem:[#allocation3 + $0x120] sm:$0xff]
    %v6332 = vld [vmem:[#allocation3 + $0x128] sm:$0xff]
    %v6333 = vld [vmem:[#allocation3 + $0x130] sm:$0xff]
    %v6334 = vld [vmem:[#allocation3 + $0x138] sm:$0xff]
    %6340 = vrot.lane.b32.xlu0 %v6326, 105
    %v6341 = vpop.permute.xlu0 %6340
    %6342 = vrot.lane.b32.xlu0 %v6327, 105
    %v6343 = vpop.permute.xlu0 %6342
    %6344 = vrot.lane.b32.xlu0 %v6328, 105
    %v6345 = vpop.permute.xlu0 %6344
    %6346 = vrot.lane.b32.xlu0 %v6329, 105
    %v6347 = vpop.permute.xlu0 %6346
    %6348 = vrot.lane.b32.xlu0 %v6330, 105
    %v6349 = vpop.permute.xlu0 %6348
    %v6350 = vsel %vm665, %v6341, %v6343
    %v6351 = vsel %vm665, %v6343, %v6345
    %v6352 = vsel %vm665, %v6345, %v6347
    %v6353 = vsel %vm665, %v6347, %v6349
    %v6358 = vmul.f32 %v6331, %v6350
    %v6359 = vmul.f32 %v6332, %v6351
    %v6360 = vmul.f32 %v6333, %v6352
    %v6361 = vmul.f32 %v6334, %v6353
    %v6362 = vadd.f32 %v6303, %v6358
    %v6363 = vadd.f32 %v6304, %v6359
    %v6364 = vadd.f32 %v6305, %v6360
    %v6365 = vadd.f32 %v6306, %v6361
    %6366 = vrot.lane.b32.xlu0 %v5803, 108
    %v6367 = vpop.permute.xlu0 %6366
    %6368 = vrot.lane.b32.xlu0 %v5804, 108
    %v6369 = vpop.permute.xlu0 %6368
    %6370 = vrot.lane.b32.xlu0 %v5805, 108
    %v6371 = vpop.permute.xlu0 %6370
    %6372 = vrot.lane.b32.xlu0 %v5806, 108
    %v6373 = vpop.permute.xlu0 %6372
    %6374 = vrot.lane.b32.xlu0 %v5807, 108
    %v6375 = vpop.permute.xlu0 %6374
    %v6376 = vsel %vm692, %v6367, %v6369
    %v6377 = vsel %vm692, %v6369, %v6371
    %v6378 = vsel %vm692, %v6371, %v6373
    %v6379 = vsel %vm692, %v6373, %v6375
    %v6385 = vadd.f32 %v5803, %v6376
    %v6386 = vadd.f32 %v5804, %v6377
    %v6387 = vadd.f32 %v5805, %v6378
    %v6388 = vadd.f32 %v5806, %v6379
    %v6389 = vadd.f32 %v5807, %v6375
    %v6390 = vld [vmem:[#allocation3 + $0x140] sm:$0xff]
    %v6391 = vld [vmem:[#allocation3 + $0x148] sm:$0xff]
    %v6392 = vld [vmem:[#allocation3 + $0x150] sm:$0xff]
    %v6393 = vld [vmem:[#allocation3 + $0x158] sm:$0xff]
    %6399 = vrot.lane.b32.xlu0 %v6385, 106
    %v6400 = vpop.permute.xlu0 %6399
    %6401 = vrot.lane.b32.xlu0 %v6386, 106
    %v6402 = vpop.permute.xlu0 %6401
    %6403 = vrot.lane.b32.xlu0 %v6387, 106
    %v6404 = vpop.permute.xlu0 %6403
    %6405 = vrot.lane.b32.xlu0 %v6388, 106
    %v6406 = vpop.permute.xlu0 %6405
    %6407 = vrot.lane.b32.xlu0 %v6389, 106
    %v6408 = vpop.permute.xlu0 %6407
    %v6409 = vsel %vm726, %v6400, %v6402
    %v6410 = vsel %vm726, %v6402, %v6404
    %v6411 = vsel %vm726, %v6404, %v6406
    %v6412 = vsel %vm726, %v6406, %v6408
    %v6417 = vmul.f32 %v6390, %v6409
    %v6418 = vmul.f32 %v6391, %v6410
    %v6419 = vmul.f32 %v6392, %v6411
    %v6420 = vmul.f32 %v6393, %v6412
    %v6421 = vadd.f32 %v6362, %v6417
    %v6422 = vadd.f32 %v6363, %v6418
    %v6423 = vadd.f32 %v6364, %v6419
    %v6424 = vadd.f32 %v6365, %v6420
    %6425 = vrot.lane.b32.xlu0 %v5803, 106
    %v6426 = vpop.permute.xlu0 %6425
    %6427 = vrot.lane.b32.xlu0 %v5804, 106
    %v6428 = vpop.permute.xlu0 %6427
    %6429 = vrot.lane.b32.xlu0 %v5805, 106
    %v6430 = vpop.permute.xlu0 %6429
    %6431 = vrot.lane.b32.xlu0 %v5806, 106
    %v6432 = vpop.permute.xlu0 %6431
    %6433 = vrot.lane.b32.xlu0 %v5807, 106
    %v6434 = vpop.permute.xlu0 %6433
    %v6435 = vsel %vm726, %v6426, %v6428
    %v6436 = vsel %vm726, %v6428, %v6430
    %v6437 = vsel %vm726, %v6430, %v6432
    %v6438 = vsel %vm726, %v6432, %v6434
    %v6444 = vadd.f32 %v5803, %v6435
    %v6445 = vadd.f32 %v5804, %v6436
    %v6446 = vadd.f32 %v5805, %v6437
    %v6447 = vadd.f32 %v5806, %v6438
    %v6448 = vadd.f32 %v5807, %v6434
    %v6449 = vld [vmem:[#allocation3 + $0x160] sm:$0xff]
    %v6450 = vld [vmem:[#allocation3 + $0x168] sm:$0xff]
    %v6451 = vld [vmem:[#allocation3 + $0x170] sm:$0xff]
    %v6452 = vld [vmem:[#allocation3 + $0x178] sm:$0xff]
    %6458 = vrot.lane.b32.xlu0 %v6444, 107
    %v6459 = vpop.permute.xlu0 %6458
    %6460 = vrot.lane.b32.xlu0 %v6445, 107
    %v6461 = vpop.permute.xlu0 %6460
    %6462 = vrot.lane.b32.xlu0 %v6446, 107
    %v6463 = vpop.permute.xlu0 %6462
    %6464 = vrot.lane.b32.xlu0 %v6447, 107
    %v6465 = vpop.permute.xlu0 %6464
    %6466 = vrot.lane.b32.xlu0 %v6448, 107
    %v6467 = vpop.permute.xlu0 %6466
    %v6468 = vsel %vm786, %v6459, %v6461
    %v6469 = vsel %vm786, %v6461, %v6463
    %v6470 = vsel %vm786, %v6463, %v6465
    %v6471 = vsel %vm786, %v6465, %v6467
    %v6476 = vmul.f32 %v6449, %v6468
    %v6477 = vmul.f32 %v6450, %v6469
    %v6478 = vmul.f32 %v6451, %v6470
    %v6479 = vmul.f32 %v6452, %v6471
    %v6480 = vadd.f32 %v6421, %v6476
    %v6481 = vadd.f32 %v6422, %v6477
    %v6482 = vadd.f32 %v6423, %v6478
    %v6483 = vadd.f32 %v6424, %v6479
    %6484 = vrot.lane.b32.xlu0 %v5803, 104
    %v6485 = vpop.permute.xlu0 %6484
    %6486 = vrot.lane.b32.xlu0 %v5804, 104
    %v6487 = vpop.permute.xlu0 %6486
    %6488 = vrot.lane.b32.xlu0 %v5805, 104
    %v6489 = vpop.permute.xlu0 %6488
    %6490 = vrot.lane.b32.xlu0 %v5806, 104
    %v6491 = vpop.permute.xlu0 %6490
    %6492 = vrot.lane.b32.xlu0 %v5807, 104
    %v6493 = vpop.permute.xlu0 %6492
    %v6494 = vsel %vm604, %v6485, %v6487
    %v6495 = vsel %vm604, %v6487, %v6489
    %v6496 = vsel %vm604, %v6489, %v6491
    %v6497 = vsel %vm604, %v6491, %v6493
    %v6503 = vadd.f32 %v5803, %v6494
    %v6504 = vadd.f32 %v5804, %v6495
    %v6505 = vadd.f32 %v5805, %v6496
    %v6506 = vadd.f32 %v5806, %v6497
    %v6507 = vadd.f32 %v5807, %v6493
    %v6508 = vld [vmem:[#allocation3 + $0x180] sm:$0xff]
    %v6509 = vld [vmem:[#allocation3 + $0x188] sm:$0xff]
    %v6510 = vld [vmem:[#allocation3 + $0x190] sm:$0xff]
    %v6511 = vld [vmem:[#allocation3 + $0x198] sm:$0xff]
    %6517 = vrot.lane.b32.xlu0 %v6503, 108
    %v6518 = vpop.permute.xlu0 %6517
    %6519 = vrot.lane.b32.xlu0 %v6504, 108
    %v6520 = vpop.permute.xlu0 %6519
    %6521 = vrot.lane.b32.xlu0 %v6505, 108
    %v6522 = vpop.permute.xlu0 %6521
    %6523 = vrot.lane.b32.xlu0 %v6506, 108
    %v6524 = vpop.permute.xlu0 %6523
    %6525 = vrot.lane.b32.xlu0 %v6507, 108
    %v6526 = vpop.permute.xlu0 %6525
    %v6527 = vsel %vm692, %v6518, %v6520
    %v6528 = vsel %vm692, %v6520, %v6522
    %v6529 = vsel %vm692, %v6522, %v6524
    %v6530 = vsel %vm692, %v6524, %v6526
    %v6535 = vmul.f32 %v6508, %v6527
    %v6536 = vmul.f32 %v6509, %v6528
    %v6537 = vmul.f32 %v6510, %v6529
    %v6538 = vmul.f32 %v6511, %v6530
    %v6539 = vadd.f32 %v6480, %v6535
    %v6540 = vadd.f32 %v6481, %v6536
    %v6541 = vadd.f32 %v6482, %v6537
    %v6542 = vadd.f32 %v6483, %v6538
    %6543 = vrot.lane.b32.xlu0 %v5803, 102
    %v6544 = vpop.permute.xlu0 %6543
    %6545 = vrot.lane.b32.xlu0 %v5804, 102
    %v6546 = vpop.permute.xlu0 %6545
    %6547 = vrot.lane.b32.xlu0 %v5805, 102
    %v6548 = vpop.permute.xlu0 %6547
    %6549 = vrot.lane.b32.xlu0 %v5806, 102
    %v6550 = vpop.permute.xlu0 %6549
    %6551 = vrot.lane.b32.xlu0 %v5807, 102
    %v6552 = vpop.permute.xlu0 %6551
    %v6553 = vsel %vm482, %v6544, %v6546
    %v6554 = vsel %vm482, %v6546, %v6548
    %v6555 = vsel %vm482, %v6548, %v6550
    %v6556 = vsel %vm482, %v6550, %v6552
    %v6562 = vadd.f32 %v5803, %v6553
    %v6563 = vadd.f32 %v5804, %v6554
    %v6564 = vadd.f32 %v5805, %v6555
    %v6565 = vadd.f32 %v5806, %v6556
    %v6566 = vadd.f32 %v5807, %v6552
    %v6567 = vld [vmem:[#allocation3 + $0x1a0] sm:$0xff]
    %v6568 = vld [vmem:[#allocation3 + $0x1a8] sm:$0xff]
    %v6569 = vld [vmem:[#allocation3 + $0x1b0] sm:$0xff]
    %v6570 = vld [vmem:[#allocation3 + $0x1b8] sm:$0xff]
    %6576 = vrot.lane.b32.xlu0 %v6562, 109
    %v6577 = vpop.permute.xlu0 %6576
    %6578 = vrot.lane.b32.xlu0 %v6563, 109
    %v6579 = vpop.permute.xlu0 %6578
    %6580 = vrot.lane.b32.xlu0 %v6564, 109
    %v6581 = vpop.permute.xlu0 %6580
    %6582 = vrot.lane.b32.xlu0 %v6565, 109
    %v6583 = vpop.permute.xlu0 %6582
    %6584 = vrot.lane.b32.xlu0 %v6566, 109
    %v6585 = vpop.permute.xlu0 %6584
    %v6586 = vsel %vm905, %v6577, %v6579
    %v6587 = vsel %vm905, %v6579, %v6581
    %v6588 = vsel %vm905, %v6581, %v6583
    %v6589 = vsel %vm905, %v6583, %v6585
    %v6594 = vmul.f32 %v6567, %v6586
    %v6595 = vmul.f32 %v6568, %v6587
    %v6596 = vmul.f32 %v6569, %v6588
    %v6597 = vmul.f32 %v6570, %v6589
    %v6598 = vadd.f32 %v6539, %v6594
    %v6599 = vadd.f32 %v6540, %v6595
    %v6600 = vadd.f32 %v6541, %v6596
    %v6601 = vadd.f32 %v6542, %v6597
    %6602 = vrot.lane.b32.xlu0 %v5803, 100
    %v6603 = vpop.permute.xlu0 %6602
    %6604 = vrot.lane.b32.xlu0 %v5804, 100
    %v6605 = vpop.permute.xlu0 %6604
    %6606 = vrot.lane.b32.xlu0 %v5805, 100
    %v6607 = vpop.permute.xlu0 %6606
    %6608 = vrot.lane.b32.xlu0 %v5806, 100
    %v6609 = vpop.permute.xlu0 %6608
    %6610 = vrot.lane.b32.xlu0 %v5807, 100
    %v6611 = vpop.permute.xlu0 %6610
    %v6612 = vsel %vm360, %v6603, %v6605
    %v6613 = vsel %vm360, %v6605, %v6607
    %v6614 = vsel %vm360, %v6607, %v6609
    %v6615 = vsel %vm360, %v6609, %v6611
    %v6621 = vadd.f32 %v5803, %v6612
    %v6622 = vadd.f32 %v5804, %v6613
    %v6623 = vadd.f32 %v5805, %v6614
    %v6624 = vadd.f32 %v5806, %v6615
    %v6625 = vadd.f32 %v5807, %v6611
    %v6626 = vld [vmem:[#allocation3 + $0x1c0] sm:$0xff]
    %v6627 = vld [vmem:[#allocation3 + $0x1c8] sm:$0xff]
    %v6628 = vld [vmem:[#allocation3 + $0x1d0] sm:$0xff]
    %v6629 = vld [vmem:[#allocation3 + $0x1d8] sm:$0xff]
    %6635 = vrot.lane.b32.xlu0 %v6621, 110
    %v6636 = vpop.permute.xlu0 %6635
    %6637 = vrot.lane.b32.xlu0 %v6622, 110
    %v6638 = vpop.permute.xlu0 %6637
    %6639 = vrot.lane.b32.xlu0 %v6623, 110
    %v6640 = vpop.permute.xlu0 %6639
    %6641 = vrot.lane.b32.xlu0 %v6624, 110
    %v6642 = vpop.permute.xlu0 %6641
    %6643 = vrot.lane.b32.xlu0 %v6625, 110
    %v6644 = vpop.permute.xlu0 %6643
    %v6645 = vsel %vm631, %v6636, %v6638
    %v6646 = vsel %vm631, %v6638, %v6640
    %v6647 = vsel %vm631, %v6640, %v6642
    %v6648 = vsel %vm631, %v6642, %v6644
    %v6653 = vmul.f32 %v6626, %v6645
    %v6654 = vmul.f32 %v6627, %v6646
    %v6655 = vmul.f32 %v6628, %v6647
    %v6656 = vmul.f32 %v6629, %v6648
    %v6657 = vadd.f32 %v6598, %v6653
    %v6658 = vadd.f32 %v6599, %v6654
    %v6659 = vadd.f32 %v6600, %v6655
    %v6660 = vadd.f32 %v6601, %v6656
    %6661 = vrot.lane.b32.xlu0 %v5803, 98
    %v6662 = vpop.permute.xlu0 %6661
    %6663 = vrot.lane.b32.xlu0 %v5804, 98
    %v6664 = vpop.permute.xlu0 %6663
    %6665 = vrot.lane.b32.xlu0 %v5805, 98
    %v6666 = vpop.permute.xlu0 %6665
    %6667 = vrot.lane.b32.xlu0 %v5806, 98
    %v6668 = vpop.permute.xlu0 %6667
    %6669 = vrot.lane.b32.xlu0 %v5807, 98
    %v6670 = vpop.permute.xlu0 %6669
    %v6671 = vsel %vm238, %v6662, %v6664
    %v6672 = vsel %vm238, %v6664, %v6666
    %v6673 = vsel %vm238, %v6666, %v6668
    %v6674 = vsel %vm238, %v6668, %v6670
    %v6680 = vadd.f32 %v5803, %v6671
    %v6681 = vadd.f32 %v5804, %v6672
    %v6682 = vadd.f32 %v5805, %v6673
    %v6683 = vadd.f32 %v5806, %v6674
    %v6684 = vadd.f32 %v5807, %v6670
    %v6685 = vld [vmem:[#allocation3 + $0x1e0] sm:$0xff]
    %v6686 = vld [vmem:[#allocation3 + $0x1e8] sm:$0xff]
    %v6687 = vld [vmem:[#allocation3 + $0x1f0] sm:$0xff]
    %v6688 = vld [vmem:[#allocation3 + $0x1f8] sm:$0xff]
    %6694 = vrot.lane.b32.xlu0 %v6680, 111
    %v6695 = vpop.permute.xlu0 %6694
    %6696 = vrot.lane.b32.xlu0 %v6681, 111
    %v6697 = vpop.permute.xlu0 %6696
    %6698 = vrot.lane.b32.xlu0 %v6682, 111
    %v6699 = vpop.permute.xlu0 %6698
    %6700 = vrot.lane.b32.xlu0 %v6683, 111
    %v6701 = vpop.permute.xlu0 %6700
    %6702 = vrot.lane.b32.xlu0 %v6684, 111
    %v6703 = vpop.permute.xlu0 %6702
    %v6704 = vsel %vm1024, %v6695, %v6697
    %v6705 = vsel %vm1024, %v6697, %v6699
    %v6706 = vsel %vm1024, %v6699, %v6701
    %v6707 = vsel %vm1024, %v6701, %v6703
    %v6712 = vmul.f32 %v6685, %v6704
    %v6713 = vmul.f32 %v6686, %v6705
    %v6714 = vmul.f32 %v6687, %v6706
    %v6715 = vmul.f32 %v6688, %v6707
    %v6716 = vadd.f32 %v6657, %v6712
    %v6717 = vadd.f32 %v6658, %v6713
    %v6718 = vadd.f32 %v6659, %v6714
    %v6719 = vadd.f32 %v6660, %v6715
    %v6721 = vadd.f32 %v5803, %v5823
    %v6722 = vadd.f32 %v5804, %v5824
    %v6723 = vadd.f32 %v5805, %v5825
    %v6724 = vadd.f32 %v5806, %v5826
    %v6725 = vadd.f32 %v5807, %v5822
    %v6726 = vld [vmem:[#allocation3 + $0x200] sm:$0xff]
    %v6727 = vld [vmem:[#allocation3 + $0x208] sm:$0xff]
    %v6728 = vld [vmem:[#allocation3 + $0x210] sm:$0xff]
    %v6729 = vld [vmem:[#allocation3 + $0x218] sm:$0xff]
    %6735 = vrot.lane.b32.xlu0 %v6721, 112
    %v6736 = vpop.permute.xlu0 %6735
    %6737 = vrot.lane.b32.xlu0 %v6722, 112
    %v6738 = vpop.permute.xlu0 %6737
    %6739 = vrot.lane.b32.xlu0 %v6723, 112
    %v6740 = vpop.permute.xlu0 %6739
    %6741 = vrot.lane.b32.xlu0 %v6724, 112
    %v6742 = vpop.permute.xlu0 %6741
    %6743 = vrot.lane.b32.xlu0 %v6725, 112
    %v6744 = vpop.permute.xlu0 %6743
    %v6745 = vsel %vm570, %v6736, %v6738
    %v6746 = vsel %vm570, %v6738, %v6740
    %v6747 = vsel %vm570, %v6740, %v6742
    %v6748 = vsel %vm570, %v6742, %v6744
    %v6753 = vmul.f32 %v6726, %v6745
    %v6754 = vmul.f32 %v6727, %v6746
    %v6755 = vmul.f32 %v6728, %v6747
    %v6756 = vmul.f32 %v6729, %v6748
    %v6757 = vadd.f32 %v6716, %v6753
    %v6758 = vadd.f32 %v6717, %v6754
    %v6759 = vadd.f32 %v6718, %v6755
    %v6760 = vadd.f32 %v6719, %v6756
    %6761 = vrot.lane.b32.xlu0 %v5803, 94
    %v6762 = vpop.permute.xlu0 %6761
    %6763 = vrot.lane.b32.xlu0 %v5804, 94
    %v6764 = vpop.permute.xlu0 %6763
    %6765 = vrot.lane.b32.xlu0 %v5805, 94
    %v6766 = vpop.permute.xlu0 %6765
    %6767 = vrot.lane.b32.xlu0 %v5806, 94
    %v6768 = vpop.permute.xlu0 %6767
    %6769 = vrot.lane.b32.xlu0 %v5807, 94
    %v6770 = vpop.permute.xlu0 %6769
    %v6771 = vsel %vm1092, %v6762, %v6764
    %v6772 = vsel %vm1092, %v6764, %v6766
    %v6773 = vsel %vm1092, %v6766, %v6768
    %v6774 = vsel %vm1092, %v6768, %v6770
    %v6780 = vadd.f32 %v5803, %v6771
    %v6781 = vadd.f32 %v5804, %v6772
    %v6782 = vadd.f32 %v5805, %v6773
    %v6783 = vadd.f32 %v5806, %v6774
    %v6784 = vadd.f32 %v5807, %v6770
    %v6785 = vld [vmem:[#allocation3 + $0x220] sm:$0xff]
    %v6786 = vld [vmem:[#allocation3 + $0x228] sm:$0xff]
    %v6787 = vld [vmem:[#allocation3 + $0x230] sm:$0xff]
    %v6788 = vld [vmem:[#allocation3 + $0x238] sm:$0xff]
    %6794 = vrot.lane.b32.xlu0 %v6780, 113
    %v6795 = vpop.permute.xlu0 %6794
    %6796 = vrot.lane.b32.xlu0 %v6781, 113
    %v6797 = vpop.permute.xlu0 %6796
    %6798 = vrot.lane.b32.xlu0 %v6782, 113
    %v6799 = vpop.permute.xlu0 %6798
    %6800 = vrot.lane.b32.xlu0 %v6783, 113
    %v6801 = vpop.permute.xlu0 %6800
    %6802 = vrot.lane.b32.xlu0 %v6784, 113
    %v6803 = vpop.permute.xlu0 %6802
    %v6804 = vsel %vm1126, %v6795, %v6797
    %v6805 = vsel %vm1126, %v6797, %v6799
    %v6806 = vsel %vm1126, %v6799, %v6801
    %v6807 = vsel %vm1126, %v6801, %v6803
    %v6812 = vmul.f32 %v6785, %v6804
    %v6813 = vmul.f32 %v6786, %v6805
    %v6814 = vmul.f32 %v6787, %v6806
    %v6815 = vmul.f32 %v6788, %v6807
    %v6816 = vadd.f32 %v6757, %v6812
    %v6817 = vadd.f32 %v6758, %v6813
    %v6818 = vadd.f32 %v6759, %v6814
    %v6819 = vadd.f32 %v6760, %v6815
    %6820 = vrot.lane.b32.xlu0 %v5803, 92
    %v6821 = vpop.permute.xlu0 %6820
    %6822 = vrot.lane.b32.xlu0 %v5804, 92
    %v6823 = vpop.permute.xlu0 %6822
    %6824 = vrot.lane.b32.xlu0 %v5805, 92
    %v6825 = vpop.permute.xlu0 %6824
    %6826 = vrot.lane.b32.xlu0 %v5806, 92
    %v6827 = vpop.permute.xlu0 %6826
    %6828 = vrot.lane.b32.xlu0 %v5807, 92
    %v6829 = vpop.permute.xlu0 %6828
    %v6830 = vsel %vm1153, %v6821, %v6823
    %v6831 = vsel %vm1153, %v6823, %v6825
    %v6832 = vsel %vm1153, %v6825, %v6827
    %v6833 = vsel %vm1153, %v6827, %v6829
    %v6839 = vadd.f32 %v5803, %v6830
    %v6840 = vadd.f32 %v5804, %v6831
    %v6841 = vadd.f32 %v5805, %v6832
    %v6842 = vadd.f32 %v5806, %v6833
    %v6843 = vadd.f32 %v5807, %v6829
    %v6844 = vld [vmem:[#allocation3 + $0x240] sm:$0xff]
    %v6845 = vld [vmem:[#allocation3 + $0x248] sm:$0xff]
    %v6846 = vld [vmem:[#allocation3 + $0x250] sm:$0xff]
    %v6847 = vld [vmem:[#allocation3 + $0x258] sm:$0xff]
    %6853 = vrot.lane.b32.xlu0 %v6839, 114
    %v6854 = vpop.permute.xlu0 %6853
    %6855 = vrot.lane.b32.xlu0 %v6840, 114
    %v6856 = vpop.permute.xlu0 %6855
    %6857 = vrot.lane.b32.xlu0 %v6841, 114
    %v6858 = vpop.permute.xlu0 %6857
    %6859 = vrot.lane.b32.xlu0 %v6842, 114
    %v6860 = vpop.permute.xlu0 %6859
    %6861 = vrot.lane.b32.xlu0 %v6843, 114
    %v6862 = vpop.permute.xlu0 %6861
    %v6863 = vsel %vm509, %v6854, %v6856
    %v6864 = vsel %vm509, %v6856, %v6858
    %v6865 = vsel %vm509, %v6858, %v6860
    %v6866 = vsel %vm509, %v6860, %v6862
    %v6871 = vmul.f32 %v6844, %v6863
    %v6872 = vmul.f32 %v6845, %v6864
    %v6873 = vmul.f32 %v6846, %v6865
    %v6874 = vmul.f32 %v6847, %v6866
    %v6875 = vadd.f32 %v6816, %v6871
    %v6876 = vadd.f32 %v6817, %v6872
    %v6877 = vadd.f32 %v6818, %v6873
    %v6878 = vadd.f32 %v6819, %v6874
    %6879 = vrot.lane.b32.xlu0 %v5803, 90
    %v6880 = vpop.permute.xlu0 %6879
    %6881 = vrot.lane.b32.xlu0 %v5804, 90
    %v6882 = vpop.permute.xlu0 %6881
    %6883 = vrot.lane.b32.xlu0 %v5805, 90
    %v6884 = vpop.permute.xlu0 %6883
    %6885 = vrot.lane.b32.xlu0 %v5806, 90
    %v6886 = vpop.permute.xlu0 %6885
    %6887 = vrot.lane.b32.xlu0 %v5807, 90
    %v6888 = vpop.permute.xlu0 %6887
    %v6889 = vsel %vm1213, %v6880, %v6882
    %v6890 = vsel %vm1213, %v6882, %v6884
    %v6891 = vsel %vm1213, %v6884, %v6886
    %v6892 = vsel %vm1213, %v6886, %v6888
    %v6898 = vadd.f32 %v5803, %v6889
    %v6899 = vadd.f32 %v5804, %v6890
    %v6900 = vadd.f32 %v5805, %v6891
    %v6901 = vadd.f32 %v5806, %v6892
    %v6902 = vadd.f32 %v5807, %v6888
    %v6903 = vld [vmem:[#allocation3 + $0x260] sm:$0xff]
    %v6904 = vld [vmem:[#allocation3 + $0x268] sm:$0xff]
    %v6905 = vld [vmem:[#allocation3 + $0x270] sm:$0xff]
    %v6906 = vld [vmem:[#allocation3 + $0x278] sm:$0xff]
    %6912 = vrot.lane.b32.xlu0 %v6898, 115
    %v6913 = vpop.permute.xlu0 %6912
    %6914 = vrot.lane.b32.xlu0 %v6899, 115
    %v6915 = vpop.permute.xlu0 %6914
    %6916 = vrot.lane.b32.xlu0 %v6900, 115
    %v6917 = vpop.permute.xlu0 %6916
    %6918 = vrot.lane.b32.xlu0 %v6901, 115
    %v6919 = vpop.permute.xlu0 %6918
    %6920 = vrot.lane.b32.xlu0 %v6902, 115
    %v6921 = vpop.permute.xlu0 %6920
    %v6922 = vsel %vm1247, %v6913, %v6915
    %v6923 = vsel %vm1247, %v6915, %v6917
    %v6924 = vsel %vm1247, %v6917, %v6919
    %v6925 = vsel %vm1247, %v6919, %v6921
    %v6930 = vmul.f32 %v6903, %v6922
    %v6931 = vmul.f32 %v6904, %v6923
    %v6932 = vmul.f32 %v6905, %v6924
    %v6933 = vmul.f32 %v6906, %v6925
    %v6934 = vadd.f32 %v6875, %v6930
    %v6935 = vadd.f32 %v6876, %v6931
    %v6936 = vadd.f32 %v6877, %v6932
    %v6937 = vadd.f32 %v6878, %v6933
    %6938 = vrot.lane.b32.xlu0 %v5803, 88
    %v6939 = vpop.permute.xlu0 %6938
    %6940 = vrot.lane.b32.xlu0 %v5804, 88
    %v6941 = vpop.permute.xlu0 %6940
    %6942 = vrot.lane.b32.xlu0 %v5805, 88
    %v6943 = vpop.permute.xlu0 %6942
    %6944 = vrot.lane.b32.xlu0 %v5806, 88
    %v6945 = vpop.permute.xlu0 %6944
    %6946 = vrot.lane.b32.xlu0 %v5807, 88
    %v6947 = vpop.permute.xlu0 %6946
    %v6948 = vsel %vm1274, %v6939, %v6941
    %v6949 = vsel %vm1274, %v6941, %v6943
    %v6950 = vsel %vm1274, %v6943, %v6945
    %v6951 = vsel %vm1274, %v6945, %v6947
    %v6957 = vadd.f32 %v5803, %v6948
    %v6958 = vadd.f32 %v5804, %v6949
    %v6959 = vadd.f32 %v5805, %v6950
    %v6960 = vadd.f32 %v5806, %v6951
    %v6961 = vadd.f32 %v5807, %v6947
    %v6962 = vld [vmem:[#allocation3 + $0x280] sm:$0xff]
    %v6963 = vld [vmem:[#allocation3 + $0x288] sm:$0xff]
    %v6964 = vld [vmem:[#allocation3 + $0x290] sm:$0xff]
    %v6965 = vld [vmem:[#allocation3 + $0x298] sm:$0xff]
    %6971 = vrot.lane.b32.xlu0 %v6957, 116
    %v6972 = vpop.permute.xlu0 %6971
    %6973 = vrot.lane.b32.xlu0 %v6958, 116
    %v6974 = vpop.permute.xlu0 %6973
    %6975 = vrot.lane.b32.xlu0 %v6959, 116
    %v6976 = vpop.permute.xlu0 %6975
    %6977 = vrot.lane.b32.xlu0 %v6960, 116
    %v6978 = vpop.permute.xlu0 %6977
    %6979 = vrot.lane.b32.xlu0 %v6961, 116
    %v6980 = vpop.permute.xlu0 %6979
    %v6981 = vsel %vm448, %v6972, %v6974
    %v6982 = vsel %vm448, %v6974, %v6976
    %v6983 = vsel %vm448, %v6976, %v6978
    %v6984 = vsel %vm448, %v6978, %v6980
    %v6989 = vmul.f32 %v6962, %v6981
    %v6990 = vmul.f32 %v6963, %v6982
    %v6991 = vmul.f32 %v6964, %v6983
    %v6992 = vmul.f32 %v6965, %v6984
    %v6993 = vadd.f32 %v6934, %v6989
    %v6994 = vadd.f32 %v6935, %v6990
    %v6995 = vadd.f32 %v6936, %v6991
    %v6996 = vadd.f32 %v6937, %v6992
    %6997 = vrot.lane.b32.xlu0 %v5803, 86
    %v6998 = vpop.permute.xlu0 %6997
    %6999 = vrot.lane.b32.xlu0 %v5804, 86
    %v7000 = vpop.permute.xlu0 %6999
    %7001 = vrot.lane.b32.xlu0 %v5805, 86
    %v7002 = vpop.permute.xlu0 %7001
    %7003 = vrot.lane.b32.xlu0 %v5806, 86
    %v7004 = vpop.permute.xlu0 %7003
    %7005 = vrot.lane.b32.xlu0 %v5807, 86
    %v7006 = vpop.permute.xlu0 %7005
    %v7007 = vsel %vm1334, %v6998, %v7000
    %v7008 = vsel %vm1334, %v7000, %v7002
    %v7009 = vsel %vm1334, %v7002, %v7004
    %v7010 = vsel %vm1334, %v7004, %v7006
    %v7016 = vadd.f32 %v5803, %v7007
    %v7017 = vadd.f32 %v5804, %v7008
    %v7018 = vadd.f32 %v5805, %v7009
    %v7019 = vadd.f32 %v5806, %v7010
    %v7020 = vadd.f32 %v5807, %v7006
    %v7021 = vld [vmem:[#allocation3 + $0x2a0] sm:$0xff]
    %v7022 = vld [vmem:[#allocation3 + $0x2a8] sm:$0xff]
    %v7023 = vld [vmem:[#allocation3 + $0x2b0] sm:$0xff]
    %v7024 = vld [vmem:[#allocation3 + $0x2b8] sm:$0xff]
    %7030 = vrot.lane.b32.xlu0 %v7016, 117
    %v7031 = vpop.permute.xlu0 %7030
    %7032 = vrot.lane.b32.xlu0 %v7017, 117
    %v7033 = vpop.permute.xlu0 %7032
    %7034 = vrot.lane.b32.xlu0 %v7018, 117
    %v7035 = vpop.permute.xlu0 %7034
    %7036 = vrot.lane.b32.xlu0 %v7019, 117
    %v7037 = vpop.permute.xlu0 %7036
    %7038 = vrot.lane.b32.xlu0 %v7020, 117
    %v7039 = vpop.permute.xlu0 %7038
    %v7040 = vsel %vm1368, %v7031, %v7033
    %v7041 = vsel %vm1368, %v7033, %v7035
    %v7042 = vsel %vm1368, %v7035, %v7037
    %v7043 = vsel %vm1368, %v7037, %v7039
    %v7048 = vmul.f32 %v7021, %v7040
    %v7049 = vmul.f32 %v7022, %v7041
    %v7050 = vmul.f32 %v7023, %v7042
    %v7051 = vmul.f32 %v7024, %v7043
    %v7052 = vadd.f32 %v6993, %v7048
    %v7053 = vadd.f32 %v6994, %v7049
    %v7054 = vadd.f32 %v6995, %v7050
    %v7055 = vadd.f32 %v6996, %v7051
    %7056 = vrot.lane.b32.xlu0 %v5803, 84
    %v7057 = vpop.permute.xlu0 %7056
    %7058 = vrot.lane.b32.xlu0 %v5804, 84
    %v7059 = vpop.permute.xlu0 %7058
    %7060 = vrot.lane.b32.xlu0 %v5805, 84
    %v7061 = vpop.permute.xlu0 %7060
    %7062 = vrot.lane.b32.xlu0 %v5806, 84
    %v7063 = vpop.permute.xlu0 %7062
    %7064 = vrot.lane.b32.xlu0 %v5807, 84
    %v7065 = vpop.permute.xlu0 %7064
    %v7066 = vsel %vm1395, %v7057, %v7059
    %v7067 = vsel %vm1395, %v7059, %v7061
    %v7068 = vsel %vm1395, %v7061, %v7063
    %v7069 = vsel %vm1395, %v7063, %v7065
    %v7075 = vadd.f32 %v5803, %v7066
    %v7076 = vadd.f32 %v5804, %v7067
    %v7077 = vadd.f32 %v5805, %v7068
    %v7078 = vadd.f32 %v5806, %v7069
    %v7079 = vadd.f32 %v5807, %v7065
    %v7080 = vld [vmem:[#allocation3 + $0x2c0] sm:$0xff]
    %v7081 = vld [vmem:[#allocation3 + $0x2c8] sm:$0xff]
    %v7082 = vld [vmem:[#allocation3 + $0x2d0] sm:$0xff]
    %v7083 = vld [vmem:[#allocation3 + $0x2d8] sm:$0xff]
    %7089 = vrot.lane.b32.xlu0 %v7075, 118
    %v7090 = vpop.permute.xlu0 %7089
    %7091 = vrot.lane.b32.xlu0 %v7076, 118
    %v7092 = vpop.permute.xlu0 %7091
    %7093 = vrot.lane.b32.xlu0 %v7077, 118
    %v7094 = vpop.permute.xlu0 %7093
    %7095 = vrot.lane.b32.xlu0 %v7078, 118
    %v7096 = vpop.permute.xlu0 %7095
    %7097 = vrot.lane.b32.xlu0 %v7079, 118
    %v7098 = vpop.permute.xlu0 %7097
    %v7099 = vsel %vm387, %v7090, %v7092
    %v7100 = vsel %vm387, %v7092, %v7094
    %v7101 = vsel %vm387, %v7094, %v7096
    %v7102 = vsel %vm387, %v7096, %v7098
    %v7107 = vmul.f32 %v7080, %v7099
    %v7108 = vmul.f32 %v7081, %v7100
    %v7109 = vmul.f32 %v7082, %v7101
    %v7110 = vmul.f32 %v7083, %v7102
    %v7111 = vadd.f32 %v7052, %v7107
    %v7112 = vadd.f32 %v7053, %v7108
    %v7113 = vadd.f32 %v7054, %v7109
    %v7114 = vadd.f32 %v7055, %v7110
    %7115 = vrot.lane.b32.xlu0 %v5803, 82
    %v7116 = vpop.permute.xlu0 %7115
    %7117 = vrot.lane.b32.xlu0 %v5804, 82
    %v7118 = vpop.permute.xlu0 %7117
    %7119 = vrot.lane.b32.xlu0 %v5805, 82
    %v7120 = vpop.permute.xlu0 %7119
    %7121 = vrot.lane.b32.xlu0 %v5806, 82
    %v7122 = vpop.permute.xlu0 %7121
    %7123 = vrot.lane.b32.xlu0 %v5807, 82
    %v7124 = vpop.permute.xlu0 %7123
    %v7125 = vsel %vm1455, %v7116, %v7118
    %v7126 = vsel %vm1455, %v7118, %v7120
    %v7127 = vsel %vm1455, %v7120, %v7122
    %v7128 = vsel %vm1455, %v7122, %v7124
    %v7134 = vadd.f32 %v5803, %v7125
    %v7135 = vadd.f32 %v5804, %v7126
    %v7136 = vadd.f32 %v5805, %v7127
    %v7137 = vadd.f32 %v5806, %v7128
    %v7138 = vadd.f32 %v5807, %v7124
    %v7139 = vld [vmem:[#allocation3 + $0x2e0] sm:$0xff]
    %v7140 = vld [vmem:[#allocation3 + $0x2e8] sm:$0xff]
    %v7141 = vld [vmem:[#allocation3 + $0x2f0] sm:$0xff]
    %v7142 = vld [vmem:[#allocation3 + $0x2f8] sm:$0xff]
    %7148 = vrot.lane.b32.xlu0 %v7134, 119
    %v7149 = vpop.permute.xlu0 %7148
    %7150 = vrot.lane.b32.xlu0 %v7135, 119
    %v7151 = vpop.permute.xlu0 %7150
    %7152 = vrot.lane.b32.xlu0 %v7136, 119
    %v7153 = vpop.permute.xlu0 %7152
    %7154 = vrot.lane.b32.xlu0 %v7137, 119
    %v7155 = vpop.permute.xlu0 %7154
    %7156 = vrot.lane.b32.xlu0 %v7138, 119
    %v7157 = vpop.permute.xlu0 %7156
    %v7158 = vsel %vm1489, %v7149, %v7151
    %v7159 = vsel %vm1489, %v7151, %v7153
    %v7160 = vsel %vm1489, %v7153, %v7155
    %v7161 = vsel %vm1489, %v7155, %v7157
    %v7166 = vmul.f32 %v7139, %v7158
    %v7167 = vmul.f32 %v7140, %v7159
    %v7168 = vmul.f32 %v7141, %v7160
    %v7169 = vmul.f32 %v7142, %v7161
    %v7170 = vadd.f32 %v7111, %v7166
    %v7171 = vadd.f32 %v7112, %v7167
    %v7172 = vadd.f32 %v7113, %v7168
    %v7173 = vadd.f32 %v7114, %v7169
    %7174 = vrot.lane.b32.xlu0 %v5803, 80
    %v7175 = vpop.permute.xlu0 %7174
    %7176 = vrot.lane.b32.xlu0 %v5804, 80
    %v7177 = vpop.permute.xlu0 %7176
    %7178 = vrot.lane.b32.xlu0 %v5805, 80
    %v7179 = vpop.permute.xlu0 %7178
    %7180 = vrot.lane.b32.xlu0 %v5806, 80
    %v7181 = vpop.permute.xlu0 %7180
    %7182 = vrot.lane.b32.xlu0 %v5807, 80
    %v7183 = vpop.permute.xlu0 %7182
    %v7184 = vsel %vm1516, %v7175, %v7177
    %v7185 = vsel %vm1516, %v7177, %v7179
    %v7186 = vsel %vm1516, %v7179, %v7181
    %v7187 = vsel %vm1516, %v7181, %v7183
    %v7193 = vadd.f32 %v5803, %v7184
    %v7194 = vadd.f32 %v5804, %v7185
    %v7195 = vadd.f32 %v5805, %v7186
    %v7196 = vadd.f32 %v5806, %v7187
    %v7197 = vadd.f32 %v5807, %v7183
    %v7198 = vld [vmem:[#allocation3 + $0x300] sm:$0xff]
    %v7199 = vld [vmem:[#allocation3 + $0x308] sm:$0xff]
    %v7200 = vld [vmem:[#allocation3 + $0x310] sm:$0xff]
    %v7201 = vld [vmem:[#allocation3 + $0x318] sm:$0xff]
    %7207 = vrot.lane.b32.xlu0 %v7193, 120
    %v7208 = vpop.permute.xlu0 %7207
    %7209 = vrot.lane.b32.xlu0 %v7194, 120
    %v7210 = vpop.permute.xlu0 %7209
    %7211 = vrot.lane.b32.xlu0 %v7195, 120
    %v7212 = vpop.permute.xlu0 %7211
    %7213 = vrot.lane.b32.xlu0 %v7196, 120
    %v7214 = vpop.permute.xlu0 %7213
    %7215 = vrot.lane.b32.xlu0 %v7197, 120
    %v7216 = vpop.permute.xlu0 %7215
    %v7217 = vsel %vm326, %v7208, %v7210
    %v7218 = vsel %vm326, %v7210, %v7212
    %v7219 = vsel %vm326, %v7212, %v7214
    %v7220 = vsel %vm326, %v7214, %v7216
    %v7225 = vmul.f32 %v7198, %v7217
    %v7226 = vmul.f32 %v7199, %v7218
    %v7227 = vmul.f32 %v7200, %v7219
    %v7228 = vmul.f32 %v7201, %v7220
    %v7229 = vadd.f32 %v7170, %v7225
    %v7230 = vadd.f32 %v7171, %v7226
    %v7231 = vadd.f32 %v7172, %v7227
    %v7232 = vadd.f32 %v7173, %v7228
    %7233 = vrot.lane.b32.xlu0 %v5803, 78
    %v7234 = vpop.permute.xlu0 %7233
    %7235 = vrot.lane.b32.xlu0 %v5804, 78
    %v7236 = vpop.permute.xlu0 %7235
    %7237 = vrot.lane.b32.xlu0 %v5805, 78
    %v7238 = vpop.permute.xlu0 %7237
    %7239 = vrot.lane.b32.xlu0 %v5806, 78
    %v7240 = vpop.permute.xlu0 %7239
    %7241 = vrot.lane.b32.xlu0 %v5807, 78
    %v7242 = vpop.permute.xlu0 %7241
    %v7243 = vsel %vm1576, %v7234, %v7236
    %v7244 = vsel %vm1576, %v7236, %v7238
    %v7245 = vsel %vm1576, %v7238, %v7240
    %v7246 = vsel %vm1576, %v7240, %v7242
    %v7252 = vadd.f32 %v5803, %v7243
    %v7253 = vadd.f32 %v5804, %v7244
    %v7254 = vadd.f32 %v5805, %v7245
    %v7255 = vadd.f32 %v5806, %v7246
    %v7256 = vadd.f32 %v5807, %v7242
    %v7257 = vld [vmem:[#allocation3 + $0x320] sm:$0xff]
    %v7258 = vld [vmem:[#allocation3 + $0x328] sm:$0xff]
    %v7259 = vld [vmem:[#allocation3 + $0x330] sm:$0xff]
    %v7260 = vld [vmem:[#allocation3 + $0x338] sm:$0xff]
    %7266 = vrot.lane.b32.xlu0 %v7252, 121
    %v7267 = vpop.permute.xlu0 %7266
    %7268 = vrot.lane.b32.xlu0 %v7253, 121
    %v7269 = vpop.permute.xlu0 %7268
    %7270 = vrot.lane.b32.xlu0 %v7254, 121
    %v7271 = vpop.permute.xlu0 %7270
    %7272 = vrot.lane.b32.xlu0 %v7255, 121
    %v7273 = vpop.permute.xlu0 %7272
    %7274 = vrot.lane.b32.xlu0 %v7256, 121
    %v7275 = vpop.permute.xlu0 %7274
    %v7276 = vsel %vm1610, %v7267, %v7269
    %v7277 = vsel %vm1610, %v7269, %v7271
    %v7278 = vsel %vm1610, %v7271, %v7273
    %v7279 = vsel %vm1610, %v7273, %v7275
    %v7284 = vmul.f32 %v7257, %v7276
    %v7285 = vmul.f32 %v7258, %v7277
    %v7286 = vmul.f32 %v7259, %v7278
    %v7287 = vmul.f32 %v7260, %v7279
    %v7288 = vadd.f32 %v7229, %v7284
    %v7289 = vadd.f32 %v7230, %v7285
    %v7290 = vadd.f32 %v7231, %v7286
    %v7291 = vadd.f32 %v7232, %v7287
    %7292 = vrot.lane.b32.xlu0 %v5803, 76
    %v7293 = vpop.permute.xlu0 %7292
    %7294 = vrot.lane.b32.xlu0 %v5804, 76
    %v7295 = vpop.permute.xlu0 %7294
    %7296 = vrot.lane.b32.xlu0 %v5805, 76
    %v7297 = vpop.permute.xlu0 %7296
    %7298 = vrot.lane.b32.xlu0 %v5806, 76
    %v7299 = vpop.permute.xlu0 %7298
    %7300 = vrot.lane.b32.xlu0 %v5807, 76
    %v7301 = vpop.permute.xlu0 %7300
    %v7302 = vsel %vm1637, %v7293, %v7295
    %v7303 = vsel %vm1637, %v7295, %v7297
    %v7304 = vsel %vm1637, %v7297, %v7299
    %v7305 = vsel %vm1637, %v7299, %v7301
    %v7311 = vadd.f32 %v5803, %v7302
    %v7312 = vadd.f32 %v5804, %v7303
    %v7313 = vadd.f32 %v5805, %v7304
    %v7314 = vadd.f32 %v5806, %v7305
    %v7315 = vadd.f32 %v5807, %v7301
    %v7316 = vld [vmem:[#allocation3 + $0x340] sm:$0xff]
    %v7317 = vld [vmem:[#allocation3 + $0x348] sm:$0xff]
    %v7318 = vld [vmem:[#allocation3 + $0x350] sm:$0xff]
    %v7319 = vld [vmem:[#allocation3 + $0x358] sm:$0xff]
    %7325 = vrot.lane.b32.xlu0 %v7311, 122
    %v7326 = vpop.permute.xlu0 %7325
    %7327 = vrot.lane.b32.xlu0 %v7312, 122
    %v7328 = vpop.permute.xlu0 %7327
    %7329 = vrot.lane.b32.xlu0 %v7313, 122
    %v7330 = vpop.permute.xlu0 %7329
    %7331 = vrot.lane.b32.xlu0 %v7314, 122
    %v7332 = vpop.permute.xlu0 %7331
    %7333 = vrot.lane.b32.xlu0 %v7315, 122
    %v7334 = vpop.permute.xlu0 %7333
    %v7335 = vsel %vm265, %v7326, %v7328
    %v7336 = vsel %vm265, %v7328, %v7330
    %v7337 = vsel %vm265, %v7330, %v7332
    %v7338 = vsel %vm265, %v7332, %v7334
    %v7343 = vmul.f32 %v7316, %v7335
    %v7344 = vmul.f32 %v7317, %v7336
    %v7345 = vmul.f32 %v7318, %v7337
    %v7346 = vmul.f32 %v7319, %v7338
    %v7347 = vadd.f32 %v7288, %v7343
    %v7348 = vadd.f32 %v7289, %v7344
    %v7349 = vadd.f32 %v7290, %v7345
    %v7350 = vadd.f32 %v7291, %v7346
    %7351 = vrot.lane.b32.xlu0 %v5803, 74
    %v7352 = vpop.permute.xlu0 %7351
    %7353 = vrot.lane.b32.xlu0 %v5804, 74
    %v7354 = vpop.permute.xlu0 %7353
    %7355 = vrot.lane.b32.xlu0 %v5805, 74
    %v7356 = vpop.permute.xlu0 %7355
    %7357 = vrot.lane.b32.xlu0 %v5806, 74
    %v7358 = vpop.permute.xlu0 %7357
    %7359 = vrot.lane.b32.xlu0 %v5807, 74
    %v7360 = vpop.permute.xlu0 %7359
    %v7361 = vsel %vm1697, %v7352, %v7354
    %v7362 = vsel %vm1697, %v7354, %v7356
    %v7363 = vsel %vm1697, %v7356, %v7358
    %v7364 = vsel %vm1697, %v7358, %v7360
    %v7370 = vadd.f32 %v5803, %v7361
    %v7371 = vadd.f32 %v5804, %v7362
    %v7372 = vadd.f32 %v5805, %v7363
    %v7373 = vadd.f32 %v5806, %v7364
    %v7374 = vadd.f32 %v5807, %v7360
    %v7375 = vld [vmem:[#allocation3 + $0x360] sm:$0xff]
    %v7376 = vld [vmem:[#allocation3 + $0x368] sm:$0xff]
    %v7377 = vld [vmem:[#allocation3 + $0x370] sm:$0xff]
    %v7378 = vld [vmem:[#allocation3 + $0x378] sm:$0xff]
    %7384 = vrot.lane.b32.xlu0 %v7370, 123
    %v7385 = vpop.permute.xlu0 %7384
    %7386 = vrot.lane.b32.xlu0 %v7371, 123
    %v7387 = vpop.permute.xlu0 %7386
    %7388 = vrot.lane.b32.xlu0 %v7372, 123
    %v7389 = vpop.permute.xlu0 %7388
    %7390 = vrot.lane.b32.xlu0 %v7373, 123
    %v7391 = vpop.permute.xlu0 %7390
    %7392 = vrot.lane.b32.xlu0 %v7374, 123
    %v7393 = vpop.permute.xlu0 %7392
    %v7394 = vsel %vm1731, %v7385, %v7387
    %v7395 = vsel %vm1731, %v7387, %v7389
    %v7396 = vsel %vm1731, %v7389, %v7391
    %v7397 = vsel %vm1731, %v7391, %v7393
    %v7402 = vmul.f32 %v7375, %v7394
    %v7403 = vmul.f32 %v7376, %v7395
    %v7404 = vmul.f32 %v7377, %v7396
    %v7405 = vmul.f32 %v7378, %v7397
    %v7406 = vadd.f32 %v7347, %v7402
    %v7407 = vadd.f32 %v7348, %v7403
    %v7408 = vadd.f32 %v7349, %v7404
    %v7409 = vadd.f32 %v7350, %v7405
    %7410 = vrot.lane.b32.xlu0 %v5803, 72
    %v7411 = vpop.permute.xlu0 %7410
    %7412 = vrot.lane.b32.xlu0 %v5804, 72
    %v7413 = vpop.permute.xlu0 %7412
    %7414 = vrot.lane.b32.xlu0 %v5805, 72
    %v7415 = vpop.permute.xlu0 %7414
    %7416 = vrot.lane.b32.xlu0 %v5806, 72
    %v7417 = vpop.permute.xlu0 %7416
    %7418 = vrot.lane.b32.xlu0 %v5807, 72
    %v7419 = vpop.permute.xlu0 %7418
    %v7420 = vsel %vm1758, %v7411, %v7413
    %v7421 = vsel %vm1758, %v7413, %v7415
    %v7422 = vsel %vm1758, %v7415, %v7417
    %v7423 = vsel %vm1758, %v7417, %v7419
    %v7429 = vadd.f32 %v5803, %v7420
    %v7430 = vadd.f32 %v5804, %v7421
    %v7431 = vadd.f32 %v5805, %v7422
    %v7432 = vadd.f32 %v5806, %v7423
    %v7433 = vadd.f32 %v5807, %v7419
    %v7434 = vld [vmem:[#allocation3 + $0x380] sm:$0xff]
    %v7435 = vld [vmem:[#allocation3 + $0x388] sm:$0xff]
    %v7436 = vld [vmem:[#allocation3 + $0x390] sm:$0xff]
    %v7437 = vld [vmem:[#allocation3 + $0x398] sm:$0xff]
    %7443 = vrot.lane.b32.xlu0 %v7429, 124
    %v7444 = vpop.permute.xlu0 %7443
    %7445 = vrot.lane.b32.xlu0 %v7430, 124
    %v7446 = vpop.permute.xlu0 %7445
    %7447 = vrot.lane.b32.xlu0 %v7431, 124
    %v7448 = vpop.permute.xlu0 %7447
    %7449 = vrot.lane.b32.xlu0 %v7432, 124
    %v7450 = vpop.permute.xlu0 %7449
    %7451 = vrot.lane.b32.xlu0 %v7433, 124
    %v7452 = vpop.permute.xlu0 %7451
    %v7453 = vsel %vm204, %v7444, %v7446
    %v7454 = vsel %vm204, %v7446, %v7448
    %v7455 = vsel %vm204, %v7448, %v7450
    %v7456 = vsel %vm204, %v7450, %v7452
    %v7461 = vmul.f32 %v7434, %v7453
    %v7462 = vmul.f32 %v7435, %v7454
    %v7463 = vmul.f32 %v7436, %v7455
    %v7464 = vmul.f32 %v7437, %v7456
    %v7465 = vadd.f32 %v7406, %v7461
    %v7466 = vadd.f32 %v7407, %v7462
    %v7467 = vadd.f32 %v7408, %v7463
    %v7468 = vadd.f32 %v7409, %v7464
    %7469 = vrot.lane.b32.xlu0 %v5803, 70
    %v7470 = vpop.permute.xlu0 %7469
    %7471 = vrot.lane.b32.xlu0 %v5804, 70
    %v7472 = vpop.permute.xlu0 %7471
    %7473 = vrot.lane.b32.xlu0 %v5805, 70
    %v7474 = vpop.permute.xlu0 %7473
    %7475 = vrot.lane.b32.xlu0 %v5806, 70
    %v7476 = vpop.permute.xlu0 %7475
    %7477 = vrot.lane.b32.xlu0 %v5807, 70
    %v7478 = vpop.permute.xlu0 %7477
    %v7479 = vsel %vm1818, %v7470, %v7472
    %v7480 = vsel %vm1818, %v7472, %v7474
    %v7481 = vsel %vm1818, %v7474, %v7476
    %v7482 = vsel %vm1818, %v7476, %v7478
    %v7488 = vadd.f32 %v5803, %v7479
    %v7489 = vadd.f32 %v5804, %v7480
    %v7490 = vadd.f32 %v5805, %v7481
    %v7491 = vadd.f32 %v5806, %v7482
    %v7492 = vadd.f32 %v5807, %v7478
    %v7493 = vld [vmem:[#allocation3 + $0x3a0] sm:$0xff]
    %v7494 = vld [vmem:[#allocation3 + $0x3a8] sm:$0xff]
    %v7495 = vld [vmem:[#allocation3 + $0x3b0] sm:$0xff]
    %v7496 = vld [vmem:[#allocation3 + $0x3b8] sm:$0xff]
    %7502 = vrot.lane.b32.xlu0 %v7488, 125
    %v7503 = vpop.permute.xlu0 %7502
    %7504 = vrot.lane.b32.xlu0 %v7489, 125
    %v7505 = vpop.permute.xlu0 %7504
    %7506 = vrot.lane.b32.xlu0 %v7490, 125
    %v7507 = vpop.permute.xlu0 %7506
    %7508 = vrot.lane.b32.xlu0 %v7491, 125
    %v7509 = vpop.permute.xlu0 %7508
    %7510 = vrot.lane.b32.xlu0 %v7492, 125
    %v7511 = vpop.permute.xlu0 %7510
    %v7512 = vsel %vm1852, %v7503, %v7505
    %v7513 = vsel %vm1852, %v7505, %v7507
    %v7514 = vsel %vm1852, %v7507, %v7509
    %v7515 = vsel %vm1852, %v7509, %v7511
    %v7520 = vmul.f32 %v7493, %v7512
    %v7521 = vmul.f32 %v7494, %v7513
    %v7522 = vmul.f32 %v7495, %v7514
    %v7523 = vmul.f32 %v7496, %v7515
    %v7524 = vadd.f32 %v7465, %v7520
    %v7525 = vadd.f32 %v7466, %v7521
    %v7526 = vadd.f32 %v7467, %v7522
    %v7527 = vadd.f32 %v7468, %v7523
    %7528 = vrot.lane.b32.xlu0 %v5803, 68
    %v7529 = vpop.permute.xlu0 %7528
    %7530 = vrot.lane.b32.xlu0 %v5804, 68
    %v7531 = vpop.permute.xlu0 %7530
    %7532 = vrot.lane.b32.xlu0 %v5805, 68
    %v7533 = vpop.permute.xlu0 %7532
    %7534 = vrot.lane.b32.xlu0 %v5806, 68
    %v7535 = vpop.permute.xlu0 %7534
    %7536 = vrot.lane.b32.xlu0 %v5807, 68
    %v7537 = vpop.permute.xlu0 %7536
    %v7538 = vsel %vm1879, %v7529, %v7531
    %v7539 = vsel %vm1879, %v7531, %v7533
    %v7540 = vsel %vm1879, %v7533, %v7535
    %v7541 = vsel %vm1879, %v7535, %v7537
    %v7547 = vadd.f32 %v5803, %v7538
    %v7548 = vadd.f32 %v5804, %v7539
    %v7549 = vadd.f32 %v5805, %v7540
    %v7550 = vadd.f32 %v5806, %v7541
    %v7551 = vadd.f32 %v5807, %v7537
    %v7552 = vld [vmem:[#allocation3 + $0x3c0] sm:$0xff]
    %v7553 = vld [vmem:[#allocation3 + $0x3c8] sm:$0xff]
    %v7554 = vld [vmem:[#allocation3 + $0x3d0] sm:$0xff]
    %v7555 = vld [vmem:[#allocation3 + $0x3d8] sm:$0xff]
    %7561 = vrot.lane.b32.xlu0 %v7547, 126
    %v7562 = vpop.permute.xlu0 %7561
    %7563 = vrot.lane.b32.xlu0 %v7548, 126
    %v7564 = vpop.permute.xlu0 %7563
    %7565 = vrot.lane.b32.xlu0 %v7549, 126
    %v7566 = vpop.permute.xlu0 %7565
    %7567 = vrot.lane.b32.xlu0 %v7550, 126
    %v7568 = vpop.permute.xlu0 %7567
    %7569 = vrot.lane.b32.xlu0 %v7551, 126
    %v7570 = vpop.permute.xlu0 %7569
    %v7571 = vsel %vm143, %v7562, %v7564
    %v7572 = vsel %vm143, %v7564, %v7566
    %v7573 = vsel %vm143, %v7566, %v7568
    %v7574 = vsel %vm143, %v7568, %v7570
    %v7579 = vmul.f32 %v7552, %v7571
    %v7580 = vmul.f32 %v7553, %v7572
    %v7581 = vmul.f32 %v7554, %v7573
    %v7582 = vmul.f32 %v7555, %v7574
    %v7583 = vadd.f32 %v7524, %v7579
    %v7584 = vadd.f32 %v7525, %v7580
    %v7585 = vadd.f32 %v7526, %v7581
    %v7586 = vadd.f32 %v7527, %v7582
    %7587 = vrot.lane.b32.xlu0 %v5803, 66
    %v7588 = vpop.permute.xlu0 %7587
    %7589 = vrot.lane.b32.xlu0 %v5804, 66
    %v7590 = vpop.permute.xlu0 %7589
    %7591 = vrot.lane.b32.xlu0 %v5805, 66
    %v7592 = vpop.permute.xlu0 %7591
    %7593 = vrot.lane.b32.xlu0 %v5806, 66
    %v7594 = vpop.permute.xlu0 %7593
    %7595 = vrot.lane.b32.xlu0 %v5807, 66
    %v7596 = vpop.permute.xlu0 %7595
    %v7597 = vsel %vm1939, %v7588, %v7590
    %v7598 = vsel %vm1939, %v7590, %v7592
    %v7599 = vsel %vm1939, %v7592, %v7594
    %v7600 = vsel %vm1939, %v7594, %v7596
    %v7606 = vadd.f32 %v5803, %v7597
    %v7607 = vadd.f32 %v5804, %v7598
    %v7608 = vadd.f32 %v5805, %v7599
    %v7609 = vadd.f32 %v5806, %v7600
    %v7610 = vadd.f32 %v5807, %v7596
    %v7611 = vld [vmem:[#allocation3 + $0x3e0] sm:$0xff]
    %v7612 = vld [vmem:[#allocation3 + $0x3e8] sm:$0xff]
    %v7613 = vld [vmem:[#allocation3 + $0x3f0] sm:$0xff]
    %v7614 = vld [vmem:[#allocation3 + $0x3f8] sm:$0xff]
    %7620 = vrot.lane.b32.xlu0 %v7606, 127
    %v7621 = vpop.permute.xlu0 %7620
    %7622 = vrot.lane.b32.xlu0 %v7607, 127
    %v7623 = vpop.permute.xlu0 %7622
    %7624 = vrot.lane.b32.xlu0 %v7608, 127
    %v7625 = vpop.permute.xlu0 %7624
    %7626 = vrot.lane.b32.xlu0 %v7609, 127
    %v7627 = vpop.permute.xlu0 %7626
    %7628 = vrot.lane.b32.xlu0 %v7610, 127
    %v7629 = vpop.permute.xlu0 %7628
    %v7630 = vsel %vm1973, %v7621, %v7623
    %v7631 = vsel %vm1973, %v7623, %v7625
    %v7632 = vsel %vm1973, %v7625, %v7627
    %v7633 = vsel %vm1973, %v7627, %v7629
    %v7638 = vmul.f32 %v7611, %v7630
    %v7639 = vmul.f32 %v7612, %v7631
    %v7640 = vmul.f32 %v7613, %v7632
    %v7641 = vmul.f32 %v7614, %v7633
    %v7642 = vadd.f32 %v7583, %v7638
    %v7643 = vadd.f32 %v7584, %v7639
    %v7644 = vadd.f32 %v7585, %v7640
    %v7645 = vadd.f32 %v7586, %v7641
    %v7646 = vld [vmem:[#allocation2 + $0x60] sm:$0xff]
    %v7647 = vld [vmem:[#allocation2 + $0x68] sm:$0xff]
    %v7648 = vld [vmem:[#allocation2 + $0x70] sm:$0xff]
    %v7649 = vld [vmem:[#allocation2 + $0x78] sm:$0xff]
    %7650 = vrot.lane.b32.xlu0 %v5803, 64
    %v7651 = vpop.permute.xlu0 %7650
    %7652 = vrot.lane.b32.xlu0 %v5804, 64
    %v7653 = vpop.permute.xlu0 %7652
    %7654 = vrot.lane.b32.xlu0 %v5805, 64
    %v7655 = vpop.permute.xlu0 %7654
    %7656 = vrot.lane.b32.xlu0 %v5806, 64
    %v7657 = vpop.permute.xlu0 %7656
    %7658 = vrot.lane.b32.xlu0 %v5807, 64
    %v7659 = vpop.permute.xlu0 %7658
    %v7660 = vsel %vm2000, %v7651, %v7653
    %v7661 = vsel %vm2000, %v7653, %v7655
    %v7662 = vsel %vm2000, %v7655, %v7657
    %v7663 = vsel %vm2000, %v7657, %v7659
    %v7668 = vadd.f32 %v7646, %v7660
    %v7669 = vadd.f32 %v7647, %v7661
    %v7670 = vadd.f32 %v7648, %v7662
    %v7671 = vadd.f32 %v7649, %v7663
    %v7672 = vld [vmem:[#allocation3 + $0x400] sm:$0xff]
    %v7673 = vld [vmem:[#allocation3 + $0x408] sm:$0xff]
    %v7674 = vld [vmem:[#allocation3 + $0x410] sm:$0xff]
    %v7675 = vld [vmem:[#allocation3 + $0x418] sm:$0xff]
    %v7676 = vmul.f32 %v7672, %v7668
    %v7677 = vmul.f32 %v7673, %v7669
    %v7678 = vmul.f32 %v7674, %v7670
    %v7679 = vmul.f32 %v7675, %v7671
    %v7680 = vadd.f32 %v7642, %v7676
    %v7681 = vadd.f32 %v7643, %v7677
    %v7682 = vadd.f32 %v7644, %v7678
    %v7683 = vadd.f32 %v7645, %v7679
    %7684 = vst [vmem:[#allocation9 + $0x60] sm:$0xff] %v7680
    %7685 = vst [vmem:[#allocation9 + $0x68] sm:$0xff] %v7681
    %7686 = vst [vmem:[#allocation9 + $0x70] sm:$0xff] %v7682
    %7687 = vst [vmem:[#allocation9 + $0x78] sm:$0xff] %v7683
    // Predicated region
    $region26: #{tpu_custom_call.1} parent=1 // pred_check
      _
    $region27: #{tpu_custom_call.1} parent=1 // pred_check_branch
      %7689 = sbr.rel (0) target = $region29
    $region28: #{tpu_custom_call.1} parent=1 // pred_region
      %7691 = vsyncadd [#allocation5], 0
      %s7693 = sshll.u32 [#allocation9], 4
      %s7694 = int_to_ptr.vmem [resolvable:$true] %s7693
      %s7695 = sshll.u32 %s3, 4
      %s7696 = int_to_ptr.hbm [resolvable:$true] %s7695
      %7698 = dma.vmem_to_hbm [thread:$0]  %s7694, 2048, %s7696, [#allocation5]
    $region29: #{tpu_custom_call.1} parent=1 // pred_fallthru
      _
    // Predicated region
    $region30: #{tpu_custom_call.1} parent=1 // pred_check
      _
    $region31: #{tpu_custom_call.1} parent=1 // pred_check_branch
      %7700 = sbr.rel (0) target = $region33
    $region32: #{tpu_custom_call.1} parent=1 // pred_region
      %7702 = dma.done [#allocation5], 2048
    $region33: #{tpu_custom_call.1} parent=1 // pred_fallthru
      _
    %7703 = vsyncpa [#allocation4], 1
    %7704 = vsyncpa [#allocation7], 1
    %7705 = vsyncpa [#allocation5], 1

</llo_original>
